<compile_context>
chip_gen: v6e
topology: v6e:2x2x1
jax: 0.10.0
libtpu: 0.0.40
codegen_flags: <defaults>
</compile_context>

<pallas_src>
import jax
import jax.numpy as jnp
from jax.experimental import pallas as pl
from jax.experimental.pallas import tpu as pltpu


# ----------------------------- kernel ---------------------------------------

def _elu(z):
    # ELU(alpha=1); clamp before exp so the not-taken branch cannot overflow.
    return jnp.where(z > 0, z, jnp.exp(jnp.minimum(z, 0.0)) - 1.0)


def upscaler_kernel(x_ref, wfc_ref, bfc_ref, d1_ref, b1_ref, d2_ref, b2_ref,
                    o_ref):
    # fc + ELU (f32 MXU).
    h = _elu(jnp.dot(x_ref[...], wfc_ref[...],
                     preferred_element_type=jnp.float32) + bfc_ref[...])
    # deconv1 (channel-mix + depth-to-space + crop folded into D1) + bias + ELU.
    a1 = _elu(jnp.dot(h.astype(jnp.bfloat16), d1_ref[...],
                      preferred_element_type=jnp.float32) + b1_ref[...])
    # deconv2 folded into D2, + bias + ELU -> (B, 28*28).
    o_ref[...] = _elu(jnp.dot(a1.astype(jnp.bfloat16), d2_ref[...],
                              preferred_element_type=jnp.float32) + b2_ref[...])


def _full_spec(shape):
    # No grid: one block == the whole array, resident in VMEM.
    return pl.BlockSpec(shape, lambda: (0,) * len(shape))


def upscaler_forward(x, p):
    b = x.shape[0]
    x2 = x.reshape(b, -1)                                  # == flatten(start_dim=1)
    out_px = p["d2"].shape[1]                              # 784
    out_hw = int(round(out_px ** 0.5))                     # 28
    args = (x2, p["fc_w"], p["fc_b"], p["d1"], p["b1"], p["d2"], p["b2"])
    out = pl.pallas_call(
        upscaler_kernel,
        out_shape=jax.ShapeDtypeStruct((b, out_px), jnp.float32),
        in_specs=[_full_spec(a.shape) for a in args],
        out_specs=_full_spec((b, out_px)),
        compiler_params=pltpu.CompilerParams(vmem_limit_bytes=40 * 1024 * 1024),
    )(*args)
    return out.reshape(b, 1, out_hw, out_hw)


# ------------------- parameter prep (deconv folding, host-side) -------------

def _dts_select(n_out, n_in):
    """A[r, i, a] = 1 iff output row r of a k=3,s=3,p=1 deconv comes from input
    row i with kernel tap a (i.e. i=(r+1)//3, a=(r+1)%3)."""
    r = jnp.arange(n_out)
    sel_pos = jax.nn.one_hot((r + 1) // 3, n_in, dtype=jnp.float32)  # (n_out, n_in)
    sel_tap = jax.nn.one_hot((r + 1) % 3, 3, dtype=jnp.float32)      # (n_out, 3)
    return sel_pos[:, :, None] * sel_tap[:, None, :]                 # (n_out, n_in, 3)


def init_params(key, hidden_size=512, output_size=28):
    gs = (output_size + 8) // 9            # 4
    conv_size = 32 * gs * gs               # 512
    h1 = 3 * gs - 2                        # 10
    h2 = 3 * h1 - 2                        # 28

    ks = jax.random.split(key, 6)

    def rnd(k, shape, fan_in):
        return jax.random.normal(k, shape, jnp.float32) / jnp.sqrt(fan_in)

    # PyTorch-layout raw weights.
    fc_w = rnd(ks[0], (conv_size, hidden_size), hidden_size)   # Linear: (out, in)
    fc_b = rnd(ks[1], (conv_size,), hidden_size)
    # ConvTranspose2d weight layout: (in_channels, out_channels, kh, kw)
    w1 = rnd(ks[2], (32, 16, 3, 3), 32 * 9)
    b1 = rnd(ks[3], (16,), 32 * 9)
    w2 = rnd(ks[4], (16, 1, 3, 3), 16 * 9)
    b2 = rnd(ks[5], (1,), 16 * 9)
    # Deconv weights are rounded to bf16 at init so the bf16-stored D1/D2 are
    # exact representations of the model weights (the reference uses the same
    # rounded values).
    w1 = w1.astype(jnp.bfloat16).astype(jnp.float32)
    w2 = w2.astype(jnp.bfloat16).astype(jnp.float32)
    raw = dict(fc_w=fc_w, fc_b=fc_b, w1=w1, b1=b1, w2=w2, b2=b2)

    # Fold (channel mix x depth-to-space x crop) of each deconv into one matrix.
    a1sel = _dts_select(h1, gs)            # (10, 4, 3)
    a2sel = _dts_select(h2, h1)            # (28, 10, 3)
    # D1[(c,i,j), (o,r,s)] = w1[c,o,a,b] with a,b selected by r,s.
    d1 = jnp.einsum('coab,ria,sjb->cijors', w1, a1sel, a1sel)
    d1 = d1.reshape(conv_size, 16 * h1 * h1)
    # D2[(m,p,q), (u,v)] = w2[m,0,a,b] with a,b selected by u,v.
    d2 = jnp.einsum('mab,upa,vqb->mpquv', w2[:, 0], a2sel, a2sel)
    d2 = d2.reshape(16 * h1 * h1, h2 * h2)

    params = dict(
        fc_w=fc_w.T,                                   # (in, out) for x @ W
        fc_b=fc_b.reshape(1, -1),
        d1=d1.astype(jnp.bfloat16),
        b1=jnp.repeat(b1, h1 * h1).reshape(1, -1),     # bias per out1 channel o
        d2=d2.astype(jnp.bfloat16),
        b2=b2.reshape(1, 1),
    )
    return params, raw


# ----------------------------- reference (plain JAX) -------------------------

def _deconv_s3k3p1(x, w, b):
    """ConvTranspose2d(kernel=3, stride=3, padding=1): since stride == kernel,
    this is a per-pixel matmul + depth-to-space, then a 1-px border crop."""
    n, _, hh, ww = x.shape
    co = w.shape[1]
    t = jnp.einsum('ncij,coab->noiajb', x, w)          # (n, co, H, 3, W, 3)
    full = t.reshape(n, co, 3 * hh, 3 * ww)
    return full[:, :, 1:3 * hh - 1, 1:3 * ww - 1] + b[None, :, None, None]


def reference_forward(x, raw):
    n = x.shape[0]
    h = _elu(x.reshape(n, -1) @ raw["fc_w"].T + raw["fc_b"])
    h = h.reshape(n, 32, 4, 4)
    h = _elu(_deconv_s3k3p1(h, raw["w1"], raw["b1"]))
    h = _elu(_deconv_s3k3p1(h, raw["w2"], raw["b2"]))
    return h


# ----------------------------- main ------------------------------------------

if __name__ == "__main__":
    key = jax.random.PRNGKey(0)
    kp, kx = jax.random.split(key)
    params, raw = init_params(kp)
    x = jax.random.normal(kx, (2, 512), jnp.float32)   # batch=2 latent vectors

    fwd = jax.jit(upscaler_forward)
    out = jax.block_until_ready(fwd(x, params))

    ref = reference_forward(x, raw)
    assert out.shape == (2, 1, 28, 28), out.shape
    max_diff = jnp.max(jnp.abs(out - ref))
    assert jnp.allclose(out, ref, rtol=1e-2, atol=1e-2), (
        f"max abs diff {max_diff}")
    print("KERNEL_OK")
</pallas_src>

<mosaic_0001>
module attributes {stable_mosaic.version = 11 : i64} {
  func.func @upscaler_kernel(%arg0: memref<2x512xf32, #tpu.memory_space<vmem>>, %arg1: memref<512x512xf32, #tpu.memory_space<vmem>>, %arg2: memref<1x512xf32, #tpu.memory_space<vmem>>, %arg3: memref<512x1600xbf16, #tpu.memory_space<vmem>>, %arg4: memref<1x1600xf32, #tpu.memory_space<vmem>>, %arg5: memref<1600x784xbf16, #tpu.memory_space<vmem>>, %arg6: memref<1x1xf32, #tpu.memory_space<vmem>>, %arg7: memref<2x784xf32, #tpu.memory_space<vmem>>) attributes {dimension_semantics = [], scalar_prefetch = 0 : i64, scratch_operands = 0 : i64, tpu.core_type = #tpu.core_type<tc>} {
    %c0 = arith.constant 0 : index
    %c0_0 = arith.constant 0 : index
    %0 = vector.load %arg0[%c0, %c0_0] : memref<2x512xf32, #tpu.memory_space<vmem>>, vector<2x512xf32>
    %c0_1 = arith.constant 0 : index
    %c0_2 = arith.constant 0 : index
    %1 = vector.load %arg1[%c0_1, %c0_2] : memref<512x512xf32, #tpu.memory_space<vmem>>, vector<512x512xf32>
    %cst = arith.constant dense<0.000000e+00> : vector<2x512xf32>
    %2 = tpu.matmul %0, %1, %cst {dimension_numbers = #tpu.dot_dimension_numbers<[1], [0], [0], [1], [0, 0, 1, 1], [], []>} : vector<2x512xf32>, vector<512x512xf32>, vector<2x512xf32> -> vector<2x512xf32>
    %c0_3 = arith.constant 0 : index
    %c0_4 = arith.constant 0 : index
    %3 = vector.load %arg2[%c0_3, %c0_4] : memref<1x512xf32, #tpu.memory_space<vmem>>, vector<1x512xf32>
    %4 = vector.broadcast %3 : vector<1x512xf32> to vector<2x512xf32>
    %5 = arith.addf %2, %4 : vector<2x512xf32>
    %cst_5 = arith.constant 0.000000e+00 : f32
    %6 = vector.broadcast %cst_5 : f32 to vector<2x512xf32>
    %7 = arith.cmpf ogt, %5, %6 : vector<2x512xf32>
    %cst_6 = arith.constant 0.000000e+00 : f32
    %8 = vector.broadcast %cst_6 : f32 to vector<2x512xf32>
    %9 = arith.minimumf %5, %8 : vector<2x512xf32>
    %10 = math.exp %9 : vector<2x512xf32>
    %cst_7 = arith.constant 1.000000e+00 : f32
    %11 = vector.broadcast %cst_7 : f32 to vector<2x512xf32>
    %12 = arith.subf %10, %11 : vector<2x512xf32>
    %13 = arith.select %7, %5, %12 : vector<2x512xi1>, vector<2x512xf32>
    %14 = arith.truncf %13 : vector<2x512xf32> to vector<2x512xbf16>
    %c0_8 = arith.constant 0 : index
    %c0_9 = arith.constant 0 : index
    %15 = vector.load %arg3[%c0_8, %c0_9] : memref<512x1600xbf16, #tpu.memory_space<vmem>>, vector<512x1600xbf16>
    %cst_10 = arith.constant dense<0.000000e+00> : vector<2x1600xf32>
    %16 = tpu.matmul %14, %15, %cst_10 {dimension_numbers = #tpu.dot_dimension_numbers<[1], [0], [0], [1], [0, 0, 1, 1], [], []>} : vector<2x512xbf16>, vector<512x1600xbf16>, vector<2x1600xf32> -> vector<2x1600xf32>
    %c0_11 = arith.constant 0 : index
    %c0_12 = arith.constant 0 : index
    %17 = vector.load %arg4[%c0_11, %c0_12] : memref<1x1600xf32, #tpu.memory_space<vmem>>, vector<1x1600xf32>
    %18 = vector.broadcast %17 : vector<1x1600xf32> to vector<2x1600xf32>
    %19 = arith.addf %16, %18 : vector<2x1600xf32>
    %cst_13 = arith.constant 0.000000e+00 : f32
    %20 = vector.broadcast %cst_13 : f32 to vector<2x1600xf32>
    %21 = arith.cmpf ogt, %19, %20 : vector<2x1600xf32>
    %cst_14 = arith.constant 0.000000e+00 : f32
    %22 = vector.broadcast %cst_14 : f32 to vector<2x1600xf32>
    %23 = arith.minimumf %19, %22 : vector<2x1600xf32>
    %24 = math.exp %23 : vector<2x1600xf32>
    %cst_15 = arith.constant 1.000000e+00 : f32
    %25 = vector.broadcast %cst_15 : f32 to vector<2x1600xf32>
    %26 = arith.subf %24, %25 : vector<2x1600xf32>
    %27 = arith.select %21, %19, %26 : vector<2x1600xi1>, vector<2x1600xf32>
    %28 = arith.truncf %27 : vector<2x1600xf32> to vector<2x1600xbf16>
    %c0_16 = arith.constant 0 : index
    %c0_17 = arith.constant 0 : index
    %29 = vector.load %arg5[%c0_16, %c0_17] : memref<1600x784xbf16, #tpu.memory_space<vmem>>, vector<1600x784xbf16>
    %cst_18 = arith.constant dense<0.000000e+00> : vector<2x784xf32>
    %30 = tpu.matmul %28, %29, %cst_18 {dimension_numbers = #tpu.dot_dimension_numbers<[1], [0], [0], [1], [0, 0, 1, 1], [], []>} : vector<2x1600xbf16>, vector<1600x784xbf16>, vector<2x784xf32> -> vector<2x784xf32>
    %c0_19 = arith.constant 0 : index
    %c0_20 = arith.constant 0 : index
    %31 = vector.load %arg6[%c0_19, %c0_20] : memref<1x1xf32, #tpu.memory_space<vmem>>, vector<1x1xf32>
    %32 = vector.broadcast %31 : vector<1x1xf32> to vector<2x784xf32>
    %33 = arith.addf %30, %32 : vector<2x784xf32>
    %cst_21 = arith.constant 0.000000e+00 : f32
    %34 = vector.broadcast %cst_21 : f32 to vector<2x784xf32>
    %35 = arith.cmpf ogt, %33, %34 : vector<2x784xf32>
    %cst_22 = arith.constant 0.000000e+00 : f32
    %36 = vector.broadcast %cst_22 : f32 to vector<2x784xf32>
    %37 = arith.minimumf %33, %36 : vector<2x784xf32>
    %38 = math.exp %37 : vector<2x784xf32>
    %cst_23 = arith.constant 1.000000e+00 : f32
    %39 = vector.broadcast %cst_23 : f32 to vector<2x784xf32>
    %40 = arith.subf %38, %39 : vector<2x784xf32>
    %41 = arith.select %35, %33, %40 : vector<2x784xi1>, vector<2x784xf32>
    %c0_24 = arith.constant 0 : index
    %c0_25 = arith.constant 0 : index
    %42 = vector.load %arg7[%c0_24, %c0_25] : memref<2x784xf32, #tpu.memory_space<vmem>>, vector<2x784xf32>
    tpu.vector_store %arg7[%c0_24, %c0_25], %41 {strides = array<i32>} : memref<2x784xf32, #tpu.memory_space<vmem>>, vector<2x784xf32>,
    return
  }
}

</mosaic_0001>

<llo_original>
// kernel: upscaler_forward.1
$region0: #{upscaler_forward.1}
  #allocation0 [shape = 'u32[]', space=smem, size = 0x4, offset = 0x4, fixed_abs, tag = 'smem constant byte address 0x4 - core index']
  #allocation1 [shape = 'u32[144,128]{1,0:T(1,128)}', space=vmem, size = 0x12000, scoped, tag = 'internal scratch']
  #allocation2 [shape = 'f32[1,1]{1,0:T(1,128)S(1)}', space=vmem, size = 0x200, scoped, tag = 'scoped memory for upscaler_forward.1']
  %s0 = inlined_call_operand.vmem [shape: f32[2,512], index: 0, kind: input, shape index: {}]
  %s1 = inlined_call_operand.vmem [shape: f32[512,512], index: 1, kind: input, shape index: {}]
  %s2 = inlined_call_operand.vmem [shape: f32[1,512], index: 2, kind: input, shape index: {}]
  %s3 = inlined_call_operand.vmem [shape: bf16[512,1600], index: 3, kind: input, shape index: {}]
  %s4 = inlined_call_operand.vmem [shape: f32[1,1600], index: 4, kind: input, shape index: {}]
  %s5 = inlined_call_operand.vmem [shape: bf16[1600,784], index: 5, kind: input, shape index: {}]
  %s6 = inlined_call_operand.<no memory space> [shape: f32[1,1], index: 6, kind: input, shape index: {}]
  %s7 = inlined_call_operand.vmem [shape: f32[2,784], index: 7, kind: output, shape index: {}]
  %s8 = sld [smem:[#allocation0]]
  $region38: #{upscaler_forward.1} parent=0
    _
  %s10 = ssub.s32 1, %s8
  %s11 = scalar_select 0, %s10, %s8
  %v12 = vstv %s6
  %13 = vst [vmem:[#allocation2] sm:$0x1] %v12
  // Predicated region
  $region2: #{upscaler_forward.1} parent=0 // pred_check
    _
  $region3: #{upscaler_forward.1} parent=0 // pred_check_branch
    %15 = sbr.rel (0) target = $region5
  $region4: #{upscaler_forward.1} parent=0 // pred_region
    _
  $region5: #{upscaler_forward.1} parent=0 // pred_fallthru
    _
  // Predicated region
  $region6: #{upscaler_forward.1} parent=0 // pred_check
    _
  $region7: #{upscaler_forward.1} parent=0 // pred_check_branch
    %17 = sbr.rel (0) target = $region9
  $region8: #{upscaler_forward.1} parent=0 // pred_region
    _
  $region9: #{upscaler_forward.1} parent=0 // pred_fallthru
    _
  // Predicated region
  $region10: #{upscaler_forward.1} parent=0 // pred_check
    _
  $region11: #{upscaler_forward.1} parent=0 // pred_check_branch
    %19 = sbr.rel (0) target = $region13
  $region12: #{upscaler_forward.1} parent=0 // pred_region
    _
  $region13: #{upscaler_forward.1} parent=0 // pred_fallthru
    _
  // Predicated region
  $region14: #{upscaler_forward.1} parent=0 // pred_check
    _
  $region15: #{upscaler_forward.1} parent=0 // pred_check_branch
    %21 = sbr.rel (0) target = $region17
  $region16: #{upscaler_forward.1} parent=0 // pred_region
    _
  $region17: #{upscaler_forward.1} parent=0 // pred_fallthru
    _
  // Predicated region
  $region18: #{upscaler_forward.1} parent=0 // pred_check
    _
  $region19: #{upscaler_forward.1} parent=0 // pred_check_branch
    %23 = sbr.rel (0) target = $region21
  $region20: #{upscaler_forward.1} parent=0 // pred_region
    _
  $region21: #{upscaler_forward.1} parent=0 // pred_fallthru
    _
  // Predicated region
  $region22: #{upscaler_forward.1} parent=0 // pred_check
    _
  $region23: #{upscaler_forward.1} parent=0 // pred_check_branch
    %25 = sbr.rel (0) target = $region25
  $region24: #{upscaler_forward.1} parent=0 // pred_region
    _
  $region25: #{upscaler_forward.1} parent=0 // pred_fallthru
    _
  // Predicated region
  $region26: #{upscaler_forward.1} parent=0 // pred_check
    _
  $region27: #{upscaler_forward.1} parent=0 // pred_check_branch
    %27 = sbr.rel (0) target = $region29
  $region28: #{upscaler_forward.1} parent=0 // pred_region
    _
  $region29: #{upscaler_forward.1} parent=0 // pred_fallthru
    _
  %v29 = vld [vmem:[%s0] sm:$0xff]
  %v30 = vld [vmem:[%s1] sm:$0xff]
  %v31 = vld [vmem:[%s1 + $0x8] sm:$0xff]
  %v32 = vld [vmem:[%s1 + $0x10] sm:$0xff]
  %v33 = vld [vmem:[%s1 + $0x18] sm:$0xff]
  %v34 = vld [vmem:[%s1 + $0x20] sm:$0xff]
  %v35 = vld [vmem:[%s1 + $0x28] sm:$0xff]
  %v36 = vld [vmem:[%s1 + $0x30] sm:$0xff]
  %v37 = vld [vmem:[%s1 + $0x38] sm:$0xff]
  %v38 = vld [vmem:[%s1 + $0x40] sm:$0xff]
  %v39 = vld [vmem:[%s1 + $0x48] sm:$0xff]
  %v40 = vld [vmem:[%s1 + $0x50] sm:$0xff]
  %v41 = vld [vmem:[%s1 + $0x58] sm:$0xff]
  %v42 = vld [vmem:[%s1 + $0x60] sm:$0xff]
  %v43 = vld [vmem:[%s1 + $0x68] sm:$0xff]
  %v44 = vld [vmem:[%s1 + $0x70] sm:$0xff]
  %v45 = vld [vmem:[%s1 + $0x78] sm:$0xff]
  %v46 = vld [vmem:[%s1 + $0x80] sm:$0xff]
  %v47 = vld [vmem:[%s1 + $0x88] sm:$0xff]
  %v48 = vld [vmem:[%s1 + $0x90] sm:$0xff]
  %v49 = vld [vmem:[%s1 + $0x98] sm:$0xff]
  %v50 = vld [vmem:[%s1 + $0xa0] sm:$0xff]
  %v51 = vld [vmem:[%s1 + $0xa8] sm:$0xff]
  %v52 = vld [vmem:[%s1 + $0xb0] sm:$0xff]
  %v53 = vld [vmem:[%s1 + $0xb8] sm:$0xff]
  %v54 = vld [vmem:[%s1 + $0xc0] sm:$0xff]
  %v55 = vld [vmem:[%s1 + $0xc8] sm:$0xff]
  %v56 = vld [vmem:[%s1 + $0xd0] sm:$0xff]
  %v57 = vld [vmem:[%s1 + $0xd8] sm:$0xff]
  %v58 = vld [vmem:[%s1 + $0xe0] sm:$0xff]
  %v59 = vld [vmem:[%s1 + $0xe8] sm:$0xff]
  %v60 = vld [vmem:[%s1 + $0xf0] sm:$0xff]
  %v61 = vld [vmem:[%s1 + $0xf8] sm:$0xff]
  %v62 = vld [vmem:[%s1 + $0x100] sm:$0xff]
  %v63 = vld [vmem:[%s1 + $0x108] sm:$0xff]
  %v64 = vld [vmem:[%s1 + $0x110] sm:$0xff]
  %v65 = vld [vmem:[%s1 + $0x118] sm:$0xff]
  %v66 = vld [vmem:[%s1 + $0x120] sm:$0xff]
  %v67 = vld [vmem:[%s1 + $0x128] sm:$0xff]
  %v68 = vld [vmem:[%s1 + $0x130] sm:$0xff]
  %v69 = vld [vmem:[%s1 + $0x138] sm:$0xff]
  %v70 = vld [vmem:[%s1 + $0x140] sm:$0xff]
  %v71 = vld [vmem:[%s1 + $0x148] sm:$0xff]
  %v72 = vld [vmem:[%s1 + $0x150] sm:$0xff]
  %v73 = vld [vmem:[%s1 + $0x158] sm:$0xff]
  %v74 = vld [vmem:[%s1 + $0x160] sm:$0xff]
  %v75 = vld [vmem:[%s1 + $0x168] sm:$0xff]
  %v76 = vld [vmem:[%s1 + $0x170] sm:$0xff]
  %v77 = vld [vmem:[%s1 + $0x178] sm:$0xff]
  %v78 = vld [vmem:[%s1 + $0x180] sm:$0xff]
  %v79 = vld [vmem:[%s1 + $0x188] sm:$0xff]
  %v80 = vld [vmem:[%s1 + $0x190] sm:$0xff]
  %v81 = vld [vmem:[%s1 + $0x198] sm:$0xff]
  %v82 = vld [vmem:[%s1 + $0x1a0] sm:$0xff]
  %v83 = vld [vmem:[%s1 + $0x1a8] sm:$0xff]
  %v84 = vld [vmem:[%s1 + $0x1b0] sm:$0xff]
  %v85 = vld [vmem:[%s1 + $0x1b8] sm:$0xff]
  %v86 = vld [vmem:[%s1 + $0x1c0] sm:$0xff]
  %v87 = vld [vmem:[%s1 + $0x1c8] sm:$0xff]
  %v88 = vld [vmem:[%s1 + $0x1d0] sm:$0xff]
  %v89 = vld [vmem:[%s1 + $0x1d8] sm:$0xff]
  %v90 = vld [vmem:[%s1 + $0x1e0] sm:$0xff]
  %v91 = vld [vmem:[%s1 + $0x1e8] sm:$0xff]
  %v92 = vld [vmem:[%s1 + $0x1f0] sm:$0xff]
  %v93 = vld [vmem:[%s1 + $0x1f8] sm:$0xff]
  %v94 = vld [vmem:[%s1 + $0x200] sm:$0xff]
  %v95 = vld [vmem:[%s1 + $0x208] sm:$0xff]
  %v96 = vld [vmem:[%s1 + $0x210] sm:$0xff]
  %v97 = vld [vmem:[%s1 + $0x218] sm:$0xff]
  %v98 = vld [vmem:[%s1 + $0x220] sm:$0xff]
  %v99 = vld [vmem:[%s1 + $0x228] sm:$0xff]
  %v100 = vld [vmem:[%s1 + $0x230] sm:$0xff]
  %v101 = vld [vmem:[%s1 + $0x238] sm:$0xff]
  %v102 = vld [vmem:[%s1 + $0x240] sm:$0xff]
  %v103 = vld [vmem:[%s1 + $0x248] sm:$0xff]
  %v104 = vld [vmem:[%s1 + $0x250] sm:$0xff]
  %v105 = vld [vmem:[%s1 + $0x258] sm:$0xff]
  %v106 = vld [vmem:[%s1 + $0x260] sm:$0xff]
  %v107 = vld [vmem:[%s1 + $0x268] sm:$0xff]
  %v108 = vld [vmem:[%s1 + $0x270] sm:$0xff]
  %v109 = vld [vmem:[%s1 + $0x278] sm:$0xff]
  %v110 = vld [vmem:[%s1 + $0x280] sm:$0xff]
  %v111 = vld [vmem:[%s1 + $0x288] sm:$0xff]
  %v112 = vld [vmem:[%s1 + $0x290] sm:$0xff]
  %v113 = vld [vmem:[%s1 + $0x298] sm:$0xff]
  %v114 = vld [vmem:[%s1 + $0x2a0] sm:$0xff]
  %v115 = vld [vmem:[%s1 + $0x2a8] sm:$0xff]
  %v116 = vld [vmem:[%s1 + $0x2b0] sm:$0xff]
  %v117 = vld [vmem:[%s1 + $0x2b8] sm:$0xff]
  %v118 = vld [vmem:[%s1 + $0x2c0] sm:$0xff]
  %v119 = vld [vmem:[%s1 + $0x2c8] sm:$0xff]
  %v120 = vld [vmem:[%s1 + $0x2d0] sm:$0xff]
  %v121 = vld [vmem:[%s1 + $0x2d8] sm:$0xff]
  %v122 = vld [vmem:[%s1 + $0x2e0] sm:$0xff]
  %v123 = vld [vmem:[%s1 + $0x2e8] sm:$0xff]
  %v124 = vld [vmem:[%s1 + $0x2f0] sm:$0xff]
  %v125 = vld [vmem:[%s1 + $0x2f8] sm:$0xff]
  %v126 = vld [vmem:[%s1 + $0x300] sm:$0xff]
  %v127 = vld [vmem:[%s1 + $0x308] sm:$0xff]
  %v128 = vld [vmem:[%s1 + $0x310] sm:$0xff]
  %v129 = vld [vmem:[%s1 + $0x318] sm:$0xff]
  %v130 = vld [vmem:[%s1 + $0x320] sm:$0xff]
  %v131 = vld [vmem:[%s1 + $0x328] sm:$0xff]
  %v132 = vld [vmem:[%s1 + $0x330] sm:$0xff]
  %v133 = vld [vmem:[%s1 + $0x338] sm:$0xff]
  %v134 = vld [vmem:[%s1 + $0x340] sm:$0xff]
  %v135 = vld [vmem:[%s1 + $0x348] sm:$0xff]
  %v136 = vld [vmem:[%s1 + $0x350] sm:$0xff]
  %v137 = vld [vmem:[%s1 + $0x358] sm:$0xff]
  %v138 = vld [vmem:[%s1 + $0x360] sm:$0xff]
  %v139 = vld [vmem:[%s1 + $0x368] sm:$0xff]
  %v140 = vld [vmem:[%s1 + $0x370] sm:$0xff]
  %v141 = vld [vmem:[%s1 + $0x378] sm:$0xff]
  %v142 = vld [vmem:[%s1 + $0x380] sm:$0xff]
  %v143 = vld [vmem:[%s1 + $0x388] sm:$0xff]
  %v144 = vld [vmem:[%s1 + $0x390] sm:$0xff]
  %v145 = vld [vmem:[%s1 + $0x398] sm:$0xff]
  %v146 = vld [vmem:[%s1 + $0x3a0] sm:$0xff]
  %v147 = vld [vmem:[%s1 + $0x3a8] sm:$0xff]
  %v148 = vld [vmem:[%s1 + $0x3b0] sm:$0xff]
  %v149 = vld [vmem:[%s1 + $0x3b8] sm:$0xff]
  %v150 = vld [vmem:[%s1 + $0x3c0] sm:$0xff]
  %v151 = vld [vmem:[%s1 + $0x3c8] sm:$0xff]
  %v152 = vld [vmem:[%s1 + $0x3d0] sm:$0xff]
  %v153 = vld [vmem:[%s1 + $0x3d8] sm:$0xff]
  %v154 = vld [vmem:[%s1 + $0x3e0] sm:$0xff]
  %v155 = vld [vmem:[%s1 + $0x3e8] sm:$0xff]
  %v156 = vld [vmem:[%s1 + $0x3f0] sm:$0xff]
  %v157 = vld [vmem:[%s1 + $0x3f8] sm:$0xff]
  %v158 = vld [vmem:[%s1 + $0x400] sm:$0xff]
  %v159 = vld [vmem:[%s1 + $0x408] sm:$0xff]
  %v160 = vld [vmem:[%s1 + $0x410] sm:$0xff]
  %v161 = vld [vmem:[%s1 + $0x418] sm:$0xff]
  %v162 = vld [vmem:[%s1 + $0x420] sm:$0xff]
  %v163 = vld [vmem:[%s1 + $0x428] sm:$0xff]
  %v164 = vld [vmem:[%s1 + $0x430] sm:$0xff]
  %v165 = vld [vmem:[%s1 + $0x438] sm:$0xff]
  %v166 = vld [vmem:[%s1 + $0x440] sm:$0xff]
  %v167 = vld [vmem:[%s1 + $0x448] sm:$0xff]
  %v168 = vld [vmem:[%s1 + $0x450] sm:$0xff]
  %v169 = vld [vmem:[%s1 + $0x458] sm:$0xff]
  %v170 = vld [vmem:[%s1 + $0x460] sm:$0xff]
  %v171 = vld [vmem:[%s1 + $0x468] sm:$0xff]
  %v172 = vld [vmem:[%s1 + $0x470] sm:$0xff]
  %v173 = vld [vmem:[%s1 + $0x478] sm:$0xff]
  %v174 = vld [vmem:[%s1 + $0x480] sm:$0xff]
  %v175 = vld [vmem:[%s1 + $0x488] sm:$0xff]
  %v176 = vld [vmem:[%s1 + $0x490] sm:$0xff]
  %v177 = vld [vmem:[%s1 + $0x498] sm:$0xff]
  %v178 = vld [vmem:[%s1 + $0x4a0] sm:$0xff]
  %v179 = vld [vmem:[%s1 + $0x4a8] sm:$0xff]
  %v180 = vld [vmem:[%s1 + $0x4b0] sm:$0xff]
  %v181 = vld [vmem:[%s1 + $0x4b8] sm:$0xff]
  %v182 = vld [vmem:[%s1 + $0x4c0] sm:$0xff]
  %v183 = vld [vmem:[%s1 + $0x4c8] sm:$0xff]
  %v184 = vld [vmem:[%s1 + $0x4d0] sm:$0xff]
  %v185 = vld [vmem:[%s1 + $0x4d8] sm:$0xff]
  %v186 = vld [vmem:[%s1 + $0x4e0] sm:$0xff]
  %v187 = vld [vmem:[%s1 + $0x4e8] sm:$0xff]
  %v188 = vld [vmem:[%s1 + $0x4f0] sm:$0xff]
  %v189 = vld [vmem:[%s1 + $0x4f8] sm:$0xff]
  %v190 = vld [vmem:[%s1 + $0x500] sm:$0xff]
  %v191 = vld [vmem:[%s1 + $0x508] sm:$0xff]
  %v192 = vld [vmem:[%s1 + $0x510] sm:$0xff]
  %v193 = vld [vmem:[%s1 + $0x518] sm:$0xff]
  %v194 = vld [vmem:[%s1 + $0x520] sm:$0xff]
  %v195 = vld [vmem:[%s1 + $0x528] sm:$0xff]
  %v196 = vld [vmem:[%s1 + $0x530] sm:$0xff]
  %v197 = vld [vmem:[%s1 + $0x538] sm:$0xff]
  %v198 = vld [vmem:[%s1 + $0x540] sm:$0xff]
  %v199 = vld [vmem:[%s1 + $0x548] sm:$0xff]
  %v200 = vld [vmem:[%s1 + $0x550] sm:$0xff]
  %v201 = vld [vmem:[%s1 + $0x558] sm:$0xff]
  %v202 = vld [vmem:[%s1 + $0x560] sm:$0xff]
  %v203 = vld [vmem:[%s1 + $0x568] sm:$0xff]
  %v204 = vld [vmem:[%s1 + $0x570] sm:$0xff]
  %v205 = vld [vmem:[%s1 + $0x578] sm:$0xff]
  %v206 = vld [vmem:[%s1 + $0x580] sm:$0xff]
  %v207 = vld [vmem:[%s1 + $0x588] sm:$0xff]
  %v208 = vld [vmem:[%s1 + $0x590] sm:$0xff]
  %v209 = vld [vmem:[%s1 + $0x598] sm:$0xff]
  %v210 = vld [vmem:[%s1 + $0x5a0] sm:$0xff]
  %v211 = vld [vmem:[%s1 + $0x5a8] sm:$0xff]
  %v212 = vld [vmem:[%s1 + $0x5b0] sm:$0xff]
  %v213 = vld [vmem:[%s1 + $0x5b8] sm:$0xff]
  %v214 = vld [vmem:[%s1 + $0x5c0] sm:$0xff]
  %v215 = vld [vmem:[%s1 + $0x5c8] sm:$0xff]
  %v216 = vld [vmem:[%s1 + $0x5d0] sm:$0xff]
  %v217 = vld [vmem:[%s1 + $0x5d8] sm:$0xff]
  %v218 = vld [vmem:[%s1 + $0x5e0] sm:$0xff]
  %v219 = vld [vmem:[%s1 + $0x5e8] sm:$0xff]
  %v220 = vld [vmem:[%s1 + $0x5f0] sm:$0xff]
  %v221 = vld [vmem:[%s1 + $0x5f8] sm:$0xff]
  %v222 = vld [vmem:[%s1 + $0x600] sm:$0xff]
  %v223 = vld [vmem:[%s1 + $0x608] sm:$0xff]
  %v224 = vld [vmem:[%s1 + $0x610] sm:$0xff]
  %v225 = vld [vmem:[%s1 + $0x618] sm:$0xff]
  %v226 = vld [vmem:[%s1 + $0x620] sm:$0xff]
  %v227 = vld [vmem:[%s1 + $0x628] sm:$0xff]
  %v228 = vld [vmem:[%s1 + $0x630] sm:$0xff]
  %v229 = vld [vmem:[%s1 + $0x638] sm:$0xff]
  %v230 = vld [vmem:[%s1 + $0x640] sm:$0xff]
  %v231 = vld [vmem:[%s1 + $0x648] sm:$0xff]
  %v232 = vld [vmem:[%s1 + $0x650] sm:$0xff]
  %v233 = vld [vmem:[%s1 + $0x658] sm:$0xff]
  %v234 = vld [vmem:[%s1 + $0x660] sm:$0xff]
  %v235 = vld [vmem:[%s1 + $0x668] sm:$0xff]
  %v236 = vld [vmem:[%s1 + $0x670] sm:$0xff]
  %v237 = vld [vmem:[%s1 + $0x678] sm:$0xff]
  %v238 = vld [vmem:[%s1 + $0x680] sm:$0xff]
  %v239 = vld [vmem:[%s1 + $0x688] sm:$0xff]
  %v240 = vld [vmem:[%s1 + $0x690] sm:$0xff]
  %v241 = vld [vmem:[%s1 + $0x698] sm:$0xff]
  %v242 = vld [vmem:[%s1 + $0x6a0] sm:$0xff]
  %v243 = vld [vmem:[%s1 + $0x6a8] sm:$0xff]
  %v244 = vld [vmem:[%s1 + $0x6b0] sm:$0xff]
  %v245 = vld [vmem:[%s1 + $0x6b8] sm:$0xff]
  %v246 = vld [vmem:[%s1 + $0x6c0] sm:$0xff]
  %v247 = vld [vmem:[%s1 + $0x6c8] sm:$0xff]
  %v248 = vld [vmem:[%s1 + $0x6d0] sm:$0xff]
  %v249 = vld [vmem:[%s1 + $0x6d8] sm:$0xff]
  %v250 = vld [vmem:[%s1 + $0x6e0] sm:$0xff]
  %v251 = vld [vmem:[%s1 + $0x6e8] sm:$0xff]
  %v252 = vld [vmem:[%s1 + $0x6f0] sm:$0xff]
  %v253 = vld [vmem:[%s1 + $0x6f8] sm:$0xff]
  %v254 = vld [vmem:[%s1 + $0x700] sm:$0xff]
  %v255 = vld [vmem:[%s1 + $0x708] sm:$0xff]
  %v256 = vld [vmem:[%s1 + $0x710] sm:$0xff]
  %v257 = vld [vmem:[%s1 + $0x718] sm:$0xff]
  %v258 = vld [vmem:[%s1 + $0x720] sm:$0xff]
  %v259 = vld [vmem:[%s1 + $0x728] sm:$0xff]
  %v260 = vld [vmem:[%s1 + $0x730] sm:$0xff]
  %v261 = vld [vmem:[%s1 + $0x738] sm:$0xff]
  %v262 = vld [vmem:[%s1 + $0x740] sm:$0xff]
  %v263 = vld [vmem:[%s1 + $0x748] sm:$0xff]
  %v264 = vld [vmem:[%s1 + $0x750] sm:$0xff]
  %v265 = vld [vmem:[%s1 + $0x758] sm:$0xff]
  %v266 = vld [vmem:[%s1 + $0x760] sm:$0xff]
  %v267 = vld [vmem:[%s1 + $0x768] sm:$0xff]
  %v268 = vld [vmem:[%s1 + $0x770] sm:$0xff]
  %v269 = vld [vmem:[%s1 + $0x778] sm:$0xff]
  %v270 = vld [vmem:[%s1 + $0x780] sm:$0xff]
  %v271 = vld [vmem:[%s1 + $0x788] sm:$0xff]
  %v272 = vld [vmem:[%s1 + $0x790] sm:$0xff]
  %v273 = vld [vmem:[%s1 + $0x798] sm:$0xff]
  %v274 = vld [vmem:[%s1 + $0x7a0] sm:$0xff]
  %v275 = vld [vmem:[%s1 + $0x7a8] sm:$0xff]
  %v276 = vld [vmem:[%s1 + $0x7b0] sm:$0xff]
  %v277 = vld [vmem:[%s1 + $0x7b8] sm:$0xff]
  %v278 = vld [vmem:[%s1 + $0x7c0] sm:$0xff]
  %v279 = vld [vmem:[%s1 + $0x7c8] sm:$0xff]
  %v280 = vld [vmem:[%s1 + $0x7d0] sm:$0xff]
  %v281 = vld [vmem:[%s1 + $0x7d8] sm:$0xff]
  %v282 = vld [vmem:[%s1 + $0x7e0] sm:$0xff]
  %v283 = vld [vmem:[%s1 + $0x7e8] sm:$0xff]
  %v284 = vld [vmem:[%s1 + $0x7f0] sm:$0xff]
  %v285 = vld [vmem:[%s1 + $0x7f8] sm:$0xff]
  %v286 = vld [vmem:[%s2] sm:$0xf]
  %v288 = vlaneseq
  %v289 = vshrl.u32 %v288, 7
  %v290 = vsub.s32 0, %v289
  %v291 = vrot.slane %v286, %v290
  %v292 = vlaneseq
  %v293 = vshrl.u32 %v292, 7
  %v294 = vsub.s32 1, %v293
  %v295 = vrot.slane %v286, %v294
  %v296 = vlaneseq
  %v297 = vshrl.u32 %v296, 7
  %v298 = vsub.s32 2, %v297
  %v299 = vrot.slane %v286, %v298
  %v300 = vlaneseq
  %v301 = vshrl.u32 %v300, 7
  %v302 = vsub.s32 3, %v301
  %v303 = vrot.slane %v286, %v302
  %v309 = vcombine.high %v29, %v29
  %v311 = vunpack.c.l.s4 1983009808
  %v312 = vunpack.c.0.s8 %v311
  %v313 = vlaneseq
  %v314 = vshrl.u32 %v313, 7
  %v315 = vsub.s32 %v312, %v314
  %v316 = vrot.slane %v29, %v315
  %v318 = vunpack.c.l.s4 1983009808
  %v319 = vunpack.c.0.s8 %v318
  %v320 = vlaneseq
  %v321 = vshrl.u32 %v320, 7
  %v322 = vsub.s32 %v319, %v321
  %v323 = vrot.slane %v309, %v322
  %v324 = vcombine.high %v316, %v316
  %v325 = vcombine.high %v323, %v323
  %330 = vmatprep.subr.mxu0 %v91
  %331 = vmatpush1.msra.mxu0 %v90
  %332 = vmatprep.subr.mxu0 %v87
  %333 = vmatpush1.msra.mxu0 %v86
  %334 = vmatprep.subr.mxu0 %v83
  %335 = vmatpush1.msra.mxu0 %v82
  %336 = vmatprep.subr.mxu0 %v79
  %337 = vmatpush1.msra.mxu0 %v78
  %338 = vmatprep.subr.mxu0 %v75
  %339 = vmatpush1.msra.mxu0 %v74
  %340 = vmatprep.subr.mxu0 %v71
  %341 = vmatpush1.msra.mxu0 %v70
  %342 = vmatprep.subr.mxu0 %v67
  %343 = vmatpush1.msra.mxu0 %v66
  %344 = vmatprep.subr.mxu0 %v63
  %345 = vmatpush1.msra.mxu0 %v62
  %346 = vmatprep.subr.mxu0 %v59
  %347 = vmatpush1.msra.mxu0 %v58
  %348 = vmatprep.subr.mxu0 %v55
  %349 = vmatpush1.msra.mxu0 %v54
  %350 = vmatprep.subr.mxu0 %v51
  %351 = vmatpush1.msra.mxu0 %v50
  %352 = vmatprep.subr.mxu0 %v47
  %353 = vmatpush1.msra.mxu0 %v46
  %354 = vmatprep.subr.mxu0 %v43
  %355 = vmatpush1.msra.mxu0 %v42
  %356 = vmatprep.subr.mxu0 %v39
  %357 = vmatpush1.msra.mxu0 %v38
  %358 = vmatprep.subr.mxu0 %v35
  %359 = vmatpush1.msra.mxu0 %v34
  %360 = vmatprep.subr.mxu0 %v31
  %361 = vmatpush1.msra.mxu0 %v30
  %362 = vmatprep.subr.mxu0 %v155
  %363 = vmatpush2.msra.mxu0 %v154
  %364 = vmatprep.subr.mxu0 %v151
  %365 = vmatpush2.msra.mxu0 %v150
  %366 = vmatprep.subr.mxu0 %v147
  %367 = vmatpush2.msra.mxu0 %v146
  %368 = vmatprep.subr.mxu0 %v143
  %369 = vmatpush2.msra.mxu0 %v142
  %370 = vmatprep.subr.mxu0 %v139
  %371 = vmatpush2.msra.mxu0 %v138
  %372 = vmatprep.subr.mxu0 %v135
  %373 = vmatpush2.msra.mxu0 %v134
  %374 = vmatprep.subr.mxu0 %v131
  %375 = vmatpush2.msra.mxu0 %v130
  %376 = vmatprep.subr.mxu0 %v127
  %377 = vmatpush2.msra.mxu0 %v126
  %378 = vmatprep.subr.mxu0 %v123
  %379 = vmatpush2.msra.mxu0 %v122
  %380 = vmatprep.subr.mxu0 %v119
  %381 = vmatpush2.msra.mxu0 %v118
  %382 = vmatprep.subr.mxu0 %v115
  %383 = vmatpush2.msra.mxu0 %v114
  %384 = vmatprep.subr.mxu0 %v111
  %385 = vmatpush2.msra.mxu0 %v110
  %386 = vmatprep.subr.mxu0 %v107
  %387 = vmatpush2.msra.mxu0 %v106
  %388 = vmatprep.subr.mxu0 %v103
  %389 = vmatpush2.msra.mxu0 %v102
  %390 = vmatprep.subr.mxu0 %v99
  %391 = vmatpush2.msra.mxu0 %v98
  %392 = vmatprep.subr.mxu0 %v95
  %393 = vmatpush2.msra.mxu0 %v94
  %394 = vmatprep.mubr.f32.mxu0 %v324
  %395 = vmatmul.mubr.f32.gmra.mxu0 %v316
  %v396 = vpop.f32.mrf.mxu0
  %v397 = vadd.f32 %v291, %v396
  %v398 = vpop.f32.mrf.mxu0
  %v399 = vadd.f32 %v295, %v398
  %400 = vdwg.mxu0
  %401 = vmatprep.subr.mxu0 %v219
  %402 = vmatpush1.msra.mxu0 %v218
  %403 = vmatprep.subr.mxu0 %v215
  %404 = vmatpush1.msra.mxu0 %v214
  %405 = vmatprep.subr.mxu0 %v211
  %406 = vmatpush1.msra.mxu0 %v210
  %407 = vmatprep.subr.mxu0 %v207
  %408 = vmatpush1.msra.mxu0 %v206
  %409 = vmatprep.subr.mxu0 %v203
  %410 = vmatpush1.msra.mxu0 %v202
  %411 = vmatprep.subr.mxu0 %v199
  %412 = vmatpush1.msra.mxu0 %v198
  %413 = vmatprep.subr.mxu0 %v195
  %414 = vmatpush1.msra.mxu0 %v194
  %415 = vmatprep.subr.mxu0 %v191
  %416 = vmatpush1.msra.mxu0 %v190
  %417 = vmatprep.subr.mxu0 %v187
  %418 = vmatpush1.msra.mxu0 %v186
  %419 = vmatprep.subr.mxu0 %v183
  %420 = vmatpush1.msra.mxu0 %v182
  %421 = vmatprep.subr.mxu0 %v179
  %422 = vmatpush1.msra.mxu0 %v178
  %423 = vmatprep.subr.mxu0 %v175
  %424 = vmatpush1.msra.mxu0 %v174
  %425 = vmatprep.subr.mxu0 %v171
  %426 = vmatpush1.msra.mxu0 %v170
  %427 = vmatprep.subr.mxu0 %v167
  %428 = vmatpush1.msra.mxu0 %v166
  %429 = vmatprep.subr.mxu0 %v163
  %430 = vmatpush1.msra.mxu0 %v162
  %431 = vmatprep.subr.mxu0 %v159
  %432 = vmatpush1.msra.mxu0 %v158
  %433 = vmatprep.subr.mxu0 %v283
  %434 = vmatpush2.msra.mxu0 %v282
  %435 = vmatprep.subr.mxu0 %v279
  %436 = vmatpush2.msra.mxu0 %v278
  %437 = vmatprep.subr.mxu0 %v275
  %438 = vmatpush2.msra.mxu0 %v274
  %439 = vmatprep.subr.mxu0 %v271
  %440 = vmatpush2.msra.mxu0 %v270
  %441 = vmatprep.subr.mxu0 %v267
  %442 = vmatpush2.msra.mxu0 %v266
  %443 = vmatprep.subr.mxu0 %v263
  %444 = vmatpush2.msra.mxu0 %v262
  %445 = vmatprep.subr.mxu0 %v259
  %446 = vmatpush2.msra.mxu0 %v258
  %447 = vmatprep.subr.mxu0 %v255
  %448 = vmatpush2.msra.mxu0 %v254
  %449 = vmatprep.subr.mxu0 %v251
  %450 = vmatpush2.msra.mxu0 %v250
  %451 = vmatprep.subr.mxu0 %v247
  %452 = vmatpush2.msra.mxu0 %v246
  %453 = vmatprep.subr.mxu0 %v243
  %454 = vmatpush2.msra.mxu0 %v242
  %455 = vmatprep.subr.mxu0 %v239
  %456 = vmatpush2.msra.mxu0 %v238
  %457 = vmatprep.subr.mxu0 %v235
  %458 = vmatpush2.msra.mxu0 %v234
  %459 = vmatprep.subr.mxu0 %v231
  %460 = vmatpush2.msra.mxu0 %v230
  %461 = vmatprep.subr.mxu0 %v227
  %462 = vmatpush2.msra.mxu0 %v226
  %463 = vmatprep.subr.mxu0 %v223
  %464 = vmatpush2.msra.mxu0 %v222
  %465 = vmatprep.mubr.f32.mxu0 %v325
  %466 = vmatmul.mubr.f32.gmra.mxu0 %v323
  %v467 = vpop.f32.mrf.mxu0
  %v468 = vadd.f32 %v397, %v467
  %v469 = vpop.f32.mrf.mxu0
  %v470 = vadd.f32 %v399, %v469
  %471 = vdwg.mxu0
  %472 = vmatprep.subr.mxu0 %v93
  %473 = vmatpush1.msra.mxu0 %v92
  %474 = vmatprep.subr.mxu0 %v89
  %475 = vmatpush1.msra.mxu0 %v88
  %476 = vmatprep.subr.mxu0 %v85
  %477 = vmatpush1.msra.mxu0 %v84
  %478 = vmatprep.subr.mxu0 %v81
  %479 = vmatpush1.msra.mxu0 %v80
  %480 = vmatprep.subr.mxu0 %v77
  %481 = vmatpush1.msra.mxu0 %v76
  %482 = vmatprep.subr.mxu0 %v73
  %483 = vmatpush1.msra.mxu0 %v72
  %484 = vmatprep.subr.mxu0 %v69
  %485 = vmatpush1.msra.mxu0 %v68
  %486 = vmatprep.subr.mxu0 %v65
  %487 = vmatpush1.msra.mxu0 %v64
  %488 = vmatprep.subr.mxu0 %v61
  %489 = vmatpush1.msra.mxu0 %v60
  %490 = vmatprep.subr.mxu0 %v57
  %491 = vmatpush1.msra.mxu0 %v56
  %492 = vmatprep.subr.mxu0 %v53
  %493 = vmatpush1.msra.mxu0 %v52
  %494 = vmatprep.subr.mxu0 %v49
  %495 = vmatpush1.msra.mxu0 %v48
  %496 = vmatprep.subr.mxu0 %v45
  %497 = vmatpush1.msra.mxu0 %v44
  %498 = vmatprep.subr.mxu0 %v41
  %499 = vmatpush1.msra.mxu0 %v40
  %500 = vmatprep.subr.mxu0 %v37
  %501 = vmatpush1.msra.mxu0 %v36
  %502 = vmatprep.subr.mxu0 %v33
  %503 = vmatpush1.msra.mxu0 %v32
  %504 = vmatprep.subr.mxu0 %v157
  %505 = vmatpush2.msra.mxu0 %v156
  %506 = vmatprep.subr.mxu0 %v153
  %507 = vmatpush2.msra.mxu0 %v152
  %508 = vmatprep.subr.mxu0 %v149
  %509 = vmatpush2.msra.mxu0 %v148
  %510 = vmatprep.subr.mxu0 %v145
  %511 = vmatpush2.msra.mxu0 %v144
  %512 = vmatprep.subr.mxu0 %v141
  %513 = vmatpush2.msra.mxu0 %v140
  %514 = vmatprep.subr.mxu0 %v137
  %515 = vmatpush2.msra.mxu0 %v136
  %516 = vmatprep.subr.mxu0 %v133
  %517 = vmatpush2.msra.mxu0 %v132
  %518 = vmatprep.subr.mxu0 %v129
  %519 = vmatpush2.msra.mxu0 %v128
  %520 = vmatprep.subr.mxu0 %v125
  %521 = vmatpush2.msra.mxu0 %v124
  %522 = vmatprep.subr.mxu0 %v121
  %523 = vmatpush2.msra.mxu0 %v120
  %524 = vmatprep.subr.mxu0 %v117
  %525 = vmatpush2.msra.mxu0 %v116
  %526 = vmatprep.subr.mxu0 %v113
  %527 = vmatpush2.msra.mxu0 %v112
  %528 = vmatprep.subr.mxu0 %v109
  %529 = vmatpush2.msra.mxu0 %v108
  %530 = vmatprep.subr.mxu0 %v105
  %531 = vmatpush2.msra.mxu0 %v104
  %532 = vmatprep.subr.mxu0 %v101
  %533 = vmatpush2.msra.mxu0 %v100
  %534 = vmatprep.subr.mxu0 %v97
  %535 = vmatpush2.msra.mxu0 %v96
  %536 = vmatprep.mubr.f32.mxu0 %v324
  %537 = vmatmul.mubr.f32.gmra.mxu0 %v316
  %v538 = vpop.f32.mrf.mxu0
  %v539 = vadd.f32 %v299, %v538
  %v540 = vpop.f32.mrf.mxu0
  %v541 = vadd.f32 %v303, %v540
  %542 = vdwg.mxu0
  %543 = vmatprep.subr.mxu0 %v221
  %544 = vmatpush1.msra.mxu0 %v220
  %545 = vmatprep.subr.mxu0 %v217
  %546 = vmatpush1.msra.mxu0 %v216
  %547 = vmatprep.subr.mxu0 %v213
  %548 = vmatpush1.msra.mxu0 %v212
  %549 = vmatprep.subr.mxu0 %v209
  %550 = vmatpush1.msra.mxu0 %v208
  %551 = vmatprep.subr.mxu0 %v205
  %552 = vmatpush1.msra.mxu0 %v204
  %553 = vmatprep.subr.mxu0 %v201
  %554 = vmatpush1.msra.mxu0 %v200
  %555 = vmatprep.subr.mxu0 %v197
  %556 = vmatpush1.msra.mxu0 %v196
  %557 = vmatprep.subr.mxu0 %v193
  %558 = vmatpush1.msra.mxu0 %v192
  %559 = vmatprep.subr.mxu0 %v189
  %560 = vmatpush1.msra.mxu0 %v188
  %561 = vmatprep.subr.mxu0 %v185
  %562 = vmatpush1.msra.mxu0 %v184
  %563 = vmatprep.subr.mxu0 %v181
  %564 = vmatpush1.msra.mxu0 %v180
  %565 = vmatprep.subr.mxu0 %v177
  %566 = vmatpush1.msra.mxu0 %v176
  %567 = vmatprep.subr.mxu0 %v173
  %568 = vmatpush1.msra.mxu0 %v172
  %569 = vmatprep.subr.mxu0 %v169
  %570 = vmatpush1.msra.mxu0 %v168
  %571 = vmatprep.subr.mxu0 %v165
  %572 = vmatpush1.msra.mxu0 %v164
  %573 = vmatprep.subr.mxu0 %v161
  %574 = vmatpush1.msra.mxu0 %v160
  %575 = vmatprep.subr.mxu0 %v285
  %576 = vmatpush2.msra.mxu0 %v284
  %577 = vmatprep.subr.mxu0 %v281
  %578 = vmatpush2.msra.mxu0 %v280
  %579 = vmatprep.subr.mxu0 %v277
  %580 = vmatpush2.msra.mxu0 %v276
  %581 = vmatprep.subr.mxu0 %v273
  %582 = vmatpush2.msra.mxu0 %v272
  %583 = vmatprep.subr.mxu0 %v269
  %584 = vmatpush2.msra.mxu0 %v268
  %585 = vmatprep.subr.mxu0 %v265
  %586 = vmatpush2.msra.mxu0 %v264
  %587 = vmatprep.subr.mxu0 %v261
  %588 = vmatpush2.msra.mxu0 %v260
  %589 = vmatprep.subr.mxu0 %v257
  %590 = vmatpush2.msra.mxu0 %v256
  %591 = vmatprep.subr.mxu0 %v253
  %592 = vmatpush2.msra.mxu0 %v252
  %593 = vmatprep.subr.mxu0 %v249
  %594 = vmatpush2.msra.mxu0 %v248
  %595 = vmatprep.subr.mxu0 %v245
  %596 = vmatpush2.msra.mxu0 %v244
  %597 = vmatprep.subr.mxu0 %v241
  %598 = vmatpush2.msra.mxu0 %v240
  %599 = vmatprep.subr.mxu0 %v237
  %600 = vmatpush2.msra.mxu0 %v236
  %601 = vmatprep.subr.mxu0 %v233
  %602 = vmatpush2.msra.mxu0 %v232
  %603 = vmatprep.subr.mxu0 %v229
  %604 = vmatpush2.msra.mxu0 %v228
  %605 = vmatprep.subr.mxu0 %v225
  %606 = vmatpush2.msra.mxu0 %v224
  %607 = vmatprep.mubr.f32.mxu0 %v325
  %608 = vmatmul.mubr.f32.gmra.mxu0 %v323
  %v609 = vpop.f32.mrf.mxu0
  %v610 = vadd.f32 %v539, %v609
  %v611 = vpop.f32.mrf.mxu0
  %v612 = vadd.f32 %v541, %v611
  %613 = vdwg.mxu0
  %vm614 = vcmp.gt.f32.partialorder %v468, 0.0
  %vm615 = vcmp.gt.f32.partialorder %v470, 0.0
  %vm616 = vcmp.gt.f32.partialorder %v610, 0.0
  %vm617 = vcmp.gt.f32.partialorder %v612, 0.0
  %v618 = vmin.f32 %v468, 0.0
  %v619 = vmin.f32 %v470, 0.0
  %v620 = vmin.f32 %v610, 0.0
  %v621 = vmin.f32 %v612, 0.0
  %v622 = vmul.f32 %v618, 1.442695
  %v623 = vpow.pop %v622
  %v624 = vmul.f32 %v619, 1.442695
  %v625 = vpow.pop %v624
  %v626 = vmul.f32 %v620, 1.442695
  %v627 = vpow.pop %v626
  %v628 = vmul.f32 %v621, 1.442695
  %v629 = vpow.pop %v628
  %v630 = vsub.f32 %v623, 1.0
  %v631 = vsub.f32 %v625, 1.0
  %v632 = vsub.f32 %v627, 1.0
  %v633 = vsub.f32 %v629, 1.0
  %v634 = vsel %vm614, %v468, %v630
  %v635 = vsel %vm615, %v470, %v631
  %v636 = vsel %vm616, %v610, %v632
  %v637 = vsel %vm617, %v612, %v633
  %v638 = vpack.c.bf16 %v634, %v634
  %v639 = vpack.c.bf16 %v635, %v635
  %v640 = vpack.c.bf16 %v636, %v636
  %v641 = vpack.c.bf16 %v637, %v637
  %v642 = vld [vmem:[%s3] sm:$0xff]
  %v643 = vld [vmem:[%s3 + $0x8] sm:$0xff]
  %v644 = vld [vmem:[%s3 + $0x10] sm:$0xff]
  %v645 = vld [vmem:[%s3 + $0x18] sm:$0xff]
  %v646 = vld [vmem:[%s3 + $0x20] sm:$0xff]
  %v647 = vld [vmem:[%s3 + $0x28] sm:$0xff]
  %v648 = vld [vmem:[%s3 + $0x30] sm:$0xf]
  %v649 = vld [vmem:[%s3 + $0x34] sm:$0xff]
  %v650 = vld [vmem:[%s3 + $0x3c] sm:$0xff]
  %v651 = vld [vmem:[%s3 + $0x44] sm:$0xff]
  %v652 = vld [vmem:[%s3 + $0x4c] sm:$0xff]
  %v653 = vld [vmem:[%s3 + $0x54] sm:$0xff]
  %v654 = vld [vmem:[%s3 + $0x5c] sm:$0xff]
  %v655 = vld [vmem:[%s3 + $0x64] sm:$0xf]
  %v656 = vld [vmem:[%s3 + $0x68] sm:$0xff]
  %v657 = vld [vmem:[%s3 + $0x70] sm:$0xff]
  %v658 = vld [vmem:[%s3 + $0x78] sm:$0xff]
  %v659 = vld [vmem:[%s3 + $0x80] sm:$0xff]
  %v660 = vld [vmem:[%s3 + $0x88] sm:$0xff]
  %v661 = vld [vmem:[%s3 + $0x90] sm:$0xff]
  %v662 = vld [vmem:[%s3 + $0x98] sm:$0xf]
  %v663 = vld [vmem:[%s3 + $0x9c] sm:$0xff]
  %v664 = vld [vmem:[%s3 + $0xa4] sm:$0xff]
  %v665 = vld [vmem:[%s3 + $0xac] sm:$0xff]
  %v666 = vld [vmem:[%s3 + $0xb4] sm:$0xff]
  %v667 = vld [vmem:[%s3 + $0xbc] sm:$0xff]
  %v668 = vld [vmem:[%s3 + $0xc4] sm:$0xff]
  %v669 = vld [vmem:[%s3 + $0xcc] sm:$0xf]
  %v670 = vld [vmem:[%s3 + $0xd0] sm:$0xff]
  %v671 = vld [vmem:[%s3 + $0xd8] sm:$0xff]
  %v672 = vld [vmem:[%s3 + $0xe0] sm:$0xff]
  %v673 = vld [vmem:[%s3 + $0xe8] sm:$0xff]
  %v674 = vld [vmem:[%s3 + $0xf0] sm:$0xff]
  %v675 = vld [vmem:[%s3 + $0xf8] sm:$0xff]
  %v676 = vld [vmem:[%s3 + $0x100] sm:$0xf]
  %v677 = vld [vmem:[%s3 + $0x104] sm:$0xff]
  %v678 = vld [vmem:[%s3 + $0x10c] sm:$0xff]
  %v679 = vld [vmem:[%s3 + $0x114] sm:$0xff]
  %v680 = vld [vmem:[%s3 + $0x11c] sm:$0xff]
  %v681 = vld [vmem:[%s3 + $0x124] sm:$0xff]
  %v682 = vld [vmem:[%s3 + $0x12c] sm:$0xff]
  %v683 = vld [vmem:[%s3 + $0x134] sm:$0xf]
  %v684 = vld [vmem:[%s3 + $0x138] sm:$0xff]
  %v685 = vld [vmem:[%s3 + $0x140] sm:$0xff]
  %v686 = vld [vmem:[%s3 + $0x148] sm:$0xff]
  %v687 = vld [vmem:[%s3 + $0x150] sm:$0xff]
  %v688 = vld [vmem:[%s3 + $0x158] sm:$0xff]
  %v689 = vld [vmem:[%s3 + $0x160] sm:$0xff]
  %v690 = vld [vmem:[%s3 + $0x168] sm:$0xf]
  %v691 = vld [vmem:[%s3 + $0x16c] sm:$0xff]
  %v692 = vld [vmem:[%s3 + $0x174] sm:$0xff]
  %v693 = vld [vmem:[%s3 + $0x17c] sm:$0xff]
  %v694 = vld [vmem:[%s3 + $0x184] sm:$0xff]
  %v695 = vld [vmem:[%s3 + $0x18c] sm:$0xff]
  %v696 = vld [vmem:[%s3 + $0x194] sm:$0xff]
  %v697 = vld [vmem:[%s3 + $0x19c] sm:$0xf]
  %v698 = vld [vmem:[%s3 + $0x1a0] sm:$0xff]
  %v699 = vld [vmem:[%s3 + $0x1a8] sm:$0xff]
  %v700 = vld [vmem:[%s3 + $0x1b0] sm:$0xff]
  %v701 = vld [vmem:[%s3 + $0x1b8] sm:$0xff]
  %v702 = vld [vmem:[%s3 + $0x1c0] sm:$0xff]
  %v703 = vld [vmem:[%s3 + $0x1c8] sm:$0xff]
  %v704 = vld [vmem:[%s3 + $0x1d0] sm:$0xf]
  %v705 = vld [vmem:[%s3 + $0x1d4] sm:$0xff]
  %v706 = vld [vmem:[%s3 + $0x1dc] sm:$0xff]
  %v707 = vld [vmem:[%s3 + $0x1e4] sm:$0xff]
  %v708 = vld [vmem:[%s3 + $0x1ec] sm:$0xff]
  %v709 = vld [vmem:[%s3 + $0x1f4] sm:$0xff]
  %v710 = vld [vmem:[%s3 + $0x1fc] sm:$0xff]
  %v711 = vld [vmem:[%s3 + $0x204] sm:$0xf]
  %v712 = vld [vmem:[%s3 + $0x208] sm:$0xff]
  %v713 = vld [vmem:[%s3 + $0x210] sm:$0xff]
  %v714 = vld [vmem:[%s3 + $0x218] sm:$0xff]
  %v715 = vld [vmem:[%s3 + $0x220] sm:$0xff]
  %v716 = vld [vmem:[%s3 + $0x228] sm:$0xff]
  %v717 = vld [vmem:[%s3 + $0x230] sm:$0xff]
  %v718 = vld [vmem:[%s3 + $0x238] sm:$0xf]
  %v719 = vld [vmem:[%s3 + $0x23c] sm:$0xff]
  %v720 = vld [vmem:[%s3 + $0x244] sm:$0xff]
  %v721 = vld [vmem:[%s3 + $0x24c] sm:$0xff]
  %v722 = vld [vmem:[%s3 + $0x254] sm:$0xff]
  %v723 = vld [vmem:[%s3 + $0x25c] sm:$0xff]
  %v724 = vld [vmem:[%s3 + $0x264] sm:$0xff]
  %v725 = vld [vmem:[%s3 + $0x26c] sm:$0xf]
  %v726 = vld [vmem:[%s3 + $0x270] sm:$0xff]
  %v727 = vld [vmem:[%s3 + $0x278] sm:$0xff]
  %v728 = vld [vmem:[%s3 + $0x280] sm:$0xff]
  %v729 = vld [vmem:[%s3 + $0x288] sm:$0xff]
  %v730 = vld [vmem:[%s3 + $0x290] sm:$0xff]
  %v731 = vld [vmem:[%s3 + $0x298] sm:$0xff]
  %v732 = vld [vmem:[%s3 + $0x2a0] sm:$0xf]
  %v733 = vld [vmem:[%s3 + $0x2a4] sm:$0xff]
  %v734 = vld [vmem:[%s3 + $0x2ac] sm:$0xff]
  %v735 = vld [vmem:[%s3 + $0x2b4] sm:$0xff]
  %v736 = vld [vmem:[%s3 + $0x2bc] sm:$0xff]
  %v737 = vld [vmem:[%s3 + $0x2c4] sm:$0xff]
  %v738 = vld [vmem:[%s3 + $0x2cc] sm:$0xff]
  %v739 = vld [vmem:[%s3 + $0x2d4] sm:$0xf]
  %v740 = vld [vmem:[%s3 + $0x2d8] sm:$0xff]
  %v741 = vld [vmem:[%s3 + $0x2e0] sm:$0xff]
  %v742 = vld [vmem:[%s3 + $0x2e8] sm:$0xff]
  %v743 = vld [vmem:[%s3 + $0x2f0] sm:$0xff]
  %v744 = vld [vmem:[%s3 + $0x2f8] sm:$0xff]
  %v745 = vld [vmem:[%s3 + $0x300] sm:$0xff]
  %v746 = vld [vmem:[%s3 + $0x308] sm:$0xf]
  %v747 = vld [vmem:[%s3 + $0x30c] sm:$0xff]
  %v748 = vld [vmem:[%s3 + $0x314] sm:$0xff]
  %v749 = vld [vmem:[%s3 + $0x31c] sm:$0xff]
  %v750 = vld [vmem:[%s3 + $0x324] sm:$0xff]
  %v751 = vld [vmem:[%s3 + $0x32c] sm:$0xff]
  %v752 = vld [vmem:[%s3 + $0x334] sm:$0xff]
  %v753 = vld [vmem:[%s3 + $0x33c] sm:$0xf]
  %v754 = vld [vmem:[%s3 + $0x340] sm:$0xff]
  %v755 = vld [vmem:[%s3 + $0x348] sm:$0xff]
  %v756 = vld [vmem:[%s3 + $0x350] sm:$0xff]
  %v757 = vld [vmem:[%s3 + $0x358] sm:$0xff]
  %v758 = vld [vmem:[%s3 + $0x360] sm:$0xff]
  %v759 = vld [vmem:[%s3 + $0x368] sm:$0xff]
  %v760 = vld [vmem:[%s3 + $0x370] sm:$0xf]
  %v761 = vld [vmem:[%s3 + $0x374] sm:$0xff]
  %v762 = vld [vmem:[%s3 + $0x37c] sm:$0xff]
  %v763 = vld [vmem:[%s3 + $0x384] sm:$0xff]
  %v764 = vld [vmem:[%s3 + $0x38c] sm:$0xff]
  %v765 = vld [vmem:[%s3 + $0x394] sm:$0xff]
  %v766 = vld [vmem:[%s3 + $0x39c] sm:$0xff]
  %v767 = vld [vmem:[%s3 + $0x3a4] sm:$0xf]
  %v768 = vld [vmem:[%s3 + $0x3a8] sm:$0xff]
  %v769 = vld [vmem:[%s3 + $0x3b0] sm:$0xff]
  %v770 = vld [vmem:[%s3 + $0x3b8] sm:$0xff]
  %v771 = vld [vmem:[%s3 + $0x3c0] sm:$0xff]
  %v772 = vld [vmem:[%s3 + $0x3c8] sm:$0xff]
  %v773 = vld [vmem:[%s3 + $0x3d0] sm:$0xff]
  %v774 = vld [vmem:[%s3 + $0x3d8] sm:$0xf]
  %v775 = vld [vmem:[%s3 + $0x3dc] sm:$0xff]
  %v776 = vld [vmem:[%s3 + $0x3e4] sm:$0xff]
  %v777 = vld [vmem:[%s3 + $0x3ec] sm:$0xff]
  %v778 = vld [vmem:[%s3 + $0x3f4] sm:$0xff]
  %v779 = vld [vmem:[%s3 + $0x3fc] sm:$0xff]
  %v780 = vld [vmem:[%s3 + $0x404] sm:$0xff]
  %v781 = vld [vmem:[%s3 + $0x40c] sm:$0xf]
  %v782 = vld [vmem:[%s3 + $0x410] sm:$0xff]
  %v783 = vld [vmem:[%s3 + $0x418] sm:$0xff]
  %v784 = vld [vmem:[%s3 + $0x420] sm:$0xff]
  %v785 = vld [vmem:[%s3 + $0x428] sm:$0xff]
  %v786 = vld [vmem:[%s3 + $0x430] sm:$0xff]
  %v787 = vld [vmem:[%s3 + $0x438] sm:$0xff]
  %v788 = vld [vmem:[%s3 + $0x440] sm:$0xf]
  %v789 = vld [vmem:[%s3 + $0x444] sm:$0xff]
  %v790 = vld [vmem:[%s3 + $0x44c] sm:$0xff]
  %v791 = vld [vmem:[%s3 + $0x454] sm:$0xff]
  %v792 = vld [vmem:[%s3 + $0x45c] sm:$0xff]
  %v793 = vld [vmem:[%s3 + $0x464] sm:$0xff]
  %v794 = vld [vmem:[%s3 + $0x46c] sm:$0xff]
  %v795 = vld [vmem:[%s3 + $0x474] sm:$0xf]
  %v796 = vld [vmem:[%s3 + $0x478] sm:$0xff]
  %v797 = vld [vmem:[%s3 + $0x480] sm:$0xff]
  %v798 = vld [vmem:[%s3 + $0x488] sm:$0xff]
  %v799 = vld [vmem:[%s3 + $0x490] sm:$0xff]
  %v800 = vld [vmem:[%s3 + $0x498] sm:$0xff]
  %v801 = vld [vmem:[%s3 + $0x4a0] sm:$0xff]
  %v802 = vld [vmem:[%s3 + $0x4a8] sm:$0xf]
  %v803 = vld [vmem:[%s3 + $0x4ac] sm:$0xff]
  %v804 = vld [vmem:[%s3 + $0x4b4] sm:$0xff]
  %v805 = vld [vmem:[%s3 + $0x4bc] sm:$0xff]
  %v806 = vld [vmem:[%s3 + $0x4c4] sm:$0xff]
  %v807 = vld [vmem:[%s3 + $0x4cc] sm:$0xff]
  %v808 = vld [vmem:[%s3 + $0x4d4] sm:$0xff]
  %v809 = vld [vmem:[%s3 + $0x4dc] sm:$0xf]
  %v810 = vld [vmem:[%s3 + $0x4e0] sm:$0xff]
  %v811 = vld [vmem:[%s3 + $0x4e8] sm:$0xff]
  %v812 = vld [vmem:[%s3 + $0x4f0] sm:$0xff]
  %v813 = vld [vmem:[%s3 + $0x4f8] sm:$0xff]
  %v814 = vld [vmem:[%s3 + $0x500] sm:$0xff]
  %v815 = vld [vmem:[%s3 + $0x508] sm:$0xff]
  %v816 = vld [vmem:[%s3 + $0x510] sm:$0xf]
  %v817 = vld [vmem:[%s3 + $0x514] sm:$0xff]
  %v818 = vld [vmem:[%s3 + $0x51c] sm:$0xff]
  %v819 = vld [vmem:[%s3 + $0x524] sm:$0xff]
  %v820 = vld [vmem:[%s3 + $0x52c] sm:$0xff]
  %v821 = vld [vmem:[%s3 + $0x534] sm:$0xff]
  %v822 = vld [vmem:[%s3 + $0x53c] sm:$0xff]
  %v823 = vld [vmem:[%s3 + $0x544] sm:$0xf]
  %v824 = vld [vmem:[%s3 + $0x548] sm:$0xff]
  %v825 = vld [vmem:[%s3 + $0x550] sm:$0xff]
  %v826 = vld [vmem:[%s3 + $0x558] sm:$0xff]
  %v827 = vld [vmem:[%s3 + $0x560] sm:$0xff]
  %v828 = vld [vmem:[%s3 + $0x568] sm:$0xff]
  %v829 = vld [vmem:[%s3 + $0x570] sm:$0xff]
  %v830 = vld [vmem:[%s3 + $0x578] sm:$0xf]
  %v831 = vld [vmem:[%s3 + $0x57c] sm:$0xff]
  %v832 = vld [vmem:[%s3 + $0x584] sm:$0xff]
  %v833 = vld [vmem:[%s3 + $0x58c] sm:$0xff]
  %v834 = vld [vmem:[%s3 + $0x594] sm:$0xff]
  %v835 = vld [vmem:[%s3 + $0x59c] sm:$0xff]
  %v836 = vld [vmem:[%s3 + $0x5a4] sm:$0xff]
  %v837 = vld [vmem:[%s3 + $0x5ac] sm:$0xf]
  %v838 = vld [vmem:[%s3 + $0x5b0] sm:$0xff]
  %v839 = vld [vmem:[%s3 + $0x5b8] sm:$0xff]
  %v840 = vld [vmem:[%s3 + $0x5c0] sm:$0xff]
  %v841 = vld [vmem:[%s3 + $0x5c8] sm:$0xff]
  %v842 = vld [vmem:[%s3 + $0x5d0] sm:$0xff]
  %v843 = vld [vmem:[%s3 + $0x5d8] sm:$0xff]
  %v844 = vld [vmem:[%s3 + $0x5e0] sm:$0xf]
  %v845 = vld [vmem:[%s3 + $0x5e4] sm:$0xff]
  %v846 = vld [vmem:[%s3 + $0x5ec] sm:$0xff]
  %v847 = vld [vmem:[%s3 + $0x5f4] sm:$0xff]
  %v848 = vld [vmem:[%s3 + $0x5fc] sm:$0xff]
  %v849 = vld [vmem:[%s3 + $0x604] sm:$0xff]
  %v850 = vld [vmem:[%s3 + $0x60c] sm:$0xff]
  %v851 = vld [vmem:[%s3 + $0x614] sm:$0xf]
  %v852 = vld [vmem:[%s3 + $0x618] sm:$0xff]
  %v853 = vld [vmem:[%s3 + $0x620] sm:$0xff]
  %v854 = vld [vmem:[%s3 + $0x628] sm:$0xff]
  %v855 = vld [vmem:[%s3 + $0x630] sm:$0xff]
  %v856 = vld [vmem:[%s3 + $0x638] sm:$0xff]
  %v857 = vld [vmem:[%s3 + $0x640] sm:$0xff]
  %v858 = vld [vmem:[%s3 + $0x648] sm:$0xf]
  %v859 = vld [vmem:[%s3 + $0x64c] sm:$0xff]
  %v860 = vld [vmem:[%s3 + $0x654] sm:$0xff]
  %v861 = vld [vmem:[%s3 + $0x65c] sm:$0xff]
  %v862 = vld [vmem:[%s3 + $0x664] sm:$0xff]
  %v863 = vld [vmem:[%s3 + $0x66c] sm:$0xff]
  %v864 = vld [vmem:[%s3 + $0x674] sm:$0xff]
  %v865 = vld [vmem:[%s3 + $0x67c] sm:$0xf]
  %v866 = vld [vmem:[%s3 + $0x680] sm:$0xff]
  %v867 = vld [vmem:[%s3 + $0x688] sm:$0xff]
  %v868 = vld [vmem:[%s3 + $0x690] sm:$0xff]
  %v869 = vld [vmem:[%s3 + $0x698] sm:$0xff]
  %v870 = vld [vmem:[%s3 + $0x6a0] sm:$0xff]
  %v871 = vld [vmem:[%s3 + $0x6a8] sm:$0xff]
  %v872 = vld [vmem:[%s3 + $0x6b0] sm:$0xf]
  %v873 = vld [vmem:[%s3 + $0x6b4] sm:$0xff]
  %v874 = vld [vmem:[%s3 + $0x6bc] sm:$0xff]
  %v875 = vld [vmem:[%s3 + $0x6c4] sm:$0xff]
  %v876 = vld [vmem:[%s3 + $0x6cc] sm:$0xff]
  %v877 = vld [vmem:[%s3 + $0x6d4] sm:$0xff]
  %v878 = vld [vmem:[%s3 + $0x6dc] sm:$0xff]
  %v879 = vld [vmem:[%s3 + $0x6e4] sm:$0xf]
  %v880 = vld [vmem:[%s3 + $0x6e8] sm:$0xff]
  %v881 = vld [vmem:[%s3 + $0x6f0] sm:$0xff]
  %v882 = vld [vmem:[%s3 + $0x6f8] sm:$0xff]
  %v883 = vld [vmem:[%s3 + $0x700] sm:$0xff]
  %v884 = vld [vmem:[%s3 + $0x708] sm:$0xff]
  %v885 = vld [vmem:[%s3 + $0x710] sm:$0xff]
  %v886 = vld [vmem:[%s3 + $0x718] sm:$0xf]
  %v887 = vld [vmem:[%s3 + $0x71c] sm:$0xff]
  %v888 = vld [vmem:[%s3 + $0x724] sm:$0xff]
  %v889 = vld [vmem:[%s3 + $0x72c] sm:$0xff]
  %v890 = vld [vmem:[%s3 + $0x734] sm:$0xff]
  %v891 = vld [vmem:[%s3 + $0x73c] sm:$0xff]
  %v892 = vld [vmem:[%s3 + $0x744] sm:$0xff]
  %v893 = vld [vmem:[%s3 + $0x74c] sm:$0xf]
  %v894 = vld [vmem:[%s3 + $0x750] sm:$0xff]
  %v895 = vld [vmem:[%s3 + $0x758] sm:$0xff]
  %v896 = vld [vmem:[%s3 + $0x760] sm:$0xff]
  %v897 = vld [vmem:[%s3 + $0x768] sm:$0xff]
  %v898 = vld [vmem:[%s3 + $0x770] sm:$0xff]
  %v899 = vld [vmem:[%s3 + $0x778] sm:$0xff]
  %v900 = vld [vmem:[%s3 + $0x780] sm:$0xf]
  %v901 = vld [vmem:[%s3 + $0x784] sm:$0xff]
  %v902 = vld [vmem:[%s3 + $0x78c] sm:$0xff]
  %v903 = vld [vmem:[%s3 + $0x794] sm:$0xff]
  %v904 = vld [vmem:[%s3 + $0x79c] sm:$0xff]
  %v905 = vld [vmem:[%s3 + $0x7a4] sm:$0xff]
  %v906 = vld [vmem:[%s3 + $0x7ac] sm:$0xff]
  %v907 = vld [vmem:[%s3 + $0x7b4] sm:$0xf]
  %v908 = vld [vmem:[%s3 + $0x7b8] sm:$0xff]
  %v909 = vld [vmem:[%s3 + $0x7c0] sm:$0xff]
  %v910 = vld [vmem:[%s3 + $0x7c8] sm:$0xff]
  %v911 = vld [vmem:[%s3 + $0x7d0] sm:$0xff]
  %v912 = vld [vmem:[%s3 + $0x7d8] sm:$0xff]
  %v913 = vld [vmem:[%s3 + $0x7e0] sm:$0xff]
  %v914 = vld [vmem:[%s3 + $0x7e8] sm:$0xf]
  %v915 = vld [vmem:[%s3 + $0x7ec] sm:$0xff]
  %v916 = vld [vmem:[%s3 + $0x7f4] sm:$0xff]
  %v917 = vld [vmem:[%s3 + $0x7fc] sm:$0xff]
  %v918 = vld [vmem:[%s3 + $0x804] sm:$0xff]
  %v919 = vld [vmem:[%s3 + $0x80c] sm:$0xff]
  %v920 = vld [vmem:[%s3 + $0x814] sm:$0xff]
  %v921 = vld [vmem:[%s3 + $0x81c] sm:$0xf]
  %v922 = vld [vmem:[%s3 + $0x820] sm:$0xff]
  %v923 = vld [vmem:[%s3 + $0x828] sm:$0xff]
  %v924 = vld [vmem:[%s3 + $0x830] sm:$0xff]
  %v925 = vld [vmem:[%s3 + $0x838] sm:$0xff]
  %v926 = vld [vmem:[%s3 + $0x840] sm:$0xff]
  %v927 = vld [vmem:[%s3 + $0x848] sm:$0xff]
  %v928 = vld [vmem:[%s3 + $0x850] sm:$0xf]
  %v929 = vld [vmem:[%s3 + $0x854] sm:$0xff]
  %v930 = vld [vmem:[%s3 + $0x85c] sm:$0xff]
  %v931 = vld [vmem:[%s3 + $0x864] sm:$0xff]
  %v932 = vld [vmem:[%s3 + $0x86c] sm:$0xff]
  %v933 = vld [vmem:[%s3 + $0x874] sm:$0xff]
  %v934 = vld [vmem:[%s3 + $0x87c] sm:$0xff]
  %v935 = vld [vmem:[%s3 + $0x884] sm:$0xf]
  %v936 = vld [vmem:[%s3 + $0x888] sm:$0xff]
  %v937 = vld [vmem:[%s3 + $0x890] sm:$0xff]
  %v938 = vld [vmem:[%s3 + $0x898] sm:$0xff]
  %v939 = vld [vmem:[%s3 + $0x8a0] sm:$0xff]
  %v940 = vld [vmem:[%s3 + $0x8a8] sm:$0xff]
  %v941 = vld [vmem:[%s3 + $0x8b0] sm:$0xff]
  %v942 = vld [vmem:[%s3 + $0x8b8] sm:$0xf]
  %v943 = vld [vmem:[%s3 + $0x8bc] sm:$0xff]
  %v944 = vld [vmem:[%s3 + $0x8c4] sm:$0xff]
  %v945 = vld [vmem:[%s3 + $0x8cc] sm:$0xff]
  %v946 = vld [vmem:[%s3 + $0x8d4] sm:$0xff]
  %v947 = vld [vmem:[%s3 + $0x8dc] sm:$0xff]
  %v948 = vld [vmem:[%s3 + $0x8e4] sm:$0xff]
  %v949 = vld [vmem:[%s3 + $0x8ec] sm:$0xf]
  %v950 = vld [vmem:[%s3 + $0x8f0] sm:$0xff]
  %v951 = vld [vmem:[%s3 + $0x8f8] sm:$0xff]
  %v952 = vld [vmem:[%s3 + $0x900] sm:$0xff]
  %v953 = vld [vmem:[%s3 + $0x908] sm:$0xff]
  %v954 = vld [vmem:[%s3 + $0x910] sm:$0xff]
  %v955 = vld [vmem:[%s3 + $0x918] sm:$0xff]
  %v956 = vld [vmem:[%s3 + $0x920] sm:$0xf]
  %v957 = vld [vmem:[%s3 + $0x924] sm:$0xff]
  %v958 = vld [vmem:[%s3 + $0x92c] sm:$0xff]
  %v959 = vld [vmem:[%s3 + $0x934] sm:$0xff]
  %v960 = vld [vmem:[%s3 + $0x93c] sm:$0xff]
  %v961 = vld [vmem:[%s3 + $0x944] sm:$0xff]
  %v962 = vld [vmem:[%s3 + $0x94c] sm:$0xff]
  %v963 = vld [vmem:[%s3 + $0x954] sm:$0xf]
  %v964 = vld [vmem:[%s3 + $0x958] sm:$0xff]
  %v965 = vld [vmem:[%s3 + $0x960] sm:$0xff]
  %v966 = vld [vmem:[%s3 + $0x968] sm:$0xff]
  %v967 = vld [vmem:[%s3 + $0x970] sm:$0xff]
  %v968 = vld [vmem:[%s3 + $0x978] sm:$0xff]
  %v969 = vld [vmem:[%s3 + $0x980] sm:$0xff]
  %v970 = vld [vmem:[%s3 + $0x988] sm:$0xf]
  %v971 = vld [vmem:[%s3 + $0x98c] sm:$0xff]
  %v972 = vld [vmem:[%s3 + $0x994] sm:$0xff]
  %v973 = vld [vmem:[%s3 + $0x99c] sm:$0xff]
  %v974 = vld [vmem:[%s3 + $0x9a4] sm:$0xff]
  %v975 = vld [vmem:[%s3 + $0x9ac] sm:$0xff]
  %v976 = vld [vmem:[%s3 + $0x9b4] sm:$0xff]
  %v977 = vld [vmem:[%s3 + $0x9bc] sm:$0xf]
  %v978 = vld [vmem:[%s3 + $0x9c0] sm:$0xff]
  %v979 = vld [vmem:[%s3 + $0x9c8] sm:$0xff]
  %v980 = vld [vmem:[%s3 + $0x9d0] sm:$0xff]
  %v981 = vld [vmem:[%s3 + $0x9d8] sm:$0xff]
  %v982 = vld [vmem:[%s3 + $0x9e0] sm:$0xff]
  %v983 = vld [vmem:[%s3 + $0x9e8] sm:$0xff]
  %v984 = vld [vmem:[%s3 + $0x9f0] sm:$0xf]
  %v985 = vld [vmem:[%s3 + $0x9f4] sm:$0xff]
  %v986 = vld [vmem:[%s3 + $0x9fc] sm:$0xff]
  %v987 = vld [vmem:[%s3 + $0xa04] sm:$0xff]
  %v988 = vld [vmem:[%s3 + $0xa0c] sm:$0xff]
  %v989 = vld [vmem:[%s3 + $0xa14] sm:$0xff]
  %v990 = vld [vmem:[%s3 + $0xa1c] sm:$0xff]
  %v991 = vld [vmem:[%s3 + $0xa24] sm:$0xf]
  %v992 = vld [vmem:[%s3 + $0xa28] sm:$0xff]
  %v993 = vld [vmem:[%s3 + $0xa30] sm:$0xff]
  %v994 = vld [vmem:[%s3 + $0xa38] sm:$0xff]
  %v995 = vld [vmem:[%s3 + $0xa40] sm:$0xff]
  %v996 = vld [vmem:[%s3 + $0xa48] sm:$0xff]
  %v997 = vld [vmem:[%s3 + $0xa50] sm:$0xff]
  %v998 = vld [vmem:[%s3 + $0xa58] sm:$0xf]
  %v999 = vld [vmem:[%s3 + $0xa5c] sm:$0xff]
  %v1000 = vld [vmem:[%s3 + $0xa64] sm:$0xff]
  %v1001 = vld [vmem:[%s3 + $0xa6c] sm:$0xff]
  %v1002 = vld [vmem:[%s3 + $0xa74] sm:$0xff]
  %v1003 = vld [vmem:[%s3 + $0xa7c] sm:$0xff]
  %v1004 = vld [vmem:[%s3 + $0xa84] sm:$0xff]
  %v1005 = vld [vmem:[%s3 + $0xa8c] sm:$0xf]
  %v1006 = vld [vmem:[%s3 + $0xa90] sm:$0xff]
  %v1007 = vld [vmem:[%s3 + $0xa98] sm:$0xff]
  %v1008 = vld [vmem:[%s3 + $0xaa0] sm:$0xff]
  %v1009 = vld [vmem:[%s3 + $0xaa8] sm:$0xff]
  %v1010 = vld [vmem:[%s3 + $0xab0] sm:$0xff]
  %v1011 = vld [vmem:[%s3 + $0xab8] sm:$0xff]
  %v1012 = vld [vmem:[%s3 + $0xac0] sm:$0xf]
  %v1013 = vld [vmem:[%s3 + $0xac4] sm:$0xff]
  %v1014 = vld [vmem:[%s3 + $0xacc] sm:$0xff]
  %v1015 = vld [vmem:[%s3 + $0xad4] sm:$0xff]
  %v1016 = vld [vmem:[%s3 + $0xadc] sm:$0xff]
  %v1017 = vld [vmem:[%s3 + $0xae4] sm:$0xff]
  %v1018 = vld [vmem:[%s3 + $0xaec] sm:$0xff]
  %v1019 = vld [vmem:[%s3 + $0xaf4] sm:$0xf]
  %v1020 = vld [vmem:[%s3 + $0xaf8] sm:$0xff]
  %v1021 = vld [vmem:[%s3 + $0xb00] sm:$0xff]
  %v1022 = vld [vmem:[%s3 + $0xb08] sm:$0xff]
  %v1023 = vld [vmem:[%s3 + $0xb10] sm:$0xff]
  %v1024 = vld [vmem:[%s3 + $0xb18] sm:$0xff]
  %v1025 = vld [vmem:[%s3 + $0xb20] sm:$0xff]
  %v1026 = vld [vmem:[%s3 + $0xb28] sm:$0xf]
  %v1027 = vld [vmem:[%s3 + $0xb2c] sm:$0xff]
  %v1028 = vld [vmem:[%s3 + $0xb34] sm:$0xff]
  %v1029 = vld [vmem:[%s3 + $0xb3c] sm:$0xff]
  %v1030 = vld [vmem:[%s3 + $0xb44] sm:$0xff]
  %v1031 = vld [vmem:[%s3 + $0xb4c] sm:$0xff]
  %v1032 = vld [vmem:[%s3 + $0xb54] sm:$0xff]
  %v1033 = vld [vmem:[%s3 + $0xb5c] sm:$0xf]
  %v1034 = vld [vmem:[%s3 + $0xb60] sm:$0xff]
  %v1035 = vld [vmem:[%s3 + $0xb68] sm:$0xff]
  %v1036 = vld [vmem:[%s3 + $0xb70] sm:$0xff]
  %v1037 = vld [vmem:[%s3 + $0xb78] sm:$0xff]
  %v1038 = vld [vmem:[%s3 + $0xb80] sm:$0xff]
  %v1039 = vld [vmem:[%s3 + $0xb88] sm:$0xff]
  %v1040 = vld [vmem:[%s3 + $0xb90] sm:$0xf]
  %v1041 = vld [vmem:[%s3 + $0xb94] sm:$0xff]
  %v1042 = vld [vmem:[%s3 + $0xb9c] sm:$0xff]
  %v1043 = vld [vmem:[%s3 + $0xba4] sm:$0xff]
  %v1044 = vld [vmem:[%s3 + $0xbac] sm:$0xff]
  %v1045 = vld [vmem:[%s3 + $0xbb4] sm:$0xff]
  %v1046 = vld [vmem:[%s3 + $0xbbc] sm:$0xff]
  %v1047 = vld [vmem:[%s3 + $0xbc4] sm:$0xf]
  %v1048 = vld [vmem:[%s3 + $0xbc8] sm:$0xff]
  %v1049 = vld [vmem:[%s3 + $0xbd0] sm:$0xff]
  %v1050 = vld [vmem:[%s3 + $0xbd8] sm:$0xff]
  %v1051 = vld [vmem:[%s3 + $0xbe0] sm:$0xff]
  %v1052 = vld [vmem:[%s3 + $0xbe8] sm:$0xff]
  %v1053 = vld [vmem:[%s3 + $0xbf0] sm:$0xff]
  %v1054 = vld [vmem:[%s3 + $0xbf8] sm:$0xf]
  %v1055 = vld [vmem:[%s3 + $0xbfc] sm:$0xff]
  %v1056 = vld [vmem:[%s3 + $0xc04] sm:$0xff]
  %v1057 = vld [vmem:[%s3 + $0xc0c] sm:$0xff]
  %v1058 = vld [vmem:[%s3 + $0xc14] sm:$0xff]
  %v1059 = vld [vmem:[%s3 + $0xc1c] sm:$0xff]
  %v1060 = vld [vmem:[%s3 + $0xc24] sm:$0xff]
  %v1061 = vld [vmem:[%s3 + $0xc2c] sm:$0xf]
  %v1062 = vld [vmem:[%s3 + $0xc30] sm:$0xff]
  %v1063 = vld [vmem:[%s3 + $0xc38] sm:$0xff]
  %v1064 = vld [vmem:[%s3 + $0xc40] sm:$0xff]
  %v1065 = vld [vmem:[%s3 + $0xc48] sm:$0xff]
  %v1066 = vld [vmem:[%s3 + $0xc50] sm:$0xff]
  %v1067 = vld [vmem:[%s3 + $0xc58] sm:$0xff]
  %v1068 = vld [vmem:[%s3 + $0xc60] sm:$0xf]
  %v1069 = vld [vmem:[%s3 + $0xc64] sm:$0xff]
  %v1070 = vld [vmem:[%s3 + $0xc6c] sm:$0xff]
  %v1071 = vld [vmem:[%s3 + $0xc74] sm:$0xff]
  %v1072 = vld [vmem:[%s3 + $0xc7c] sm:$0xff]
  %v1073 = vld [vmem:[%s3 + $0xc84] sm:$0xff]
  %v1074 = vld [vmem:[%s3 + $0xc8c] sm:$0xff]
  %v1075 = vld [vmem:[%s3 + $0xc94] sm:$0xf]
  %v1076 = vld [vmem:[%s3 + $0xc98] sm:$0xff]
  %v1077 = vld [vmem:[%s3 + $0xca0] sm:$0xff]
  %v1078 = vld [vmem:[%s3 + $0xca8] sm:$0xff]
  %v1079 = vld [vmem:[%s3 + $0xcb0] sm:$0xff]
  %v1080 = vld [vmem:[%s3 + $0xcb8] sm:$0xff]
  %v1081 = vld [vmem:[%s3 + $0xcc0] sm:$0xff]
  %v1082 = vld [vmem:[%s3 + $0xcc8] sm:$0xf]
  %v1083 = vld [vmem:[%s3 + $0xccc] sm:$0xff]
  %v1084 = vld [vmem:[%s3 + $0xcd4] sm:$0xff]
  %v1085 = vld [vmem:[%s3 + $0xcdc] sm:$0xff]
  %v1086 = vld [vmem:[%s3 + $0xce4] sm:$0xff]
  %v1087 = vld [vmem:[%s3 + $0xcec] sm:$0xff]
  %v1088 = vld [vmem:[%s3 + $0xcf4] sm:$0xff]
  %v1089 = vld [vmem:[%s3 + $0xcfc] sm:$0xf]
  %v1090 = vld [vmem:[%s4] sm:$0xff]
  %v1091 = vld [vmem:[%s4 + $0x8] sm:$0x1f]
  %v1094 = vlaneseq
  %v1095 = vshrl.u32 %v1094, 7
  %v1096 = vsub.s32 0, %v1095
  %v1097 = vrot.slane %v1090, %v1096
  %v1098 = vlaneseq
  %v1099 = vshrl.u32 %v1098, 7
  %v1100 = vsub.s32 1, %v1099
  %v1101 = vrot.slane %v1090, %v1100
  %v1102 = vlaneseq
  %v1103 = vshrl.u32 %v1102, 7
  %v1104 = vsub.s32 2, %v1103
  %v1105 = vrot.slane %v1090, %v1104
  %v1106 = vlaneseq
  %v1107 = vshrl.u32 %v1106, 7
  %v1108 = vsub.s32 3, %v1107
  %v1109 = vrot.slane %v1090, %v1108
  %v1110 = vlaneseq
  %v1111 = vshrl.u32 %v1110, 7
  %v1112 = vsub.s32 4, %v1111
  %v1113 = vrot.slane %v1090, %v1112
  %v1114 = vlaneseq
  %v1115 = vshrl.u32 %v1114, 7
  %v1116 = vsub.s32 5, %v1115
  %v1117 = vrot.slane %v1090, %v1116
  %v1118 = vlaneseq
  %v1119 = vshrl.u32 %v1118, 7
  %v1120 = vsub.s32 6, %v1119
  %v1121 = vrot.slane %v1090, %v1120
  %v1122 = vlaneseq
  %v1123 = vshrl.u32 %v1122, 7
  %v1124 = vsub.s32 7, %v1123
  %v1125 = vrot.slane %v1090, %v1124
  %v1126 = vlaneseq
  %v1127 = vshrl.u32 %v1126, 7
  %v1128 = vsub.s32 0, %v1127
  %v1129 = vrot.slane %v1091, %v1128
  %v1130 = vlaneseq
  %v1131 = vshrl.u32 %v1130, 7
  %v1132 = vsub.s32 1, %v1131
  %v1133 = vrot.slane %v1091, %v1132
  %v1134 = vlaneseq
  %v1135 = vshrl.u32 %v1134, 7
  %v1136 = vsub.s32 2, %v1135
  %v1137 = vrot.slane %v1091, %v1136
  %v1138 = vlaneseq
  %v1139 = vshrl.u32 %v1138, 7
  %v1140 = vsub.s32 3, %v1139
  %v1141 = vrot.slane %v1091, %v1140
  %v1142 = vlaneseq
  %v1143 = vshrl.u32 %v1142, 7
  %v1144 = vsub.s32 4, %v1143
  %v1145 = vrot.slane %v1091, %v1144
  %v1607 = vunpack.c.l.b16 %v642
  %v1608 = vunpack.c.h.b16 %v642
  %v1609 = vunpack.c.l.b16 %v643
  %v1610 = vunpack.c.h.b16 %v643
  %v1611 = vunpack.c.l.b16 %v644
  %v1612 = vunpack.c.h.b16 %v644
  %v1613 = vunpack.c.l.b16 %v645
  %v1614 = vunpack.c.h.b16 %v645
  %v1615 = vunpack.c.l.b16 %v646
  %v1616 = vunpack.c.h.b16 %v646
  %v1617 = vunpack.c.l.b16 %v647
  %v1618 = vunpack.c.h.b16 %v647
  %v1619 = vunpack.c.l.b16 %v648
  %v1620 = vunpack.c.l.b16 %v649
  %v1621 = vunpack.c.h.b16 %v649
  %v1622 = vunpack.c.l.b16 %v650
  %v1623 = vunpack.c.h.b16 %v650
  %v1624 = vunpack.c.l.b16 %v651
  %v1625 = vunpack.c.h.b16 %v651
  %v1626 = vunpack.c.l.b16 %v652
  %v1627 = vunpack.c.h.b16 %v652
  %v1628 = vunpack.c.l.b16 %v653
  %v1629 = vunpack.c.h.b16 %v653
  %v1630 = vunpack.c.l.b16 %v654
  %v1631 = vunpack.c.h.b16 %v654
  %v1632 = vunpack.c.l.b16 %v655
  %v1633 = vunpack.c.l.b16 %v656
  %v1634 = vunpack.c.h.b16 %v656
  %v1635 = vunpack.c.l.b16 %v657
  %v1636 = vunpack.c.h.b16 %v657
  %v1637 = vunpack.c.l.b16 %v658
  %v1638 = vunpack.c.h.b16 %v658
  %v1639 = vunpack.c.l.b16 %v659
  %v1640 = vunpack.c.h.b16 %v659
  %v1641 = vunpack.c.l.b16 %v660
  %v1642 = vunpack.c.h.b16 %v660
  %v1643 = vunpack.c.l.b16 %v661
  %v1644 = vunpack.c.h.b16 %v661
  %v1645 = vunpack.c.l.b16 %v662
  %v1646 = vunpack.c.l.b16 %v663
  %v1647 = vunpack.c.h.b16 %v663
  %v1648 = vunpack.c.l.b16 %v664
  %v1649 = vunpack.c.h.b16 %v664
  %v1650 = vunpack.c.l.b16 %v665
  %v1651 = vunpack.c.h.b16 %v665
  %v1652 = vunpack.c.l.b16 %v666
  %v1653 = vunpack.c.h.b16 %v666
  %v1654 = vunpack.c.l.b16 %v667
  %v1655 = vunpack.c.h.b16 %v667
  %v1656 = vunpack.c.l.b16 %v668
  %v1657 = vunpack.c.h.b16 %v668
  %v1658 = vunpack.c.l.b16 %v669
  %v1659 = vunpack.c.l.b16 %v670
  %v1660 = vunpack.c.h.b16 %v670
  %v1661 = vunpack.c.l.b16 %v671
  %v1662 = vunpack.c.h.b16 %v671
  %v1663 = vunpack.c.l.b16 %v672
  %v1664 = vunpack.c.h.b16 %v672
  %v1665 = vunpack.c.l.b16 %v673
  %v1666 = vunpack.c.h.b16 %v673
  %v1667 = vunpack.c.l.b16 %v674
  %v1668 = vunpack.c.h.b16 %v674
  %v1669 = vunpack.c.l.b16 %v675
  %v1670 = vunpack.c.h.b16 %v675
  %v1671 = vunpack.c.l.b16 %v676
  %v1672 = vunpack.c.l.b16 %v677
  %v1673 = vunpack.c.h.b16 %v677
  %v1674 = vunpack.c.l.b16 %v678
  %v1675 = vunpack.c.h.b16 %v678
  %v1676 = vunpack.c.l.b16 %v679
  %v1677 = vunpack.c.h.b16 %v679
  %v1678 = vunpack.c.l.b16 %v680
  %v1679 = vunpack.c.h.b16 %v680
  %v1680 = vunpack.c.l.b16 %v681
  %v1681 = vunpack.c.h.b16 %v681
  %v1682 = vunpack.c.l.b16 %v682
  %v1683 = vunpack.c.h.b16 %v682
  %v1684 = vunpack.c.l.b16 %v683
  %v1685 = vunpack.c.l.b16 %v684
  %v1686 = vunpack.c.h.b16 %v684
  %v1687 = vunpack.c.l.b16 %v685
  %v1688 = vunpack.c.h.b16 %v685
  %v1689 = vunpack.c.l.b16 %v686
  %v1690 = vunpack.c.h.b16 %v686
  %v1691 = vunpack.c.l.b16 %v687
  %v1692 = vunpack.c.h.b16 %v687
  %v1693 = vunpack.c.l.b16 %v688
  %v1694 = vunpack.c.h.b16 %v688
  %v1695 = vunpack.c.l.b16 %v689
  %v1696 = vunpack.c.h.b16 %v689
  %v1697 = vunpack.c.l.b16 %v690
  %v1698 = vunpack.c.l.b16 %v691
  %v1699 = vunpack.c.h.b16 %v691
  %v1700 = vunpack.c.l.b16 %v692
  %v1701 = vunpack.c.h.b16 %v692
  %v1702 = vunpack.c.l.b16 %v693
  %v1703 = vunpack.c.h.b16 %v693
  %v1704 = vunpack.c.l.b16 %v694
  %v1705 = vunpack.c.h.b16 %v694
  %v1706 = vunpack.c.l.b16 %v695
  %v1707 = vunpack.c.h.b16 %v695
  %v1708 = vunpack.c.l.b16 %v696
  %v1709 = vunpack.c.h.b16 %v696
  %v1710 = vunpack.c.l.b16 %v697
  %v1711 = vunpack.c.l.b16 %v698
  %v1712 = vunpack.c.h.b16 %v698
  %v1713 = vunpack.c.l.b16 %v699
  %v1714 = vunpack.c.h.b16 %v699
  %v1715 = vunpack.c.l.b16 %v700
  %v1716 = vunpack.c.h.b16 %v700
  %v1717 = vunpack.c.l.b16 %v701
  %v1718 = vunpack.c.h.b16 %v701
  %v1719 = vunpack.c.l.b16 %v702
  %v1720 = vunpack.c.h.b16 %v702
  %v1721 = vunpack.c.l.b16 %v703
  %v1722 = vunpack.c.h.b16 %v703
  %v1723 = vunpack.c.l.b16 %v704
  %v1724 = vunpack.c.l.b16 %v705
  %v1725 = vunpack.c.h.b16 %v705
  %v1726 = vunpack.c.l.b16 %v706
  %v1727 = vunpack.c.h.b16 %v706
  %v1728 = vunpack.c.l.b16 %v707
  %v1729 = vunpack.c.h.b16 %v707
  %v1730 = vunpack.c.l.b16 %v708
  %v1731 = vunpack.c.h.b16 %v708
  %v1732 = vunpack.c.l.b16 %v709
  %v1733 = vunpack.c.h.b16 %v709
  %v1734 = vunpack.c.l.b16 %v710
  %v1735 = vunpack.c.h.b16 %v710
  %v1736 = vunpack.c.l.b16 %v711
  %v1737 = vunpack.c.l.b16 %v712
  %v1738 = vunpack.c.h.b16 %v712
  %v1739 = vunpack.c.l.b16 %v713
  %v1740 = vunpack.c.h.b16 %v713
  %v1741 = vunpack.c.l.b16 %v714
  %v1742 = vunpack.c.h.b16 %v714
  %v1743 = vunpack.c.l.b16 %v715
  %v1744 = vunpack.c.h.b16 %v715
  %v1745 = vunpack.c.l.b16 %v716
  %v1746 = vunpack.c.h.b16 %v716
  %v1747 = vunpack.c.l.b16 %v717
  %v1748 = vunpack.c.h.b16 %v717
  %v1749 = vunpack.c.l.b16 %v718
  %v1750 = vunpack.c.l.b16 %v719
  %v1751 = vunpack.c.h.b16 %v719
  %v1752 = vunpack.c.l.b16 %v720
  %v1753 = vunpack.c.h.b16 %v720
  %v1754 = vunpack.c.l.b16 %v721
  %v1755 = vunpack.c.h.b16 %v721
  %v1756 = vunpack.c.l.b16 %v722
  %v1757 = vunpack.c.h.b16 %v722
  %v1758 = vunpack.c.l.b16 %v723
  %v1759 = vunpack.c.h.b16 %v723
  %v1760 = vunpack.c.l.b16 %v724
  %v1761 = vunpack.c.h.b16 %v724
  %v1762 = vunpack.c.l.b16 %v725
  %v1763 = vunpack.c.l.b16 %v726
  %v1764 = vunpack.c.h.b16 %v726
  %v1765 = vunpack.c.l.b16 %v727
  %v1766 = vunpack.c.h.b16 %v727
  %v1767 = vunpack.c.l.b16 %v728
  %v1768 = vunpack.c.h.b16 %v728
  %v1769 = vunpack.c.l.b16 %v729
  %v1770 = vunpack.c.h.b16 %v729
  %v1771 = vunpack.c.l.b16 %v730
  %v1772 = vunpack.c.h.b16 %v730
  %v1773 = vunpack.c.l.b16 %v731
  %v1774 = vunpack.c.h.b16 %v731
  %v1775 = vunpack.c.l.b16 %v732
  %v1776 = vunpack.c.l.b16 %v733
  %v1777 = vunpack.c.h.b16 %v733
  %v1778 = vunpack.c.l.b16 %v734
  %v1779 = vunpack.c.h.b16 %v734
  %v1780 = vunpack.c.l.b16 %v735
  %v1781 = vunpack.c.h.b16 %v735
  %v1782 = vunpack.c.l.b16 %v736
  %v1783 = vunpack.c.h.b16 %v736
  %v1784 = vunpack.c.l.b16 %v737
  %v1785 = vunpack.c.h.b16 %v737
  %v1786 = vunpack.c.l.b16 %v738
  %v1787 = vunpack.c.h.b16 %v738
  %v1788 = vunpack.c.l.b16 %v739
  %v1789 = vunpack.c.l.b16 %v740
  %v1790 = vunpack.c.h.b16 %v740
  %v1791 = vunpack.c.l.b16 %v741
  %v1792 = vunpack.c.h.b16 %v741
  %v1793 = vunpack.c.l.b16 %v742
  %v1794 = vunpack.c.h.b16 %v742
  %v1795 = vunpack.c.l.b16 %v743
  %v1796 = vunpack.c.h.b16 %v743
  %v1797 = vunpack.c.l.b16 %v744
  %v1798 = vunpack.c.h.b16 %v744
  %v1799 = vunpack.c.l.b16 %v745
  %v1800 = vunpack.c.h.b16 %v745
  %v1801 = vunpack.c.l.b16 %v746
  %v1802 = vunpack.c.l.b16 %v747
  %v1803 = vunpack.c.h.b16 %v747
  %v1804 = vunpack.c.l.b16 %v748
  %v1805 = vunpack.c.h.b16 %v748
  %v1806 = vunpack.c.l.b16 %v749
  %v1807 = vunpack.c.h.b16 %v749
  %v1808 = vunpack.c.l.b16 %v750
  %v1809 = vunpack.c.h.b16 %v750
  %v1810 = vunpack.c.l.b16 %v751
  %v1811 = vunpack.c.h.b16 %v751
  %v1812 = vunpack.c.l.b16 %v752
  %v1813 = vunpack.c.h.b16 %v752
  %v1814 = vunpack.c.l.b16 %v753
  %v1815 = vunpack.c.l.b16 %v754
  %v1816 = vunpack.c.h.b16 %v754
  %v1817 = vunpack.c.l.b16 %v755
  %v1818 = vunpack.c.h.b16 %v755
  %v1819 = vunpack.c.l.b16 %v756
  %v1820 = vunpack.c.h.b16 %v756
  %v1821 = vunpack.c.l.b16 %v757
  %v1822 = vunpack.c.h.b16 %v757
  %v1823 = vunpack.c.l.b16 %v758
  %v1824 = vunpack.c.h.b16 %v758
  %v1825 = vunpack.c.l.b16 %v759
  %v1826 = vunpack.c.h.b16 %v759
  %v1827 = vunpack.c.l.b16 %v760
  %v1828 = vunpack.c.l.b16 %v761
  %v1829 = vunpack.c.h.b16 %v761
  %v1830 = vunpack.c.l.b16 %v762
  %v1831 = vunpack.c.h.b16 %v762
  %v1832 = vunpack.c.l.b16 %v763
  %v1833 = vunpack.c.h.b16 %v763
  %v1834 = vunpack.c.l.b16 %v764
  %v1835 = vunpack.c.h.b16 %v764
  %v1836 = vunpack.c.l.b16 %v765
  %v1837 = vunpack.c.h.b16 %v765
  %v1838 = vunpack.c.l.b16 %v766
  %v1839 = vunpack.c.h.b16 %v766
  %v1840 = vunpack.c.l.b16 %v767
  %v1841 = vunpack.c.l.b16 %v768
  %v1842 = vunpack.c.h.b16 %v768
  %v1843 = vunpack.c.l.b16 %v769
  %v1844 = vunpack.c.h.b16 %v769
  %v1845 = vunpack.c.l.b16 %v770
  %v1846 = vunpack.c.h.b16 %v770
  %v1847 = vunpack.c.l.b16 %v771
  %v1848 = vunpack.c.h.b16 %v771
  %v1849 = vunpack.c.l.b16 %v772
  %v1850 = vunpack.c.h.b16 %v772
  %v1851 = vunpack.c.l.b16 %v773
  %v1852 = vunpack.c.h.b16 %v773
  %v1853 = vunpack.c.l.b16 %v774
  %v1854 = vunpack.c.l.b16 %v775
  %v1855 = vunpack.c.h.b16 %v775
  %v1856 = vunpack.c.l.b16 %v776
  %v1857 = vunpack.c.h.b16 %v776
  %v1858 = vunpack.c.l.b16 %v777
  %v1859 = vunpack.c.h.b16 %v777
  %v1860 = vunpack.c.l.b16 %v778
  %v1861 = vunpack.c.h.b16 %v778
  %v1862 = vunpack.c.l.b16 %v779
  %v1863 = vunpack.c.h.b16 %v779
  %v1864 = vunpack.c.l.b16 %v780
  %v1865 = vunpack.c.h.b16 %v780
  %v1866 = vunpack.c.l.b16 %v781
  %v1867 = vunpack.c.l.b16 %v782
  %v1868 = vunpack.c.h.b16 %v782
  %v1869 = vunpack.c.l.b16 %v783
  %v1870 = vunpack.c.h.b16 %v783
  %v1871 = vunpack.c.l.b16 %v784
  %v1872 = vunpack.c.h.b16 %v784
  %v1873 = vunpack.c.l.b16 %v785
  %v1874 = vunpack.c.h.b16 %v785
  %v1875 = vunpack.c.l.b16 %v786
  %v1876 = vunpack.c.h.b16 %v786
  %v1877 = vunpack.c.l.b16 %v787
  %v1878 = vunpack.c.h.b16 %v787
  %v1879 = vunpack.c.l.b16 %v788
  %v1880 = vunpack.c.l.b16 %v789
  %v1881 = vunpack.c.h.b16 %v789
  %v1882 = vunpack.c.l.b16 %v790
  %v1883 = vunpack.c.h.b16 %v790
  %v1884 = vunpack.c.l.b16 %v791
  %v1885 = vunpack.c.h.b16 %v791
  %v1886 = vunpack.c.l.b16 %v792
  %v1887 = vunpack.c.h.b16 %v792
  %v1888 = vunpack.c.l.b16 %v793
  %v1889 = vunpack.c.h.b16 %v793
  %v1890 = vunpack.c.l.b16 %v794
  %v1891 = vunpack.c.h.b16 %v794
  %v1892 = vunpack.c.l.b16 %v795
  %v1893 = vunpack.c.l.b16 %v796
  %v1894 = vunpack.c.h.b16 %v796
  %v1895 = vunpack.c.l.b16 %v797
  %v1896 = vunpack.c.h.b16 %v797
  %v1897 = vunpack.c.l.b16 %v798
  %v1898 = vunpack.c.h.b16 %v798
  %v1899 = vunpack.c.l.b16 %v799
  %v1900 = vunpack.c.h.b16 %v799
  %v1901 = vunpack.c.l.b16 %v800
  %v1902 = vunpack.c.h.b16 %v800
  %v1903 = vunpack.c.l.b16 %v801
  %v1904 = vunpack.c.h.b16 %v801
  %v1905 = vunpack.c.l.b16 %v802
  %v1906 = vunpack.c.l.b16 %v803
  %v1907 = vunpack.c.h.b16 %v803
  %v1908 = vunpack.c.l.b16 %v804
  %v1909 = vunpack.c.h.b16 %v804
  %v1910 = vunpack.c.l.b16 %v805
  %v1911 = vunpack.c.h.b16 %v805
  %v1912 = vunpack.c.l.b16 %v806
  %v1913 = vunpack.c.h.b16 %v806
  %v1914 = vunpack.c.l.b16 %v807
  %v1915 = vunpack.c.h.b16 %v807
  %v1916 = vunpack.c.l.b16 %v808
  %v1917 = vunpack.c.h.b16 %v808
  %v1918 = vunpack.c.l.b16 %v809
  %v1919 = vunpack.c.l.b16 %v810
  %v1920 = vunpack.c.h.b16 %v810
  %v1921 = vunpack.c.l.b16 %v811
  %v1922 = vunpack.c.h.b16 %v811
  %v1923 = vunpack.c.l.b16 %v812
  %v1924 = vunpack.c.h.b16 %v812
  %v1925 = vunpack.c.l.b16 %v813
  %v1926 = vunpack.c.h.b16 %v813
  %v1927 = vunpack.c.l.b16 %v814
  %v1928 = vunpack.c.h.b16 %v814
  %v1929 = vunpack.c.l.b16 %v815
  %v1930 = vunpack.c.h.b16 %v815
  %v1931 = vunpack.c.l.b16 %v816
  %v1932 = vunpack.c.l.b16 %v817
  %v1933 = vunpack.c.h.b16 %v817
  %v1934 = vunpack.c.l.b16 %v818
  %v1935 = vunpack.c.h.b16 %v818
  %v1936 = vunpack.c.l.b16 %v819
  %v1937 = vunpack.c.h.b16 %v819
  %v1938 = vunpack.c.l.b16 %v820
  %v1939 = vunpack.c.h.b16 %v820
  %v1940 = vunpack.c.l.b16 %v821
  %v1941 = vunpack.c.h.b16 %v821
  %v1942 = vunpack.c.l.b16 %v822
  %v1943 = vunpack.c.h.b16 %v822
  %v1944 = vunpack.c.l.b16 %v823
  %v1945 = vunpack.c.l.b16 %v824
  %v1946 = vunpack.c.h.b16 %v824
  %v1947 = vunpack.c.l.b16 %v825
  %v1948 = vunpack.c.h.b16 %v825
  %v1949 = vunpack.c.l.b16 %v826
  %v1950 = vunpack.c.h.b16 %v826
  %v1951 = vunpack.c.l.b16 %v827
  %v1952 = vunpack.c.h.b16 %v827
  %v1953 = vunpack.c.l.b16 %v828
  %v1954 = vunpack.c.h.b16 %v828
  %v1955 = vunpack.c.l.b16 %v829
  %v1956 = vunpack.c.h.b16 %v829
  %v1957 = vunpack.c.l.b16 %v830
  %v1958 = vunpack.c.l.b16 %v831
  %v1959 = vunpack.c.h.b16 %v831
  %v1960 = vunpack.c.l.b16 %v832
  %v1961 = vunpack.c.h.b16 %v832
  %v1962 = vunpack.c.l.b16 %v833
  %v1963 = vunpack.c.h.b16 %v833
  %v1964 = vunpack.c.l.b16 %v834
  %v1965 = vunpack.c.h.b16 %v834
  %v1966 = vunpack.c.l.b16 %v835
  %v1967 = vunpack.c.h.b16 %v835
  %v1968 = vunpack.c.l.b16 %v836
  %v1969 = vunpack.c.h.b16 %v836
  %v1970 = vunpack.c.l.b16 %v837
  %v1971 = vunpack.c.l.b16 %v838
  %v1972 = vunpack.c.h.b16 %v838
  %v1973 = vunpack.c.l.b16 %v839
  %v1974 = vunpack.c.h.b16 %v839
  %v1975 = vunpack.c.l.b16 %v840
  %v1976 = vunpack.c.h.b16 %v840
  %v1977 = vunpack.c.l.b16 %v841
  %v1978 = vunpack.c.h.b16 %v841
  %v1979 = vunpack.c.l.b16 %v842
  %v1980 = vunpack.c.h.b16 %v842
  %v1981 = vunpack.c.l.b16 %v843
  %v1982 = vunpack.c.h.b16 %v843
  %v1983 = vunpack.c.l.b16 %v844
  %v1984 = vunpack.c.l.b16 %v845
  %v1985 = vunpack.c.h.b16 %v845
  %v1986 = vunpack.c.l.b16 %v846
  %v1987 = vunpack.c.h.b16 %v846
  %v1988 = vunpack.c.l.b16 %v847
  %v1989 = vunpack.c.h.b16 %v847
  %v1990 = vunpack.c.l.b16 %v848
  %v1991 = vunpack.c.h.b16 %v848
  %v1992 = vunpack.c.l.b16 %v849
  %v1993 = vunpack.c.h.b16 %v849
  %v1994 = vunpack.c.l.b16 %v850
  %v1995 = vunpack.c.h.b16 %v850
  %v1996 = vunpack.c.l.b16 %v851
  %v1997 = vunpack.c.l.b16 %v852
  %v1998 = vunpack.c.h.b16 %v852
  %v1999 = vunpack.c.l.b16 %v853
  %v2000 = vunpack.c.h.b16 %v853
  %v2001 = vunpack.c.l.b16 %v854
  %v2002 = vunpack.c.h.b16 %v854
  %v2003 = vunpack.c.l.b16 %v855
  %v2004 = vunpack.c.h.b16 %v855
  %v2005 = vunpack.c.l.b16 %v856
  %v2006 = vunpack.c.h.b16 %v856
  %v2007 = vunpack.c.l.b16 %v857
  %v2008 = vunpack.c.h.b16 %v857
  %v2009 = vunpack.c.l.b16 %v858
  %v2010 = vunpack.c.l.b16 %v859
  %v2011 = vunpack.c.h.b16 %v859
  %v2012 = vunpack.c.l.b16 %v860
  %v2013 = vunpack.c.h.b16 %v860
  %v2014 = vunpack.c.l.b16 %v861
  %v2015 = vunpack.c.h.b16 %v861
  %v2016 = vunpack.c.l.b16 %v862
  %v2017 = vunpack.c.h.b16 %v862
  %v2018 = vunpack.c.l.b16 %v863
  %v2019 = vunpack.c.h.b16 %v863
  %v2020 = vunpack.c.l.b16 %v864
  %v2021 = vunpack.c.h.b16 %v864
  %v2022 = vunpack.c.l.b16 %v865
  %v2023 = vunpack.c.l.b16 %v866
  %v2024 = vunpack.c.h.b16 %v866
  %v2025 = vunpack.c.l.b16 %v867
  %v2026 = vunpack.c.h.b16 %v867
  %v2027 = vunpack.c.l.b16 %v868
  %v2028 = vunpack.c.h.b16 %v868
  %v2029 = vunpack.c.l.b16 %v869
  %v2030 = vunpack.c.h.b16 %v869
  %v2031 = vunpack.c.l.b16 %v870
  %v2032 = vunpack.c.h.b16 %v870
  %v2033 = vunpack.c.l.b16 %v871
  %v2034 = vunpack.c.h.b16 %v871
  %v2035 = vunpack.c.l.b16 %v872
  %v2036 = vunpack.c.l.b16 %v873
  %v2037 = vunpack.c.h.b16 %v873
  %v2038 = vunpack.c.l.b16 %v874
  %v2039 = vunpack.c.h.b16 %v874
  %v2040 = vunpack.c.l.b16 %v875
  %v2041 = vunpack.c.h.b16 %v875
  %v2042 = vunpack.c.l.b16 %v876
  %v2043 = vunpack.c.h.b16 %v876
  %v2044 = vunpack.c.l.b16 %v877
  %v2045 = vunpack.c.h.b16 %v877
  %v2046 = vunpack.c.l.b16 %v878
  %v2047 = vunpack.c.h.b16 %v878
  %v2048 = vunpack.c.l.b16 %v879
  %v2049 = vunpack.c.l.b16 %v880
  %v2050 = vunpack.c.h.b16 %v880
  %v2051 = vunpack.c.l.b16 %v881
  %v2052 = vunpack.c.h.b16 %v881
  %v2053 = vunpack.c.l.b16 %v882
  %v2054 = vunpack.c.h.b16 %v882
  %v2055 = vunpack.c.l.b16 %v883
  %v2056 = vunpack.c.h.b16 %v883
  %v2057 = vunpack.c.l.b16 %v884
  %v2058 = vunpack.c.h.b16 %v884
  %v2059 = vunpack.c.l.b16 %v885
  %v2060 = vunpack.c.h.b16 %v885
  %v2061 = vunpack.c.l.b16 %v886
  %v2062 = vunpack.c.l.b16 %v887
  %v2063 = vunpack.c.h.b16 %v887
  %v2064 = vunpack.c.l.b16 %v888
  %v2065 = vunpack.c.h.b16 %v888
  %v2066 = vunpack.c.l.b16 %v889
  %v2067 = vunpack.c.h.b16 %v889
  %v2068 = vunpack.c.l.b16 %v890
  %v2069 = vunpack.c.h.b16 %v890
  %v2070 = vunpack.c.l.b16 %v891
  %v2071 = vunpack.c.h.b16 %v891
  %v2072 = vunpack.c.l.b16 %v892
  %v2073 = vunpack.c.h.b16 %v892
  %v2074 = vunpack.c.l.b16 %v893
  %v2075 = vunpack.c.l.b16 %v894
  %v2076 = vunpack.c.h.b16 %v894
  %v2077 = vunpack.c.l.b16 %v895
  %v2078 = vunpack.c.h.b16 %v895
  %v2079 = vunpack.c.l.b16 %v896
  %v2080 = vunpack.c.h.b16 %v896
  %v2081 = vunpack.c.l.b16 %v897
  %v2082 = vunpack.c.h.b16 %v897
  %v2083 = vunpack.c.l.b16 %v898
  %v2084 = vunpack.c.h.b16 %v898
  %v2085 = vunpack.c.l.b16 %v899
  %v2086 = vunpack.c.h.b16 %v899
  %v2087 = vunpack.c.l.b16 %v900
  %v2088 = vunpack.c.l.b16 %v901
  %v2089 = vunpack.c.h.b16 %v901
  %v2090 = vunpack.c.l.b16 %v902
  %v2091 = vunpack.c.h.b16 %v902
  %v2092 = vunpack.c.l.b16 %v903
  %v2093 = vunpack.c.h.b16 %v903
  %v2094 = vunpack.c.l.b16 %v904
  %v2095 = vunpack.c.h.b16 %v904
  %v2096 = vunpack.c.l.b16 %v905
  %v2097 = vunpack.c.h.b16 %v905
  %v2098 = vunpack.c.l.b16 %v906
  %v2099 = vunpack.c.h.b16 %v906
  %v2100 = vunpack.c.l.b16 %v907
  %v2101 = vunpack.c.l.b16 %v908
  %v2102 = vunpack.c.h.b16 %v908
  %v2103 = vunpack.c.l.b16 %v909
  %v2104 = vunpack.c.h.b16 %v909
  %v2105 = vunpack.c.l.b16 %v910
  %v2106 = vunpack.c.h.b16 %v910
  %v2107 = vunpack.c.l.b16 %v911
  %v2108 = vunpack.c.h.b16 %v911
  %v2109 = vunpack.c.l.b16 %v912
  %v2110 = vunpack.c.h.b16 %v912
  %v2111 = vunpack.c.l.b16 %v913
  %v2112 = vunpack.c.h.b16 %v913
  %v2113 = vunpack.c.l.b16 %v914
  %v2114 = vunpack.c.l.b16 %v915
  %v2115 = vunpack.c.h.b16 %v915
  %v2116 = vunpack.c.l.b16 %v916
  %v2117 = vunpack.c.h.b16 %v916
  %v2118 = vunpack.c.l.b16 %v917
  %v2119 = vunpack.c.h.b16 %v917
  %v2120 = vunpack.c.l.b16 %v918
  %v2121 = vunpack.c.h.b16 %v918
  %v2122 = vunpack.c.l.b16 %v919
  %v2123 = vunpack.c.h.b16 %v919
  %v2124 = vunpack.c.l.b16 %v920
  %v2125 = vunpack.c.h.b16 %v920
  %v2126 = vunpack.c.l.b16 %v921
  %v2127 = vunpack.c.l.b16 %v922
  %v2128 = vunpack.c.h.b16 %v922
  %v2129 = vunpack.c.l.b16 %v923
  %v2130 = vunpack.c.h.b16 %v923
  %v2131 = vunpack.c.l.b16 %v924
  %v2132 = vunpack.c.h.b16 %v924
  %v2133 = vunpack.c.l.b16 %v925
  %v2134 = vunpack.c.h.b16 %v925
  %v2135 = vunpack.c.l.b16 %v926
  %v2136 = vunpack.c.h.b16 %v926
  %v2137 = vunpack.c.l.b16 %v927
  %v2138 = vunpack.c.h.b16 %v927
  %v2139 = vunpack.c.l.b16 %v928
  %v2140 = vunpack.c.l.b16 %v929
  %v2141 = vunpack.c.h.b16 %v929
  %v2142 = vunpack.c.l.b16 %v930
  %v2143 = vunpack.c.h.b16 %v930
  %v2144 = vunpack.c.l.b16 %v931
  %v2145 = vunpack.c.h.b16 %v931
  %v2146 = vunpack.c.l.b16 %v932
  %v2147 = vunpack.c.h.b16 %v932
  %v2148 = vunpack.c.l.b16 %v933
  %v2149 = vunpack.c.h.b16 %v933
  %v2150 = vunpack.c.l.b16 %v934
  %v2151 = vunpack.c.h.b16 %v934
  %v2152 = vunpack.c.l.b16 %v935
  %v2153 = vunpack.c.l.b16 %v936
  %v2154 = vunpack.c.h.b16 %v936
  %v2155 = vunpack.c.l.b16 %v937
  %v2156 = vunpack.c.h.b16 %v937
  %v2157 = vunpack.c.l.b16 %v938
  %v2158 = vunpack.c.h.b16 %v938
  %v2159 = vunpack.c.l.b16 %v939
  %v2160 = vunpack.c.h.b16 %v939
  %v2161 = vunpack.c.l.b16 %v940
  %v2162 = vunpack.c.h.b16 %v940
  %v2163 = vunpack.c.l.b16 %v941
  %v2164 = vunpack.c.h.b16 %v941
  %v2165 = vunpack.c.l.b16 %v942
  %v2166 = vunpack.c.l.b16 %v943
  %v2167 = vunpack.c.h.b16 %v943
  %v2168 = vunpack.c.l.b16 %v944
  %v2169 = vunpack.c.h.b16 %v944
  %v2170 = vunpack.c.l.b16 %v945
  %v2171 = vunpack.c.h.b16 %v945
  %v2172 = vunpack.c.l.b16 %v946
  %v2173 = vunpack.c.h.b16 %v946
  %v2174 = vunpack.c.l.b16 %v947
  %v2175 = vunpack.c.h.b16 %v947
  %v2176 = vunpack.c.l.b16 %v948
  %v2177 = vunpack.c.h.b16 %v948
  %v2178 = vunpack.c.l.b16 %v949
  %v2179 = vunpack.c.l.b16 %v950
  %v2180 = vunpack.c.h.b16 %v950
  %v2181 = vunpack.c.l.b16 %v951
  %v2182 = vunpack.c.h.b16 %v951
  %v2183 = vunpack.c.l.b16 %v952
  %v2184 = vunpack.c.h.b16 %v952
  %v2185 = vunpack.c.l.b16 %v953
  %v2186 = vunpack.c.h.b16 %v953
  %v2187 = vunpack.c.l.b16 %v954
  %v2188 = vunpack.c.h.b16 %v954
  %v2189 = vunpack.c.l.b16 %v955
  %v2190 = vunpack.c.h.b16 %v955
  %v2191 = vunpack.c.l.b16 %v956
  %v2192 = vunpack.c.l.b16 %v957
  %v2193 = vunpack.c.h.b16 %v957
  %v2194 = vunpack.c.l.b16 %v958
  %v2195 = vunpack.c.h.b16 %v958
  %v2196 = vunpack.c.l.b16 %v959
  %v2197 = vunpack.c.h.b16 %v959
  %v2198 = vunpack.c.l.b16 %v960
  %v2199 = vunpack.c.h.b16 %v960
  %v2200 = vunpack.c.l.b16 %v961
  %v2201 = vunpack.c.h.b16 %v961
  %v2202 = vunpack.c.l.b16 %v962
  %v2203 = vunpack.c.h.b16 %v962
  %v2204 = vunpack.c.l.b16 %v963
  %v2205 = vunpack.c.l.b16 %v964
  %v2206 = vunpack.c.h.b16 %v964
  %v2207 = vunpack.c.l.b16 %v965
  %v2208 = vunpack.c.h.b16 %v965
  %v2209 = vunpack.c.l.b16 %v966
  %v2210 = vunpack.c.h.b16 %v966
  %v2211 = vunpack.c.l.b16 %v967
  %v2212 = vunpack.c.h.b16 %v967
  %v2213 = vunpack.c.l.b16 %v968
  %v2214 = vunpack.c.h.b16 %v968
  %v2215 = vunpack.c.l.b16 %v969
  %v2216 = vunpack.c.h.b16 %v969
  %v2217 = vunpack.c.l.b16 %v970
  %v2218 = vunpack.c.l.b16 %v971
  %v2219 = vunpack.c.h.b16 %v971
  %v2220 = vunpack.c.l.b16 %v972
  %v2221 = vunpack.c.h.b16 %v972
  %v2222 = vunpack.c.l.b16 %v973
  %v2223 = vunpack.c.h.b16 %v973
  %v2224 = vunpack.c.l.b16 %v974
  %v2225 = vunpack.c.h.b16 %v974
  %v2226 = vunpack.c.l.b16 %v975
  %v2227 = vunpack.c.h.b16 %v975
  %v2228 = vunpack.c.l.b16 %v976
  %v2229 = vunpack.c.h.b16 %v976
  %v2230 = vunpack.c.l.b16 %v977
  %v2231 = vunpack.c.l.b16 %v978
  %v2232 = vunpack.c.h.b16 %v978
  %v2233 = vunpack.c.l.b16 %v979
  %v2234 = vunpack.c.h.b16 %v979
  %v2235 = vunpack.c.l.b16 %v980
  %v2236 = vunpack.c.h.b16 %v980
  %v2237 = vunpack.c.l.b16 %v981
  %v2238 = vunpack.c.h.b16 %v981
  %v2239 = vunpack.c.l.b16 %v982
  %v2240 = vunpack.c.h.b16 %v982
  %v2241 = vunpack.c.l.b16 %v983
  %v2242 = vunpack.c.h.b16 %v983
  %v2243 = vunpack.c.l.b16 %v984
  %v2244 = vunpack.c.l.b16 %v985
  %v2245 = vunpack.c.h.b16 %v985
  %v2246 = vunpack.c.l.b16 %v986
  %v2247 = vunpack.c.h.b16 %v986
  %v2248 = vunpack.c.l.b16 %v987
  %v2249 = vunpack.c.h.b16 %v987
  %v2250 = vunpack.c.l.b16 %v988
  %v2251 = vunpack.c.h.b16 %v988
  %v2252 = vunpack.c.l.b16 %v989
  %v2253 = vunpack.c.h.b16 %v989
  %v2254 = vunpack.c.l.b16 %v990
  %v2255 = vunpack.c.h.b16 %v990
  %v2256 = vunpack.c.l.b16 %v991
  %v2257 = vunpack.c.l.b16 %v992
  %v2258 = vunpack.c.h.b16 %v992
  %v2259 = vunpack.c.l.b16 %v993
  %v2260 = vunpack.c.h.b16 %v993
  %v2261 = vunpack.c.l.b16 %v994
  %v2262 = vunpack.c.h.b16 %v994
  %v2263 = vunpack.c.l.b16 %v995
  %v2264 = vunpack.c.h.b16 %v995
  %v2265 = vunpack.c.l.b16 %v996
  %v2266 = vunpack.c.h.b16 %v996
  %v2267 = vunpack.c.l.b16 %v997
  %v2268 = vunpack.c.h.b16 %v997
  %v2269 = vunpack.c.l.b16 %v998
  %v2270 = vunpack.c.l.b16 %v999
  %v2271 = vunpack.c.h.b16 %v999
  %v2272 = vunpack.c.l.b16 %v1000
  %v2273 = vunpack.c.h.b16 %v1000
  %v2274 = vunpack.c.l.b16 %v1001
  %v2275 = vunpack.c.h.b16 %v1001
  %v2276 = vunpack.c.l.b16 %v1002
  %v2277 = vunpack.c.h.b16 %v1002
  %v2278 = vunpack.c.l.b16 %v1003
  %v2279 = vunpack.c.h.b16 %v1003
  %v2280 = vunpack.c.l.b16 %v1004
  %v2281 = vunpack.c.h.b16 %v1004
  %v2282 = vunpack.c.l.b16 %v1005
  %v2283 = vunpack.c.l.b16 %v1006
  %v2284 = vunpack.c.h.b16 %v1006
  %v2285 = vunpack.c.l.b16 %v1007
  %v2286 = vunpack.c.h.b16 %v1007
  %v2287 = vunpack.c.l.b16 %v1008
  %v2288 = vunpack.c.h.b16 %v1008
  %v2289 = vunpack.c.l.b16 %v1009
  %v2290 = vunpack.c.h.b16 %v1009
  %v2291 = vunpack.c.l.b16 %v1010
  %v2292 = vunpack.c.h.b16 %v1010
  %v2293 = vunpack.c.l.b16 %v1011
  %v2294 = vunpack.c.h.b16 %v1011
  %v2295 = vunpack.c.l.b16 %v1012
  %v2296 = vunpack.c.l.b16 %v1013
  %v2297 = vunpack.c.h.b16 %v1013
  %v2298 = vunpack.c.l.b16 %v1014
  %v2299 = vunpack.c.h.b16 %v1014
  %v2300 = vunpack.c.l.b16 %v1015
  %v2301 = vunpack.c.h.b16 %v1015
  %v2302 = vunpack.c.l.b16 %v1016
  %v2303 = vunpack.c.h.b16 %v1016
  %v2304 = vunpack.c.l.b16 %v1017
  %v2305 = vunpack.c.h.b16 %v1017
  %v2306 = vunpack.c.l.b16 %v1018
  %v2307 = vunpack.c.h.b16 %v1018
  %v2308 = vunpack.c.l.b16 %v1019
  %v2309 = vunpack.c.l.b16 %v1020
  %v2310 = vunpack.c.h.b16 %v1020
  %v2311 = vunpack.c.l.b16 %v1021
  %v2312 = vunpack.c.h.b16 %v1021
  %v2313 = vunpack.c.l.b16 %v1022
  %v2314 = vunpack.c.h.b16 %v1022
  %v2315 = vunpack.c.l.b16 %v1023
  %v2316 = vunpack.c.h.b16 %v1023
  %v2317 = vunpack.c.l.b16 %v1024
  %v2318 = vunpack.c.h.b16 %v1024
  %v2319 = vunpack.c.l.b16 %v1025
  %v2320 = vunpack.c.h.b16 %v1025
  %v2321 = vunpack.c.l.b16 %v1026
  %v2322 = vunpack.c.l.b16 %v1027
  %v2323 = vunpack.c.h.b16 %v1027
  %v2324 = vunpack.c.l.b16 %v1028
  %v2325 = vunpack.c.h.b16 %v1028
  %v2326 = vunpack.c.l.b16 %v1029
  %v2327 = vunpack.c.h.b16 %v1029
  %v2328 = vunpack.c.l.b16 %v1030
  %v2329 = vunpack.c.h.b16 %v1030
  %v2330 = vunpack.c.l.b16 %v1031
  %v2331 = vunpack.c.h.b16 %v1031
  %v2332 = vunpack.c.l.b16 %v1032
  %v2333 = vunpack.c.h.b16 %v1032
  %v2334 = vunpack.c.l.b16 %v1033
  %v2335 = vunpack.c.l.b16 %v1034
  %v2336 = vunpack.c.h.b16 %v1034
  %v2337 = vunpack.c.l.b16 %v1035
  %v2338 = vunpack.c.h.b16 %v1035
  %v2339 = vunpack.c.l.b16 %v1036
  %v2340 = vunpack.c.h.b16 %v1036
  %v2341 = vunpack.c.l.b16 %v1037
  %v2342 = vunpack.c.h.b16 %v1037
  %v2343 = vunpack.c.l.b16 %v1038
  %v2344 = vunpack.c.h.b16 %v1038
  %v2345 = vunpack.c.l.b16 %v1039
  %v2346 = vunpack.c.h.b16 %v1039
  %v2347 = vunpack.c.l.b16 %v1040
  %v2348 = vunpack.c.l.b16 %v1041
  %v2349 = vunpack.c.h.b16 %v1041
  %v2350 = vunpack.c.l.b16 %v1042
  %v2351 = vunpack.c.h.b16 %v1042
  %v2352 = vunpack.c.l.b16 %v1043
  %v2353 = vunpack.c.h.b16 %v1043
  %v2354 = vunpack.c.l.b16 %v1044
  %v2355 = vunpack.c.h.b16 %v1044
  %v2356 = vunpack.c.l.b16 %v1045
  %v2357 = vunpack.c.h.b16 %v1045
  %v2358 = vunpack.c.l.b16 %v1046
  %v2359 = vunpack.c.h.b16 %v1046
  %v2360 = vunpack.c.l.b16 %v1047
  %v2361 = vunpack.c.l.b16 %v1048
  %v2362 = vunpack.c.h.b16 %v1048
  %v2363 = vunpack.c.l.b16 %v1049
  %v2364 = vunpack.c.h.b16 %v1049
  %v2365 = vunpack.c.l.b16 %v1050
  %v2366 = vunpack.c.h.b16 %v1050
  %v2367 = vunpack.c.l.b16 %v1051
  %v2368 = vunpack.c.h.b16 %v1051
  %v2369 = vunpack.c.l.b16 %v1052
  %v2370 = vunpack.c.h.b16 %v1052
  %v2371 = vunpack.c.l.b16 %v1053
  %v2372 = vunpack.c.h.b16 %v1053
  %v2373 = vunpack.c.l.b16 %v1054
  %v2374 = vunpack.c.l.b16 %v1055
  %v2375 = vunpack.c.h.b16 %v1055
  %v2376 = vunpack.c.l.b16 %v1056
  %v2377 = vunpack.c.h.b16 %v1056
  %v2378 = vunpack.c.l.b16 %v1057
  %v2379 = vunpack.c.h.b16 %v1057
  %v2380 = vunpack.c.l.b16 %v1058
  %v2381 = vunpack.c.h.b16 %v1058
  %v2382 = vunpack.c.l.b16 %v1059
  %v2383 = vunpack.c.h.b16 %v1059
  %v2384 = vunpack.c.l.b16 %v1060
  %v2385 = vunpack.c.h.b16 %v1060
  %v2386 = vunpack.c.l.b16 %v1061
  %v2387 = vunpack.c.l.b16 %v1062
  %v2388 = vunpack.c.h.b16 %v1062
  %v2389 = vunpack.c.l.b16 %v1063
  %v2390 = vunpack.c.h.b16 %v1063
  %v2391 = vunpack.c.l.b16 %v1064
  %v2392 = vunpack.c.h.b16 %v1064
  %v2393 = vunpack.c.l.b16 %v1065
  %v2394 = vunpack.c.h.b16 %v1065
  %v2395 = vunpack.c.l.b16 %v1066
  %v2396 = vunpack.c.h.b16 %v1066
  %v2397 = vunpack.c.l.b16 %v1067
  %v2398 = vunpack.c.h.b16 %v1067
  %v2399 = vunpack.c.l.b16 %v1068
  %v2400 = vunpack.c.l.b16 %v1069
  %v2401 = vunpack.c.h.b16 %v1069
  %v2402 = vunpack.c.l.b16 %v1070
  %v2403 = vunpack.c.h.b16 %v1070
  %v2404 = vunpack.c.l.b16 %v1071
  %v2405 = vunpack.c.h.b16 %v1071
  %v2406 = vunpack.c.l.b16 %v1072
  %v2407 = vunpack.c.h.b16 %v1072
  %v2408 = vunpack.c.l.b16 %v1073
  %v2409 = vunpack.c.h.b16 %v1073
  %v2410 = vunpack.c.l.b16 %v1074
  %v2411 = vunpack.c.h.b16 %v1074
  %v2412 = vunpack.c.l.b16 %v1075
  %v2413 = vunpack.c.l.b16 %v1076
  %v2414 = vunpack.c.h.b16 %v1076
  %v2415 = vunpack.c.l.b16 %v1077
  %v2416 = vunpack.c.h.b16 %v1077
  %v2417 = vunpack.c.l.b16 %v1078
  %v2418 = vunpack.c.h.b16 %v1078
  %v2419 = vunpack.c.l.b16 %v1079
  %v2420 = vunpack.c.h.b16 %v1079
  %v2421 = vunpack.c.l.b16 %v1080
  %v2422 = vunpack.c.h.b16 %v1080
  %v2423 = vunpack.c.l.b16 %v1081
  %v2424 = vunpack.c.h.b16 %v1081
  %v2425 = vunpack.c.l.b16 %v1082
  %v2426 = vunpack.c.l.b16 %v1083
  %v2427 = vunpack.c.h.b16 %v1083
  %v2428 = vunpack.c.l.b16 %v1084
  %v2429 = vunpack.c.h.b16 %v1084
  %v2430 = vunpack.c.l.b16 %v1085
  %v2431 = vunpack.c.h.b16 %v1085
  %v2432 = vunpack.c.l.b16 %v1086
  %v2433 = vunpack.c.h.b16 %v1086
  %v2434 = vunpack.c.l.b16 %v1087
  %v2435 = vunpack.c.h.b16 %v1087
  %v2436 = vunpack.c.l.b16 %v1088
  %v2437 = vunpack.c.h.b16 %v1088
  %v2438 = vunpack.c.l.b16 %v1089
  %v2439 = vpack.c.b16 %v1620, %v1607
  %v2440 = vpack.c.b16 %v1621, %v1608
  %v2441 = vpack.c.b16 %v1622, %v1609
  %v2442 = vpack.c.b16 %v1623, %v1610
  %v2443 = vpack.c.b16 %v1624, %v1611
  %v2444 = vpack.c.b16 %v1625, %v1612
  %v2445 = vpack.c.b16 %v1626, %v1613
  %v2446 = vpack.c.b16 %v1627, %v1614
  %v2447 = vpack.c.b16 %v1628, %v1615
  %v2448 = vpack.c.b16 %v1629, %v1616
  %v2449 = vpack.c.b16 %v1630, %v1617
  %v2450 = vpack.c.b16 %v1631, %v1618
  %v2451 = vpack.c.b16 %v1632, %v1619
  %v2452 = vpack.c.b16 %v1646, %v1633
  %v2453 = vpack.c.b16 %v1647, %v1634
  %v2454 = vpack.c.b16 %v1648, %v1635
  %v2455 = vpack.c.b16 %v1649, %v1636
  %v2456 = vpack.c.b16 %v1650, %v1637
  %v2457 = vpack.c.b16 %v1651, %v1638
  %v2458 = vpack.c.b16 %v1652, %v1639
  %v2459 = vpack.c.b16 %v1653, %v1640
  %v2460 = vpack.c.b16 %v1654, %v1641
  %v2461 = vpack.c.b16 %v1655, %v1642
  %v2462 = vpack.c.b16 %v1656, %v1643
  %v2463 = vpack.c.b16 %v1657, %v1644
  %v2464 = vpack.c.b16 %v1658, %v1645
  %v2465 = vpack.c.b16 %v1672, %v1659
  %v2466 = vpack.c.b16 %v1673, %v1660
  %v2467 = vpack.c.b16 %v1674, %v1661
  %v2468 = vpack.c.b16 %v1675, %v1662
  %v2469 = vpack.c.b16 %v1676, %v1663
  %v2470 = vpack.c.b16 %v1677, %v1664
  %v2471 = vpack.c.b16 %v1678, %v1665
  %v2472 = vpack.c.b16 %v1679, %v1666
  %v2473 = vpack.c.b16 %v1680, %v1667
  %v2474 = vpack.c.b16 %v1681, %v1668
  %v2475 = vpack.c.b16 %v1682, %v1669
  %v2476 = vpack.c.b16 %v1683, %v1670
  %v2477 = vpack.c.b16 %v1684, %v1671
  %v2478 = vpack.c.b16 %v1698, %v1685
  %v2479 = vpack.c.b16 %v1699, %v1686
  %v2480 = vpack.c.b16 %v1700, %v1687
  %v2481 = vpack.c.b16 %v1701, %v1688
  %v2482 = vpack.c.b16 %v1702, %v1689
  %v2483 = vpack.c.b16 %v1703, %v1690
  %v2484 = vpack.c.b16 %v1704, %v1691
  %v2485 = vpack.c.b16 %v1705, %v1692
  %v2486 = vpack.c.b16 %v1706, %v1693
  %v2487 = vpack.c.b16 %v1707, %v1694
  %v2488 = vpack.c.b16 %v1708, %v1695
  %v2489 = vpack.c.b16 %v1709, %v1696
  %v2490 = vpack.c.b16 %v1710, %v1697
  %v2491 = vpack.c.b16 %v1724, %v1711
  %v2492 = vpack.c.b16 %v1725, %v1712
  %v2493 = vpack.c.b16 %v1726, %v1713
  %v2494 = vpack.c.b16 %v1727, %v1714
  %v2495 = vpack.c.b16 %v1728, %v1715
  %v2496 = vpack.c.b16 %v1729, %v1716
  %v2497 = vpack.c.b16 %v1730, %v1717
  %v2498 = vpack.c.b16 %v1731, %v1718
  %v2499 = vpack.c.b16 %v1732, %v1719
  %v2500 = vpack.c.b16 %v1733, %v1720
  %v2501 = vpack.c.b16 %v1734, %v1721
  %v2502 = vpack.c.b16 %v1735, %v1722
  %v2503 = vpack.c.b16 %v1736, %v1723
  %v2504 = vpack.c.b16 %v1750, %v1737
  %v2505 = vpack.c.b16 %v1751, %v1738
  %v2506 = vpack.c.b16 %v1752, %v1739
  %v2507 = vpack.c.b16 %v1753, %v1740
  %v2508 = vpack.c.b16 %v1754, %v1741
  %v2509 = vpack.c.b16 %v1755, %v1742
  %v2510 = vpack.c.b16 %v1756, %v1743
  %v2511 = vpack.c.b16 %v1757, %v1744
  %v2512 = vpack.c.b16 %v1758, %v1745
  %v2513 = vpack.c.b16 %v1759, %v1746
  %v2514 = vpack.c.b16 %v1760, %v1747
  %v2515 = vpack.c.b16 %v1761, %v1748
  %v2516 = vpack.c.b16 %v1762, %v1749
  %v2517 = vpack.c.b16 %v1776, %v1763
  %v2518 = vpack.c.b16 %v1777, %v1764
  %v2519 = vpack.c.b16 %v1778, %v1765
  %v2520 = vpack.c.b16 %v1779, %v1766
  %v2521 = vpack.c.b16 %v1780, %v1767
  %v2522 = vpack.c.b16 %v1781, %v1768
  %v2523 = vpack.c.b16 %v1782, %v1769
  %v2524 = vpack.c.b16 %v1783, %v1770
  %v2525 = vpack.c.b16 %v1784, %v1771
  %v2526 = vpack.c.b16 %v1785, %v1772
  %v2527 = vpack.c.b16 %v1786, %v1773
  %v2528 = vpack.c.b16 %v1787, %v1774
  %v2529 = vpack.c.b16 %v1788, %v1775
  %v2530 = vpack.c.b16 %v1802, %v1789
  %v2531 = vpack.c.b16 %v1803, %v1790
  %v2532 = vpack.c.b16 %v1804, %v1791
  %v2533 = vpack.c.b16 %v1805, %v1792
  %v2534 = vpack.c.b16 %v1806, %v1793
  %v2535 = vpack.c.b16 %v1807, %v1794
  %v2536 = vpack.c.b16 %v1808, %v1795
  %v2537 = vpack.c.b16 %v1809, %v1796
  %v2538 = vpack.c.b16 %v1810, %v1797
  %v2539 = vpack.c.b16 %v1811, %v1798
  %v2540 = vpack.c.b16 %v1812, %v1799
  %v2541 = vpack.c.b16 %v1813, %v1800
  %v2542 = vpack.c.b16 %v1814, %v1801
  %v2543 = vpack.c.b16 %v1828, %v1815
  %v2544 = vpack.c.b16 %v1829, %v1816
  %v2545 = vpack.c.b16 %v1830, %v1817
  %v2546 = vpack.c.b16 %v1831, %v1818
  %v2547 = vpack.c.b16 %v1832, %v1819
  %v2548 = vpack.c.b16 %v1833, %v1820
  %v2549 = vpack.c.b16 %v1834, %v1821
  %v2550 = vpack.c.b16 %v1835, %v1822
  %v2551 = vpack.c.b16 %v1836, %v1823
  %v2552 = vpack.c.b16 %v1837, %v1824
  %v2553 = vpack.c.b16 %v1838, %v1825
  %v2554 = vpack.c.b16 %v1839, %v1826
  %v2555 = vpack.c.b16 %v1840, %v1827
  %v2556 = vpack.c.b16 %v1854, %v1841
  %v2557 = vpack.c.b16 %v1855, %v1842
  %v2558 = vpack.c.b16 %v1856, %v1843
  %v2559 = vpack.c.b16 %v1857, %v1844
  %v2560 = vpack.c.b16 %v1858, %v1845
  %v2561 = vpack.c.b16 %v1859, %v1846
  %v2562 = vpack.c.b16 %v1860, %v1847
  %v2563 = vpack.c.b16 %v1861, %v1848
  %v2564 = vpack.c.b16 %v1862, %v1849
  %v2565 = vpack.c.b16 %v1863, %v1850
  %v2566 = vpack.c.b16 %v1864, %v1851
  %v2567 = vpack.c.b16 %v1865, %v1852
  %v2568 = vpack.c.b16 %v1866, %v1853
  %v2569 = vpack.c.b16 %v1880, %v1867
  %v2570 = vpack.c.b16 %v1881, %v1868
  %v2571 = vpack.c.b16 %v1882, %v1869
  %v2572 = vpack.c.b16 %v1883, %v1870
  %v2573 = vpack.c.b16 %v1884, %v1871
  %v2574 = vpack.c.b16 %v1885, %v1872
  %v2575 = vpack.c.b16 %v1886, %v1873
  %v2576 = vpack.c.b16 %v1887, %v1874
  %v2577 = vpack.c.b16 %v1888, %v1875
  %v2578 = vpack.c.b16 %v1889, %v1876
  %v2579 = vpack.c.b16 %v1890, %v1877
  %v2580 = vpack.c.b16 %v1891, %v1878
  %v2581 = vpack.c.b16 %v1892, %v1879
  %v2582 = vpack.c.b16 %v1906, %v1893
  %v2583 = vpack.c.b16 %v1907, %v1894
  %v2584 = vpack.c.b16 %v1908, %v1895
  %v2585 = vpack.c.b16 %v1909, %v1896
  %v2586 = vpack.c.b16 %v1910, %v1897
  %v2587 = vpack.c.b16 %v1911, %v1898
  %v2588 = vpack.c.b16 %v1912, %v1899
  %v2589 = vpack.c.b16 %v1913, %v1900
  %v2590 = vpack.c.b16 %v1914, %v1901
  %v2591 = vpack.c.b16 %v1915, %v1902
  %v2592 = vpack.c.b16 %v1916, %v1903
  %v2593 = vpack.c.b16 %v1917, %v1904
  %v2594 = vpack.c.b16 %v1918, %v1905
  %v2595 = vpack.c.b16 %v1932, %v1919
  %v2596 = vpack.c.b16 %v1933, %v1920
  %v2597 = vpack.c.b16 %v1934, %v1921
  %v2598 = vpack.c.b16 %v1935, %v1922
  %v2599 = vpack.c.b16 %v1936, %v1923
  %v2600 = vpack.c.b16 %v1937, %v1924
  %v2601 = vpack.c.b16 %v1938, %v1925
  %v2602 = vpack.c.b16 %v1939, %v1926
  %v2603 = vpack.c.b16 %v1940, %v1927
  %v2604 = vpack.c.b16 %v1941, %v1928
  %v2605 = vpack.c.b16 %v1942, %v1929
  %v2606 = vpack.c.b16 %v1943, %v1930
  %v2607 = vpack.c.b16 %v1944, %v1931
  %v2608 = vpack.c.b16 %v1958, %v1945
  %v2609 = vpack.c.b16 %v1959, %v1946
  %v2610 = vpack.c.b16 %v1960, %v1947
  %v2611 = vpack.c.b16 %v1961, %v1948
  %v2612 = vpack.c.b16 %v1962, %v1949
  %v2613 = vpack.c.b16 %v1963, %v1950
  %v2614 = vpack.c.b16 %v1964, %v1951
  %v2615 = vpack.c.b16 %v1965, %v1952
  %v2616 = vpack.c.b16 %v1966, %v1953
  %v2617 = vpack.c.b16 %v1967, %v1954
  %v2618 = vpack.c.b16 %v1968, %v1955
  %v2619 = vpack.c.b16 %v1969, %v1956
  %v2620 = vpack.c.b16 %v1970, %v1957
  %v2621 = vpack.c.b16 %v1984, %v1971
  %v2622 = vpack.c.b16 %v1985, %v1972
  %v2623 = vpack.c.b16 %v1986, %v1973
  %v2624 = vpack.c.b16 %v1987, %v1974
  %v2625 = vpack.c.b16 %v1988, %v1975
  %v2626 = vpack.c.b16 %v1989, %v1976
  %v2627 = vpack.c.b16 %v1990, %v1977
  %v2628 = vpack.c.b16 %v1991, %v1978
  %v2629 = vpack.c.b16 %v1992, %v1979
  %v2630 = vpack.c.b16 %v1993, %v1980
  %v2631 = vpack.c.b16 %v1994, %v1981
  %v2632 = vpack.c.b16 %v1995, %v1982
  %v2633 = vpack.c.b16 %v1996, %v1983
  %v2634 = vpack.c.b16 %v2010, %v1997
  %v2635 = vpack.c.b16 %v2011, %v1998
  %v2636 = vpack.c.b16 %v2012, %v1999
  %v2637 = vpack.c.b16 %v2013, %v2000
  %v2638 = vpack.c.b16 %v2014, %v2001
  %v2639 = vpack.c.b16 %v2015, %v2002
  %v2640 = vpack.c.b16 %v2016, %v2003
  %v2641 = vpack.c.b16 %v2017, %v2004
  %v2642 = vpack.c.b16 %v2018, %v2005
  %v2643 = vpack.c.b16 %v2019, %v2006
  %v2644 = vpack.c.b16 %v2020, %v2007
  %v2645 = vpack.c.b16 %v2021, %v2008
  %v2646 = vpack.c.b16 %v2022, %v2009
  %v2647 = vpack.c.b16 %v2036, %v2023
  %v2648 = vpack.c.b16 %v2037, %v2024
  %v2649 = vpack.c.b16 %v2038, %v2025
  %v2650 = vpack.c.b16 %v2039, %v2026
  %v2651 = vpack.c.b16 %v2040, %v2027
  %v2652 = vpack.c.b16 %v2041, %v2028
  %v2653 = vpack.c.b16 %v2042, %v2029
  %v2654 = vpack.c.b16 %v2043, %v2030
  %v2655 = vpack.c.b16 %v2044, %v2031
  %v2656 = vpack.c.b16 %v2045, %v2032
  %v2657 = vpack.c.b16 %v2046, %v2033
  %v2658 = vpack.c.b16 %v2047, %v2034
  %v2659 = vpack.c.b16 %v2048, %v2035
  %v2660 = vpack.c.b16 %v2062, %v2049
  %v2661 = vpack.c.b16 %v2063, %v2050
  %v2662 = vpack.c.b16 %v2064, %v2051
  %v2663 = vpack.c.b16 %v2065, %v2052
  %v2664 = vpack.c.b16 %v2066, %v2053
  %v2665 = vpack.c.b16 %v2067, %v2054
  %v2666 = vpack.c.b16 %v2068, %v2055
  %v2667 = vpack.c.b16 %v2069, %v2056
  %v2668 = vpack.c.b16 %v2070, %v2057
  %v2669 = vpack.c.b16 %v2071, %v2058
  %v2670 = vpack.c.b16 %v2072, %v2059
  %v2671 = vpack.c.b16 %v2073, %v2060
  %v2672 = vpack.c.b16 %v2074, %v2061
  %v2673 = vpack.c.b16 %v2088, %v2075
  %v2674 = vpack.c.b16 %v2089, %v2076
  %v2675 = vpack.c.b16 %v2090, %v2077
  %v2676 = vpack.c.b16 %v2091, %v2078
  %v2677 = vpack.c.b16 %v2092, %v2079
  %v2678 = vpack.c.b16 %v2093, %v2080
  %v2679 = vpack.c.b16 %v2094, %v2081
  %v2680 = vpack.c.b16 %v2095, %v2082
  %v2681 = vpack.c.b16 %v2096, %v2083
  %v2682 = vpack.c.b16 %v2097, %v2084
  %v2683 = vpack.c.b16 %v2098, %v2085
  %v2684 = vpack.c.b16 %v2099, %v2086
  %v2685 = vpack.c.b16 %v2100, %v2087
  %v2686 = vpack.c.b16 %v2114, %v2101
  %v2687 = vpack.c.b16 %v2115, %v2102
  %v2688 = vpack.c.b16 %v2116, %v2103
  %v2689 = vpack.c.b16 %v2117, %v2104
  %v2690 = vpack.c.b16 %v2118, %v2105
  %v2691 = vpack.c.b16 %v2119, %v2106
  %v2692 = vpack.c.b16 %v2120, %v2107
  %v2693 = vpack.c.b16 %v2121, %v2108
  %v2694 = vpack.c.b16 %v2122, %v2109
  %v2695 = vpack.c.b16 %v2123, %v2110
  %v2696 = vpack.c.b16 %v2124, %v2111
  %v2697 = vpack.c.b16 %v2125, %v2112
  %v2698 = vpack.c.b16 %v2126, %v2113
  %v2699 = vpack.c.b16 %v2140, %v2127
  %v2700 = vpack.c.b16 %v2141, %v2128
  %v2701 = vpack.c.b16 %v2142, %v2129
  %v2702 = vpack.c.b16 %v2143, %v2130
  %v2703 = vpack.c.b16 %v2144, %v2131
  %v2704 = vpack.c.b16 %v2145, %v2132
  %v2705 = vpack.c.b16 %v2146, %v2133
  %v2706 = vpack.c.b16 %v2147, %v2134
  %v2707 = vpack.c.b16 %v2148, %v2135
  %v2708 = vpack.c.b16 %v2149, %v2136
  %v2709 = vpack.c.b16 %v2150, %v2137
  %v2710 = vpack.c.b16 %v2151, %v2138
  %v2711 = vpack.c.b16 %v2152, %v2139
  %v2712 = vpack.c.b16 %v2166, %v2153
  %v2713 = vpack.c.b16 %v2167, %v2154
  %v2714 = vpack.c.b16 %v2168, %v2155
  %v2715 = vpack.c.b16 %v2169, %v2156
  %v2716 = vpack.c.b16 %v2170, %v2157
  %v2717 = vpack.c.b16 %v2171, %v2158
  %v2718 = vpack.c.b16 %v2172, %v2159
  %v2719 = vpack.c.b16 %v2173, %v2160
  %v2720 = vpack.c.b16 %v2174, %v2161
  %v2721 = vpack.c.b16 %v2175, %v2162
  %v2722 = vpack.c.b16 %v2176, %v2163
  %v2723 = vpack.c.b16 %v2177, %v2164
  %v2724 = vpack.c.b16 %v2178, %v2165
  %v2725 = vpack.c.b16 %v2192, %v2179
  %v2726 = vpack.c.b16 %v2193, %v2180
  %v2727 = vpack.c.b16 %v2194, %v2181
  %v2728 = vpack.c.b16 %v2195, %v2182
  %v2729 = vpack.c.b16 %v2196, %v2183
  %v2730 = vpack.c.b16 %v2197, %v2184
  %v2731 = vpack.c.b16 %v2198, %v2185
  %v2732 = vpack.c.b16 %v2199, %v2186
  %v2733 = vpack.c.b16 %v2200, %v2187
  %v2734 = vpack.c.b16 %v2201, %v2188
  %v2735 = vpack.c.b16 %v2202, %v2189
  %v2736 = vpack.c.b16 %v2203, %v2190
  %v2737 = vpack.c.b16 %v2204, %v2191
  %v2738 = vpack.c.b16 %v2218, %v2205
  %v2739 = vpack.c.b16 %v2219, %v2206
  %v2740 = vpack.c.b16 %v2220, %v2207
  %v2741 = vpack.c.b16 %v2221, %v2208
  %v2742 = vpack.c.b16 %v2222, %v2209
  %v2743 = vpack.c.b16 %v2223, %v2210
  %v2744 = vpack.c.b16 %v2224, %v2211
  %v2745 = vpack.c.b16 %v2225, %v2212
  %v2746 = vpack.c.b16 %v2226, %v2213
  %v2747 = vpack.c.b16 %v2227, %v2214
  %v2748 = vpack.c.b16 %v2228, %v2215
  %v2749 = vpack.c.b16 %v2229, %v2216
  %v2750 = vpack.c.b16 %v2230, %v2217
  %v2751 = vpack.c.b16 %v2244, %v2231
  %v2752 = vpack.c.b16 %v2245, %v2232
  %v2753 = vpack.c.b16 %v2246, %v2233
  %v2754 = vpack.c.b16 %v2247, %v2234
  %v2755 = vpack.c.b16 %v2248, %v2235
  %v2756 = vpack.c.b16 %v2249, %v2236
  %v2757 = vpack.c.b16 %v2250, %v2237
  %v2758 = vpack.c.b16 %v2251, %v2238
  %v2759 = vpack.c.b16 %v2252, %v2239
  %v2760 = vpack.c.b16 %v2253, %v2240
  %v2761 = vpack.c.b16 %v2254, %v2241
  %v2762 = vpack.c.b16 %v2255, %v2242
  %v2763 = vpack.c.b16 %v2256, %v2243
  %v2764 = vpack.c.b16 %v2270, %v2257
  %v2765 = vpack.c.b16 %v2271, %v2258
  %v2766 = vpack.c.b16 %v2272, %v2259
  %v2767 = vpack.c.b16 %v2273, %v2260
  %v2768 = vpack.c.b16 %v2274, %v2261
  %v2769 = vpack.c.b16 %v2275, %v2262
  %v2770 = vpack.c.b16 %v2276, %v2263
  %v2771 = vpack.c.b16 %v2277, %v2264
  %v2772 = vpack.c.b16 %v2278, %v2265
  %v2773 = vpack.c.b16 %v2279, %v2266
  %v2774 = vpack.c.b16 %v2280, %v2267
  %v2775 = vpack.c.b16 %v2281, %v2268
  %v2776 = vpack.c.b16 %v2282, %v2269
  %v2777 = vpack.c.b16 %v2296, %v2283
  %v2778 = vpack.c.b16 %v2297, %v2284
  %v2779 = vpack.c.b16 %v2298, %v2285
  %v2780 = vpack.c.b16 %v2299, %v2286
  %v2781 = vpack.c.b16 %v2300, %v2287
  %v2782 = vpack.c.b16 %v2301, %v2288
  %v2783 = vpack.c.b16 %v2302, %v2289
  %v2784 = vpack.c.b16 %v2303, %v2290
  %v2785 = vpack.c.b16 %v2304, %v2291
  %v2786 = vpack.c.b16 %v2305, %v2292
  %v2787 = vpack.c.b16 %v2306, %v2293
  %v2788 = vpack.c.b16 %v2307, %v2294
  %v2789 = vpack.c.b16 %v2308, %v2295
  %v2790 = vpack.c.b16 %v2322, %v2309
  %v2791 = vpack.c.b16 %v2323, %v2310
  %v2792 = vpack.c.b16 %v2324, %v2311
  %v2793 = vpack.c.b16 %v2325, %v2312
  %v2794 = vpack.c.b16 %v2326, %v2313
  %v2795 = vpack.c.b16 %v2327, %v2314
  %v2796 = vpack.c.b16 %v2328, %v2315
  %v2797 = vpack.c.b16 %v2329, %v2316
  %v2798 = vpack.c.b16 %v2330, %v2317
  %v2799 = vpack.c.b16 %v2331, %v2318
  %v2800 = vpack.c.b16 %v2332, %v2319
  %v2801 = vpack.c.b16 %v2333, %v2320
  %v2802 = vpack.c.b16 %v2334, %v2321
  %v2803 = vpack.c.b16 %v2348, %v2335
  %v2804 = vpack.c.b16 %v2349, %v2336
  %v2805 = vpack.c.b16 %v2350, %v2337
  %v2806 = vpack.c.b16 %v2351, %v2338
  %v2807 = vpack.c.b16 %v2352, %v2339
  %v2808 = vpack.c.b16 %v2353, %v2340
  %v2809 = vpack.c.b16 %v2354, %v2341
  %v2810 = vpack.c.b16 %v2355, %v2342
  %v2811 = vpack.c.b16 %v2356, %v2343
  %v2812 = vpack.c.b16 %v2357, %v2344
  %v2813 = vpack.c.b16 %v2358, %v2345
  %v2814 = vpack.c.b16 %v2359, %v2346
  %v2815 = vpack.c.b16 %v2360, %v2347
  %v2816 = vpack.c.b16 %v2374, %v2361
  %v2817 = vpack.c.b16 %v2375, %v2362
  %v2818 = vpack.c.b16 %v2376, %v2363
  %v2819 = vpack.c.b16 %v2377, %v2364
  %v2820 = vpack.c.b16 %v2378, %v2365
  %v2821 = vpack.c.b16 %v2379, %v2366
  %v2822 = vpack.c.b16 %v2380, %v2367
  %v2823 = vpack.c.b16 %v2381, %v2368
  %v2824 = vpack.c.b16 %v2382, %v2369
  %v2825 = vpack.c.b16 %v2383, %v2370
  %v2826 = vpack.c.b16 %v2384, %v2371
  %v2827 = vpack.c.b16 %v2385, %v2372
  %v2828 = vpack.c.b16 %v2386, %v2373
  %v2829 = vpack.c.b16 %v2400, %v2387
  %v2830 = vpack.c.b16 %v2401, %v2388
  %v2831 = vpack.c.b16 %v2402, %v2389
  %v2832 = vpack.c.b16 %v2403, %v2390
  %v2833 = vpack.c.b16 %v2404, %v2391
  %v2834 = vpack.c.b16 %v2405, %v2392
  %v2835 = vpack.c.b16 %v2406, %v2393
  %v2836 = vpack.c.b16 %v2407, %v2394
  %v2837 = vpack.c.b16 %v2408, %v2395
  %v2838 = vpack.c.b16 %v2409, %v2396
  %v2839 = vpack.c.b16 %v2410, %v2397
  %v2840 = vpack.c.b16 %v2411, %v2398
  %v2841 = vpack.c.b16 %v2412, %v2399
  %v2842 = vpack.c.b16 %v2426, %v2413
  %v2843 = vpack.c.b16 %v2427, %v2414
  %v2844 = vpack.c.b16 %v2428, %v2415
  %v2845 = vpack.c.b16 %v2429, %v2416
  %v2846 = vpack.c.b16 %v2430, %v2417
  %v2847 = vpack.c.b16 %v2431, %v2418
  %v2848 = vpack.c.b16 %v2432, %v2419
  %v2849 = vpack.c.b16 %v2433, %v2420
  %v2850 = vpack.c.b16 %v2434, %v2421
  %v2851 = vpack.c.b16 %v2435, %v2422
  %v2852 = vpack.c.b16 %v2436, %v2423
  %v2853 = vpack.c.b16 %v2437, %v2424
  %v2854 = vpack.c.b16 %v2438, %v2425
  %3271 = vmatprep.subr.bf16.mxu0 %v2531
  %3272 = vmatpush1.bf16.msra.mxu0 %v2530
  %3273 = vmatprep.subr.bf16.mxu0 %v2518
  %3274 = vmatpush1.bf16.msra.mxu0 %v2517
  %3275 = vmatprep.subr.bf16.mxu0 %v2505
  %3276 = vmatpush1.bf16.msra.mxu0 %v2504
  %3277 = vmatprep.subr.bf16.mxu0 %v2492
  %3278 = vmatpush1.bf16.msra.mxu0 %v2491
  %3279 = vmatprep.subr.bf16.mxu0 %v2479
  %3280 = vmatpush1.bf16.msra.mxu0 %v2478
  %3281 = vmatprep.subr.bf16.mxu0 %v2466
  %3282 = vmatpush1.bf16.msra.mxu0 %v2465
  %3283 = vmatprep.subr.bf16.mxu0 %v2453
  %3284 = vmatpush1.bf16.msra.mxu0 %v2452
  %3285 = vmatprep.subr.bf16.mxu0 %v2440
  %3286 = vmatpush1.bf16.msra.mxu0 %v2439
  %3287 = vmatprep.subr.bf16.mxu0 %v2635
  %3288 = vmatpush2.bf16.msra.mxu0 %v2634
  %3289 = vmatprep.subr.bf16.mxu0 %v2622
  %3290 = vmatpush2.bf16.msra.mxu0 %v2621
  %3291 = vmatprep.subr.bf16.mxu0 %v2609
  %3292 = vmatpush2.bf16.msra.mxu0 %v2608
  %3293 = vmatprep.subr.bf16.mxu0 %v2596
  %3294 = vmatpush2.bf16.msra.mxu0 %v2595
  %3295 = vmatprep.subr.bf16.mxu0 %v2583
  %3296 = vmatpush2.bf16.msra.mxu0 %v2582
  %3297 = vmatprep.subr.bf16.mxu0 %v2570
  %3298 = vmatpush2.bf16.msra.mxu0 %v2569
  %3299 = vmatprep.subr.bf16.mxu0 %v2557
  %3300 = vmatpush2.bf16.msra.mxu0 %v2556
  %3301 = vmatprep.subr.bf16.mxu0 %v2544
  %3302 = vmatpush2.bf16.msra.mxu0 %v2543
  %3303 = vmatprep.mubr.bf16.mxu0 %v639
  %3304 = vmatmul.mubr.bf16.gmra.mxu0 %v638
  %v3305 = vpop.f32.mrf.mxu0
  %v3306 = vadd.f32 %v1097, %v3305
  %v3307 = vpop.f32.mrf.mxu0
  %v3308 = vadd.f32 %v1101, %v3307
  %v3309 = vpop.f32.mrf.mxu0
  %v3310 = vpop.f32.mrf.mxu0
  %3311 = vdwg.mxu0
  %3312 = vmatprep.subr.bf16.mxu0 %v2739
  %3313 = vmatpush1.bf16.msra.mxu0 %v2738
  %3314 = vmatprep.subr.bf16.mxu0 %v2726
  %3315 = vmatpush1.bf16.msra.mxu0 %v2725
  %3316 = vmatprep.subr.bf16.mxu0 %v2713
  %3317 = vmatpush1.bf16.msra.mxu0 %v2712
  %3318 = vmatprep.subr.bf16.mxu0 %v2700
  %3319 = vmatpush1.bf16.msra.mxu0 %v2699
  %3320 = vmatprep.subr.bf16.mxu0 %v2687
  %3321 = vmatpush1.bf16.msra.mxu0 %v2686
  %3322 = vmatprep.subr.bf16.mxu0 %v2674
  %3323 = vmatpush1.bf16.msra.mxu0 %v2673
  %3324 = vmatprep.subr.bf16.mxu0 %v2661
  %3325 = vmatpush1.bf16.msra.mxu0 %v2660
  %3326 = vmatprep.subr.bf16.mxu0 %v2648
  %3327 = vmatpush1.bf16.msra.mxu0 %v2647
  %3328 = vmatprep.subr.bf16.mxu0 %v2843
  %3329 = vmatpush2.bf16.msra.mxu0 %v2842
  %3330 = vmatprep.subr.bf16.mxu0 %v2830
  %3331 = vmatpush2.bf16.msra.mxu0 %v2829
  %3332 = vmatprep.subr.bf16.mxu0 %v2817
  %3333 = vmatpush2.bf16.msra.mxu0 %v2816
  %3334 = vmatprep.subr.bf16.mxu0 %v2804
  %3335 = vmatpush2.bf16.msra.mxu0 %v2803
  %3336 = vmatprep.subr.bf16.mxu0 %v2791
  %3337 = vmatpush2.bf16.msra.mxu0 %v2790
  %3338 = vmatprep.subr.bf16.mxu0 %v2778
  %3339 = vmatpush2.bf16.msra.mxu0 %v2777
  %3340 = vmatprep.subr.bf16.mxu0 %v2765
  %3341 = vmatpush2.bf16.msra.mxu0 %v2764
  %3342 = vmatprep.subr.bf16.mxu0 %v2752
  %3343 = vmatpush2.bf16.msra.mxu0 %v2751
  %3344 = vmatprep.mubr.bf16.mxu0 %v641
  %3345 = vmatmul.mubr.bf16.gmra.mxu0 %v640
  %v3346 = vpop.f32.mrf.mxu0
  %v3347 = vadd.f32 %v3306, %v3346
  %v3348 = vpop.f32.mrf.mxu0
  %v3349 = vadd.f32 %v3308, %v3348
  %v3350 = vpop.f32.mrf.mxu0
  %v3351 = vpop.f32.mrf.mxu0
  %3352 = vdwg.mxu0
  %3353 = vmatprep.subr.bf16.mxu0 %v2533
  %3354 = vmatpush1.bf16.msra.mxu0 %v2532
  %3355 = vmatprep.subr.bf16.mxu0 %v2520
  %3356 = vmatpush1.bf16.msra.mxu0 %v2519
  %3357 = vmatprep.subr.bf16.mxu0 %v2507
  %3358 = vmatpush1.bf16.msra.mxu0 %v2506
  %3359 = vmatprep.subr.bf16.mxu0 %v2494
  %3360 = vmatpush1.bf16.msra.mxu0 %v2493
  %3361 = vmatprep.subr.bf16.mxu0 %v2481
  %3362 = vmatpush1.bf16.msra.mxu0 %v2480
  %3363 = vmatprep.subr.bf16.mxu0 %v2468
  %3364 = vmatpush1.bf16.msra.mxu0 %v2467
  %3365 = vmatprep.subr.bf16.mxu0 %v2455
  %3366 = vmatpush1.bf16.msra.mxu0 %v2454
  %3367 = vmatprep.subr.bf16.mxu0 %v2442
  %3368 = vmatpush1.bf16.msra.mxu0 %v2441
  %3369 = vmatprep.subr.bf16.mxu0 %v2637
  %3370 = vmatpush2.bf16.msra.mxu0 %v2636
  %3371 = vmatprep.subr.bf16.mxu0 %v2624
  %3372 = vmatpush2.bf16.msra.mxu0 %v2623
  %3373 = vmatprep.subr.bf16.mxu0 %v2611
  %3374 = vmatpush2.bf16.msra.mxu0 %v2610
  %3375 = vmatprep.subr.bf16.mxu0 %v2598
  %3376 = vmatpush2.bf16.msra.mxu0 %v2597
  %3377 = vmatprep.subr.bf16.mxu0 %v2585
  %3378 = vmatpush2.bf16.msra.mxu0 %v2584
  %3379 = vmatprep.subr.bf16.mxu0 %v2572
  %3380 = vmatpush2.bf16.msra.mxu0 %v2571
  %3381 = vmatprep.subr.bf16.mxu0 %v2559
  %3382 = vmatpush2.bf16.msra.mxu0 %v2558
  %3383 = vmatprep.subr.bf16.mxu0 %v2546
  %3384 = vmatpush2.bf16.msra.mxu0 %v2545
  %3385 = vmatprep.mubr.bf16.mxu0 %v639
  %3386 = vmatmul.mubr.bf16.gmra.mxu0 %v638
  %v3387 = vpop.f32.mrf.mxu0
  %v3388 = vadd.f32 %v1105, %v3387
  %v3389 = vpop.f32.mrf.mxu0
  %v3390 = vadd.f32 %v1109, %v3389
  %v3391 = vpop.f32.mrf.mxu0
  %v3392 = vpop.f32.mrf.mxu0
  %3393 = vdwg.mxu0
  %3394 = vmatprep.subr.bf16.mxu0 %v2741
  %3395 = vmatpush1.bf16.msra.mxu0 %v2740
  %3396 = vmatprep.subr.bf16.mxu0 %v2728
  %3397 = vmatpush1.bf16.msra.mxu0 %v2727
  %3398 = vmatprep.subr.bf16.mxu0 %v2715
  %3399 = vmatpush1.bf16.msra.mxu0 %v2714
  %3400 = vmatprep.subr.bf16.mxu0 %v2702
  %3401 = vmatpush1.bf16.msra.mxu0 %v2701
  %3402 = vmatprep.subr.bf16.mxu0 %v2689
  %3403 = vmatpush1.bf16.msra.mxu0 %v2688
  %3404 = vmatprep.subr.bf16.mxu0 %v2676
  %3405 = vmatpush1.bf16.msra.mxu0 %v2675
  %3406 = vmatprep.subr.bf16.mxu0 %v2663
  %3407 = vmatpush1.bf16.msra.mxu0 %v2662
  %3408 = vmatprep.subr.bf16.mxu0 %v2650
  %3409 = vmatpush1.bf16.msra.mxu0 %v2649
  %3410 = vmatprep.subr.bf16.mxu0 %v2845
  %3411 = vmatpush2.bf16.msra.mxu0 %v2844
  %3412 = vmatprep.subr.bf16.mxu0 %v2832
  %3413 = vmatpush2.bf16.msra.mxu0 %v2831
  %3414 = vmatprep.subr.bf16.mxu0 %v2819
  %3415 = vmatpush2.bf16.msra.mxu0 %v2818
  %3416 = vmatprep.subr.bf16.mxu0 %v2806
  %3417 = vmatpush2.bf16.msra.mxu0 %v2805
  %3418 = vmatprep.subr.bf16.mxu0 %v2793
  %3419 = vmatpush2.bf16.msra.mxu0 %v2792
  %3420 = vmatprep.subr.bf16.mxu0 %v2780
  %3421 = vmatpush2.bf16.msra.mxu0 %v2779
  %3422 = vmatprep.subr.bf16.mxu0 %v2767
  %3423 = vmatpush2.bf16.msra.mxu0 %v2766
  %3424 = vmatprep.subr.bf16.mxu0 %v2754
  %3425 = vmatpush2.bf16.msra.mxu0 %v2753
  %3426 = vmatprep.mubr.bf16.mxu0 %v641
  %3427 = vmatmul.mubr.bf16.gmra.mxu0 %v640
  %v3428 = vpop.f32.mrf.mxu0
  %v3429 = vadd.f32 %v3388, %v3428
  %v3430 = vpop.f32.mrf.mxu0
  %v3431 = vadd.f32 %v3390, %v3430
  %v3432 = vpop.f32.mrf.mxu0
  %v3433 = vpop.f32.mrf.mxu0
  %3434 = vdwg.mxu0
  %3435 = vmatprep.subr.bf16.mxu0 %v2535
  %3436 = vmatpush1.bf16.msra.mxu0 %v2534
  %3437 = vmatprep.subr.bf16.mxu0 %v2522
  %3438 = vmatpush1.bf16.msra.mxu0 %v2521
  %3439 = vmatprep.subr.bf16.mxu0 %v2509
  %3440 = vmatpush1.bf16.msra.mxu0 %v2508
  %3441 = vmatprep.subr.bf16.mxu0 %v2496
  %3442 = vmatpush1.bf16.msra.mxu0 %v2495
  %3443 = vmatprep.subr.bf16.mxu0 %v2483
  %3444 = vmatpush1.bf16.msra.mxu0 %v2482
  %3445 = vmatprep.subr.bf16.mxu0 %v2470
  %3446 = vmatpush1.bf16.msra.mxu0 %v2469
  %3447 = vmatprep.subr.bf16.mxu0 %v2457
  %3448 = vmatpush1.bf16.msra.mxu0 %v2456
  %3449 = vmatprep.subr.bf16.mxu0 %v2444
  %3450 = vmatpush1.bf16.msra.mxu0 %v2443
  %3451 = vmatprep.subr.bf16.mxu0 %v2639
  %3452 = vmatpush2.bf16.msra.mxu0 %v2638
  %3453 = vmatprep.subr.bf16.mxu0 %v2626
  %3454 = vmatpush2.bf16.msra.mxu0 %v2625
  %3455 = vmatprep.subr.bf16.mxu0 %v2613
  %3456 = vmatpush2.bf16.msra.mxu0 %v2612
  %3457 = vmatprep.subr.bf16.mxu0 %v2600
  %3458 = vmatpush2.bf16.msra.mxu0 %v2599
  %3459 = vmatprep.subr.bf16.mxu0 %v2587
  %3460 = vmatpush2.bf16.msra.mxu0 %v2586
  %3461 = vmatprep.subr.bf16.mxu0 %v2574
  %3462 = vmatpush2.bf16.msra.mxu0 %v2573
  %3463 = vmatprep.subr.bf16.mxu0 %v2561
  %3464 = vmatpush2.bf16.msra.mxu0 %v2560
  %3465 = vmatprep.subr.bf16.mxu0 %v2548
  %3466 = vmatpush2.bf16.msra.mxu0 %v2547
  %3467 = vmatprep.mubr.bf16.mxu0 %v639
  %3468 = vmatmul.mubr.bf16.gmra.mxu0 %v638
  %v3469 = vpop.f32.mrf.mxu0
  %v3470 = vadd.f32 %v1113, %v3469
  %v3471 = vpop.f32.mrf.mxu0
  %v3472 = vadd.f32 %v1117, %v3471
  %v3473 = vpop.f32.mrf.mxu0
  %v3474 = vpop.f32.mrf.mxu0
  %3475 = vdwg.mxu0
  %3476 = vmatprep.subr.bf16.mxu0 %v2743
  %3477 = vmatpush1.bf16.msra.mxu0 %v2742
  %3478 = vmatprep.subr.bf16.mxu0 %v2730
  %3479 = vmatpush1.bf16.msra.mxu0 %v2729
  %3480 = vmatprep.subr.bf16.mxu0 %v2717
  %3481 = vmatpush1.bf16.msra.mxu0 %v2716
  %3482 = vmatprep.subr.bf16.mxu0 %v2704
  %3483 = vmatpush1.bf16.msra.mxu0 %v2703
  %3484 = vmatprep.subr.bf16.mxu0 %v2691
  %3485 = vmatpush1.bf16.msra.mxu0 %v2690
  %3486 = vmatprep.subr.bf16.mxu0 %v2678
  %3487 = vmatpush1.bf16.msra.mxu0 %v2677
  %3488 = vmatprep.subr.bf16.mxu0 %v2665
  %3489 = vmatpush1.bf16.msra.mxu0 %v2664
  %3490 = vmatprep.subr.bf16.mxu0 %v2652
  %3491 = vmatpush1.bf16.msra.mxu0 %v2651
  %3492 = vmatprep.subr.bf16.mxu0 %v2847
  %3493 = vmatpush2.bf16.msra.mxu0 %v2846
  %3494 = vmatprep.subr.bf16.mxu0 %v2834
  %3495 = vmatpush2.bf16.msra.mxu0 %v2833
  %3496 = vmatprep.subr.bf16.mxu0 %v2821
  %3497 = vmatpush2.bf16.msra.mxu0 %v2820
  %3498 = vmatprep.subr.bf16.mxu0 %v2808
  %3499 = vmatpush2.bf16.msra.mxu0 %v2807
  %3500 = vmatprep.subr.bf16.mxu0 %v2795
  %3501 = vmatpush2.bf16.msra.mxu0 %v2794
  %3502 = vmatprep.subr.bf16.mxu0 %v2782
  %3503 = vmatpush2.bf16.msra.mxu0 %v2781
  %3504 = vmatprep.subr.bf16.mxu0 %v2769
  %3505 = vmatpush2.bf16.msra.mxu0 %v2768
  %3506 = vmatprep.subr.bf16.mxu0 %v2756
  %3507 = vmatpush2.bf16.msra.mxu0 %v2755
  %3508 = vmatprep.mubr.bf16.mxu0 %v641
  %3509 = vmatmul.mubr.bf16.gmra.mxu0 %v640
  %v3510 = vpop.f32.mrf.mxu0
  %v3511 = vadd.f32 %v3470, %v3510
  %v3512 = vpop.f32.mrf.mxu0
  %v3513 = vadd.f32 %v3472, %v3512
  %v3514 = vpop.f32.mrf.mxu0
  %v3515 = vpop.f32.mrf.mxu0
  %3516 = vdwg.mxu0
  %3517 = vmatprep.subr.bf16.mxu0 %v2537
  %3518 = vmatpush1.bf16.msra.mxu0 %v2536
  %3519 = vmatprep.subr.bf16.mxu0 %v2524
  %3520 = vmatpush1.bf16.msra.mxu0 %v2523
  %3521 = vmatprep.subr.bf16.mxu0 %v2511
  %3522 = vmatpush1.bf16.msra.mxu0 %v2510
  %3523 = vmatprep.subr.bf16.mxu0 %v2498
  %3524 = vmatpush1.bf16.msra.mxu0 %v2497
  %3525 = vmatprep.subr.bf16.mxu0 %v2485
  %3526 = vmatpush1.bf16.msra.mxu0 %v2484
  %3527 = vmatprep.subr.bf16.mxu0 %v2472
  %3528 = vmatpush1.bf16.msra.mxu0 %v2471
  %3529 = vmatprep.subr.bf16.mxu0 %v2459
  %3530 = vmatpush1.bf16.msra.mxu0 %v2458
  %3531 = vmatprep.subr.bf16.mxu0 %v2446
  %3532 = vmatpush1.bf16.msra.mxu0 %v2445
  %3533 = vmatprep.subr.bf16.mxu0 %v2641
  %3534 = vmatpush2.bf16.msra.mxu0 %v2640
  %3535 = vmatprep.subr.bf16.mxu0 %v2628
  %3536 = vmatpush2.bf16.msra.mxu0 %v2627
  %3537 = vmatprep.subr.bf16.mxu0 %v2615
  %3538 = vmatpush2.bf16.msra.mxu0 %v2614
  %3539 = vmatprep.subr.bf16.mxu0 %v2602
  %3540 = vmatpush2.bf16.msra.mxu0 %v2601
  %3541 = vmatprep.subr.bf16.mxu0 %v2589
  %3542 = vmatpush2.bf16.msra.mxu0 %v2588
  %3543 = vmatprep.subr.bf16.mxu0 %v2576
  %3544 = vmatpush2.bf16.msra.mxu0 %v2575
  %3545 = vmatprep.subr.bf16.mxu0 %v2563
  %3546 = vmatpush2.bf16.msra.mxu0 %v2562
  %3547 = vmatprep.subr.bf16.mxu0 %v2550
  %3548 = vmatpush2.bf16.msra.mxu0 %v2549
  %3549 = vmatprep.mubr.bf16.mxu0 %v639
  %3550 = vmatmul.mubr.bf16.gmra.mxu0 %v638
  %v3551 = vpop.f32.mrf.mxu0
  %v3552 = vadd.f32 %v1121, %v3551
  %v3553 = vpop.f32.mrf.mxu0
  %v3554 = vadd.f32 %v1125, %v3553
  %v3555 = vpop.f32.mrf.mxu0
  %v3556 = vpop.f32.mrf.mxu0
  %3557 = vdwg.mxu0
  %3558 = vmatprep.subr.bf16.mxu0 %v2745
  %3559 = vmatpush1.bf16.msra.mxu0 %v2744
  %3560 = vmatprep.subr.bf16.mxu0 %v2732
  %3561 = vmatpush1.bf16.msra.mxu0 %v2731
  %3562 = vmatprep.subr.bf16.mxu0 %v2719
  %3563 = vmatpush1.bf16.msra.mxu0 %v2718
  %3564 = vmatprep.subr.bf16.mxu0 %v2706
  %3565 = vmatpush1.bf16.msra.mxu0 %v2705
  %3566 = vmatprep.subr.bf16.mxu0 %v2693
  %3567 = vmatpush1.bf16.msra.mxu0 %v2692
  %3568 = vmatprep.subr.bf16.mxu0 %v2680
  %3569 = vmatpush1.bf16.msra.mxu0 %v2679
  %3570 = vmatprep.subr.bf16.mxu0 %v2667
  %3571 = vmatpush1.bf16.msra.mxu0 %v2666
  %3572 = vmatprep.subr.bf16.mxu0 %v2654
  %3573 = vmatpush1.bf16.msra.mxu0 %v2653
  %3574 = vmatprep.subr.bf16.mxu0 %v2849
  %3575 = vmatpush2.bf16.msra.mxu0 %v2848
  %3576 = vmatprep.subr.bf16.mxu0 %v2836
  %3577 = vmatpush2.bf16.msra.mxu0 %v2835
  %3578 = vmatprep.subr.bf16.mxu0 %v2823
  %3579 = vmatpush2.bf16.msra.mxu0 %v2822
  %3580 = vmatprep.subr.bf16.mxu0 %v2810
  %3581 = vmatpush2.bf16.msra.mxu0 %v2809
  %3582 = vmatprep.subr.bf16.mxu0 %v2797
  %3583 = vmatpush2.bf16.msra.mxu0 %v2796
  %3584 = vmatprep.subr.bf16.mxu0 %v2784
  %3585 = vmatpush2.bf16.msra.mxu0 %v2783
  %3586 = vmatprep.subr.bf16.mxu0 %v2771
  %3587 = vmatpush2.bf16.msra.mxu0 %v2770
  %3588 = vmatprep.subr.bf16.mxu0 %v2758
  %3589 = vmatpush2.bf16.msra.mxu0 %v2757
  %3590 = vmatprep.mubr.bf16.mxu0 %v641
  %3591 = vmatmul.mubr.bf16.gmra.mxu0 %v640
  %v3592 = vpop.f32.mrf.mxu0
  %v3593 = vadd.f32 %v3552, %v3592
  %v3594 = vpop.f32.mrf.mxu0
  %v3595 = vadd.f32 %v3554, %v3594
  %v3596 = vpop.f32.mrf.mxu0
  %v3597 = vpop.f32.mrf.mxu0
  %3598 = vdwg.mxu0
  %3599 = vmatprep.subr.bf16.mxu0 %v2539
  %3600 = vmatpush1.bf16.msra.mxu0 %v2538
  %3601 = vmatprep.subr.bf16.mxu0 %v2526
  %3602 = vmatpush1.bf16.msra.mxu0 %v2525
  %3603 = vmatprep.subr.bf16.mxu0 %v2513
  %3604 = vmatpush1.bf16.msra.mxu0 %v2512
  %3605 = vmatprep.subr.bf16.mxu0 %v2500
  %3606 = vmatpush1.bf16.msra.mxu0 %v2499
  %3607 = vmatprep.subr.bf16.mxu0 %v2487
  %3608 = vmatpush1.bf16.msra.mxu0 %v2486
  %3609 = vmatprep.subr.bf16.mxu0 %v2474
  %3610 = vmatpush1.bf16.msra.mxu0 %v2473
  %3611 = vmatprep.subr.bf16.mxu0 %v2461
  %3612 = vmatpush1.bf16.msra.mxu0 %v2460
  %3613 = vmatprep.subr.bf16.mxu0 %v2448
  %3614 = vmatpush1.bf16.msra.mxu0 %v2447
  %3615 = vmatprep.subr.bf16.mxu0 %v2643
  %3616 = vmatpush2.bf16.msra.mxu0 %v2642
  %3617 = vmatprep.subr.bf16.mxu0 %v2630
  %3618 = vmatpush2.bf16.msra.mxu0 %v2629
  %3619 = vmatprep.subr.bf16.mxu0 %v2617
  %3620 = vmatpush2.bf16.msra.mxu0 %v2616
  %3621 = vmatprep.subr.bf16.mxu0 %v2604
  %3622 = vmatpush2.bf16.msra.mxu0 %v2603
  %3623 = vmatprep.subr.bf16.mxu0 %v2591
  %3624 = vmatpush2.bf16.msra.mxu0 %v2590
  %3625 = vmatprep.subr.bf16.mxu0 %v2578
  %3626 = vmatpush2.bf16.msra.mxu0 %v2577
  %3627 = vmatprep.subr.bf16.mxu0 %v2565
  %3628 = vmatpush2.bf16.msra.mxu0 %v2564
  %3629 = vmatprep.subr.bf16.mxu0 %v2552
  %3630 = vmatpush2.bf16.msra.mxu0 %v2551
  %3631 = vmatprep.mubr.bf16.mxu0 %v639
  %3632 = vmatmul.mubr.bf16.gmra.mxu0 %v638
  %v3633 = vpop.f32.mrf.mxu0
  %v3634 = vadd.f32 %v1129, %v3633
  %v3635 = vpop.f32.mrf.mxu0
  %v3636 = vadd.f32 %v1133, %v3635
  %v3637 = vpop.f32.mrf.mxu0
  %v3638 = vpop.f32.mrf.mxu0
  %3639 = vdwg.mxu0
  %3640 = vmatprep.subr.bf16.mxu0 %v2747
  %3641 = vmatpush1.bf16.msra.mxu0 %v2746
  %3642 = vmatprep.subr.bf16.mxu0 %v2734
  %3643 = vmatpush1.bf16.msra.mxu0 %v2733
  %3644 = vmatprep.subr.bf16.mxu0 %v2721
  %3645 = vmatpush1.bf16.msra.mxu0 %v2720
  %3646 = vmatprep.subr.bf16.mxu0 %v2708
  %3647 = vmatpush1.bf16.msra.mxu0 %v2707
  %3648 = vmatprep.subr.bf16.mxu0 %v2695
  %3649 = vmatpush1.bf16.msra.mxu0 %v2694
  %3650 = vmatprep.subr.bf16.mxu0 %v2682
  %3651 = vmatpush1.bf16.msra.mxu0 %v2681
  %3652 = vmatprep.subr.bf16.mxu0 %v2669
  %3653 = vmatpush1.bf16.msra.mxu0 %v2668
  %3654 = vmatprep.subr.bf16.mxu0 %v2656
  %3655 = vmatpush1.bf16.msra.mxu0 %v2655
  %3656 = vmatprep.subr.bf16.mxu0 %v2851
  %3657 = vmatpush2.bf16.msra.mxu0 %v2850
  %3658 = vmatprep.subr.bf16.mxu0 %v2838
  %3659 = vmatpush2.bf16.msra.mxu0 %v2837
  %3660 = vmatprep.subr.bf16.mxu0 %v2825
  %3661 = vmatpush2.bf16.msra.mxu0 %v2824
  %3662 = vmatprep.subr.bf16.mxu0 %v2812
  %3663 = vmatpush2.bf16.msra.mxu0 %v2811
  %3664 = vmatprep.subr.bf16.mxu0 %v2799
  %3665 = vmatpush2.bf16.msra.mxu0 %v2798
  %3666 = vmatprep.subr.bf16.mxu0 %v2786
  %3667 = vmatpush2.bf16.msra.mxu0 %v2785
  %3668 = vmatprep.subr.bf16.mxu0 %v2773
  %3669 = vmatpush2.bf16.msra.mxu0 %v2772
  %3670 = vmatprep.subr.bf16.mxu0 %v2760
  %3671 = vmatpush2.bf16.msra.mxu0 %v2759
  %3672 = vmatprep.mubr.bf16.mxu0 %v641
  %3673 = vmatmul.mubr.bf16.gmra.mxu0 %v640
  %v3674 = vpop.f32.mrf.mxu0
  %v3675 = vadd.f32 %v3634, %v3674
  %v3676 = vpop.f32.mrf.mxu0
  %v3677 = vadd.f32 %v3636, %v3676
  %v3678 = vpop.f32.mrf.mxu0
  %v3679 = vpop.f32.mrf.mxu0
  %3680 = vdwg.mxu0
  %3681 = vmatprep.subr.bf16.mxu0 %v2541
  %3682 = vmatpush1.bf16.msra.mxu0 %v2540
  %3683 = vmatprep.subr.bf16.mxu0 %v2528
  %3684 = vmatpush1.bf16.msra.mxu0 %v2527
  %3685 = vmatprep.subr.bf16.mxu0 %v2515
  %3686 = vmatpush1.bf16.msra.mxu0 %v2514
  %3687 = vmatprep.subr.bf16.mxu0 %v2502
  %3688 = vmatpush1.bf16.msra.mxu0 %v2501
  %3689 = vmatprep.subr.bf16.mxu0 %v2489
  %3690 = vmatpush1.bf16.msra.mxu0 %v2488
  %3691 = vmatprep.subr.bf16.mxu0 %v2476
  %3692 = vmatpush1.bf16.msra.mxu0 %v2475
  %3693 = vmatprep.subr.bf16.mxu0 %v2463
  %3694 = vmatpush1.bf16.msra.mxu0 %v2462
  %3695 = vmatprep.subr.bf16.mxu0 %v2450
  %3696 = vmatpush1.bf16.msra.mxu0 %v2449
  %3697 = vmatprep.subr.bf16.mxu0 %v2645
  %3698 = vmatpush2.bf16.msra.mxu0 %v2644
  %3699 = vmatprep.subr.bf16.mxu0 %v2632
  %3700 = vmatpush2.bf16.msra.mxu0 %v2631
  %3701 = vmatprep.subr.bf16.mxu0 %v2619
  %3702 = vmatpush2.bf16.msra.mxu0 %v2618
  %3703 = vmatprep.subr.bf16.mxu0 %v2606
  %3704 = vmatpush2.bf16.msra.mxu0 %v2605
  %3705 = vmatprep.subr.bf16.mxu0 %v2593
  %3706 = vmatpush2.bf16.msra.mxu0 %v2592
  %3707 = vmatprep.subr.bf16.mxu0 %v2580
  %3708 = vmatpush2.bf16.msra.mxu0 %v2579
  %3709 = vmatprep.subr.bf16.mxu0 %v2567
  %3710 = vmatpush2.bf16.msra.mxu0 %v2566
  %3711 = vmatprep.subr.bf16.mxu0 %v2554
  %3712 = vmatpush2.bf16.msra.mxu0 %v2553
  %3713 = vmatprep.mubr.bf16.mxu0 %v639
  %3714 = vmatmul.mubr.bf16.gmra.mxu0 %v638
  %v3715 = vpop.f32.mrf.mxu0
  %v3716 = vadd.f32 %v1137, %v3715
  %v3717 = vpop.f32.mrf.mxu0
  %v3718 = vadd.f32 %v1141, %v3717
  %v3719 = vpop.f32.mrf.mxu0
  %v3720 = vpop.f32.mrf.mxu0
  %3721 = vdwg.mxu0
  %3722 = vmatprep.subr.bf16.mxu0 %v2749
  %3723 = vmatpush1.bf16.msra.mxu0 %v2748
  %3724 = vmatprep.subr.bf16.mxu0 %v2736
  %3725 = vmatpush1.bf16.msra.mxu0 %v2735
  %3726 = vmatprep.subr.bf16.mxu0 %v2723
  %3727 = vmatpush1.bf16.msra.mxu0 %v2722
  %3728 = vmatprep.subr.bf16.mxu0 %v2710
  %3729 = vmatpush1.bf16.msra.mxu0 %v2709
  %3730 = vmatprep.subr.bf16.mxu0 %v2697
  %3731 = vmatpush1.bf16.msra.mxu0 %v2696
  %3732 = vmatprep.subr.bf16.mxu0 %v2684
  %3733 = vmatpush1.bf16.msra.mxu0 %v2683
  %3734 = vmatprep.subr.bf16.mxu0 %v2671
  %3735 = vmatpush1.bf16.msra.mxu0 %v2670
  %3736 = vmatprep.subr.bf16.mxu0 %v2658
  %3737 = vmatpush1.bf16.msra.mxu0 %v2657
  %3738 = vmatprep.subr.bf16.mxu0 %v2853
  %3739 = vmatpush2.bf16.msra.mxu0 %v2852
  %3740 = vmatprep.subr.bf16.mxu0 %v2840
  %3741 = vmatpush2.bf16.msra.mxu0 %v2839
  %3742 = vmatprep.subr.bf16.mxu0 %v2827
  %3743 = vmatpush2.bf16.msra.mxu0 %v2826
  %3744 = vmatprep.subr.bf16.mxu0 %v2814
  %3745 = vmatpush2.bf16.msra.mxu0 %v2813
  %3746 = vmatprep.subr.bf16.mxu0 %v2801
  %3747 = vmatpush2.bf16.msra.mxu0 %v2800
  %3748 = vmatprep.subr.bf16.mxu0 %v2788
  %3749 = vmatpush2.bf16.msra.mxu0 %v2787
  %3750 = vmatprep.subr.bf16.mxu0 %v2775
  %3751 = vmatpush2.bf16.msra.mxu0 %v2774
  %3752 = vmatprep.subr.bf16.mxu0 %v2762
  %3753 = vmatpush2.bf16.msra.mxu0 %v2761
  %3754 = vmatprep.mubr.bf16.mxu0 %v641
  %3755 = vmatmul.mubr.bf16.gmra.mxu0 %v640
  %v3756 = vpop.f32.mrf.mxu0
  %v3757 = vadd.f32 %v3716, %v3756
  %v3758 = vpop.f32.mrf.mxu0
  %v3759 = vadd.f32 %v3718, %v3758
  %v3760 = vpop.f32.mrf.mxu0
  %v3761 = vpop.f32.mrf.mxu0
  %3762 = vdwg.mxu0
  %3763 = vmatprep.subr.bf16.mxu0 0
  %3764 = vmatpush1.bf16.msra.mxu0 %v2542
  %3765 = vmatprep.subr.bf16.mxu0 0
  %3766 = vmatpush1.bf16.msra.mxu0 %v2529
  %3767 = vmatprep.subr.bf16.mxu0 0
  %3768 = vmatpush1.bf16.msra.mxu0 %v2516
  %3769 = vmatprep.subr.bf16.mxu0 0
  %3770 = vmatpush1.bf16.msra.mxu0 %v2503
  %3771 = vmatprep.subr.bf16.mxu0 0
  %3772 = vmatpush1.bf16.msra.mxu0 %v2490
  %3773 = vmatprep.subr.bf16.mxu0 0
  %3774 = vmatpush1.bf16.msra.mxu0 %v2477
  %3775 = vmatprep.subr.bf16.mxu0 0
  %3776 = vmatpush1.bf16.msra.mxu0 %v2464
  %3777 = vmatprep.subr.bf16.mxu0 0
  %3778 = vmatpush1.bf16.msra.mxu0 %v2451
  %3779 = vmatprep.subr.bf16.mxu0 0
  %3780 = vmatpush2.bf16.msra.mxu0 %v2646
  %3781 = vmatprep.subr.bf16.mxu0 0
  %3782 = vmatpush2.bf16.msra.mxu0 %v2633
  %3783 = vmatprep.subr.bf16.mxu0 0
  %3784 = vmatpush2.bf16.msra.mxu0 %v2620
  %3785 = vmatprep.subr.bf16.mxu0 0
  %3786 = vmatpush2.bf16.msra.mxu0 %v2607
  %3787 = vmatprep.subr.bf16.mxu0 0
  %3788 = vmatpush2.bf16.msra.mxu0 %v2594
  %3789 = vmatprep.subr.bf16.mxu0 0
  %3790 = vmatpush2.bf16.msra.mxu0 %v2581
  %3791 = vmatprep.subr.bf16.mxu0 0
  %3792 = vmatpush2.bf16.msra.mxu0 %v2568
  %3793 = vmatprep.subr.bf16.mxu0 0
  %3794 = vmatpush2.bf16.msra.mxu0 %v2555
  %3795 = vmatprep.mubr.bf16.mxu0 %v639
  %3796 = vmatmul.mubr.bf16.gmra.mxu0 %v638
  %v3797 = vpop.f32.mrf.mxu0
  %v3798 = vadd.f32 %v1145, %v3797
  %v3799 = vpop.f32.mrf.mxu0
  %v3800 = vpop.f32.mrf.mxu0
  %v3801 = vpop.f32.mrf.mxu0
  %3802 = vdwg.mxu0
  %3803 = vmatprep.subr.bf16.mxu0 0
  %3804 = vmatpush1.bf16.msra.mxu0 %v2750
  %3805 = vmatprep.subr.bf16.mxu0 0
  %3806 = vmatpush1.bf16.msra.mxu0 %v2737
  %3807 = vmatprep.subr.bf16.mxu0 0
  %3808 = vmatpush1.bf16.msra.mxu0 %v2724
  %3809 = vmatprep.subr.bf16.mxu0 0
  %3810 = vmatpush1.bf16.msra.mxu0 %v2711
  %3811 = vmatprep.subr.bf16.mxu0 0
  %3812 = vmatpush1.bf16.msra.mxu0 %v2698
  %3813 = vmatprep.subr.bf16.mxu0 0
  %3814 = vmatpush1.bf16.msra.mxu0 %v2685
  %3815 = vmatprep.subr.bf16.mxu0 0
  %3816 = vmatpush1.bf16.msra.mxu0 %v2672
  %3817 = vmatprep.subr.bf16.mxu0 0
  %3818 = vmatpush1.bf16.msra.mxu0 %v2659
  %3819 = vmatprep.subr.bf16.mxu0 0
  %3820 = vmatpush2.bf16.msra.mxu0 %v2854
  %3821 = vmatprep.subr.bf16.mxu0 0
  %3822 = vmatpush2.bf16.msra.mxu0 %v2841
  %3823 = vmatprep.subr.bf16.mxu0 0
  %3824 = vmatpush2.bf16.msra.mxu0 %v2828
  %3825 = vmatprep.subr.bf16.mxu0 0
  %3826 = vmatpush2.bf16.msra.mxu0 %v2815
  %3827 = vmatprep.subr.bf16.mxu0 0
  %3828 = vmatpush2.bf16.msra.mxu0 %v2802
  %3829 = vmatprep.subr.bf16.mxu0 0
  %3830 = vmatpush2.bf16.msra.mxu0 %v2789
  %3831 = vmatprep.subr.bf16.mxu0 0
  %3832 = vmatpush2.bf16.msra.mxu0 %v2776
  %3833 = vmatprep.subr.bf16.mxu0 0
  %3834 = vmatpush2.bf16.msra.mxu0 %v2763
  %3835 = vmatprep.mubr.bf16.mxu0 %v641
  %3836 = vmatmul.mubr.bf16.gmra.mxu0 %v640
  %v3837 = vpop.f32.mrf.mxu0
  %v3838 = vadd.f32 %v3798, %v3837
  %v3839 = vpop.f32.mrf.mxu0
  %v3840 = vpop.f32.mrf.mxu0
  %v3841 = vpop.f32.mrf.mxu0
  %3842 = vdwg.mxu0
  %vm3843 = vcmp.gt.f32.partialorder %v3347, 0.0
  %vm3844 = vcmp.gt.f32.partialorder %v3349, 0.0
  %vm3845 = vcmp.gt.f32.partialorder %v3429, 0.0
  %vm3846 = vcmp.gt.f32.partialorder %v3431, 0.0
  %vm3847 = vcmp.gt.f32.partialorder %v3511, 0.0
  %vm3848 = vcmp.gt.f32.partialorder %v3513, 0.0
  %vm3849 = vcmp.gt.f32.partialorder %v3593, 0.0
  %vm3850 = vcmp.gt.f32.partialorder %v3595, 0.0
  %vm3851 = vcmp.gt.f32.partialorder %v3675, 0.0
  %vm3852 = vcmp.gt.f32.partialorder %v3677, 0.0
  %vm3853 = vcmp.gt.f32.partialorder %v3757, 0.0
  %vm3854 = vcmp.gt.f32.partialorder %v3759, 0.0
  %vm3855 = vcmp.gt.f32.partialorder %v3838, 0.0
  %v3856 = vmin.f32 %v3347, 0.0
  %v3857 = vmin.f32 %v3349, 0.0
  %v3858 = vmin.f32 %v3429, 0.0
  %v3859 = vmin.f32 %v3431, 0.0
  %v3860 = vmin.f32 %v3511, 0.0
  %v3861 = vmin.f32 %v3513, 0.0
  %v3862 = vmin.f32 %v3593, 0.0
  %v3863 = vmin.f32 %v3595, 0.0
  %v3864 = vmin.f32 %v3675, 0.0
  %v3865 = vmin.f32 %v3677, 0.0
  %v3866 = vmin.f32 %v3757, 0.0
  %v3867 = vmin.f32 %v3759, 0.0
  %v3868 = vmin.f32 %v3838, 0.0
  %v3869 = vmul.f32 %v3856, 1.442695
  %v3870 = vpow.pop %v3869
  %v3871 = vmul.f32 %v3857, 1.442695
  %v3872 = vpow.pop %v3871
  %v3873 = vmul.f32 %v3858, 1.442695
  %v3874 = vpow.pop %v3873
  %v3875 = vmul.f32 %v3859, 1.442695
  %v3876 = vpow.pop %v3875
  %v3877 = vmul.f32 %v3860, 1.442695
  %v3878 = vpow.pop %v3877
  %v3879 = vmul.f32 %v3861, 1.442695
  %v3880 = vpow.pop %v3879
  %v3881 = vmul.f32 %v3862, 1.442695
  %v3882 = vpow.pop %v3881
  %v3883 = vmul.f32 %v3863, 1.442695
  %v3884 = vpow.pop %v3883
  %v3885 = vmul.f32 %v3864, 1.442695
  %v3886 = vpow.pop %v3885
  %v3887 = vmul.f32 %v3865, 1.442695
  %v3888 = vpow.pop %v3887
  %v3889 = vmul.f32 %v3866, 1.442695
  %v3890 = vpow.pop %v3889
  %v3891 = vmul.f32 %v3867, 1.442695
  %v3892 = vpow.pop %v3891
  %v3893 = vmul.f32 %v3868, 1.442695
  %v3894 = vpow.pop %v3893
  %v3895 = vsub.f32 %v3870, 1.0
  %v3896 = vsub.f32 %v3872, 1.0
  %v3897 = vsub.f32 %v3874, 1.0
  %v3898 = vsub.f32 %v3876, 1.0
  %v3899 = vsub.f32 %v3878, 1.0
  %v3900 = vsub.f32 %v3880, 1.0
  %v3901 = vsub.f32 %v3882, 1.0
  %v3902 = vsub.f32 %v3884, 1.0
  %v3903 = vsub.f32 %v3886, 1.0
  %v3904 = vsub.f32 %v3888, 1.0
  %v3905 = vsub.f32 %v3890, 1.0
  %v3906 = vsub.f32 %v3892, 1.0
  %v3907 = vsub.f32 %v3894, 1.0
  %v3908 = vsel %vm3843, %v3347, %v3895
  %v3909 = vsel %vm3844, %v3349, %v3896
  %v3910 = vsel %vm3845, %v3429, %v3897
  %v3911 = vsel %vm3846, %v3431, %v3898
  %v3912 = vsel %vm3847, %v3511, %v3899
  %v3913 = vsel %vm3848, %v3513, %v3900
  %v3914 = vsel %vm3849, %v3593, %v3901
  %v3915 = vsel %vm3850, %v3595, %v3902
  %v3916 = vsel %vm3851, %v3675, %v3903
  %v3917 = vsel %vm3852, %v3677, %v3904
  %v3918 = vsel %vm3853, %v3757, %v3905
  %v3919 = vsel %vm3854, %v3759, %v3906
  %v3920 = vsel %vm3855, %v3838, %v3907
  %v3921 = vpack.c.bf16 %v3908, %v3908
  %v3922 = vpack.c.bf16 %v3909, %v3909
  %v3923 = vpack.c.bf16 %v3910, %v3910
  %v3924 = vpack.c.bf16 %v3911, %v3911
  %v3925 = vpack.c.bf16 %v3912, %v3912
  %v3926 = vpack.c.bf16 %v3913, %v3913
  %v3927 = vpack.c.bf16 %v3914, %v3914
  %v3928 = vpack.c.bf16 %v3915, %v3915
  %v3929 = vpack.c.bf16 %v3916, %v3916
  %v3930 = vpack.c.bf16 %v3917, %v3917
  %v3931 = vpack.c.bf16 %v3918, %v3918
  %v3932 = vpack.c.bf16 %v3919, %v3919
  %v3933 = vpack.c.bf16 %v3920, %v3920
  %v3934 = vld [vmem:[%s5] sm:$0xff]
  %v3935 = vld [vmem:[%s5 + $0x8] sm:$0xff]
  %v3936 = vld [vmem:[%s5 + $0x10] sm:$0xff]
  %v3937 = vld [vmem:[%s5 + $0x18] sm:$0xf]
  %v3938 = vld [vmem:[%s5 + $0x1c] sm:$0xff]
  %v3939 = vld [vmem:[%s5 + $0x24] sm:$0xff]
  %v3940 = vld [vmem:[%s5 + $0x2c] sm:$0xff]
  %v3941 = vld [vmem:[%s5 + $0x34] sm:$0xf]
  %v3942 = vld [vmem:[%s5 + $0x38] sm:$0xff]
  %v3943 = vld [vmem:[%s5 + $0x40] sm:$0xff]
  %v3944 = vld [vmem:[%s5 + $0x48] sm:$0xff]
  %v3945 = vld [vmem:[%s5 + $0x50] sm:$0xf]
  %v3946 = vld [vmem:[%s5 + $0x54] sm:$0xff]
  %v3947 = vld [vmem:[%s5 + $0x5c] sm:$0xff]
  %v3948 = vld [vmem:[%s5 + $0x64] sm:$0xff]
  %v3949 = vld [vmem:[%s5 + $0x6c] sm:$0xf]
  %v3950 = vld [vmem:[%s5 + $0x70] sm:$0xff]
  %v3951 = vld [vmem:[%s5 + $0x78] sm:$0xff]
  %v3952 = vld [vmem:[%s5 + $0x80] sm:$0xff]
  %v3953 = vld [vmem:[%s5 + $0x88] sm:$0xf]
  %v3954 = vld [vmem:[%s5 + $0x8c] sm:$0xff]
  %v3955 = vld [vmem:[%s5 + $0x94] sm:$0xff]
  %v3956 = vld [vmem:[%s5 + $0x9c] sm:$0xff]
  %v3957 = vld [vmem:[%s5 + $0xa4] sm:$0xf]
  %v3958 = vld [vmem:[%s5 + $0xa8] sm:$0xff]
  %v3959 = vld [vmem:[%s5 + $0xb0] sm:$0xff]
  %v3960 = vld [vmem:[%s5 + $0xb8] sm:$0xff]
  %v3961 = vld [vmem:[%s5 + $0xc0] sm:$0xf]
  %v3962 = vld [vmem:[%s5 + $0xc4] sm:$0xff]
  %v3963 = vld [vmem:[%s5 + $0xcc] sm:$0xff]
  %v3964 = vld [vmem:[%s5 + $0xd4] sm:$0xff]
  %v3965 = vld [vmem:[%s5 + $0xdc] sm:$0xf]
  %v3966 = vld [vmem:[%s5 + $0xe0] sm:$0xff]
  %v3967 = vld [vmem:[%s5 + $0xe8] sm:$0xff]
  %v3968 = vld [vmem:[%s5 + $0xf0] sm:$0xff]
  %v3969 = vld [vmem:[%s5 + $0xf8] sm:$0xf]
  %v3970 = vld [vmem:[%s5 + $0xfc] sm:$0xff]
  %v3971 = vld [vmem:[%s5 + $0x104] sm:$0xff]
  %v3972 = vld [vmem:[%s5 + $0x10c] sm:$0xff]
  %v3973 = vld [vmem:[%s5 + $0x114] sm:$0xf]
  %v3974 = vld [vmem:[%s5 + $0x118] sm:$0xff]
  %v3975 = vld [vmem:[%s5 + $0x120] sm:$0xff]
  %v3976 = vld [vmem:[%s5 + $0x128] sm:$0xff]
  %v3977 = vld [vmem:[%s5 + $0x130] sm:$0xf]
  %v3978 = vld [vmem:[%s5 + $0x134] sm:$0xff]
  %v3979 = vld [vmem:[%s5 + $0x13c] sm:$0xff]
  %v3980 = vld [vmem:[%s5 + $0x144] sm:$0xff]
  %v3981 = vld [vmem:[%s5 + $0x14c] sm:$0xf]
  %v3982 = vld [vmem:[%s5 + $0x150] sm:$0xff]
  %v3983 = vld [vmem:[%s5 + $0x158] sm:$0xff]
  %v3984 = vld [vmem:[%s5 + $0x160] sm:$0xff]
  %v3985 = vld [vmem:[%s5 + $0x168] sm:$0xf]
  %v3986 = vld [vmem:[%s5 + $0x16c] sm:$0xff]
  %v3987 = vld [vmem:[%s5 + $0x174] sm:$0xff]
  %v3988 = vld [vmem:[%s5 + $0x17c] sm:$0xff]
  %v3989 = vld [vmem:[%s5 + $0x184] sm:$0xf]
  %v3990 = vld [vmem:[%s5 + $0x188] sm:$0xff]
  %v3991 = vld [vmem:[%s5 + $0x190] sm:$0xff]
  %v3992 = vld [vmem:[%s5 + $0x198] sm:$0xff]
  %v3993 = vld [vmem:[%s5 + $0x1a0] sm:$0xf]
  %v3994 = vld [vmem:[%s5 + $0x1a4] sm:$0xff]
  %v3995 = vld [vmem:[%s5 + $0x1ac] sm:$0xff]
  %v3996 = vld [vmem:[%s5 + $0x1b4] sm:$0xff]
  %v3997 = vld [vmem:[%s5 + $0x1bc] sm:$0xf]
  %v3998 = vld [vmem:[%s5 + $0x1c0] sm:$0xff]
  %v3999 = vld [vmem:[%s5 + $0x1c8] sm:$0xff]
  %v4000 = vld [vmem:[%s5 + $0x1d0] sm:$0xff]
  %v4001 = vld [vmem:[%s5 + $0x1d8] sm:$0xf]
  %v4002 = vld [vmem:[%s5 + $0x1dc] sm:$0xff]
  %v4003 = vld [vmem:[%s5 + $0x1e4] sm:$0xff]
  %v4004 = vld [vmem:[%s5 + $0x1ec] sm:$0xff]
  %v4005 = vld [vmem:[%s5 + $0x1f4] sm:$0xf]
  %v4006 = vld [vmem:[%s5 + $0x1f8] sm:$0xff]
  %v4007 = vld [vmem:[%s5 + $0x200] sm:$0xff]
  %v4008 = vld [vmem:[%s5 + $0x208] sm:$0xff]
  %v4009 = vld [vmem:[%s5 + $0x210] sm:$0xf]
  %v4010 = vld [vmem:[%s5 + $0x214] sm:$0xff]
  %v4011 = vld [vmem:[%s5 + $0x21c] sm:$0xff]
  %v4012 = vld [vmem:[%s5 + $0x224] sm:$0xff]
  %v4013 = vld [vmem:[%s5 + $0x22c] sm:$0xf]
  %v4014 = vld [vmem:[%s5 + $0x230] sm:$0xff]
  %v4015 = vld [vmem:[%s5 + $0x238] sm:$0xff]
  %v4016 = vld [vmem:[%s5 + $0x240] sm:$0xff]
  %v4017 = vld [vmem:[%s5 + $0x248] sm:$0xf]
  %v4018 = vld [vmem:[%s5 + $0x24c] sm:$0xff]
  %v4019 = vld [vmem:[%s5 + $0x254] sm:$0xff]
  %v4020 = vld [vmem:[%s5 + $0x25c] sm:$0xff]
  %v4021 = vld [vmem:[%s5 + $0x264] sm:$0xf]
  %v4022 = vld [vmem:[%s5 + $0x268] sm:$0xff]
  %v4023 = vld [vmem:[%s5 + $0x270] sm:$0xff]
  %v4024 = vld [vmem:[%s5 + $0x278] sm:$0xff]
  %v4025 = vld [vmem:[%s5 + $0x280] sm:$0xf]
  %v4026 = vld [vmem:[%s5 + $0x284] sm:$0xff]
  %v4027 = vld [vmem:[%s5 + $0x28c] sm:$0xff]
  %v4028 = vld [vmem:[%s5 + $0x294] sm:$0xff]
  %v4029 = vld [vmem:[%s5 + $0x29c] sm:$0xf]
  %v4030 = vld [vmem:[%s5 + $0x2a0] sm:$0xff]
  %v4031 = vld [vmem:[%s5 + $0x2a8] sm:$0xff]
  %v4032 = vld [vmem:[%s5 + $0x2b0] sm:$0xff]
  %v4033 = vld [vmem:[%s5 + $0x2b8] sm:$0xf]
  %v4034 = vld [vmem:[%s5 + $0x2bc] sm:$0xff]
  %v4035 = vld [vmem:[%s5 + $0x2c4] sm:$0xff]
  %v4036 = vld [vmem:[%s5 + $0x2cc] sm:$0xff]
  %v4037 = vld [vmem:[%s5 + $0x2d4] sm:$0xf]
  %v4038 = vld [vmem:[%s5 + $0x2d8] sm:$0xff]
  %v4039 = vld [vmem:[%s5 + $0x2e0] sm:$0xff]
  %v4040 = vld [vmem:[%s5 + $0x2e8] sm:$0xff]
  %v4041 = vld [vmem:[%s5 + $0x2f0] sm:$0xf]
  %v4042 = vld [vmem:[%s5 + $0x2f4] sm:$0xff]
  %v4043 = vld [vmem:[%s5 + $0x2fc] sm:$0xff]
  %v4044 = vld [vmem:[%s5 + $0x304] sm:$0xff]
  %v4045 = vld [vmem:[%s5 + $0x30c] sm:$0xf]
  %v4046 = vld [vmem:[%s5 + $0x310] sm:$0xff]
  %v4047 = vld [vmem:[%s5 + $0x318] sm:$0xff]
  %v4048 = vld [vmem:[%s5 + $0x320] sm:$0xff]
  %v4049 = vld [vmem:[%s5 + $0x328] sm:$0xf]
  %v4050 = vld [vmem:[%s5 + $0x32c] sm:$0xff]
  %v4051 = vld [vmem:[%s5 + $0x334] sm:$0xff]
  %v4052 = vld [vmem:[%s5 + $0x33c] sm:$0xff]
  %v4053 = vld [vmem:[%s5 + $0x344] sm:$0xf]
  %v4054 = vld [vmem:[%s5 + $0x348] sm:$0xff]
  %v4055 = vld [vmem:[%s5 + $0x350] sm:$0xff]
  %v4056 = vld [vmem:[%s5 + $0x358] sm:$0xff]
  %v4057 = vld [vmem:[%s5 + $0x360] sm:$0xf]
  %v4058 = vld [vmem:[%s5 + $0x364] sm:$0xff]
  %v4059 = vld [vmem:[%s5 + $0x36c] sm:$0xff]
  %v4060 = vld [vmem:[%s5 + $0x374] sm:$0xff]
  %v4061 = vld [vmem:[%s5 + $0x37c] sm:$0xf]
  %v4062 = vld [vmem:[%s5 + $0x380] sm:$0xff]
  %v4063 = vld [vmem:[%s5 + $0x388] sm:$0xff]
  %v4064 = vld [vmem:[%s5 + $0x390] sm:$0xff]
  %v4065 = vld [vmem:[%s5 + $0x398] sm:$0xf]
  %v4066 = vld [vmem:[%s5 + $0x39c] sm:$0xff]
  %v4067 = vld [vmem:[%s5 + $0x3a4] sm:$0xff]
  %v4068 = vld [vmem:[%s5 + $0x3ac] sm:$0xff]
  %v4069 = vld [vmem:[%s5 + $0x3b4] sm:$0xf]
  %v4070 = vld [vmem:[%s5 + $0x3b8] sm:$0xff]
  %v4071 = vld [vmem:[%s5 + $0x3c0] sm:$0xff]
  %v4072 = vld [vmem:[%s5 + $0x3c8] sm:$0xff]
  %v4073 = vld [vmem:[%s5 + $0x3d0] sm:$0xf]
  %v4074 = vld [vmem:[%s5 + $0x3d4] sm:$0xff]
  %v4075 = vld [vmem:[%s5 + $0x3dc] sm:$0xff]
  %v4076 = vld [vmem:[%s5 + $0x3e4] sm:$0xff]
  %v4077 = vld [vmem:[%s5 + $0x3ec] sm:$0xf]
  %v4078 = vld [vmem:[%s5 + $0x3f0] sm:$0xff]
  %v4079 = vld [vmem:[%s5 + $0x3f8] sm:$0xff]
  %v4080 = vld [vmem:[%s5 + $0x400] sm:$0xff]
  %v4081 = vld [vmem:[%s5 + $0x408] sm:$0xf]
  %v4082 = vld [vmem:[%s5 + $0x40c] sm:$0xff]
  %v4083 = vld [vmem:[%s5 + $0x414] sm:$0xff]
  %v4084 = vld [vmem:[%s5 + $0x41c] sm:$0xff]
  %v4085 = vld [vmem:[%s5 + $0x424] sm:$0xf]
  %v4086 = vld [vmem:[%s5 + $0x428] sm:$0xff]
  %v4087 = vld [vmem:[%s5 + $0x430] sm:$0xff]
  %v4088 = vld [vmem:[%s5 + $0x438] sm:$0xff]
  %v4089 = vld [vmem:[%s5 + $0x440] sm:$0xf]
  %v4090 = vld [vmem:[%s5 + $0x444] sm:$0xff]
  %v4091 = vld [vmem:[%s5 + $0x44c] sm:$0xff]
  %v4092 = vld [vmem:[%s5 + $0x454] sm:$0xff]
  %v4093 = vld [vmem:[%s5 + $0x45c] sm:$0xf]
  %v4094 = vld [vmem:[%s5 + $0x460] sm:$0xff]
  %v4095 = vld [vmem:[%s5 + $0x468] sm:$0xff]
  %v4096 = vld [vmem:[%s5 + $0x470] sm:$0xff]
  %v4097 = vld [vmem:[%s5 + $0x478] sm:$0xf]
  %v4098 = vld [vmem:[%s5 + $0x47c] sm:$0xff]
  %v4099 = vld [vmem:[%s5 + $0x484] sm:$0xff]
  %v4100 = vld [vmem:[%s5 + $0x48c] sm:$0xff]
  %v4101 = vld [vmem:[%s5 + $0x494] sm:$0xf]
  %v4102 = vld [vmem:[%s5 + $0x498] sm:$0xff]
  %v4103 = vld [vmem:[%s5 + $0x4a0] sm:$0xff]
  %v4104 = vld [vmem:[%s5 + $0x4a8] sm:$0xff]
  %v4105 = vld [vmem:[%s5 + $0x4b0] sm:$0xf]
  %v4106 = vld [vmem:[%s5 + $0x4b4] sm:$0xff]
  %v4107 = vld [vmem:[%s5 + $0x4bc] sm:$0xff]
  %v4108 = vld [vmem:[%s5 + $0x4c4] sm:$0xff]
  %v4109 = vld [vmem:[%s5 + $0x4cc] sm:$0xf]
  %v4110 = vld [vmem:[%s5 + $0x4d0] sm:$0xff]
  %v4111 = vld [vmem:[%s5 + $0x4d8] sm:$0xff]
  %v4112 = vld [vmem:[%s5 + $0x4e0] sm:$0xff]
  %v4113 = vld [vmem:[%s5 + $0x4e8] sm:$0xf]
  %v4114 = vld [vmem:[%s5 + $0x4ec] sm:$0xff]
  %v4115 = vld [vmem:[%s5 + $0x4f4] sm:$0xff]
  %v4116 = vld [vmem:[%s5 + $0x4fc] sm:$0xff]
  %v4117 = vld [vmem:[%s5 + $0x504] sm:$0xf]
  %v4118 = vld [vmem:[%s5 + $0x508] sm:$0xff]
  %v4119 = vld [vmem:[%s5 + $0x510] sm:$0xff]
  %v4120 = vld [vmem:[%s5 + $0x518] sm:$0xff]
  %v4121 = vld [vmem:[%s5 + $0x520] sm:$0xf]
  %v4122 = vld [vmem:[%s5 + $0x524] sm:$0xff]
  %v4123 = vld [vmem:[%s5 + $0x52c] sm:$0xff]
  %v4124 = vld [vmem:[%s5 + $0x534] sm:$0xff]
  %v4125 = vld [vmem:[%s5 + $0x53c] sm:$0xf]
  %v4126 = vld [vmem:[%s5 + $0x540] sm:$0xff]
  %v4127 = vld [vmem:[%s5 + $0x548] sm:$0xff]
  %v4128 = vld [vmem:[%s5 + $0x550] sm:$0xff]
  %v4129 = vld [vmem:[%s5 + $0x558] sm:$0xf]
  %v4130 = vld [vmem:[%s5 + $0x55c] sm:$0xff]
  %v4131 = vld [vmem:[%s5 + $0x564] sm:$0xff]
  %v4132 = vld [vmem:[%s5 + $0x56c] sm:$0xff]
  %v4133 = vld [vmem:[%s5 + $0x574] sm:$0xf]
  %v4134 = vld [vmem:[%s5 + $0x578] sm:$0xff]
  %v4135 = vld [vmem:[%s5 + $0x580] sm:$0xff]
  %v4136 = vld [vmem:[%s5 + $0x588] sm:$0xff]
  %v4137 = vld [vmem:[%s5 + $0x590] sm:$0xf]
  %v4138 = vld [vmem:[%s5 + $0x594] sm:$0xff]
  %v4139 = vld [vmem:[%s5 + $0x59c] sm:$0xff]
  %v4140 = vld [vmem:[%s5 + $0x5a4] sm:$0xff]
  %v4141 = vld [vmem:[%s5 + $0x5ac] sm:$0xf]
  %v4142 = vld [vmem:[%s5 + $0x5b0] sm:$0xff]
  %v4143 = vld [vmem:[%s5 + $0x5b8] sm:$0xff]
  %v4144 = vld [vmem:[%s5 + $0x5c0] sm:$0xff]
  %v4145 = vld [vmem:[%s5 + $0x5c8] sm:$0xf]
  %v4146 = vld [vmem:[%s5 + $0x5cc] sm:$0xff]
  %v4147 = vld [vmem:[%s5 + $0x5d4] sm:$0xff]
  %v4148 = vld [vmem:[%s5 + $0x5dc] sm:$0xff]
  %v4149 = vld [vmem:[%s5 + $0x5e4] sm:$0xf]
  %v4150 = vld [vmem:[%s5 + $0x5e8] sm:$0xff]
  %v4151 = vld [vmem:[%s5 + $0x5f0] sm:$0xff]
  %v4152 = vld [vmem:[%s5 + $0x5f8] sm:$0xff]
  %v4153 = vld [vmem:[%s5 + $0x600] sm:$0xf]
  %v4154 = vld [vmem:[%s5 + $0x604] sm:$0xff]
  %v4155 = vld [vmem:[%s5 + $0x60c] sm:$0xff]
  %v4156 = vld [vmem:[%s5 + $0x614] sm:$0xff]
  %v4157 = vld [vmem:[%s5 + $0x61c] sm:$0xf]
  %v4158 = vld [vmem:[%s5 + $0x620] sm:$0xff]
  %v4159 = vld [vmem:[%s5 + $0x628] sm:$0xff]
  %v4160 = vld [vmem:[%s5 + $0x630] sm:$0xff]
  %v4161 = vld [vmem:[%s5 + $0x638] sm:$0xf]
  %v4162 = vld [vmem:[%s5 + $0x63c] sm:$0xff]
  %v4163 = vld [vmem:[%s5 + $0x644] sm:$0xff]
  %v4164 = vld [vmem:[%s5 + $0x64c] sm:$0xff]
  %v4165 = vld [vmem:[%s5 + $0x654] sm:$0xf]
  %v4166 = vld [vmem:[%s5 + $0x658] sm:$0xff]
  %v4167 = vld [vmem:[%s5 + $0x660] sm:$0xff]
  %v4168 = vld [vmem:[%s5 + $0x668] sm:$0xff]
  %v4169 = vld [vmem:[%s5 + $0x670] sm:$0xf]
  %v4170 = vld [vmem:[%s5 + $0x674] sm:$0xff]
  %v4171 = vld [vmem:[%s5 + $0x67c] sm:$0xff]
  %v4172 = vld [vmem:[%s5 + $0x684] sm:$0xff]
  %v4173 = vld [vmem:[%s5 + $0x68c] sm:$0xf]
  %v4174 = vld [vmem:[%s5 + $0x690] sm:$0xff]
  %v4175 = vld [vmem:[%s5 + $0x698] sm:$0xff]
  %v4176 = vld [vmem:[%s5 + $0x6a0] sm:$0xff]
  %v4177 = vld [vmem:[%s5 + $0x6a8] sm:$0xf]
  %v4178 = vld [vmem:[%s5 + $0x6ac] sm:$0xff]
  %v4179 = vld [vmem:[%s5 + $0x6b4] sm:$0xff]
  %v4180 = vld [vmem:[%s5 + $0x6bc] sm:$0xff]
  %v4181 = vld [vmem:[%s5 + $0x6c4] sm:$0xf]
  %v4182 = vld [vmem:[%s5 + $0x6c8] sm:$0xff]
  %v4183 = vld [vmem:[%s5 + $0x6d0] sm:$0xff]
  %v4184 = vld [vmem:[%s5 + $0x6d8] sm:$0xff]
  %v4185 = vld [vmem:[%s5 + $0x6e0] sm:$0xf]
  %v4186 = vld [vmem:[%s5 + $0x6e4] sm:$0xff]
  %v4187 = vld [vmem:[%s5 + $0x6ec] sm:$0xff]
  %v4188 = vld [vmem:[%s5 + $0x6f4] sm:$0xff]
  %v4189 = vld [vmem:[%s5 + $0x6fc] sm:$0xf]
  %v4190 = vld [vmem:[%s5 + $0x700] sm:$0xff]
  %v4191 = vld [vmem:[%s5 + $0x708] sm:$0xff]
  %v4192 = vld [vmem:[%s5 + $0x710] sm:$0xff]
  %v4193 = vld [vmem:[%s5 + $0x718] sm:$0xf]
  %v4194 = vld [vmem:[%s5 + $0x71c] sm:$0xff]
  %v4195 = vld [vmem:[%s5 + $0x724] sm:$0xff]
  %v4196 = vld [vmem:[%s5 + $0x72c] sm:$0xff]
  %v4197 = vld [vmem:[%s5 + $0x734] sm:$0xf]
  %v4198 = vld [vmem:[%s5 + $0x738] sm:$0xff]
  %v4199 = vld [vmem:[%s5 + $0x740] sm:$0xff]
  %v4200 = vld [vmem:[%s5 + $0x748] sm:$0xff]
  %v4201 = vld [vmem:[%s5 + $0x750] sm:$0xf]
  %v4202 = vld [vmem:[%s5 + $0x754] sm:$0xff]
  %v4203 = vld [vmem:[%s5 + $0x75c] sm:$0xff]
  %v4204 = vld [vmem:[%s5 + $0x764] sm:$0xff]
  %v4205 = vld [vmem:[%s5 + $0x76c] sm:$0xf]
  %v4206 = vld [vmem:[%s5 + $0x770] sm:$0xff]
  %v4207 = vld [vmem:[%s5 + $0x778] sm:$0xff]
  %v4208 = vld [vmem:[%s5 + $0x780] sm:$0xff]
  %v4209 = vld [vmem:[%s5 + $0x788] sm:$0xf]
  %v4210 = vld [vmem:[%s5 + $0x78c] sm:$0xff]
  %v4211 = vld [vmem:[%s5 + $0x794] sm:$0xff]
  %v4212 = vld [vmem:[%s5 + $0x79c] sm:$0xff]
  %v4213 = vld [vmem:[%s5 + $0x7a4] sm:$0xf]
  %v4214 = vld [vmem:[%s5 + $0x7a8] sm:$0xff]
  %v4215 = vld [vmem:[%s5 + $0x7b0] sm:$0xff]
  %v4216 = vld [vmem:[%s5 + $0x7b8] sm:$0xff]
  %v4217 = vld [vmem:[%s5 + $0x7c0] sm:$0xf]
  %v4218 = vld [vmem:[%s5 + $0x7c4] sm:$0xff]
  %v4219 = vld [vmem:[%s5 + $0x7cc] sm:$0xff]
  %v4220 = vld [vmem:[%s5 + $0x7d4] sm:$0xff]
  %v4221 = vld [vmem:[%s5 + $0x7dc] sm:$0xf]
  %v4222 = vld [vmem:[%s5 + $0x7e0] sm:$0xff]
  %v4223 = vld [vmem:[%s5 + $0x7e8] sm:$0xff]
  %v4224 = vld [vmem:[%s5 + $0x7f0] sm:$0xff]
  %v4225 = vld [vmem:[%s5 + $0x7f8] sm:$0xf]
  %v4226 = vld [vmem:[%s5 + $0x7fc] sm:$0xff]
  %v4227 = vld [vmem:[%s5 + $0x804] sm:$0xff]
  %v4228 = vld [vmem:[%s5 + $0x80c] sm:$0xff]
  %v4229 = vld [vmem:[%s5 + $0x814] sm:$0xf]
  %v4230 = vld [vmem:[%s5 + $0x818] sm:$0xff]
  %v4231 = vld [vmem:[%s5 + $0x820] sm:$0xff]
  %v4232 = vld [vmem:[%s5 + $0x828] sm:$0xff]
  %v4233 = vld [vmem:[%s5 + $0x830] sm:$0xf]
  %v4234 = vld [vmem:[%s5 + $0x834] sm:$0xff]
  %v4235 = vld [vmem:[%s5 + $0x83c] sm:$0xff]
  %v4236 = vld [vmem:[%s5 + $0x844] sm:$0xff]
  %v4237 = vld [vmem:[%s5 + $0x84c] sm:$0xf]
  %v4238 = vld [vmem:[%s5 + $0x850] sm:$0xff]
  %v4239 = vld [vmem:[%s5 + $0x858] sm:$0xff]
  %v4240 = vld [vmem:[%s5 + $0x860] sm:$0xff]
  %v4241 = vld [vmem:[%s5 + $0x868] sm:$0xf]
  %v4242 = vld [vmem:[%s5 + $0x86c] sm:$0xff]
  %v4243 = vld [vmem:[%s5 + $0x874] sm:$0xff]
  %v4244 = vld [vmem:[%s5 + $0x87c] sm:$0xff]
  %v4245 = vld [vmem:[%s5 + $0x884] sm:$0xf]
  %v4246 = vld [vmem:[%s5 + $0x888] sm:$0xff]
  %v4247 = vld [vmem:[%s5 + $0x890] sm:$0xff]
  %v4248 = vld [vmem:[%s5 + $0x898] sm:$0xff]
  %v4249 = vld [vmem:[%s5 + $0x8a0] sm:$0xf]
  %v4250 = vld [vmem:[%s5 + $0x8a4] sm:$0xff]
  %v4251 = vld [vmem:[%s5 + $0x8ac] sm:$0xff]
  %v4252 = vld [vmem:[%s5 + $0x8b4] sm:$0xff]
  %v4253 = vld [vmem:[%s5 + $0x8bc] sm:$0xf]
  %v4254 = vld [vmem:[%s5 + $0x8c0] sm:$0xff]
  %v4255 = vld [vmem:[%s5 + $0x8c8] sm:$0xff]
  %v4256 = vld [vmem:[%s5 + $0x8d0] sm:$0xff]
  %v4257 = vld [vmem:[%s5 + $0x8d8] sm:$0xf]
  %v4258 = vld [vmem:[%s5 + $0x8dc] sm:$0xff]
  %v4259 = vld [vmem:[%s5 + $0x8e4] sm:$0xff]
  %v4260 = vld [vmem:[%s5 + $0x8ec] sm:$0xff]
  %v4261 = vld [vmem:[%s5 + $0x8f4] sm:$0xf]
  %v4262 = vld [vmem:[%s5 + $0x8f8] sm:$0xff]
  %v4263 = vld [vmem:[%s5 + $0x900] sm:$0xff]
  %v4264 = vld [vmem:[%s5 + $0x908] sm:$0xff]
  %v4265 = vld [vmem:[%s5 + $0x910] sm:$0xf]
  %v4266 = vld [vmem:[%s5 + $0x914] sm:$0xff]
  %v4267 = vld [vmem:[%s5 + $0x91c] sm:$0xff]
  %v4268 = vld [vmem:[%s5 + $0x924] sm:$0xff]
  %v4269 = vld [vmem:[%s5 + $0x92c] sm:$0xf]
  %v4270 = vld [vmem:[%s5 + $0x930] sm:$0xff]
  %v4271 = vld [vmem:[%s5 + $0x938] sm:$0xff]
  %v4272 = vld [vmem:[%s5 + $0x940] sm:$0xff]
  %v4273 = vld [vmem:[%s5 + $0x948] sm:$0xf]
  %v4274 = vld [vmem:[%s5 + $0x94c] sm:$0xff]
  %v4275 = vld [vmem:[%s5 + $0x954] sm:$0xff]
  %v4276 = vld [vmem:[%s5 + $0x95c] sm:$0xff]
  %v4277 = vld [vmem:[%s5 + $0x964] sm:$0xf]
  %v4278 = vld [vmem:[%s5 + $0x968] sm:$0xff]
  %v4279 = vld [vmem:[%s5 + $0x970] sm:$0xff]
  %v4280 = vld [vmem:[%s5 + $0x978] sm:$0xff]
  %v4281 = vld [vmem:[%s5 + $0x980] sm:$0xf]
  %v4282 = vld [vmem:[%s5 + $0x984] sm:$0xff]
  %v4283 = vld [vmem:[%s5 + $0x98c] sm:$0xff]
  %v4284 = vld [vmem:[%s5 + $0x994] sm:$0xff]
  %v4285 = vld [vmem:[%s5 + $0x99c] sm:$0xf]
  %v4286 = vld [vmem:[%s5 + $0x9a0] sm:$0xff]
  %v4287 = vld [vmem:[%s5 + $0x9a8] sm:$0xff]
  %v4288 = vld [vmem:[%s5 + $0x9b0] sm:$0xff]
  %v4289 = vld [vmem:[%s5 + $0x9b8] sm:$0xf]
  %v4290 = vld [vmem:[%s5 + $0x9bc] sm:$0xff]
  %v4291 = vld [vmem:[%s5 + $0x9c4] sm:$0xff]
  %v4292 = vld [vmem:[%s5 + $0x9cc] sm:$0xff]
  %v4293 = vld [vmem:[%s5 + $0x9d4] sm:$0xf]
  %v4294 = vld [vmem:[%s5 + $0x9d8] sm:$0xff]
  %v4295 = vld [vmem:[%s5 + $0x9e0] sm:$0xff]
  %v4296 = vld [vmem:[%s5 + $0x9e8] sm:$0xff]
  %v4297 = vld [vmem:[%s5 + $0x9f0] sm:$0xf]
  %v4298 = vld [vmem:[%s5 + $0x9f4] sm:$0xff]
  %v4299 = vld [vmem:[%s5 + $0x9fc] sm:$0xff]
  %v4300 = vld [vmem:[%s5 + $0xa04] sm:$0xff]
  %v4301 = vld [vmem:[%s5 + $0xa0c] sm:$0xf]
  %v4302 = vld [vmem:[%s5 + $0xa10] sm:$0xff]
  %v4303 = vld [vmem:[%s5 + $0xa18] sm:$0xff]
  %v4304 = vld [vmem:[%s5 + $0xa20] sm:$0xff]
  %v4305 = vld [vmem:[%s5 + $0xa28] sm:$0xf]
  %v4306 = vld [vmem:[%s5 + $0xa2c] sm:$0xff]
  %v4307 = vld [vmem:[%s5 + $0xa34] sm:$0xff]
  %v4308 = vld [vmem:[%s5 + $0xa3c] sm:$0xff]
  %v4309 = vld [vmem:[%s5 + $0xa44] sm:$0xf]
  %v4310 = vld [vmem:[%s5 + $0xa48] sm:$0xff]
  %v4311 = vld [vmem:[%s5 + $0xa50] sm:$0xff]
  %v4312 = vld [vmem:[%s5 + $0xa58] sm:$0xff]
  %v4313 = vld [vmem:[%s5 + $0xa60] sm:$0xf]
  %v4314 = vld [vmem:[%s5 + $0xa64] sm:$0xff]
  %v4315 = vld [vmem:[%s5 + $0xa6c] sm:$0xff]
  %v4316 = vld [vmem:[%s5 + $0xa74] sm:$0xff]
  %v4317 = vld [vmem:[%s5 + $0xa7c] sm:$0xf]
  %v4318 = vld [vmem:[%s5 + $0xa80] sm:$0xff]
  %v4319 = vld [vmem:[%s5 + $0xa88] sm:$0xff]
  %v4320 = vld [vmem:[%s5 + $0xa90] sm:$0xff]
  %v4321 = vld [vmem:[%s5 + $0xa98] sm:$0xf]
  %v4322 = vld [vmem:[%s5 + $0xa9c] sm:$0xff]
  %v4323 = vld [vmem:[%s5 + $0xaa4] sm:$0xff]
  %v4324 = vld [vmem:[%s5 + $0xaac] sm:$0xff]
  %v4325 = vld [vmem:[%s5 + $0xab4] sm:$0xf]
  %v4326 = vld [vmem:[%s5 + $0xab8] sm:$0xff]
  %v4327 = vld [vmem:[%s5 + $0xac0] sm:$0xff]
  %v4328 = vld [vmem:[%s5 + $0xac8] sm:$0xff]
  %v4329 = vld [vmem:[%s5 + $0xad0] sm:$0xf]
  %v4330 = vld [vmem:[%s5 + $0xad4] sm:$0xff]
  %v4331 = vld [vmem:[%s5 + $0xadc] sm:$0xff]
  %v4332 = vld [vmem:[%s5 + $0xae4] sm:$0xff]
  %v4333 = vld [vmem:[%s5 + $0xaec] sm:$0xf]
  %v4334 = vld [vmem:[%s5 + $0xaf0] sm:$0xff]
  %v4335 = vld [vmem:[%s5 + $0xaf8] sm:$0xff]
  %v4336 = vld [vmem:[%s5 + $0xb00] sm:$0xff]
  %v4337 = vld [vmem:[%s5 + $0xb08] sm:$0xf]
  %v4338 = vld [vmem:[%s5 + $0xb0c] sm:$0xff]
  %v4339 = vld [vmem:[%s5 + $0xb14] sm:$0xff]
  %v4340 = vld [vmem:[%s5 + $0xb1c] sm:$0xff]
  %v4341 = vld [vmem:[%s5 + $0xb24] sm:$0xf]
  %v4342 = vld [vmem:[%s5 + $0xb28] sm:$0xff]
  %v4343 = vld [vmem:[%s5 + $0xb30] sm:$0xff]
  %v4344 = vld [vmem:[%s5 + $0xb38] sm:$0xff]
  %v4345 = vld [vmem:[%s5 + $0xb40] sm:$0xf]
  %v4346 = vld [vmem:[%s5 + $0xb44] sm:$0xff]
  %v4347 = vld [vmem:[%s5 + $0xb4c] sm:$0xff]
  %v4348 = vld [vmem:[%s5 + $0xb54] sm:$0xff]
  %v4349 = vld [vmem:[%s5 + $0xb5c] sm:$0xf]
  %v4350 = vld [vmem:[%s5 + $0xb60] sm:$0xff]
  %v4351 = vld [vmem:[%s5 + $0xb68] sm:$0xff]
  %v4352 = vld [vmem:[%s5 + $0xb70] sm:$0xff]
  %v4353 = vld [vmem:[%s5 + $0xb78] sm:$0xf]
  %v4354 = vld [vmem:[%s5 + $0xb7c] sm:$0xff]
  %v4355 = vld [vmem:[%s5 + $0xb84] sm:$0xff]
  %v4356 = vld [vmem:[%s5 + $0xb8c] sm:$0xff]
  %v4357 = vld [vmem:[%s5 + $0xb94] sm:$0xf]
  %v4358 = vld [vmem:[%s5 + $0xb98] sm:$0xff]
  %v4359 = vld [vmem:[%s5 + $0xba0] sm:$0xff]
  %v4360 = vld [vmem:[%s5 + $0xba8] sm:$0xff]
  %v4361 = vld [vmem:[%s5 + $0xbb0] sm:$0xf]
  %v4362 = vld [vmem:[%s5 + $0xbb4] sm:$0xff]
  %v4363 = vld [vmem:[%s5 + $0xbbc] sm:$0xff]
  %v4364 = vld [vmem:[%s5 + $0xbc4] sm:$0xff]
  %v4365 = vld [vmem:[%s5 + $0xbcc] sm:$0xf]
  %v4366 = vld [vmem:[%s5 + $0xbd0] sm:$0xff]
  %v4367 = vld [vmem:[%s5 + $0xbd8] sm:$0xff]
  %v4368 = vld [vmem:[%s5 + $0xbe0] sm:$0xff]
  %v4369 = vld [vmem:[%s5 + $0xbe8] sm:$0xf]
  %v4370 = vld [vmem:[%s5 + $0xbec] sm:$0xff]
  %v4371 = vld [vmem:[%s5 + $0xbf4] sm:$0xff]
  %v4372 = vld [vmem:[%s5 + $0xbfc] sm:$0xff]
  %v4373 = vld [vmem:[%s5 + $0xc04] sm:$0xf]
  %v4374 = vld [vmem:[%s5 + $0xc08] sm:$0xff]
  %v4375 = vld [vmem:[%s5 + $0xc10] sm:$0xff]
  %v4376 = vld [vmem:[%s5 + $0xc18] sm:$0xff]
  %v4377 = vld [vmem:[%s5 + $0xc20] sm:$0xf]
  %v4378 = vld [vmem:[%s5 + $0xc24] sm:$0xff]
  %v4379 = vld [vmem:[%s5 + $0xc2c] sm:$0xff]
  %v4380 = vld [vmem:[%s5 + $0xc34] sm:$0xff]
  %v4381 = vld [vmem:[%s5 + $0xc3c] sm:$0xf]
  %v4382 = vld [vmem:[%s5 + $0xc40] sm:$0xff]
  %v4383 = vld [vmem:[%s5 + $0xc48] sm:$0xff]
  %v4384 = vld [vmem:[%s5 + $0xc50] sm:$0xff]
  %v4385 = vld [vmem:[%s5 + $0xc58] sm:$0xf]
  %v4386 = vld [vmem:[%s5 + $0xc5c] sm:$0xff]
  %v4387 = vld [vmem:[%s5 + $0xc64] sm:$0xff]
  %v4388 = vld [vmem:[%s5 + $0xc6c] sm:$0xff]
  %v4389 = vld [vmem:[%s5 + $0xc74] sm:$0xf]
  %v4390 = vld [vmem:[%s5 + $0xc78] sm:$0xff]
  %v4391 = vld [vmem:[%s5 + $0xc80] sm:$0xff]
  %v4392 = vld [vmem:[%s5 + $0xc88] sm:$0xff]
  %v4393 = vld [vmem:[%s5 + $0xc90] sm:$0xf]
  %v4394 = vld [vmem:[%s5 + $0xc94] sm:$0xff]
  %v4395 = vld [vmem:[%s5 + $0xc9c] sm:$0xff]
  %v4396 = vld [vmem:[%s5 + $0xca4] sm:$0xff]
  %v4397 = vld [vmem:[%s5 + $0xcac] sm:$0xf]
  %v4398 = vld [vmem:[%s5 + $0xcb0] sm:$0xff]
  %v4399 = vld [vmem:[%s5 + $0xcb8] sm:$0xff]
  %v4400 = vld [vmem:[%s5 + $0xcc0] sm:$0xff]
  %v4401 = vld [vmem:[%s5 + $0xcc8] sm:$0xf]
  %v4402 = vld [vmem:[%s5 + $0xccc] sm:$0xff]
  %v4403 = vld [vmem:[%s5 + $0xcd4] sm:$0xff]
  %v4404 = vld [vmem:[%s5 + $0xcdc] sm:$0xff]
  %v4405 = vld [vmem:[%s5 + $0xce4] sm:$0xf]
  %v4406 = vld [vmem:[%s5 + $0xce8] sm:$0xff]
  %v4407 = vld [vmem:[%s5 + $0xcf0] sm:$0xff]
  %v4408 = vld [vmem:[%s5 + $0xcf8] sm:$0xff]
  %v4409 = vld [vmem:[%s5 + $0xd00] sm:$0xf]
  %v4410 = vld [vmem:[%s5 + $0xd04] sm:$0xff]
  %v4411 = vld [vmem:[%s5 + $0xd0c] sm:$0xff]
  %v4412 = vld [vmem:[%s5 + $0xd14] sm:$0xff]
  %v4413 = vld [vmem:[%s5 + $0xd1c] sm:$0xf]
  %v4414 = vld [vmem:[%s5 + $0xd20] sm:$0xff]
  %v4415 = vld [vmem:[%s5 + $0xd28] sm:$0xff]
  %v4416 = vld [vmem:[%s5 + $0xd30] sm:$0xff]
  %v4417 = vld [vmem:[%s5 + $0xd38] sm:$0xf]
  %v4418 = vld [vmem:[%s5 + $0xd3c] sm:$0xff]
  %v4419 = vld [vmem:[%s5 + $0xd44] sm:$0xff]
  %v4420 = vld [vmem:[%s5 + $0xd4c] sm:$0xff]
  %v4421 = vld [vmem:[%s5 + $0xd54] sm:$0xf]
  %v4422 = vld [vmem:[%s5 + $0xd58] sm:$0xff]
  %v4423 = vld [vmem:[%s5 + $0xd60] sm:$0xff]
  %v4424 = vld [vmem:[%s5 + $0xd68] sm:$0xff]
  %v4425 = vld [vmem:[%s5 + $0xd70] sm:$0xf]
  %v4426 = vld [vmem:[%s5 + $0xd74] sm:$0xff]
  %v4427 = vld [vmem:[%s5 + $0xd7c] sm:$0xff]
  %v4428 = vld [vmem:[%s5 + $0xd84] sm:$0xff]
  %v4429 = vld [vmem:[%s5 + $0xd8c] sm:$0xf]
  %v4430 = vld [vmem:[%s5 + $0xd90] sm:$0xff]
  %v4431 = vld [vmem:[%s5 + $0xd98] sm:$0xff]
  %v4432 = vld [vmem:[%s5 + $0xda0] sm:$0xff]
  %v4433 = vld [vmem:[%s5 + $0xda8] sm:$0xf]
  %v4434 = vld [vmem:[%s5 + $0xdac] sm:$0xff]
  %v4435 = vld [vmem:[%s5 + $0xdb4] sm:$0xff]
  %v4436 = vld [vmem:[%s5 + $0xdbc] sm:$0xff]
  %v4437 = vld [vmem:[%s5 + $0xdc4] sm:$0xf]
  %v4438 = vld [vmem:[%s5 + $0xdc8] sm:$0xff]
  %v4439 = vld [vmem:[%s5 + $0xdd0] sm:$0xff]
  %v4440 = vld [vmem:[%s5 + $0xdd8] sm:$0xff]
  %v4441 = vld [vmem:[%s5 + $0xde0] sm:$0xf]
  %v4442 = vld [vmem:[%s5 + $0xde4] sm:$0xff]
  %v4443 = vld [vmem:[%s5 + $0xdec] sm:$0xff]
  %v4444 = vld [vmem:[%s5 + $0xdf4] sm:$0xff]
  %v4445 = vld [vmem:[%s5 + $0xdfc] sm:$0xf]
  %v4446 = vld [vmem:[%s5 + $0xe00] sm:$0xff]
  %v4447 = vld [vmem:[%s5 + $0xe08] sm:$0xff]
  %v4448 = vld [vmem:[%s5 + $0xe10] sm:$0xff]
  %v4449 = vld [vmem:[%s5 + $0xe18] sm:$0xf]
  %v4450 = vld [vmem:[%s5 + $0xe1c] sm:$0xff]
  %v4451 = vld [vmem:[%s5 + $0xe24] sm:$0xff]
  %v4452 = vld [vmem:[%s5 + $0xe2c] sm:$0xff]
  %v4453 = vld [vmem:[%s5 + $0xe34] sm:$0xf]
  %v4454 = vld [vmem:[%s5 + $0xe38] sm:$0xff]
  %v4455 = vld [vmem:[%s5 + $0xe40] sm:$0xff]
  %v4456 = vld [vmem:[%s5 + $0xe48] sm:$0xff]
  %v4457 = vld [vmem:[%s5 + $0xe50] sm:$0xf]
  %v4458 = vld [vmem:[%s5 + $0xe54] sm:$0xff]
  %v4459 = vld [vmem:[%s5 + $0xe5c] sm:$0xff]
  %v4460 = vld [vmem:[%s5 + $0xe64] sm:$0xff]
  %v4461 = vld [vmem:[%s5 + $0xe6c] sm:$0xf]
  %v4462 = vld [vmem:[%s5 + $0xe70] sm:$0xff]
  %v4463 = vld [vmem:[%s5 + $0xe78] sm:$0xff]
  %v4464 = vld [vmem:[%s5 + $0xe80] sm:$0xff]
  %v4465 = vld [vmem:[%s5 + $0xe88] sm:$0xf]
  %v4466 = vld [vmem:[%s5 + $0xe8c] sm:$0xff]
  %v4467 = vld [vmem:[%s5 + $0xe94] sm:$0xff]
  %v4468 = vld [vmem:[%s5 + $0xe9c] sm:$0xff]
  %v4469 = vld [vmem:[%s5 + $0xea4] sm:$0xf]
  %v4470 = vld [vmem:[%s5 + $0xea8] sm:$0xff]
  %v4471 = vld [vmem:[%s5 + $0xeb0] sm:$0xff]
  %v4472 = vld [vmem:[%s5 + $0xeb8] sm:$0xff]
  %v4473 = vld [vmem:[%s5 + $0xec0] sm:$0xf]
  %v4474 = vld [vmem:[%s5 + $0xec4] sm:$0xff]
  %v4475 = vld [vmem:[%s5 + $0xecc] sm:$0xff]
  %v4476 = vld [vmem:[%s5 + $0xed4] sm:$0xff]
  %v4477 = vld [vmem:[%s5 + $0xedc] sm:$0xf]
  %v4478 = vld [vmem:[%s5 + $0xee0] sm:$0xff]
  %v4479 = vld [vmem:[%s5 + $0xee8] sm:$0xff]
  %v4480 = vld [vmem:[%s5 + $0xef0] sm:$0xff]
  %v4481 = vld [vmem:[%s5 + $0xef8] sm:$0xf]
  %v4482 = vld [vmem:[%s5 + $0xefc] sm:$0xff]
  %v4483 = vld [vmem:[%s5 + $0xf04] sm:$0xff]
  %v4484 = vld [vmem:[%s5 + $0xf0c] sm:$0xff]
  %v4485 = vld [vmem:[%s5 + $0xf14] sm:$0xf]
  %v4486 = vld [vmem:[%s5 + $0xf18] sm:$0xff]
  %v4487 = vld [vmem:[%s5 + $0xf20] sm:$0xff]
  %v4488 = vld [vmem:[%s5 + $0xf28] sm:$0xff]
  %v4489 = vld [vmem:[%s5 + $0xf30] sm:$0xf]
  %v4490 = vld [vmem:[%s5 + $0xf34] sm:$0xff]
  %v4491 = vld [vmem:[%s5 + $0xf3c] sm:$0xff]
  %v4492 = vld [vmem:[%s5 + $0xf44] sm:$0xff]
  %v4493 = vld [vmem:[%s5 + $0xf4c] sm:$0xf]
  %v4494 = vld [vmem:[%s5 + $0xf50] sm:$0xff]
  %v4495 = vld [vmem:[%s5 + $0xf58] sm:$0xff]
  %v4496 = vld [vmem:[%s5 + $0xf60] sm:$0xff]
  %v4497 = vld [vmem:[%s5 + $0xf68] sm:$0xf]
  %v4498 = vld [vmem:[%s5 + $0xf6c] sm:$0xff]
  %v4499 = vld [vmem:[%s5 + $0xf74] sm:$0xff]
  %v4500 = vld [vmem:[%s5 + $0xf7c] sm:$0xff]
  %v4501 = vld [vmem:[%s5 + $0xf84] sm:$0xf]
  %v4502 = vld [vmem:[%s5 + $0xf88] sm:$0xff]
  %v4503 = vld [vmem:[%s5 + $0xf90] sm:$0xff]
  %v4504 = vld [vmem:[%s5 + $0xf98] sm:$0xff]
  %v4505 = vld [vmem:[%s5 + $0xfa0] sm:$0xf]
  %v4506 = vld [vmem:[%s5 + $0xfa4] sm:$0xff]
  %v4507 = vld [vmem:[%s5 + $0xfac] sm:$0xff]
  %v4508 = vld [vmem:[%s5 + $0xfb4] sm:$0xff]
  %v4509 = vld [vmem:[%s5 + $0xfbc] sm:$0xf]
  %v4510 = vld [vmem:[%s5 + $0xfc0] sm:$0xff]
  %v4511 = vld [vmem:[%s5 + $0xfc8] sm:$0xff]
  %v4512 = vld [vmem:[%s5 + $0xfd0] sm:$0xff]
  %v4513 = vld [vmem:[%s5 + $0xfd8] sm:$0xf]
  %v4514 = vld [vmem:[%s5 + $0xfdc] sm:$0xff]
  %v4515 = vld [vmem:[%s5 + $0xfe4] sm:$0xff]
  %v4516 = vld [vmem:[%s5 + $0xfec] sm:$0xff]
  %v4517 = vld [vmem:[%s5 + $0xff4] sm:$0xf]
  %v4518 = vld [vmem:[%s5 + $0xff8] sm:$0xff]
  %v4519 = vld [vmem:[%s5 + $0x1000] sm:$0xff]
  %v4520 = vld [vmem:[%s5 + $0x1008] sm:$0xff]
  %v4521 = vld [vmem:[%s5 + $0x1010] sm:$0xf]
  %v4522 = vld [vmem:[%s5 + $0x1014] sm:$0xff]
  %v4523 = vld [vmem:[%s5 + $0x101c] sm:$0xff]
  %v4524 = vld [vmem:[%s5 + $0x1024] sm:$0xff]
  %v4525 = vld [vmem:[%s5 + $0x102c] sm:$0xf]
  %v4526 = vld [vmem:[%s5 + $0x1030] sm:$0xff]
  %v4527 = vld [vmem:[%s5 + $0x1038] sm:$0xff]
  %v4528 = vld [vmem:[%s5 + $0x1040] sm:$0xff]
  %v4529 = vld [vmem:[%s5 + $0x1048] sm:$0xf]
  %v4530 = vld [vmem:[%s5 + $0x104c] sm:$0xff]
  %v4531 = vld [vmem:[%s5 + $0x1054] sm:$0xff]
  %v4532 = vld [vmem:[%s5 + $0x105c] sm:$0xff]
  %v4533 = vld [vmem:[%s5 + $0x1064] sm:$0xf]
  %v4534 = vld [vmem:[%s5 + $0x1068] sm:$0xff]
  %v4535 = vld [vmem:[%s5 + $0x1070] sm:$0xff]
  %v4536 = vld [vmem:[%s5 + $0x1078] sm:$0xff]
  %v4537 = vld [vmem:[%s5 + $0x1080] sm:$0xf]
  %v4538 = vld [vmem:[%s5 + $0x1084] sm:$0xff]
  %v4539 = vld [vmem:[%s5 + $0x108c] sm:$0xff]
  %v4540 = vld [vmem:[%s5 + $0x1094] sm:$0xff]
  %v4541 = vld [vmem:[%s5 + $0x109c] sm:$0xf]
  %v4542 = vld [vmem:[%s5 + $0x10a0] sm:$0xff]
  %v4543 = vld [vmem:[%s5 + $0x10a8] sm:$0xff]
  %v4544 = vld [vmem:[%s5 + $0x10b0] sm:$0xff]
  %v4545 = vld [vmem:[%s5 + $0x10b8] sm:$0xf]
  %v4546 = vld [vmem:[%s5 + $0x10bc] sm:$0xff]
  %v4547 = vld [vmem:[%s5 + $0x10c4] sm:$0xff]
  %v4548 = vld [vmem:[%s5 + $0x10cc] sm:$0xff]
  %v4549 = vld [vmem:[%s5 + $0x10d4] sm:$0xf]
  %v4550 = vld [vmem:[%s5 + $0x10d8] sm:$0xff]
  %v4551 = vld [vmem:[%s5 + $0x10e0] sm:$0xff]
  %v4552 = vld [vmem:[%s5 + $0x10e8] sm:$0xff]
  %v4553 = vld [vmem:[%s5 + $0x10f0] sm:$0xf]
  %v4554 = vld [vmem:[%s5 + $0x10f4] sm:$0xff]
  %v4555 = vld [vmem:[%s5 + $0x10fc] sm:$0xff]
  %v4556 = vld [vmem:[%s5 + $0x1104] sm:$0xff]
  %v4557 = vld [vmem:[%s5 + $0x110c] sm:$0xf]
  %v4558 = vld [vmem:[%s5 + $0x1110] sm:$0xff]
  %v4559 = vld [vmem:[%s5 + $0x1118] sm:$0xff]
  %v4560 = vld [vmem:[%s5 + $0x1120] sm:$0xff]
  %v4561 = vld [vmem:[%s5 + $0x1128] sm:$0xf]
  %v4562 = vld [vmem:[%s5 + $0x112c] sm:$0xff]
  %v4563 = vld [vmem:[%s5 + $0x1134] sm:$0xff]
  %v4564 = vld [vmem:[%s5 + $0x113c] sm:$0xff]
  %v4565 = vld [vmem:[%s5 + $0x1144] sm:$0xf]
  %v4566 = vld [vmem:[%s5 + $0x1148] sm:$0xff]
  %v4567 = vld [vmem:[%s5 + $0x1150] sm:$0xff]
  %v4568 = vld [vmem:[%s5 + $0x1158] sm:$0xff]
  %v4569 = vld [vmem:[%s5 + $0x1160] sm:$0xf]
  %v4570 = vld [vmem:[%s5 + $0x1164] sm:$0xff]
  %v4571 = vld [vmem:[%s5 + $0x116c] sm:$0xff]
  %v4572 = vld [vmem:[%s5 + $0x1174] sm:$0xff]
  %v4573 = vld [vmem:[%s5 + $0x117c] sm:$0xf]
  %v4574 = vld [vmem:[%s5 + $0x1180] sm:$0xff]
  %v4575 = vld [vmem:[%s5 + $0x1188] sm:$0xff]
  %v4576 = vld [vmem:[%s5 + $0x1190] sm:$0xff]
  %v4577 = vld [vmem:[%s5 + $0x1198] sm:$0xf]
  %v4578 = vld [vmem:[%s5 + $0x119c] sm:$0xff]
  %v4579 = vld [vmem:[%s5 + $0x11a4] sm:$0xff]
  %v4580 = vld [vmem:[%s5 + $0x11ac] sm:$0xff]
  %v4581 = vld [vmem:[%s5 + $0x11b4] sm:$0xf]
  %v4582 = vld [vmem:[%s5 + $0x11b8] sm:$0xff]
  %v4583 = vld [vmem:[%s5 + $0x11c0] sm:$0xff]
  %v4584 = vld [vmem:[%s5 + $0x11c8] sm:$0xff]
  %v4585 = vld [vmem:[%s5 + $0x11d0] sm:$0xf]
  %v4586 = vld [vmem:[%s5 + $0x11d4] sm:$0xff]
  %v4587 = vld [vmem:[%s5 + $0x11dc] sm:$0xff]
  %v4588 = vld [vmem:[%s5 + $0x11e4] sm:$0xff]
  %v4589 = vld [vmem:[%s5 + $0x11ec] sm:$0xf]
  %v4590 = vld [vmem:[%s5 + $0x11f0] sm:$0xff]
  %v4591 = vld [vmem:[%s5 + $0x11f8] sm:$0xff]
  %v4592 = vld [vmem:[%s5 + $0x1200] sm:$0xff]
  %v4593 = vld [vmem:[%s5 + $0x1208] sm:$0xf]
  %v4594 = vld [vmem:[%s5 + $0x120c] sm:$0xff]
  %v4595 = vld [vmem:[%s5 + $0x1214] sm:$0xff]
  %v4596 = vld [vmem:[%s5 + $0x121c] sm:$0xff]
  %v4597 = vld [vmem:[%s5 + $0x1224] sm:$0xf]
  %v4598 = vld [vmem:[%s5 + $0x1228] sm:$0xff]
  %v4599 = vld [vmem:[%s5 + $0x1230] sm:$0xff]
  %v4600 = vld [vmem:[%s5 + $0x1238] sm:$0xff]
  %v4601 = vld [vmem:[%s5 + $0x1240] sm:$0xf]
  %v4602 = vld [vmem:[%s5 + $0x1244] sm:$0xff]
  %v4603 = vld [vmem:[%s5 + $0x124c] sm:$0xff]
  %v4604 = vld [vmem:[%s5 + $0x1254] sm:$0xff]
  %v4605 = vld [vmem:[%s5 + $0x125c] sm:$0xf]
  %v4606 = vld [vmem:[%s5 + $0x1260] sm:$0xff]
  %v4607 = vld [vmem:[%s5 + $0x1268] sm:$0xff]
  %v4608 = vld [vmem:[%s5 + $0x1270] sm:$0xff]
  %v4609 = vld [vmem:[%s5 + $0x1278] sm:$0xf]
  %v4610 = vld [vmem:[%s5 + $0x127c] sm:$0xff]
  %v4611 = vld [vmem:[%s5 + $0x1284] sm:$0xff]
  %v4612 = vld [vmem:[%s5 + $0x128c] sm:$0xff]
  %v4613 = vld [vmem:[%s5 + $0x1294] sm:$0xf]
  %v4614 = vld [vmem:[%s5 + $0x1298] sm:$0xff]
  %v4615 = vld [vmem:[%s5 + $0x12a0] sm:$0xff]
  %v4616 = vld [vmem:[%s5 + $0x12a8] sm:$0xff]
  %v4617 = vld [vmem:[%s5 + $0x12b0] sm:$0xf]
  %v4618 = vld [vmem:[%s5 + $0x12b4] sm:$0xff]
  %v4619 = vld [vmem:[%s5 + $0x12bc] sm:$0xff]
  %v4620 = vld [vmem:[%s5 + $0x12c4] sm:$0xff]
  %v4621 = vld [vmem:[%s5 + $0x12cc] sm:$0xf]
  %v4622 = vld [vmem:[%s5 + $0x12d0] sm:$0xff]
  %v4623 = vld [vmem:[%s5 + $0x12d8] sm:$0xff]
  %v4624 = vld [vmem:[%s5 + $0x12e0] sm:$0xff]
  %v4625 = vld [vmem:[%s5 + $0x12e8] sm:$0xf]
  %v4626 = vld [vmem:[%s5 + $0x12ec] sm:$0xff]
  %v4627 = vld [vmem:[%s5 + $0x12f4] sm:$0xff]
  %v4628 = vld [vmem:[%s5 + $0x12fc] sm:$0xff]
  %v4629 = vld [vmem:[%s5 + $0x1304] sm:$0xf]
  %v4630 = vld [vmem:[%s5 + $0x1308] sm:$0xff]
  %v4631 = vld [vmem:[%s5 + $0x1310] sm:$0xff]
  %v4632 = vld [vmem:[%s5 + $0x1318] sm:$0xff]
  %v4633 = vld [vmem:[%s5 + $0x1320] sm:$0xf]
  %v4634 = vld [vmem:[%s5 + $0x1324] sm:$0xff]
  %v4635 = vld [vmem:[%s5 + $0x132c] sm:$0xff]
  %v4636 = vld [vmem:[%s5 + $0x1334] sm:$0xff]
  %v4637 = vld [vmem:[%s5 + $0x133c] sm:$0xf]
  %v4638 = vld [vmem:[%s5 + $0x1340] sm:$0xff]
  %v4639 = vld [vmem:[%s5 + $0x1348] sm:$0xff]
  %v4640 = vld [vmem:[%s5 + $0x1350] sm:$0xff]
  %v4641 = vld [vmem:[%s5 + $0x1358] sm:$0xf]
  %v4642 = vld [vmem:[%s5 + $0x135c] sm:$0xff]
  %v4643 = vld [vmem:[%s5 + $0x1364] sm:$0xff]
  %v4644 = vld [vmem:[%s5 + $0x136c] sm:$0xff]
  %v4645 = vld [vmem:[%s5 + $0x1374] sm:$0xf]
  %v4646 = vld [vmem:[%s5 + $0x1378] sm:$0xff]
  %v4647 = vld [vmem:[%s5 + $0x1380] sm:$0xff]
  %v4648 = vld [vmem:[%s5 + $0x1388] sm:$0xff]
  %v4649 = vld [vmem:[%s5 + $0x1390] sm:$0xf]
  %v4650 = vld [vmem:[%s5 + $0x1394] sm:$0xff]
  %v4651 = vld [vmem:[%s5 + $0x139c] sm:$0xff]
  %v4652 = vld [vmem:[%s5 + $0x13a4] sm:$0xff]
  %v4653 = vld [vmem:[%s5 + $0x13ac] sm:$0xf]
  %v4654 = vld [vmem:[%s5 + $0x13b0] sm:$0xff]
  %v4655 = vld [vmem:[%s5 + $0x13b8] sm:$0xff]
  %v4656 = vld [vmem:[%s5 + $0x13c0] sm:$0xff]
  %v4657 = vld [vmem:[%s5 + $0x13c8] sm:$0xf]
  %v4658 = vld [vmem:[%s5 + $0x13cc] sm:$0xff]
  %v4659 = vld [vmem:[%s5 + $0x13d4] sm:$0xff]
  %v4660 = vld [vmem:[%s5 + $0x13dc] sm:$0xff]
  %v4661 = vld [vmem:[%s5 + $0x13e4] sm:$0xf]
  %v4662 = vld [vmem:[%s5 + $0x13e8] sm:$0xff]
  %v4663 = vld [vmem:[%s5 + $0x13f0] sm:$0xff]
  %v4664 = vld [vmem:[%s5 + $0x13f8] sm:$0xff]
  %v4665 = vld [vmem:[%s5 + $0x1400] sm:$0xf]
  %v4666 = vld [vmem:[%s5 + $0x1404] sm:$0xff]
  %v4667 = vld [vmem:[%s5 + $0x140c] sm:$0xff]
  %v4668 = vld [vmem:[%s5 + $0x1414] sm:$0xff]
  %v4669 = vld [vmem:[%s5 + $0x141c] sm:$0xf]
  %v4670 = vld [vmem:[%s5 + $0x1420] sm:$0xff]
  %v4671 = vld [vmem:[%s5 + $0x1428] sm:$0xff]
  %v4672 = vld [vmem:[%s5 + $0x1430] sm:$0xff]
  %v4673 = vld [vmem:[%s5 + $0x1438] sm:$0xf]
  %v4674 = vld [vmem:[%s5 + $0x143c] sm:$0xff]
  %v4675 = vld [vmem:[%s5 + $0x1444] sm:$0xff]
  %v4676 = vld [vmem:[%s5 + $0x144c] sm:$0xff]
  %v4677 = vld [vmem:[%s5 + $0x1454] sm:$0xf]
  %v4678 = vld [vmem:[%s5 + $0x1458] sm:$0xff]
  %v4679 = vld [vmem:[%s5 + $0x1460] sm:$0xff]
  %v4680 = vld [vmem:[%s5 + $0x1468] sm:$0xff]
  %v4681 = vld [vmem:[%s5 + $0x1470] sm:$0xf]
  %v4682 = vld [vmem:[%s5 + $0x1474] sm:$0xff]
  %v4683 = vld [vmem:[%s5 + $0x147c] sm:$0xff]
  %v4684 = vld [vmem:[%s5 + $0x1484] sm:$0xff]
  %v4685 = vld [vmem:[%s5 + $0x148c] sm:$0xf]
  %v4686 = vld [vmem:[%s5 + $0x1490] sm:$0xff]
  %v4687 = vld [vmem:[%s5 + $0x1498] sm:$0xff]
  %v4688 = vld [vmem:[%s5 + $0x14a0] sm:$0xff]
  %v4689 = vld [vmem:[%s5 + $0x14a8] sm:$0xf]
  %v4690 = vld [vmem:[%s5 + $0x14ac] sm:$0xff]
  %v4691 = vld [vmem:[%s5 + $0x14b4] sm:$0xff]
  %v4692 = vld [vmem:[%s5 + $0x14bc] sm:$0xff]
  %v4693 = vld [vmem:[%s5 + $0x14c4] sm:$0xf]
  %v4694 = vld [vmem:[%s5 + $0x14c8] sm:$0xff]
  %v4695 = vld [vmem:[%s5 + $0x14d0] sm:$0xff]
  %v4696 = vld [vmem:[%s5 + $0x14d8] sm:$0xff]
  %v4697 = vld [vmem:[%s5 + $0x14e0] sm:$0xf]
  %v4698 = vld [vmem:[%s5 + $0x14e4] sm:$0xff]
  %v4699 = vld [vmem:[%s5 + $0x14ec] sm:$0xff]
  %v4700 = vld [vmem:[%s5 + $0x14f4] sm:$0xff]
  %v4701 = vld [vmem:[%s5 + $0x14fc] sm:$0xf]
  %v4702 = vld [vmem:[%s5 + $0x1500] sm:$0xff]
  %v4703 = vld [vmem:[%s5 + $0x1508] sm:$0xff]
  %v4704 = vld [vmem:[%s5 + $0x1510] sm:$0xff]
  %v4705 = vld [vmem:[%s5 + $0x1518] sm:$0xf]
  %v4706 = vld [vmem:[%s5 + $0x151c] sm:$0xff]
  %v4707 = vld [vmem:[%s5 + $0x1524] sm:$0xff]
  %v4708 = vld [vmem:[%s5 + $0x152c] sm:$0xff]
  %v4709 = vld [vmem:[%s5 + $0x1534] sm:$0xf]
  %v4710 = vld [vmem:[%s5 + $0x1538] sm:$0xff]
  %v4711 = vld [vmem:[%s5 + $0x1540] sm:$0xff]
  %v4712 = vld [vmem:[%s5 + $0x1548] sm:$0xff]
  %v4713 = vld [vmem:[%s5 + $0x1550] sm:$0xf]
  %v4714 = vld [vmem:[%s5 + $0x1554] sm:$0xff]
  %v4715 = vld [vmem:[%s5 + $0x155c] sm:$0xff]
  %v4716 = vld [vmem:[%s5 + $0x1564] sm:$0xff]
  %v4717 = vld [vmem:[%s5 + $0x156c] sm:$0xf]
  %v4718 = vld [vmem:[%s5 + $0x1570] sm:$0xff]
  %v4719 = vld [vmem:[%s5 + $0x1578] sm:$0xff]
  %v4720 = vld [vmem:[%s5 + $0x1580] sm:$0xff]
  %v4721 = vld [vmem:[%s5 + $0x1588] sm:$0xf]
  %v4722 = vld [vmem:[%s5 + $0x158c] sm:$0xff]
  %v4723 = vld [vmem:[%s5 + $0x1594] sm:$0xff]
  %v4724 = vld [vmem:[%s5 + $0x159c] sm:$0xff]
  %v4725 = vld [vmem:[%s5 + $0x15a4] sm:$0xf]
  %v4726 = vld [vmem:[%s5 + $0x15a8] sm:$0xff]
  %v4727 = vld [vmem:[%s5 + $0x15b0] sm:$0xff]
  %v4728 = vld [vmem:[%s5 + $0x15b8] sm:$0xff]
  %v4729 = vld [vmem:[%s5 + $0x15c0] sm:$0xf]
  %v4730 = vld [vmem:[%s5 + $0x15c4] sm:$0xff]
  %v4731 = vld [vmem:[%s5 + $0x15cc] sm:$0xff]
  %v4732 = vld [vmem:[%s5 + $0x15d4] sm:$0xff]
  %v4733 = vld [vmem:[%s5 + $0x15dc] sm:$0xf]
  %v4734 = vld [vmem:[#allocation2] sm:$0x1]
  %v4736 = vlaneseq
  %v4737 = vshrl.u32 %v4736, 7
  %v4738 = vsub.s32 0, %v4737
  %v4739 = vrot.slane %v4734, %v4738
  %4740 = vset.pattern.permute.xlu0 0
  %4741 = vperm.xlu0 %4740, %v4739
  %v4742 = vpop.permute.xlu0 %4741
  %v5544 = vunpack.c.l.b16 %v3934
  %v5545 = vunpack.c.h.b16 %v3934
  %v5546 = vunpack.c.l.b16 %v3935
  %v5547 = vunpack.c.h.b16 %v3935
  %v5548 = vunpack.c.l.b16 %v3936
  %v5549 = vunpack.c.h.b16 %v3936
  %v5550 = vunpack.c.l.b16 %v3937
  %v5551 = vunpack.c.l.b16 %v3938
  %v5552 = vunpack.c.h.b16 %v3938
  %v5553 = vunpack.c.l.b16 %v3939
  %v5554 = vunpack.c.h.b16 %v3939
  %v5555 = vunpack.c.l.b16 %v3940
  %v5556 = vunpack.c.h.b16 %v3940
  %v5557 = vunpack.c.l.b16 %v3941
  %v5558 = vunpack.c.l.b16 %v3942
  %v5559 = vunpack.c.h.b16 %v3942
  %v5560 = vunpack.c.l.b16 %v3943
  %v5561 = vunpack.c.h.b16 %v3943
  %v5562 = vunpack.c.l.b16 %v3944
  %v5563 = vunpack.c.h.b16 %v3944
  %v5564 = vunpack.c.l.b16 %v3945
  %v5565 = vunpack.c.l.b16 %v3946
  %v5566 = vunpack.c.h.b16 %v3946
  %v5567 = vunpack.c.l.b16 %v3947
  %v5568 = vunpack.c.h.b16 %v3947
  %v5569 = vunpack.c.l.b16 %v3948
  %v5570 = vunpack.c.h.b16 %v3948
  %v5571 = vunpack.c.l.b16 %v3949
  %v5572 = vunpack.c.l.b16 %v3950
  %v5573 = vunpack.c.h.b16 %v3950
  %v5574 = vunpack.c.l.b16 %v3951
  %v5575 = vunpack.c.h.b16 %v3951
  %v5576 = vunpack.c.l.b16 %v3952
  %v5577 = vunpack.c.h.b16 %v3952
  %v5578 = vunpack.c.l.b16 %v3953
  %v5579 = vunpack.c.l.b16 %v3954
  %v5580 = vunpack.c.h.b16 %v3954
  %v5581 = vunpack.c.l.b16 %v3955
  %v5582 = vunpack.c.h.b16 %v3955
  %v5583 = vunpack.c.l.b16 %v3956
  %v5584 = vunpack.c.h.b16 %v3956
  %v5585 = vunpack.c.l.b16 %v3957
  %v5586 = vunpack.c.l.b16 %v3958
  %v5587 = vunpack.c.h.b16 %v3958
  %v5588 = vunpack.c.l.b16 %v3959
  %v5589 = vunpack.c.h.b16 %v3959
  %v5590 = vunpack.c.l.b16 %v3960
  %v5591 = vunpack.c.h.b16 %v3960
  %v5592 = vunpack.c.l.b16 %v3961
  %v5593 = vunpack.c.l.b16 %v3962
  %v5594 = vunpack.c.h.b16 %v3962
  %v5595 = vunpack.c.l.b16 %v3963
  %v5596 = vunpack.c.h.b16 %v3963
  %v5597 = vunpack.c.l.b16 %v3964
  %v5598 = vunpack.c.h.b16 %v3964
  %v5599 = vunpack.c.l.b16 %v3965
  %v5600 = vunpack.c.l.b16 %v3966
  %v5601 = vunpack.c.h.b16 %v3966
  %v5602 = vunpack.c.l.b16 %v3967
  %v5603 = vunpack.c.h.b16 %v3967
  %v5604 = vunpack.c.l.b16 %v3968
  %v5605 = vunpack.c.h.b16 %v3968
  %v5606 = vunpack.c.l.b16 %v3969
  %v5607 = vunpack.c.l.b16 %v3970
  %v5608 = vunpack.c.h.b16 %v3970
  %v5609 = vunpack.c.l.b16 %v3971
  %v5610 = vunpack.c.h.b16 %v3971
  %v5611 = vunpack.c.l.b16 %v3972
  %v5612 = vunpack.c.h.b16 %v3972
  %v5613 = vunpack.c.l.b16 %v3973
  %v5614 = vunpack.c.l.b16 %v3974
  %v5615 = vunpack.c.h.b16 %v3974
  %v5616 = vunpack.c.l.b16 %v3975
  %v5617 = vunpack.c.h.b16 %v3975
  %v5618 = vunpack.c.l.b16 %v3976
  %v5619 = vunpack.c.h.b16 %v3976
  %v5620 = vunpack.c.l.b16 %v3977
  %v5621 = vunpack.c.l.b16 %v3978
  %v5622 = vunpack.c.h.b16 %v3978
  %v5623 = vunpack.c.l.b16 %v3979
  %v5624 = vunpack.c.h.b16 %v3979
  %v5625 = vunpack.c.l.b16 %v3980
  %v5626 = vunpack.c.h.b16 %v3980
  %v5627 = vunpack.c.l.b16 %v3981
  %v5628 = vunpack.c.l.b16 %v3982
  %v5629 = vunpack.c.h.b16 %v3982
  %v5630 = vunpack.c.l.b16 %v3983
  %v5631 = vunpack.c.h.b16 %v3983
  %v5632 = vunpack.c.l.b16 %v3984
  %v5633 = vunpack.c.h.b16 %v3984
  %v5634 = vunpack.c.l.b16 %v3985
  %v5635 = vunpack.c.l.b16 %v3986
  %v5636 = vunpack.c.h.b16 %v3986
  %v5637 = vunpack.c.l.b16 %v3987
  %v5638 = vunpack.c.h.b16 %v3987
  %v5639 = vunpack.c.l.b16 %v3988
  %v5640 = vunpack.c.h.b16 %v3988
  %v5641 = vunpack.c.l.b16 %v3989
  %v5642 = vunpack.c.l.b16 %v3990
  %v5643 = vunpack.c.h.b16 %v3990
  %v5644 = vunpack.c.l.b16 %v3991
  %v5645 = vunpack.c.h.b16 %v3991
  %v5646 = vunpack.c.l.b16 %v3992
  %v5647 = vunpack.c.h.b16 %v3992
  %v5648 = vunpack.c.l.b16 %v3993
  %v5649 = vunpack.c.l.b16 %v3994
  %v5650 = vunpack.c.h.b16 %v3994
  %v5651 = vunpack.c.l.b16 %v3995
  %v5652 = vunpack.c.h.b16 %v3995
  %v5653 = vunpack.c.l.b16 %v3996
  %v5654 = vunpack.c.h.b16 %v3996
  %v5655 = vunpack.c.l.b16 %v3997
  %v5656 = vunpack.c.l.b16 %v3998
  %v5657 = vunpack.c.h.b16 %v3998
  %v5658 = vunpack.c.l.b16 %v3999
  %v5659 = vunpack.c.h.b16 %v3999
  %v5660 = vunpack.c.l.b16 %v4000
  %v5661 = vunpack.c.h.b16 %v4000
  %v5662 = vunpack.c.l.b16 %v4001
  %v5663 = vunpack.c.l.b16 %v4002
  %v5664 = vunpack.c.h.b16 %v4002
  %v5665 = vunpack.c.l.b16 %v4003
  %v5666 = vunpack.c.h.b16 %v4003
  %v5667 = vunpack.c.l.b16 %v4004
  %v5668 = vunpack.c.h.b16 %v4004
  %v5669 = vunpack.c.l.b16 %v4005
  %v5670 = vunpack.c.l.b16 %v4006
  %v5671 = vunpack.c.h.b16 %v4006
  %v5672 = vunpack.c.l.b16 %v4007
  %v5673 = vunpack.c.h.b16 %v4007
  %v5674 = vunpack.c.l.b16 %v4008
  %v5675 = vunpack.c.h.b16 %v4008
  %v5676 = vunpack.c.l.b16 %v4009
  %v5677 = vunpack.c.l.b16 %v4010
  %v5678 = vunpack.c.h.b16 %v4010
  %v5679 = vunpack.c.l.b16 %v4011
  %v5680 = vunpack.c.h.b16 %v4011
  %v5681 = vunpack.c.l.b16 %v4012
  %v5682 = vunpack.c.h.b16 %v4012
  %v5683 = vunpack.c.l.b16 %v4013
  %v5684 = vunpack.c.l.b16 %v4014
  %v5685 = vunpack.c.h.b16 %v4014
  %v5686 = vunpack.c.l.b16 %v4015
  %v5687 = vunpack.c.h.b16 %v4015
  %v5688 = vunpack.c.l.b16 %v4016
  %v5689 = vunpack.c.h.b16 %v4016
  %v5690 = vunpack.c.l.b16 %v4017
  %v5691 = vunpack.c.l.b16 %v4018
  %v5692 = vunpack.c.h.b16 %v4018
  %v5693 = vunpack.c.l.b16 %v4019
  %v5694 = vunpack.c.h.b16 %v4019
  %v5695 = vunpack.c.l.b16 %v4020
  %v5696 = vunpack.c.h.b16 %v4020
  %v5697 = vunpack.c.l.b16 %v4021
  %v5698 = vunpack.c.l.b16 %v4022
  %v5699 = vunpack.c.h.b16 %v4022
  %v5700 = vunpack.c.l.b16 %v4023
  %v5701 = vunpack.c.h.b16 %v4023
  %v5702 = vunpack.c.l.b16 %v4024
  %v5703 = vunpack.c.h.b16 %v4024
  %v5704 = vunpack.c.l.b16 %v4025
  %v5705 = vunpack.c.l.b16 %v4026
  %v5706 = vunpack.c.h.b16 %v4026
  %v5707 = vunpack.c.l.b16 %v4027
  %v5708 = vunpack.c.h.b16 %v4027
  %v5709 = vunpack.c.l.b16 %v4028
  %v5710 = vunpack.c.h.b16 %v4028
  %v5711 = vunpack.c.l.b16 %v4029
  %v5712 = vunpack.c.l.b16 %v4030
  %v5713 = vunpack.c.h.b16 %v4030
  %v5714 = vunpack.c.l.b16 %v4031
  %v5715 = vunpack.c.h.b16 %v4031
  %v5716 = vunpack.c.l.b16 %v4032
  %v5717 = vunpack.c.h.b16 %v4032
  %v5718 = vunpack.c.l.b16 %v4033
  %v5719 = vunpack.c.l.b16 %v4034
  %v5720 = vunpack.c.h.b16 %v4034
  %v5721 = vunpack.c.l.b16 %v4035
  %v5722 = vunpack.c.h.b16 %v4035
  %v5723 = vunpack.c.l.b16 %v4036
  %v5724 = vunpack.c.h.b16 %v4036
  %v5725 = vunpack.c.l.b16 %v4037
  %v5726 = vunpack.c.l.b16 %v4038
  %v5727 = vunpack.c.h.b16 %v4038
  %v5728 = vunpack.c.l.b16 %v4039
  %v5729 = vunpack.c.h.b16 %v4039
  %v5730 = vunpack.c.l.b16 %v4040
  %v5731 = vunpack.c.h.b16 %v4040
  %v5732 = vunpack.c.l.b16 %v4041
  %v5733 = vunpack.c.l.b16 %v4042
  %v5734 = vunpack.c.h.b16 %v4042
  %v5735 = vunpack.c.l.b16 %v4043
  %v5736 = vunpack.c.h.b16 %v4043
  %v5737 = vunpack.c.l.b16 %v4044
  %v5738 = vunpack.c.h.b16 %v4044
  %v5739 = vunpack.c.l.b16 %v4045
  %v5740 = vunpack.c.l.b16 %v4046
  %v5741 = vunpack.c.h.b16 %v4046
  %v5742 = vunpack.c.l.b16 %v4047
  %v5743 = vunpack.c.h.b16 %v4047
  %v5744 = vunpack.c.l.b16 %v4048
  %v5745 = vunpack.c.h.b16 %v4048
  %v5746 = vunpack.c.l.b16 %v4049
  %v5747 = vunpack.c.l.b16 %v4050
  %v5748 = vunpack.c.h.b16 %v4050
  %v5749 = vunpack.c.l.b16 %v4051
  %v5750 = vunpack.c.h.b16 %v4051
  %v5751 = vunpack.c.l.b16 %v4052
  %v5752 = vunpack.c.h.b16 %v4052
  %v5753 = vunpack.c.l.b16 %v4053
  %v5754 = vunpack.c.l.b16 %v4054
  %v5755 = vunpack.c.h.b16 %v4054
  %v5756 = vunpack.c.l.b16 %v4055
  %v5757 = vunpack.c.h.b16 %v4055
  %v5758 = vunpack.c.l.b16 %v4056
  %v5759 = vunpack.c.h.b16 %v4056
  %v5760 = vunpack.c.l.b16 %v4057
  %v5761 = vunpack.c.l.b16 %v4058
  %v5762 = vunpack.c.h.b16 %v4058
  %v5763 = vunpack.c.l.b16 %v4059
  %v5764 = vunpack.c.h.b16 %v4059
  %v5765 = vunpack.c.l.b16 %v4060
  %v5766 = vunpack.c.h.b16 %v4060
  %v5767 = vunpack.c.l.b16 %v4061
  %v5768 = vunpack.c.l.b16 %v4062
  %v5769 = vunpack.c.h.b16 %v4062
  %v5770 = vunpack.c.l.b16 %v4063
  %v5771 = vunpack.c.h.b16 %v4063
  %v5772 = vunpack.c.l.b16 %v4064
  %v5773 = vunpack.c.h.b16 %v4064
  %v5774 = vunpack.c.l.b16 %v4065
  %v5775 = vunpack.c.l.b16 %v4066
  %v5776 = vunpack.c.h.b16 %v4066
  %v5777 = vunpack.c.l.b16 %v4067
  %v5778 = vunpack.c.h.b16 %v4067
  %v5779 = vunpack.c.l.b16 %v4068
  %v5780 = vunpack.c.h.b16 %v4068
  %v5781 = vunpack.c.l.b16 %v4069
  %v5782 = vunpack.c.l.b16 %v4070
  %v5783 = vunpack.c.h.b16 %v4070
  %v5784 = vunpack.c.l.b16 %v4071
  %v5785 = vunpack.c.h.b16 %v4071
  %v5786 = vunpack.c.l.b16 %v4072
  %v5787 = vunpack.c.h.b16 %v4072
  %v5788 = vunpack.c.l.b16 %v4073
  %v5789 = vunpack.c.l.b16 %v4074
  %v5790 = vunpack.c.h.b16 %v4074
  %v5791 = vunpack.c.l.b16 %v4075
  %v5792 = vunpack.c.h.b16 %v4075
  %v5793 = vunpack.c.l.b16 %v4076
  %v5794 = vunpack.c.h.b16 %v4076
  %v5795 = vunpack.c.l.b16 %v4077
  %v5796 = vunpack.c.l.b16 %v4078
  %v5797 = vunpack.c.h.b16 %v4078
  %v5798 = vunpack.c.l.b16 %v4079
  %v5799 = vunpack.c.h.b16 %v4079
  %v5800 = vunpack.c.l.b16 %v4080
  %v5801 = vunpack.c.h.b16 %v4080
  %v5802 = vunpack.c.l.b16 %v4081
  %v5803 = vunpack.c.l.b16 %v4082
  %v5804 = vunpack.c.h.b16 %v4082
  %v5805 = vunpack.c.l.b16 %v4083
  %v5806 = vunpack.c.h.b16 %v4083
  %v5807 = vunpack.c.l.b16 %v4084
  %v5808 = vunpack.c.h.b16 %v4084
  %v5809 = vunpack.c.l.b16 %v4085
  %v5810 = vunpack.c.l.b16 %v4086
  %v5811 = vunpack.c.h.b16 %v4086
  %v5812 = vunpack.c.l.b16 %v4087
  %v5813 = vunpack.c.h.b16 %v4087
  %v5814 = vunpack.c.l.b16 %v4088
  %v5815 = vunpack.c.h.b16 %v4088
  %v5816 = vunpack.c.l.b16 %v4089
  %v5817 = vunpack.c.l.b16 %v4090
  %v5818 = vunpack.c.h.b16 %v4090
  %v5819 = vunpack.c.l.b16 %v4091
  %v5820 = vunpack.c.h.b16 %v4091
  %v5821 = vunpack.c.l.b16 %v4092
  %v5822 = vunpack.c.h.b16 %v4092
  %v5823 = vunpack.c.l.b16 %v4093
  %v5824 = vunpack.c.l.b16 %v4094
  %v5825 = vunpack.c.h.b16 %v4094
  %v5826 = vunpack.c.l.b16 %v4095
  %v5827 = vunpack.c.h.b16 %v4095
  %v5828 = vunpack.c.l.b16 %v4096
  %v5829 = vunpack.c.h.b16 %v4096
  %v5830 = vunpack.c.l.b16 %v4097
  %v5831 = vunpack.c.l.b16 %v4098
  %v5832 = vunpack.c.h.b16 %v4098
  %v5833 = vunpack.c.l.b16 %v4099
  %v5834 = vunpack.c.h.b16 %v4099
  %v5835 = vunpack.c.l.b16 %v4100
  %v5836 = vunpack.c.h.b16 %v4100
  %v5837 = vunpack.c.l.b16 %v4101
  %v5838 = vunpack.c.l.b16 %v4102
  %v5839 = vunpack.c.h.b16 %v4102
  %v5840 = vunpack.c.l.b16 %v4103
  %v5841 = vunpack.c.h.b16 %v4103
  %v5842 = vunpack.c.l.b16 %v4104
  %v5843 = vunpack.c.h.b16 %v4104
  %v5844 = vunpack.c.l.b16 %v4105
  %v5845 = vunpack.c.l.b16 %v4106
  %v5846 = vunpack.c.h.b16 %v4106
  %v5847 = vunpack.c.l.b16 %v4107
  %v5848 = vunpack.c.h.b16 %v4107
  %v5849 = vunpack.c.l.b16 %v4108
  %v5850 = vunpack.c.h.b16 %v4108
  %v5851 = vunpack.c.l.b16 %v4109
  %v5852 = vunpack.c.l.b16 %v4110
  %v5853 = vunpack.c.h.b16 %v4110
  %v5854 = vunpack.c.l.b16 %v4111
  %v5855 = vunpack.c.h.b16 %v4111
  %v5856 = vunpack.c.l.b16 %v4112
  %v5857 = vunpack.c.h.b16 %v4112
  %v5858 = vunpack.c.l.b16 %v4113
  %v5859 = vunpack.c.l.b16 %v4114
  %v5860 = vunpack.c.h.b16 %v4114
  %v5861 = vunpack.c.l.b16 %v4115
  %v5862 = vunpack.c.h.b16 %v4115
  %v5863 = vunpack.c.l.b16 %v4116
  %v5864 = vunpack.c.h.b16 %v4116
  %v5865 = vunpack.c.l.b16 %v4117
  %v5866 = vunpack.c.l.b16 %v4118
  %v5867 = vunpack.c.h.b16 %v4118
  %v5868 = vunpack.c.l.b16 %v4119
  %v5869 = vunpack.c.h.b16 %v4119
  %v5870 = vunpack.c.l.b16 %v4120
  %v5871 = vunpack.c.h.b16 %v4120
  %v5872 = vunpack.c.l.b16 %v4121
  %v5873 = vunpack.c.l.b16 %v4122
  %v5874 = vunpack.c.h.b16 %v4122
  %v5875 = vunpack.c.l.b16 %v4123
  %v5876 = vunpack.c.h.b16 %v4123
  %v5877 = vunpack.c.l.b16 %v4124
  %v5878 = vunpack.c.h.b16 %v4124
  %v5879 = vunpack.c.l.b16 %v4125
  %v5880 = vunpack.c.l.b16 %v4126
  %v5881 = vunpack.c.h.b16 %v4126
  %v5882 = vunpack.c.l.b16 %v4127
  %v5883 = vunpack.c.h.b16 %v4127
  %v5884 = vunpack.c.l.b16 %v4128
  %v5885 = vunpack.c.h.b16 %v4128
  %v5886 = vunpack.c.l.b16 %v4129
  %v5887 = vunpack.c.l.b16 %v4130
  %v5888 = vunpack.c.h.b16 %v4130
  %v5889 = vunpack.c.l.b16 %v4131
  %v5890 = vunpack.c.h.b16 %v4131
  %v5891 = vunpack.c.l.b16 %v4132
  %v5892 = vunpack.c.h.b16 %v4132
  %v5893 = vunpack.c.l.b16 %v4133
  %v5894 = vunpack.c.l.b16 %v4134
  %v5895 = vunpack.c.h.b16 %v4134
  %v5896 = vunpack.c.l.b16 %v4135
  %v5897 = vunpack.c.h.b16 %v4135
  %v5898 = vunpack.c.l.b16 %v4136
  %v5899 = vunpack.c.h.b16 %v4136
  %v5900 = vunpack.c.l.b16 %v4137
  %v5901 = vunpack.c.l.b16 %v4138
  %v5902 = vunpack.c.h.b16 %v4138
  %v5903 = vunpack.c.l.b16 %v4139
  %v5904 = vunpack.c.h.b16 %v4139
  %v5905 = vunpack.c.l.b16 %v4140
  %v5906 = vunpack.c.h.b16 %v4140
  %v5907 = vunpack.c.l.b16 %v4141
  %v5908 = vunpack.c.l.b16 %v4142
  %v5909 = vunpack.c.h.b16 %v4142
  %v5910 = vunpack.c.l.b16 %v4143
  %v5911 = vunpack.c.h.b16 %v4143
  %v5912 = vunpack.c.l.b16 %v4144
  %v5913 = vunpack.c.h.b16 %v4144
  %v5914 = vunpack.c.l.b16 %v4145
  %v5915 = vunpack.c.l.b16 %v4146
  %v5916 = vunpack.c.h.b16 %v4146
  %v5917 = vunpack.c.l.b16 %v4147
  %v5918 = vunpack.c.h.b16 %v4147
  %v5919 = vunpack.c.l.b16 %v4148
  %v5920 = vunpack.c.h.b16 %v4148
  %v5921 = vunpack.c.l.b16 %v4149
  %v5922 = vunpack.c.l.b16 %v4150
  %v5923 = vunpack.c.h.b16 %v4150
  %v5924 = vunpack.c.l.b16 %v4151
  %v5925 = vunpack.c.h.b16 %v4151
  %v5926 = vunpack.c.l.b16 %v4152
  %v5927 = vunpack.c.h.b16 %v4152
  %v5928 = vunpack.c.l.b16 %v4153
  %v5929 = vunpack.c.l.b16 %v4154
  %v5930 = vunpack.c.h.b16 %v4154
  %v5931 = vunpack.c.l.b16 %v4155
  %v5932 = vunpack.c.h.b16 %v4155
  %v5933 = vunpack.c.l.b16 %v4156
  %v5934 = vunpack.c.h.b16 %v4156
  %v5935 = vunpack.c.l.b16 %v4157
  %v5936 = vunpack.c.l.b16 %v4158
  %v5937 = vunpack.c.h.b16 %v4158
  %v5938 = vunpack.c.l.b16 %v4159
  %v5939 = vunpack.c.h.b16 %v4159
  %v5940 = vunpack.c.l.b16 %v4160
  %v5941 = vunpack.c.h.b16 %v4160
  %v5942 = vunpack.c.l.b16 %v4161
  %v5943 = vunpack.c.l.b16 %v4162
  %v5944 = vunpack.c.h.b16 %v4162
  %v5945 = vunpack.c.l.b16 %v4163
  %v5946 = vunpack.c.h.b16 %v4163
  %v5947 = vunpack.c.l.b16 %v4164
  %v5948 = vunpack.c.h.b16 %v4164
  %v5949 = vunpack.c.l.b16 %v4165
  %v5950 = vunpack.c.l.b16 %v4166
  %v5951 = vunpack.c.h.b16 %v4166
  %v5952 = vunpack.c.l.b16 %v4167
  %v5953 = vunpack.c.h.b16 %v4167
  %v5954 = vunpack.c.l.b16 %v4168
  %v5955 = vunpack.c.h.b16 %v4168
  %v5956 = vunpack.c.l.b16 %v4169
  %v5957 = vunpack.c.l.b16 %v4170
  %v5958 = vunpack.c.h.b16 %v4170
  %v5959 = vunpack.c.l.b16 %v4171
  %v5960 = vunpack.c.h.b16 %v4171
  %v5961 = vunpack.c.l.b16 %v4172
  %v5962 = vunpack.c.h.b16 %v4172
  %v5963 = vunpack.c.l.b16 %v4173
  %v5964 = vunpack.c.l.b16 %v4174
  %v5965 = vunpack.c.h.b16 %v4174
  %v5966 = vunpack.c.l.b16 %v4175
  %v5967 = vunpack.c.h.b16 %v4175
  %v5968 = vunpack.c.l.b16 %v4176
  %v5969 = vunpack.c.h.b16 %v4176
  %v5970 = vunpack.c.l.b16 %v4177
  %v5971 = vunpack.c.l.b16 %v4178
  %v5972 = vunpack.c.h.b16 %v4178
  %v5973 = vunpack.c.l.b16 %v4179
  %v5974 = vunpack.c.h.b16 %v4179
  %v5975 = vunpack.c.l.b16 %v4180
  %v5976 = vunpack.c.h.b16 %v4180
  %v5977 = vunpack.c.l.b16 %v4181
  %v5978 = vunpack.c.l.b16 %v4182
  %v5979 = vunpack.c.h.b16 %v4182
  %v5980 = vunpack.c.l.b16 %v4183
  %v5981 = vunpack.c.h.b16 %v4183
  %v5982 = vunpack.c.l.b16 %v4184
  %v5983 = vunpack.c.h.b16 %v4184
  %v5984 = vunpack.c.l.b16 %v4185
  %v5985 = vunpack.c.l.b16 %v4186
  %v5986 = vunpack.c.h.b16 %v4186
  %v5987 = vunpack.c.l.b16 %v4187
  %v5988 = vunpack.c.h.b16 %v4187
  %v5989 = vunpack.c.l.b16 %v4188
  %v5990 = vunpack.c.h.b16 %v4188
  %v5991 = vunpack.c.l.b16 %v4189
  %v5992 = vunpack.c.l.b16 %v4190
  %v5993 = vunpack.c.h.b16 %v4190
  %v5994 = vunpack.c.l.b16 %v4191
  %v5995 = vunpack.c.h.b16 %v4191
  %v5996 = vunpack.c.l.b16 %v4192
  %v5997 = vunpack.c.h.b16 %v4192
  %v5998 = vunpack.c.l.b16 %v4193
  %v5999 = vunpack.c.l.b16 %v4194
  %v6000 = vunpack.c.h.b16 %v4194
  %v6001 = vunpack.c.l.b16 %v4195
  %v6002 = vunpack.c.h.b16 %v4195
  %v6003 = vunpack.c.l.b16 %v4196
  %v6004 = vunpack.c.h.b16 %v4196
  %v6005 = vunpack.c.l.b16 %v4197
  %v6006 = vunpack.c.l.b16 %v4198
  %v6007 = vunpack.c.h.b16 %v4198
  %v6008 = vunpack.c.l.b16 %v4199
  %v6009 = vunpack.c.h.b16 %v4199
  %v6010 = vunpack.c.l.b16 %v4200
  %v6011 = vunpack.c.h.b16 %v4200
  %v6012 = vunpack.c.l.b16 %v4201
  %v6013 = vunpack.c.l.b16 %v4202
  %v6014 = vunpack.c.h.b16 %v4202
  %v6015 = vunpack.c.l.b16 %v4203
  %v6016 = vunpack.c.h.b16 %v4203
  %v6017 = vunpack.c.l.b16 %v4204
  %v6018 = vunpack.c.h.b16 %v4204
  %v6019 = vunpack.c.l.b16 %v4205
  %v6020 = vunpack.c.l.b16 %v4206
  %v6021 = vunpack.c.h.b16 %v4206
  %v6022 = vunpack.c.l.b16 %v4207
  %v6023 = vunpack.c.h.b16 %v4207
  %v6024 = vunpack.c.l.b16 %v4208
  %v6025 = vunpack.c.h.b16 %v4208
  %v6026 = vunpack.c.l.b16 %v4209
  %v6027 = vunpack.c.l.b16 %v4210
  %v6028 = vunpack.c.h.b16 %v4210
  %v6029 = vunpack.c.l.b16 %v4211
  %v6030 = vunpack.c.h.b16 %v4211
  %v6031 = vunpack.c.l.b16 %v4212
  %v6032 = vunpack.c.h.b16 %v4212
  %v6033 = vunpack.c.l.b16 %v4213
  %v6034 = vunpack.c.l.b16 %v4214
  %v6035 = vunpack.c.h.b16 %v4214
  %v6036 = vunpack.c.l.b16 %v4215
  %v6037 = vunpack.c.h.b16 %v4215
  %v6038 = vunpack.c.l.b16 %v4216
  %v6039 = vunpack.c.h.b16 %v4216
  %v6040 = vunpack.c.l.b16 %v4217
  %v6041 = vunpack.c.l.b16 %v4218
  %v6042 = vunpack.c.h.b16 %v4218
  %v6043 = vunpack.c.l.b16 %v4219
  %v6044 = vunpack.c.h.b16 %v4219
  %v6045 = vunpack.c.l.b16 %v4220
  %v6046 = vunpack.c.h.b16 %v4220
  %v6047 = vunpack.c.l.b16 %v4221
  %v6048 = vunpack.c.l.b16 %v4222
  %v6049 = vunpack.c.h.b16 %v4222
  %v6050 = vunpack.c.l.b16 %v4223
  %v6051 = vunpack.c.h.b16 %v4223
  %v6052 = vunpack.c.l.b16 %v4224
  %v6053 = vunpack.c.h.b16 %v4224
  %v6054 = vunpack.c.l.b16 %v4225
  %v6055 = vunpack.c.l.b16 %v4226
  %v6056 = vunpack.c.h.b16 %v4226
  %v6057 = vunpack.c.l.b16 %v4227
  %v6058 = vunpack.c.h.b16 %v4227
  %v6059 = vunpack.c.l.b16 %v4228
  %v6060 = vunpack.c.h.b16 %v4228
  %v6061 = vunpack.c.l.b16 %v4229
  %v6062 = vunpack.c.l.b16 %v4230
  %v6063 = vunpack.c.h.b16 %v4230
  %v6064 = vunpack.c.l.b16 %v4231
  %v6065 = vunpack.c.h.b16 %v4231
  %v6066 = vunpack.c.l.b16 %v4232
  %v6067 = vunpack.c.h.b16 %v4232
  %v6068 = vunpack.c.l.b16 %v4233
  %v6069 = vunpack.c.l.b16 %v4234
  %v6070 = vunpack.c.h.b16 %v4234
  %v6071 = vunpack.c.l.b16 %v4235
  %v6072 = vunpack.c.h.b16 %v4235
  %v6073 = vunpack.c.l.b16 %v4236
  %v6074 = vunpack.c.h.b16 %v4236
  %v6075 = vunpack.c.l.b16 %v4237
  %v6076 = vunpack.c.l.b16 %v4238
  %v6077 = vunpack.c.h.b16 %v4238
  %v6078 = vunpack.c.l.b16 %v4239
  %v6079 = vunpack.c.h.b16 %v4239
  %v6080 = vunpack.c.l.b16 %v4240
  %v6081 = vunpack.c.h.b16 %v4240
  %v6082 = vunpack.c.l.b16 %v4241
  %v6083 = vunpack.c.l.b16 %v4242
  %v6084 = vunpack.c.h.b16 %v4242
  %v6085 = vunpack.c.l.b16 %v4243
  %v6086 = vunpack.c.h.b16 %v4243
  %v6087 = vunpack.c.l.b16 %v4244
  %v6088 = vunpack.c.h.b16 %v4244
  %v6089 = vunpack.c.l.b16 %v4245
  %v6090 = vunpack.c.l.b16 %v4246
  %v6091 = vunpack.c.h.b16 %v4246
  %v6092 = vunpack.c.l.b16 %v4247
  %v6093 = vunpack.c.h.b16 %v4247
  %v6094 = vunpack.c.l.b16 %v4248
  %v6095 = vunpack.c.h.b16 %v4248
  %v6096 = vunpack.c.l.b16 %v4249
  %v6097 = vunpack.c.l.b16 %v4250
  %v6098 = vunpack.c.h.b16 %v4250
  %v6099 = vunpack.c.l.b16 %v4251
  %v6100 = vunpack.c.h.b16 %v4251
  %v6101 = vunpack.c.l.b16 %v4252
  %v6102 = vunpack.c.h.b16 %v4252
  %v6103 = vunpack.c.l.b16 %v4253
  %v6104 = vunpack.c.l.b16 %v4254
  %v6105 = vunpack.c.h.b16 %v4254
  %v6106 = vunpack.c.l.b16 %v4255
  %v6107 = vunpack.c.h.b16 %v4255
  %v6108 = vunpack.c.l.b16 %v4256
  %v6109 = vunpack.c.h.b16 %v4256
  %v6110 = vunpack.c.l.b16 %v4257
  %v6111 = vunpack.c.l.b16 %v4258
  %v6112 = vunpack.c.h.b16 %v4258
  %v6113 = vunpack.c.l.b16 %v4259
  %v6114 = vunpack.c.h.b16 %v4259
  %v6115 = vunpack.c.l.b16 %v4260
  %v6116 = vunpack.c.h.b16 %v4260
  %v6117 = vunpack.c.l.b16 %v4261
  %v6118 = vunpack.c.l.b16 %v4262
  %v6119 = vunpack.c.h.b16 %v4262
  %v6120 = vunpack.c.l.b16 %v4263
  %v6121 = vunpack.c.h.b16 %v4263
  %v6122 = vunpack.c.l.b16 %v4264
  %v6123 = vunpack.c.h.b16 %v4264
  %v6124 = vunpack.c.l.b16 %v4265
  %v6125 = vunpack.c.l.b16 %v4266
  %v6126 = vunpack.c.h.b16 %v4266
  %v6127 = vunpack.c.l.b16 %v4267
  %v6128 = vunpack.c.h.b16 %v4267
  %v6129 = vunpack.c.l.b16 %v4268
  %v6130 = vunpack.c.h.b16 %v4268
  %v6131 = vunpack.c.l.b16 %v4269
  %v6132 = vunpack.c.l.b16 %v4270
  %v6133 = vunpack.c.h.b16 %v4270
  %v6134 = vunpack.c.l.b16 %v4271
  %v6135 = vunpack.c.h.b16 %v4271
  %v6136 = vunpack.c.l.b16 %v4272
  %v6137 = vunpack.c.h.b16 %v4272
  %v6138 = vunpack.c.l.b16 %v4273
  %v6139 = vunpack.c.l.b16 %v4274
  %v6140 = vunpack.c.h.b16 %v4274
  %v6141 = vunpack.c.l.b16 %v4275
  %v6142 = vunpack.c.h.b16 %v4275
  %v6143 = vunpack.c.l.b16 %v4276
  %v6144 = vunpack.c.h.b16 %v4276
  %v6145 = vunpack.c.l.b16 %v4277
  %v6146 = vunpack.c.l.b16 %v4278
  %v6147 = vunpack.c.h.b16 %v4278
  %v6148 = vunpack.c.l.b16 %v4279
  %v6149 = vunpack.c.h.b16 %v4279
  %v6150 = vunpack.c.l.b16 %v4280
  %v6151 = vunpack.c.h.b16 %v4280
  %v6152 = vunpack.c.l.b16 %v4281
  %v6153 = vunpack.c.l.b16 %v4282
  %v6154 = vunpack.c.h.b16 %v4282
  %v6155 = vunpack.c.l.b16 %v4283
  %v6156 = vunpack.c.h.b16 %v4283
  %v6157 = vunpack.c.l.b16 %v4284
  %v6158 = vunpack.c.h.b16 %v4284
  %v6159 = vunpack.c.l.b16 %v4285
  %v6160 = vunpack.c.l.b16 %v4286
  %v6161 = vunpack.c.h.b16 %v4286
  %v6162 = vunpack.c.l.b16 %v4287
  %v6163 = vunpack.c.h.b16 %v4287
  %v6164 = vunpack.c.l.b16 %v4288
  %v6165 = vunpack.c.h.b16 %v4288
  %v6166 = vunpack.c.l.b16 %v4289
  %v6167 = vunpack.c.l.b16 %v4290
  %v6168 = vunpack.c.h.b16 %v4290
  %v6169 = vunpack.c.l.b16 %v4291
  %v6170 = vunpack.c.h.b16 %v4291
  %v6171 = vunpack.c.l.b16 %v4292
  %v6172 = vunpack.c.h.b16 %v4292
  %v6173 = vunpack.c.l.b16 %v4293
  %v6174 = vunpack.c.l.b16 %v4294
  %v6175 = vunpack.c.h.b16 %v4294
  %v6176 = vunpack.c.l.b16 %v4295
  %v6177 = vunpack.c.h.b16 %v4295
  %v6178 = vunpack.c.l.b16 %v4296
  %v6179 = vunpack.c.h.b16 %v4296
  %v6180 = vunpack.c.l.b16 %v4297
  %v6181 = vunpack.c.l.b16 %v4298
  %v6182 = vunpack.c.h.b16 %v4298
  %v6183 = vunpack.c.l.b16 %v4299
  %v6184 = vunpack.c.h.b16 %v4299
  %v6185 = vunpack.c.l.b16 %v4300
  %v6186 = vunpack.c.h.b16 %v4300
  %v6187 = vunpack.c.l.b16 %v4301
  %v6188 = vunpack.c.l.b16 %v4302
  %v6189 = vunpack.c.h.b16 %v4302
  %v6190 = vunpack.c.l.b16 %v4303
  %v6191 = vunpack.c.h.b16 %v4303
  %v6192 = vunpack.c.l.b16 %v4304
  %v6193 = vunpack.c.h.b16 %v4304
  %v6194 = vunpack.c.l.b16 %v4305
  %v6195 = vunpack.c.l.b16 %v4306
  %v6196 = vunpack.c.h.b16 %v4306
  %v6197 = vunpack.c.l.b16 %v4307
  %v6198 = vunpack.c.h.b16 %v4307
  %v6199 = vunpack.c.l.b16 %v4308
  %v6200 = vunpack.c.h.b16 %v4308
  %v6201 = vunpack.c.l.b16 %v4309
  %v6202 = vunpack.c.l.b16 %v4310
  %v6203 = vunpack.c.h.b16 %v4310
  %v6204 = vunpack.c.l.b16 %v4311
  %v6205 = vunpack.c.h.b16 %v4311
  %v6206 = vunpack.c.l.b16 %v4312
  %v6207 = vunpack.c.h.b16 %v4312
  %v6208 = vunpack.c.l.b16 %v4313
  %v6209 = vunpack.c.l.b16 %v4314
  %v6210 = vunpack.c.h.b16 %v4314
  %v6211 = vunpack.c.l.b16 %v4315
  %v6212 = vunpack.c.h.b16 %v4315
  %v6213 = vunpack.c.l.b16 %v4316
  %v6214 = vunpack.c.h.b16 %v4316
  %v6215 = vunpack.c.l.b16 %v4317
  %v6216 = vunpack.c.l.b16 %v4318
  %v6217 = vunpack.c.h.b16 %v4318
  %v6218 = vunpack.c.l.b16 %v4319
  %v6219 = vunpack.c.h.b16 %v4319
  %v6220 = vunpack.c.l.b16 %v4320
  %v6221 = vunpack.c.h.b16 %v4320
  %v6222 = vunpack.c.l.b16 %v4321
  %v6223 = vunpack.c.l.b16 %v4322
  %v6224 = vunpack.c.h.b16 %v4322
  %v6225 = vunpack.c.l.b16 %v4323
  %v6226 = vunpack.c.h.b16 %v4323
  %v6227 = vunpack.c.l.b16 %v4324
  %v6228 = vunpack.c.h.b16 %v4324
  %v6229 = vunpack.c.l.b16 %v4325
  %v6230 = vunpack.c.l.b16 %v4326
  %v6231 = vunpack.c.h.b16 %v4326
  %v6232 = vunpack.c.l.b16 %v4327
  %v6233 = vunpack.c.h.b16 %v4327
  %v6234 = vunpack.c.l.b16 %v4328
  %v6235 = vunpack.c.h.b16 %v4328
  %v6236 = vunpack.c.l.b16 %v4329
  %v6237 = vunpack.c.l.b16 %v4330
  %v6238 = vunpack.c.h.b16 %v4330
  %v6239 = vunpack.c.l.b16 %v4331
  %v6240 = vunpack.c.h.b16 %v4331
  %v6241 = vunpack.c.l.b16 %v4332
  %v6242 = vunpack.c.h.b16 %v4332
  %v6243 = vunpack.c.l.b16 %v4333
  %v6244 = vunpack.c.l.b16 %v4334
  %v6245 = vunpack.c.h.b16 %v4334
  %v6246 = vunpack.c.l.b16 %v4335
  %v6247 = vunpack.c.h.b16 %v4335
  %v6248 = vunpack.c.l.b16 %v4336
  %v6249 = vunpack.c.h.b16 %v4336
  %v6250 = vunpack.c.l.b16 %v4337
  %v6251 = vunpack.c.l.b16 %v4338
  %v6252 = vunpack.c.h.b16 %v4338
  %v6253 = vunpack.c.l.b16 %v4339
  %v6254 = vunpack.c.h.b16 %v4339
  %v6255 = vunpack.c.l.b16 %v4340
  %v6256 = vunpack.c.h.b16 %v4340
  %v6257 = vunpack.c.l.b16 %v4341
  %v6258 = vunpack.c.l.b16 %v4342
  %v6259 = vunpack.c.h.b16 %v4342
  %v6260 = vunpack.c.l.b16 %v4343
  %v6261 = vunpack.c.h.b16 %v4343
  %v6262 = vunpack.c.l.b16 %v4344
  %v6263 = vunpack.c.h.b16 %v4344
  %v6264 = vunpack.c.l.b16 %v4345
  %v6265 = vunpack.c.l.b16 %v4346
  %v6266 = vunpack.c.h.b16 %v4346
  %v6267 = vunpack.c.l.b16 %v4347
  %v6268 = vunpack.c.h.b16 %v4347
  %v6269 = vunpack.c.l.b16 %v4348
  %v6270 = vunpack.c.h.b16 %v4348
  %v6271 = vunpack.c.l.b16 %v4349
  %v6272 = vunpack.c.l.b16 %v4350
  %v6273 = vunpack.c.h.b16 %v4350
  %v6274 = vunpack.c.l.b16 %v4351
  %v6275 = vunpack.c.h.b16 %v4351
  %v6276 = vunpack.c.l.b16 %v4352
  %v6277 = vunpack.c.h.b16 %v4352
  %v6278 = vunpack.c.l.b16 %v4353
  %v6279 = vunpack.c.l.b16 %v4354
  %v6280 = vunpack.c.h.b16 %v4354
  %v6281 = vunpack.c.l.b16 %v4355
  %v6282 = vunpack.c.h.b16 %v4355
  %v6283 = vunpack.c.l.b16 %v4356
  %v6284 = vunpack.c.h.b16 %v4356
  %v6285 = vunpack.c.l.b16 %v4357
  %v6286 = vunpack.c.l.b16 %v4358
  %v6287 = vunpack.c.h.b16 %v4358
  %v6288 = vunpack.c.l.b16 %v4359
  %v6289 = vunpack.c.h.b16 %v4359
  %v6290 = vunpack.c.l.b16 %v4360
  %v6291 = vunpack.c.h.b16 %v4360
  %v6292 = vunpack.c.l.b16 %v4361
  %v6293 = vunpack.c.l.b16 %v4362
  %v6294 = vunpack.c.h.b16 %v4362
  %v6295 = vunpack.c.l.b16 %v4363
  %v6296 = vunpack.c.h.b16 %v4363
  %v6297 = vunpack.c.l.b16 %v4364
  %v6298 = vunpack.c.h.b16 %v4364
  %v6299 = vunpack.c.l.b16 %v4365
  %v6300 = vunpack.c.l.b16 %v4366
  %v6301 = vunpack.c.h.b16 %v4366
  %v6302 = vunpack.c.l.b16 %v4367
  %v6303 = vunpack.c.h.b16 %v4367
  %v6304 = vunpack.c.l.b16 %v4368
  %v6305 = vunpack.c.h.b16 %v4368
  %v6306 = vunpack.c.l.b16 %v4369
  %v6307 = vunpack.c.l.b16 %v4370
  %v6308 = vunpack.c.h.b16 %v4370
  %v6309 = vunpack.c.l.b16 %v4371
  %v6310 = vunpack.c.h.b16 %v4371
  %v6311 = vunpack.c.l.b16 %v4372
  %v6312 = vunpack.c.h.b16 %v4372
  %v6313 = vunpack.c.l.b16 %v4373
  %v6314 = vunpack.c.l.b16 %v4374
  %v6315 = vunpack.c.h.b16 %v4374
  %v6316 = vunpack.c.l.b16 %v4375
  %v6317 = vunpack.c.h.b16 %v4375
  %v6318 = vunpack.c.l.b16 %v4376
  %v6319 = vunpack.c.h.b16 %v4376
  %v6320 = vunpack.c.l.b16 %v4377
  %v6321 = vunpack.c.l.b16 %v4378
  %v6322 = vunpack.c.h.b16 %v4378
  %v6323 = vunpack.c.l.b16 %v4379
  %v6324 = vunpack.c.h.b16 %v4379
  %v6325 = vunpack.c.l.b16 %v4380
  %v6326 = vunpack.c.h.b16 %v4380
  %v6327 = vunpack.c.l.b16 %v4381
  %v6328 = vunpack.c.l.b16 %v4382
  %v6329 = vunpack.c.h.b16 %v4382
  %v6330 = vunpack.c.l.b16 %v4383
  %v6331 = vunpack.c.h.b16 %v4383
  %v6332 = vunpack.c.l.b16 %v4384
  %v6333 = vunpack.c.h.b16 %v4384
  %v6334 = vunpack.c.l.b16 %v4385
  %v6335 = vunpack.c.l.b16 %v4386
  %v6336 = vunpack.c.h.b16 %v4386
  %v6337 = vunpack.c.l.b16 %v4387
  %v6338 = vunpack.c.h.b16 %v4387
  %v6339 = vunpack.c.l.b16 %v4388
  %v6340 = vunpack.c.h.b16 %v4388
  %v6341 = vunpack.c.l.b16 %v4389
  %v6342 = vunpack.c.l.b16 %v4390
  %v6343 = vunpack.c.h.b16 %v4390
  %v6344 = vunpack.c.l.b16 %v4391
  %v6345 = vunpack.c.h.b16 %v4391
  %v6346 = vunpack.c.l.b16 %v4392
  %v6347 = vunpack.c.h.b16 %v4392
  %v6348 = vunpack.c.l.b16 %v4393
  %v6349 = vunpack.c.l.b16 %v4394
  %v6350 = vunpack.c.h.b16 %v4394
  %v6351 = vunpack.c.l.b16 %v4395
  %v6352 = vunpack.c.h.b16 %v4395
  %v6353 = vunpack.c.l.b16 %v4396
  %v6354 = vunpack.c.h.b16 %v4396
  %v6355 = vunpack.c.l.b16 %v4397
  %v6356 = vunpack.c.l.b16 %v4398
  %v6357 = vunpack.c.h.b16 %v4398
  %v6358 = vunpack.c.l.b16 %v4399
  %v6359 = vunpack.c.h.b16 %v4399
  %v6360 = vunpack.c.l.b16 %v4400
  %v6361 = vunpack.c.h.b16 %v4400
  %v6362 = vunpack.c.l.b16 %v4401
  %v6363 = vunpack.c.l.b16 %v4402
  %v6364 = vunpack.c.h.b16 %v4402
  %v6365 = vunpack.c.l.b16 %v4403
  %v6366 = vunpack.c.h.b16 %v4403
  %v6367 = vunpack.c.l.b16 %v4404
  %v6368 = vunpack.c.h.b16 %v4404
  %v6369 = vunpack.c.l.b16 %v4405
  %v6370 = vunpack.c.l.b16 %v4406
  %v6371 = vunpack.c.h.b16 %v4406
  %v6372 = vunpack.c.l.b16 %v4407
  %v6373 = vunpack.c.h.b16 %v4407
  %v6374 = vunpack.c.l.b16 %v4408
  %v6375 = vunpack.c.h.b16 %v4408
  %v6376 = vunpack.c.l.b16 %v4409
  %v6377 = vunpack.c.l.b16 %v4410
  %v6378 = vunpack.c.h.b16 %v4410
  %v6379 = vunpack.c.l.b16 %v4411
  %v6380 = vunpack.c.h.b16 %v4411
  %v6381 = vunpack.c.l.b16 %v4412
  %v6382 = vunpack.c.h.b16 %v4412
  %v6383 = vunpack.c.l.b16 %v4413
  %v6384 = vunpack.c.l.b16 %v4414
  %v6385 = vunpack.c.h.b16 %v4414
  %v6386 = vunpack.c.l.b16 %v4415
  %v6387 = vunpack.c.h.b16 %v4415
  %v6388 = vunpack.c.l.b16 %v4416
  %v6389 = vunpack.c.h.b16 %v4416
  %v6390 = vunpack.c.l.b16 %v4417
  %v6391 = vunpack.c.l.b16 %v4418
  %v6392 = vunpack.c.h.b16 %v4418
  %v6393 = vunpack.c.l.b16 %v4419
  %v6394 = vunpack.c.h.b16 %v4419
  %v6395 = vunpack.c.l.b16 %v4420
  %v6396 = vunpack.c.h.b16 %v4420
  %v6397 = vunpack.c.l.b16 %v4421
  %v6398 = vunpack.c.l.b16 %v4422
  %v6399 = vunpack.c.h.b16 %v4422
  %v6400 = vunpack.c.l.b16 %v4423
  %v6401 = vunpack.c.h.b16 %v4423
  %v6402 = vunpack.c.l.b16 %v4424
  %v6403 = vunpack.c.h.b16 %v4424
  %v6404 = vunpack.c.l.b16 %v4425
  %v6405 = vunpack.c.l.b16 %v4426
  %v6406 = vunpack.c.h.b16 %v4426
  %v6407 = vunpack.c.l.b16 %v4427
  %v6408 = vunpack.c.h.b16 %v4427
  %v6409 = vunpack.c.l.b16 %v4428
  %v6410 = vunpack.c.h.b16 %v4428
  %v6411 = vunpack.c.l.b16 %v4429
  %v6412 = vunpack.c.l.b16 %v4430
  %v6413 = vunpack.c.h.b16 %v4430
  %v6414 = vunpack.c.l.b16 %v4431
  %v6415 = vunpack.c.h.b16 %v4431
  %v6416 = vunpack.c.l.b16 %v4432
  %v6417 = vunpack.c.h.b16 %v4432
  %v6418 = vunpack.c.l.b16 %v4433
  %v6419 = vunpack.c.l.b16 %v4434
  %v6420 = vunpack.c.h.b16 %v4434
  %v6421 = vunpack.c.l.b16 %v4435
  %v6422 = vunpack.c.h.b16 %v4435
  %v6423 = vunpack.c.l.b16 %v4436
  %v6424 = vunpack.c.h.b16 %v4436
  %v6425 = vunpack.c.l.b16 %v4437
  %v6426 = vunpack.c.l.b16 %v4438
  %v6427 = vunpack.c.h.b16 %v4438
  %v6428 = vunpack.c.l.b16 %v4439
  %v6429 = vunpack.c.h.b16 %v4439
  %v6430 = vunpack.c.l.b16 %v4440
  %v6431 = vunpack.c.h.b16 %v4440
  %v6432 = vunpack.c.l.b16 %v4441
  %v6433 = vunpack.c.l.b16 %v4442
  %v6434 = vunpack.c.h.b16 %v4442
  %v6435 = vunpack.c.l.b16 %v4443
  %v6436 = vunpack.c.h.b16 %v4443
  %v6437 = vunpack.c.l.b16 %v4444
  %v6438 = vunpack.c.h.b16 %v4444
  %v6439 = vunpack.c.l.b16 %v4445
  %v6440 = vunpack.c.l.b16 %v4446
  %v6441 = vunpack.c.h.b16 %v4446
  %v6442 = vunpack.c.l.b16 %v4447
  %v6443 = vunpack.c.h.b16 %v4447
  %v6444 = vunpack.c.l.b16 %v4448
  %v6445 = vunpack.c.h.b16 %v4448
  %v6446 = vunpack.c.l.b16 %v4449
  %v6447 = vunpack.c.l.b16 %v4450
  %v6448 = vunpack.c.h.b16 %v4450
  %v6449 = vunpack.c.l.b16 %v4451
  %v6450 = vunpack.c.h.b16 %v4451
  %v6451 = vunpack.c.l.b16 %v4452
  %v6452 = vunpack.c.h.b16 %v4452
  %v6453 = vunpack.c.l.b16 %v4453
  %v6454 = vunpack.c.l.b16 %v4454
  %v6455 = vunpack.c.h.b16 %v4454
  %v6456 = vunpack.c.l.b16 %v4455
  %v6457 = vunpack.c.h.b16 %v4455
  %v6458 = vunpack.c.l.b16 %v4456
  %v6459 = vunpack.c.h.b16 %v4456
  %v6460 = vunpack.c.l.b16 %v4457
  %v6461 = vunpack.c.l.b16 %v4458
  %v6462 = vunpack.c.h.b16 %v4458
  %v6463 = vunpack.c.l.b16 %v4459
  %v6464 = vunpack.c.h.b16 %v4459
  %v6465 = vunpack.c.l.b16 %v4460
  %v6466 = vunpack.c.h.b16 %v4460
  %v6467 = vunpack.c.l.b16 %v4461
  %v6468 = vunpack.c.l.b16 %v4462
  %v6469 = vunpack.c.h.b16 %v4462
  %v6470 = vunpack.c.l.b16 %v4463
  %v6471 = vunpack.c.h.b16 %v4463
  %v6472 = vunpack.c.l.b16 %v4464
  %v6473 = vunpack.c.h.b16 %v4464
  %v6474 = vunpack.c.l.b16 %v4465
  %v6475 = vunpack.c.l.b16 %v4466
  %v6476 = vunpack.c.h.b16 %v4466
  %v6477 = vunpack.c.l.b16 %v4467
  %v6478 = vunpack.c.h.b16 %v4467
  %v6479 = vunpack.c.l.b16 %v4468
  %v6480 = vunpack.c.h.b16 %v4468
  %v6481 = vunpack.c.l.b16 %v4469
  %v6482 = vunpack.c.l.b16 %v4470
  %v6483 = vunpack.c.h.b16 %v4470
  %v6484 = vunpack.c.l.b16 %v4471
  %v6485 = vunpack.c.h.b16 %v4471
  %v6486 = vunpack.c.l.b16 %v4472
  %v6487 = vunpack.c.h.b16 %v4472
  %v6488 = vunpack.c.l.b16 %v4473
  %v6489 = vunpack.c.l.b16 %v4474
  %v6490 = vunpack.c.h.b16 %v4474
  %v6491 = vunpack.c.l.b16 %v4475
  %v6492 = vunpack.c.h.b16 %v4475
  %v6493 = vunpack.c.l.b16 %v4476
  %v6494 = vunpack.c.h.b16 %v4476
  %v6495 = vunpack.c.l.b16 %v4477
  %v6496 = vunpack.c.l.b16 %v4478
  %v6497 = vunpack.c.h.b16 %v4478
  %v6498 = vunpack.c.l.b16 %v4479
  %v6499 = vunpack.c.h.b16 %v4479
  %v6500 = vunpack.c.l.b16 %v4480
  %v6501 = vunpack.c.h.b16 %v4480
  %v6502 = vunpack.c.l.b16 %v4481
  %v6503 = vunpack.c.l.b16 %v4482
  %v6504 = vunpack.c.h.b16 %v4482
  %v6505 = vunpack.c.l.b16 %v4483
  %v6506 = vunpack.c.h.b16 %v4483
  %v6507 = vunpack.c.l.b16 %v4484
  %v6508 = vunpack.c.h.b16 %v4484
  %v6509 = vunpack.c.l.b16 %v4485
  %v6510 = vunpack.c.l.b16 %v4486
  %v6511 = vunpack.c.h.b16 %v4486
  %v6512 = vunpack.c.l.b16 %v4487
  %v6513 = vunpack.c.h.b16 %v4487
  %v6514 = vunpack.c.l.b16 %v4488
  %v6515 = vunpack.c.h.b16 %v4488
  %v6516 = vunpack.c.l.b16 %v4489
  %v6517 = vunpack.c.l.b16 %v4490
  %v6518 = vunpack.c.h.b16 %v4490
  %v6519 = vunpack.c.l.b16 %v4491
  %v6520 = vunpack.c.h.b16 %v4491
  %v6521 = vunpack.c.l.b16 %v4492
  %v6522 = vunpack.c.h.b16 %v4492
  %v6523 = vunpack.c.l.b16 %v4493
  %v6524 = vunpack.c.l.b16 %v4494
  %v6525 = vunpack.c.h.b16 %v4494
  %v6526 = vunpack.c.l.b16 %v4495
  %v6527 = vunpack.c.h.b16 %v4495
  %v6528 = vunpack.c.l.b16 %v4496
  %v6529 = vunpack.c.h.b16 %v4496
  %v6530 = vunpack.c.l.b16 %v4497
  %v6531 = vunpack.c.l.b16 %v4498
  %v6532 = vunpack.c.h.b16 %v4498
  %v6533 = vunpack.c.l.b16 %v4499
  %v6534 = vunpack.c.h.b16 %v4499
  %v6535 = vunpack.c.l.b16 %v4500
  %v6536 = vunpack.c.h.b16 %v4500
  %v6537 = vunpack.c.l.b16 %v4501
  %v6538 = vunpack.c.l.b16 %v4502
  %v6539 = vunpack.c.h.b16 %v4502
  %v6540 = vunpack.c.l.b16 %v4503
  %v6541 = vunpack.c.h.b16 %v4503
  %v6542 = vunpack.c.l.b16 %v4504
  %v6543 = vunpack.c.h.b16 %v4504
  %v6544 = vunpack.c.l.b16 %v4505
  %v6545 = vunpack.c.l.b16 %v4506
  %v6546 = vunpack.c.h.b16 %v4506
  %v6547 = vunpack.c.l.b16 %v4507
  %v6548 = vunpack.c.h.b16 %v4507
  %v6549 = vunpack.c.l.b16 %v4508
  %v6550 = vunpack.c.h.b16 %v4508
  %v6551 = vunpack.c.l.b16 %v4509
  %v6552 = vunpack.c.l.b16 %v4510
  %v6553 = vunpack.c.h.b16 %v4510
  %v6554 = vunpack.c.l.b16 %v4511
  %v6555 = vunpack.c.h.b16 %v4511
  %v6556 = vunpack.c.l.b16 %v4512
  %v6557 = vunpack.c.h.b16 %v4512
  %v6558 = vunpack.c.l.b16 %v4513
  %v6559 = vunpack.c.l.b16 %v4514
  %v6560 = vunpack.c.h.b16 %v4514
  %v6561 = vunpack.c.l.b16 %v4515
  %v6562 = vunpack.c.h.b16 %v4515
  %v6563 = vunpack.c.l.b16 %v4516
  %v6564 = vunpack.c.h.b16 %v4516
  %v6565 = vunpack.c.l.b16 %v4517
  %v6566 = vunpack.c.l.b16 %v4518
  %v6567 = vunpack.c.h.b16 %v4518
  %v6568 = vunpack.c.l.b16 %v4519
  %v6569 = vunpack.c.h.b16 %v4519
  %v6570 = vunpack.c.l.b16 %v4520
  %v6571 = vunpack.c.h.b16 %v4520
  %v6572 = vunpack.c.l.b16 %v4521
  %v6573 = vunpack.c.l.b16 %v4522
  %v6574 = vunpack.c.h.b16 %v4522
  %v6575 = vunpack.c.l.b16 %v4523
  %v6576 = vunpack.c.h.b16 %v4523
  %v6577 = vunpack.c.l.b16 %v4524
  %v6578 = vunpack.c.h.b16 %v4524
  %v6579 = vunpack.c.l.b16 %v4525
  %v6580 = vunpack.c.l.b16 %v4526
  %v6581 = vunpack.c.h.b16 %v4526
  %v6582 = vunpack.c.l.b16 %v4527
  %v6583 = vunpack.c.h.b16 %v4527
  %v6584 = vunpack.c.l.b16 %v4528
  %v6585 = vunpack.c.h.b16 %v4528
  %v6586 = vunpack.c.l.b16 %v4529
  %v6587 = vunpack.c.l.b16 %v4530
  %v6588 = vunpack.c.h.b16 %v4530
  %v6589 = vunpack.c.l.b16 %v4531
  %v6590 = vunpack.c.h.b16 %v4531
  %v6591 = vunpack.c.l.b16 %v4532
  %v6592 = vunpack.c.h.b16 %v4532
  %v6593 = vunpack.c.l.b16 %v4533
  %v6594 = vunpack.c.l.b16 %v4534
  %v6595 = vunpack.c.h.b16 %v4534
  %v6596 = vunpack.c.l.b16 %v4535
  %v6597 = vunpack.c.h.b16 %v4535
  %v6598 = vunpack.c.l.b16 %v4536
  %v6599 = vunpack.c.h.b16 %v4536
  %v6600 = vunpack.c.l.b16 %v4537
  %v6601 = vunpack.c.l.b16 %v4538
  %v6602 = vunpack.c.h.b16 %v4538
  %v6603 = vunpack.c.l.b16 %v4539
  %v6604 = vunpack.c.h.b16 %v4539
  %v6605 = vunpack.c.l.b16 %v4540
  %v6606 = vunpack.c.h.b16 %v4540
  %v6607 = vunpack.c.l.b16 %v4541
  %v6608 = vunpack.c.l.b16 %v4542
  %v6609 = vunpack.c.h.b16 %v4542
  %v6610 = vunpack.c.l.b16 %v4543
  %v6611 = vunpack.c.h.b16 %v4543
  %v6612 = vunpack.c.l.b16 %v4544
  %v6613 = vunpack.c.h.b16 %v4544
  %v6614 = vunpack.c.l.b16 %v4545
  %v6615 = vunpack.c.l.b16 %v4546
  %v6616 = vunpack.c.h.b16 %v4546
  %v6617 = vunpack.c.l.b16 %v4547
  %v6618 = vunpack.c.h.b16 %v4547
  %v6619 = vunpack.c.l.b16 %v4548
  %v6620 = vunpack.c.h.b16 %v4548
  %v6621 = vunpack.c.l.b16 %v4549
  %v6622 = vunpack.c.l.b16 %v4550
  %v6623 = vunpack.c.h.b16 %v4550
  %v6624 = vunpack.c.l.b16 %v4551
  %v6625 = vunpack.c.h.b16 %v4551
  %v6626 = vunpack.c.l.b16 %v4552
  %v6627 = vunpack.c.h.b16 %v4552
  %v6628 = vunpack.c.l.b16 %v4553
  %v6629 = vunpack.c.l.b16 %v4554
  %v6630 = vunpack.c.h.b16 %v4554
  %v6631 = vunpack.c.l.b16 %v4555
  %v6632 = vunpack.c.h.b16 %v4555
  %v6633 = vunpack.c.l.b16 %v4556
  %v6634 = vunpack.c.h.b16 %v4556
  %v6635 = vunpack.c.l.b16 %v4557
  %v6636 = vunpack.c.l.b16 %v4558
  %v6637 = vunpack.c.h.b16 %v4558
  %v6638 = vunpack.c.l.b16 %v4559
  %v6639 = vunpack.c.h.b16 %v4559
  %v6640 = vunpack.c.l.b16 %v4560
  %v6641 = vunpack.c.h.b16 %v4560
  %v6642 = vunpack.c.l.b16 %v4561
  %v6643 = vunpack.c.l.b16 %v4562
  %v6644 = vunpack.c.h.b16 %v4562
  %v6645 = vunpack.c.l.b16 %v4563
  %v6646 = vunpack.c.h.b16 %v4563
  %v6647 = vunpack.c.l.b16 %v4564
  %v6648 = vunpack.c.h.b16 %v4564
  %v6649 = vunpack.c.l.b16 %v4565
  %v6650 = vunpack.c.l.b16 %v4566
  %v6651 = vunpack.c.h.b16 %v4566
  %v6652 = vunpack.c.l.b16 %v4567
  %v6653 = vunpack.c.h.b16 %v4567
  %v6654 = vunpack.c.l.b16 %v4568
  %v6655 = vunpack.c.h.b16 %v4568
  %v6656 = vunpack.c.l.b16 %v4569
  %v6657 = vunpack.c.l.b16 %v4570
  %v6658 = vunpack.c.h.b16 %v4570
  %v6659 = vunpack.c.l.b16 %v4571
  %v6660 = vunpack.c.h.b16 %v4571
  %v6661 = vunpack.c.l.b16 %v4572
  %v6662 = vunpack.c.h.b16 %v4572
  %v6663 = vunpack.c.l.b16 %v4573
  %v6664 = vunpack.c.l.b16 %v4574
  %v6665 = vunpack.c.h.b16 %v4574
  %v6666 = vunpack.c.l.b16 %v4575
  %v6667 = vunpack.c.h.b16 %v4575
  %v6668 = vunpack.c.l.b16 %v4576
  %v6669 = vunpack.c.h.b16 %v4576
  %v6670 = vunpack.c.l.b16 %v4577
  %v6671 = vunpack.c.l.b16 %v4578
  %v6672 = vunpack.c.h.b16 %v4578
  %v6673 = vunpack.c.l.b16 %v4579
  %v6674 = vunpack.c.h.b16 %v4579
  %v6675 = vunpack.c.l.b16 %v4580
  %v6676 = vunpack.c.h.b16 %v4580
  %v6677 = vunpack.c.l.b16 %v4581
  %v6678 = vunpack.c.l.b16 %v4582
  %v6679 = vunpack.c.h.b16 %v4582
  %v6680 = vunpack.c.l.b16 %v4583
  %v6681 = vunpack.c.h.b16 %v4583
  %v6682 = vunpack.c.l.b16 %v4584
  %v6683 = vunpack.c.h.b16 %v4584
  %v6684 = vunpack.c.l.b16 %v4585
  %v6685 = vunpack.c.l.b16 %v4586
  %v6686 = vunpack.c.h.b16 %v4586
  %v6687 = vunpack.c.l.b16 %v4587
  %v6688 = vunpack.c.h.b16 %v4587
  %v6689 = vunpack.c.l.b16 %v4588
  %v6690 = vunpack.c.h.b16 %v4588
  %v6691 = vunpack.c.l.b16 %v4589
  %v6692 = vunpack.c.l.b16 %v4590
  %v6693 = vunpack.c.h.b16 %v4590
  %v6694 = vunpack.c.l.b16 %v4591
  %v6695 = vunpack.c.h.b16 %v4591
  %v6696 = vunpack.c.l.b16 %v4592
  %v6697 = vunpack.c.h.b16 %v4592
  %v6698 = vunpack.c.l.b16 %v4593
  %v6699 = vunpack.c.l.b16 %v4594
  %v6700 = vunpack.c.h.b16 %v4594
  %v6701 = vunpack.c.l.b16 %v4595
  %v6702 = vunpack.c.h.b16 %v4595
  %v6703 = vunpack.c.l.b16 %v4596
  %v6704 = vunpack.c.h.b16 %v4596
  %v6705 = vunpack.c.l.b16 %v4597
  %v6706 = vunpack.c.l.b16 %v4598
  %v6707 = vunpack.c.h.b16 %v4598
  %v6708 = vunpack.c.l.b16 %v4599
  %v6709 = vunpack.c.h.b16 %v4599
  %v6710 = vunpack.c.l.b16 %v4600
  %v6711 = vunpack.c.h.b16 %v4600
  %v6712 = vunpack.c.l.b16 %v4601
  %v6713 = vunpack.c.l.b16 %v4602
  %v6714 = vunpack.c.h.b16 %v4602
  %v6715 = vunpack.c.l.b16 %v4603
  %v6716 = vunpack.c.h.b16 %v4603
  %v6717 = vunpack.c.l.b16 %v4604
  %v6718 = vunpack.c.h.b16 %v4604
  %v6719 = vunpack.c.l.b16 %v4605
  %v6720 = vunpack.c.l.b16 %v4606
  %v6721 = vunpack.c.h.b16 %v4606
  %v6722 = vunpack.c.l.b16 %v4607
  %v6723 = vunpack.c.h.b16 %v4607
  %v6724 = vunpack.c.l.b16 %v4608
  %v6725 = vunpack.c.h.b16 %v4608
  %v6726 = vunpack.c.l.b16 %v4609
  %v6727 = vunpack.c.l.b16 %v4610
  %v6728 = vunpack.c.h.b16 %v4610
  %v6729 = vunpack.c.l.b16 %v4611
  %v6730 = vunpack.c.h.b16 %v4611
  %v6731 = vunpack.c.l.b16 %v4612
  %v6732 = vunpack.c.h.b16 %v4612
  %v6733 = vunpack.c.l.b16 %v4613
  %v6734 = vunpack.c.l.b16 %v4614
  %v6735 = vunpack.c.h.b16 %v4614
  %v6736 = vunpack.c.l.b16 %v4615
  %v6737 = vunpack.c.h.b16 %v4615
  %v6738 = vunpack.c.l.b16 %v4616
  %v6739 = vunpack.c.h.b16 %v4616
  %v6740 = vunpack.c.l.b16 %v4617
  %v6741 = vunpack.c.l.b16 %v4618
  %v6742 = vunpack.c.h.b16 %v4618
  %v6743 = vunpack.c.l.b16 %v4619
  %v6744 = vunpack.c.h.b16 %v4619
  %v6745 = vunpack.c.l.b16 %v4620
  %v6746 = vunpack.c.h.b16 %v4620
  %v6747 = vunpack.c.l.b16 %v4621
  %v6748 = vunpack.c.l.b16 %v4622
  %v6749 = vunpack.c.h.b16 %v4622
  %v6750 = vunpack.c.l.b16 %v4623
  %v6751 = vunpack.c.h.b16 %v4623
  %v6752 = vunpack.c.l.b16 %v4624
  %v6753 = vunpack.c.h.b16 %v4624
  %v6754 = vunpack.c.l.b16 %v4625
  %v6755 = vunpack.c.l.b16 %v4626
  %v6756 = vunpack.c.h.b16 %v4626
  %v6757 = vunpack.c.l.b16 %v4627
  %v6758 = vunpack.c.h.b16 %v4627
  %v6759 = vunpack.c.l.b16 %v4628
  %v6760 = vunpack.c.h.b16 %v4628
  %v6761 = vunpack.c.l.b16 %v4629
  %v6762 = vunpack.c.l.b16 %v4630
  %v6763 = vunpack.c.h.b16 %v4630
  %v6764 = vunpack.c.l.b16 %v4631
  %v6765 = vunpack.c.h.b16 %v4631
  %v6766 = vunpack.c.l.b16 %v4632
  %v6767 = vunpack.c.h.b16 %v4632
  %v6768 = vunpack.c.l.b16 %v4633
  %v6769 = vunpack.c.l.b16 %v4634
  %v6770 = vunpack.c.h.b16 %v4634
  %v6771 = vunpack.c.l.b16 %v4635
  %v6772 = vunpack.c.h.b16 %v4635
  %v6773 = vunpack.c.l.b16 %v4636
  %v6774 = vunpack.c.h.b16 %v4636
  %v6775 = vunpack.c.l.b16 %v4637
  %v6776 = vunpack.c.l.b16 %v4638
  %v6777 = vunpack.c.h.b16 %v4638
  %v6778 = vunpack.c.l.b16 %v4639
  %v6779 = vunpack.c.h.b16 %v4639
  %v6780 = vunpack.c.l.b16 %v4640
  %v6781 = vunpack.c.h.b16 %v4640
  %v6782 = vunpack.c.l.b16 %v4641
  %v6783 = vunpack.c.l.b16 %v4642
  %v6784 = vunpack.c.h.b16 %v4642
  %v6785 = vunpack.c.l.b16 %v4643
  %v6786 = vunpack.c.h.b16 %v4643
  %v6787 = vunpack.c.l.b16 %v4644
  %v6788 = vunpack.c.h.b16 %v4644
  %v6789 = vunpack.c.l.b16 %v4645
  %v6790 = vunpack.c.l.b16 %v4646
  %v6791 = vunpack.c.h.b16 %v4646
  %v6792 = vunpack.c.l.b16 %v4647
  %v6793 = vunpack.c.h.b16 %v4647
  %v6794 = vunpack.c.l.b16 %v4648
  %v6795 = vunpack.c.h.b16 %v4648
  %v6796 = vunpack.c.l.b16 %v4649
  %v6797 = vunpack.c.l.b16 %v4650
  %v6798 = vunpack.c.h.b16 %v4650
  %v6799 = vunpack.c.l.b16 %v4651
  %v6800 = vunpack.c.h.b16 %v4651
  %v6801 = vunpack.c.l.b16 %v4652
  %v6802 = vunpack.c.h.b16 %v4652
  %v6803 = vunpack.c.l.b16 %v4653
  %v6804 = vunpack.c.l.b16 %v4654
  %v6805 = vunpack.c.h.b16 %v4654
  %v6806 = vunpack.c.l.b16 %v4655
  %v6807 = vunpack.c.h.b16 %v4655
  %v6808 = vunpack.c.l.b16 %v4656
  %v6809 = vunpack.c.h.b16 %v4656
  %v6810 = vunpack.c.l.b16 %v4657
  %v6811 = vunpack.c.l.b16 %v4658
  %v6812 = vunpack.c.h.b16 %v4658
  %v6813 = vunpack.c.l.b16 %v4659
  %v6814 = vunpack.c.h.b16 %v4659
  %v6815 = vunpack.c.l.b16 %v4660
  %v6816 = vunpack.c.h.b16 %v4660
  %v6817 = vunpack.c.l.b16 %v4661
  %v6818 = vunpack.c.l.b16 %v4662
  %v6819 = vunpack.c.h.b16 %v4662
  %v6820 = vunpack.c.l.b16 %v4663
  %v6821 = vunpack.c.h.b16 %v4663
  %v6822 = vunpack.c.l.b16 %v4664
  %v6823 = vunpack.c.h.b16 %v4664
  %v6824 = vunpack.c.l.b16 %v4665
  %v6825 = vunpack.c.l.b16 %v4666
  %v6826 = vunpack.c.h.b16 %v4666
  %v6827 = vunpack.c.l.b16 %v4667
  %v6828 = vunpack.c.h.b16 %v4667
  %v6829 = vunpack.c.l.b16 %v4668
  %v6830 = vunpack.c.h.b16 %v4668
  %v6831 = vunpack.c.l.b16 %v4669
  %v6832 = vunpack.c.l.b16 %v4670
  %v6833 = vunpack.c.h.b16 %v4670
  %v6834 = vunpack.c.l.b16 %v4671
  %v6835 = vunpack.c.h.b16 %v4671
  %v6836 = vunpack.c.l.b16 %v4672
  %v6837 = vunpack.c.h.b16 %v4672
  %v6838 = vunpack.c.l.b16 %v4673
  %v6839 = vunpack.c.l.b16 %v4674
  %v6840 = vunpack.c.h.b16 %v4674
  %v6841 = vunpack.c.l.b16 %v4675
  %v6842 = vunpack.c.h.b16 %v4675
  %v6843 = vunpack.c.l.b16 %v4676
  %v6844 = vunpack.c.h.b16 %v4676
  %v6845 = vunpack.c.l.b16 %v4677
  %v6846 = vunpack.c.l.b16 %v4678
  %v6847 = vunpack.c.h.b16 %v4678
  %v6848 = vunpack.c.l.b16 %v4679
  %v6849 = vunpack.c.h.b16 %v4679
  %v6850 = vunpack.c.l.b16 %v4680
  %v6851 = vunpack.c.h.b16 %v4680
  %v6852 = vunpack.c.l.b16 %v4681
  %v6853 = vunpack.c.l.b16 %v4682
  %v6854 = vunpack.c.h.b16 %v4682
  %v6855 = vunpack.c.l.b16 %v4683
  %v6856 = vunpack.c.h.b16 %v4683
  %v6857 = vunpack.c.l.b16 %v4684
  %v6858 = vunpack.c.h.b16 %v4684
  %v6859 = vunpack.c.l.b16 %v4685
  %v6860 = vunpack.c.l.b16 %v4686
  %v6861 = vunpack.c.h.b16 %v4686
  %v6862 = vunpack.c.l.b16 %v4687
  %v6863 = vunpack.c.h.b16 %v4687
  %v6864 = vunpack.c.l.b16 %v4688
  %v6865 = vunpack.c.h.b16 %v4688
  %v6866 = vunpack.c.l.b16 %v4689
  %v6867 = vunpack.c.l.b16 %v4690
  %v6868 = vunpack.c.h.b16 %v4690
  %v6869 = vunpack.c.l.b16 %v4691
  %v6870 = vunpack.c.h.b16 %v4691
  %v6871 = vunpack.c.l.b16 %v4692
  %v6872 = vunpack.c.h.b16 %v4692
  %v6873 = vunpack.c.l.b16 %v4693
  %v6874 = vunpack.c.l.b16 %v4694
  %v6875 = vunpack.c.h.b16 %v4694
  %v6876 = vunpack.c.l.b16 %v4695
  %v6877 = vunpack.c.h.b16 %v4695
  %v6878 = vunpack.c.l.b16 %v4696
  %v6879 = vunpack.c.h.b16 %v4696
  %v6880 = vunpack.c.l.b16 %v4697
  %v6881 = vunpack.c.l.b16 %v4698
  %v6882 = vunpack.c.h.b16 %v4698
  %v6883 = vunpack.c.l.b16 %v4699
  %v6884 = vunpack.c.h.b16 %v4699
  %v6885 = vunpack.c.l.b16 %v4700
  %v6886 = vunpack.c.h.b16 %v4700
  %v6887 = vunpack.c.l.b16 %v4701
  %v6888 = vunpack.c.l.b16 %v4702
  %v6889 = vunpack.c.h.b16 %v4702
  %v6890 = vunpack.c.l.b16 %v4703
  %v6891 = vunpack.c.h.b16 %v4703
  %v6892 = vunpack.c.l.b16 %v4704
  %v6893 = vunpack.c.h.b16 %v4704
  %v6894 = vunpack.c.l.b16 %v4705
  %v6895 = vunpack.c.l.b16 %v4706
  %v6896 = vunpack.c.h.b16 %v4706
  %v6897 = vunpack.c.l.b16 %v4707
  %v6898 = vunpack.c.h.b16 %v4707
  %v6899 = vunpack.c.l.b16 %v4708
  %v6900 = vunpack.c.h.b16 %v4708
  %v6901 = vunpack.c.l.b16 %v4709
  %v6902 = vunpack.c.l.b16 %v4710
  %v6903 = vunpack.c.h.b16 %v4710
  %v6904 = vunpack.c.l.b16 %v4711
  %v6905 = vunpack.c.h.b16 %v4711
  %v6906 = vunpack.c.l.b16 %v4712
  %v6907 = vunpack.c.h.b16 %v4712
  %v6908 = vunpack.c.l.b16 %v4713
  %v6909 = vunpack.c.l.b16 %v4714
  %v6910 = vunpack.c.h.b16 %v4714
  %v6911 = vunpack.c.l.b16 %v4715
  %v6912 = vunpack.c.h.b16 %v4715
  %v6913 = vunpack.c.l.b16 %v4716
  %v6914 = vunpack.c.h.b16 %v4716
  %v6915 = vunpack.c.l.b16 %v4717
  %v6916 = vunpack.c.l.b16 %v4718
  %v6917 = vunpack.c.h.b16 %v4718
  %v6918 = vunpack.c.l.b16 %v4719
  %v6919 = vunpack.c.h.b16 %v4719
  %v6920 = vunpack.c.l.b16 %v4720
  %v6921 = vunpack.c.h.b16 %v4720
  %v6922 = vunpack.c.l.b16 %v4721
  %v6923 = vunpack.c.l.b16 %v4722
  %v6924 = vunpack.c.h.b16 %v4722
  %v6925 = vunpack.c.l.b16 %v4723
  %v6926 = vunpack.c.h.b16 %v4723
  %v6927 = vunpack.c.l.b16 %v4724
  %v6928 = vunpack.c.h.b16 %v4724
  %v6929 = vunpack.c.l.b16 %v4725
  %v6930 = vunpack.c.l.b16 %v4726
  %v6931 = vunpack.c.h.b16 %v4726
  %v6932 = vunpack.c.l.b16 %v4727
  %v6933 = vunpack.c.h.b16 %v4727
  %v6934 = vunpack.c.l.b16 %v4728
  %v6935 = vunpack.c.h.b16 %v4728
  %v6936 = vunpack.c.l.b16 %v4729
  %v6937 = vunpack.c.l.b16 %v4730
  %v6938 = vunpack.c.h.b16 %v4730
  %v6939 = vunpack.c.l.b16 %v4731
  %v6940 = vunpack.c.h.b16 %v4731
  %v6941 = vunpack.c.l.b16 %v4732
  %v6942 = vunpack.c.h.b16 %v4732
  %v6943 = vunpack.c.l.b16 %v4733
  %v6944 = vpack.c.b16 %v5551, %v5544
  %v6945 = vpack.c.b16 %v5552, %v5545
  %v6946 = vpack.c.b16 %v5553, %v5546
  %v6947 = vpack.c.b16 %v5554, %v5547
  %v6948 = vpack.c.b16 %v5555, %v5548
  %v6949 = vpack.c.b16 %v5556, %v5549
  %v6950 = vpack.c.b16 %v5557, %v5550
  %v6951 = vpack.c.b16 %v5565, %v5558
  %v6952 = vpack.c.b16 %v5566, %v5559
  %v6953 = vpack.c.b16 %v5567, %v5560
  %v6954 = vpack.c.b16 %v5568, %v5561
  %v6955 = vpack.c.b16 %v5569, %v5562
  %v6956 = vpack.c.b16 %v5570, %v5563
  %v6957 = vpack.c.b16 %v5571, %v5564
  %v6958 = vpack.c.b16 %v5579, %v5572
  %v6959 = vpack.c.b16 %v5580, %v5573
  %v6960 = vpack.c.b16 %v5581, %v5574
  %v6961 = vpack.c.b16 %v5582, %v5575
  %v6962 = vpack.c.b16 %v5583, %v5576
  %v6963 = vpack.c.b16 %v5584, %v5577
  %v6964 = vpack.c.b16 %v5585, %v5578
  %v6965 = vpack.c.b16 %v5593, %v5586
  %v6966 = vpack.c.b16 %v5594, %v5587
  %v6967 = vpack.c.b16 %v5595, %v5588
  %v6968 = vpack.c.b16 %v5596, %v5589
  %v6969 = vpack.c.b16 %v5597, %v5590
  %v6970 = vpack.c.b16 %v5598, %v5591
  %v6971 = vpack.c.b16 %v5599, %v5592
  %v6972 = vpack.c.b16 %v5607, %v5600
  %v6973 = vpack.c.b16 %v5608, %v5601
  %v6974 = vpack.c.b16 %v5609, %v5602
  %v6975 = vpack.c.b16 %v5610, %v5603
  %v6976 = vpack.c.b16 %v5611, %v5604
  %v6977 = vpack.c.b16 %v5612, %v5605
  %v6978 = vpack.c.b16 %v5613, %v5606
  %v6979 = vpack.c.b16 %v5621, %v5614
  %v6980 = vpack.c.b16 %v5622, %v5615
  %v6981 = vpack.c.b16 %v5623, %v5616
  %v6982 = vpack.c.b16 %v5624, %v5617
  %v6983 = vpack.c.b16 %v5625, %v5618
  %v6984 = vpack.c.b16 %v5626, %v5619
  %v6985 = vpack.c.b16 %v5627, %v5620
  %v6986 = vpack.c.b16 %v5635, %v5628
  %v6987 = vpack.c.b16 %v5636, %v5629
  %v6988 = vpack.c.b16 %v5637, %v5630
  %v6989 = vpack.c.b16 %v5638, %v5631
  %v6990 = vpack.c.b16 %v5639, %v5632
  %v6991 = vpack.c.b16 %v5640, %v5633
  %v6992 = vpack.c.b16 %v5641, %v5634
  %v6993 = vpack.c.b16 %v5649, %v5642
  %v6994 = vpack.c.b16 %v5650, %v5643
  %v6995 = vpack.c.b16 %v5651, %v5644
  %v6996 = vpack.c.b16 %v5652, %v5645
  %v6997 = vpack.c.b16 %v5653, %v5646
  %v6998 = vpack.c.b16 %v5654, %v5647
  %v6999 = vpack.c.b16 %v5655, %v5648
  %v7000 = vpack.c.b16 %v5663, %v5656
  %v7001 = vpack.c.b16 %v5664, %v5657
  %v7002 = vpack.c.b16 %v5665, %v5658
  %v7003 = vpack.c.b16 %v5666, %v5659
  %v7004 = vpack.c.b16 %v5667, %v5660
  %v7005 = vpack.c.b16 %v5668, %v5661
  %v7006 = vpack.c.b16 %v5669, %v5662
  %v7007 = vpack.c.b16 %v5677, %v5670
  %v7008 = vpack.c.b16 %v5678, %v5671
  %v7009 = vpack.c.b16 %v5679, %v5672
  %v7010 = vpack.c.b16 %v5680, %v5673
  %v7011 = vpack.c.b16 %v5681, %v5674
  %v7012 = vpack.c.b16 %v5682, %v5675
  %v7013 = vpack.c.b16 %v5683, %v5676
  %v7014 = vpack.c.b16 %v5691, %v5684
  %v7015 = vpack.c.b16 %v5692, %v5685
  %v7016 = vpack.c.b16 %v5693, %v5686
  %v7017 = vpack.c.b16 %v5694, %v5687
  %v7018 = vpack.c.b16 %v5695, %v5688
  %v7019 = vpack.c.b16 %v5696, %v5689
  %v7020 = vpack.c.b16 %v5697, %v5690
  %v7021 = vpack.c.b16 %v5705, %v5698
  %v7022 = vpack.c.b16 %v5706, %v5699
  %v7023 = vpack.c.b16 %v5707, %v5700
  %v7024 = vpack.c.b16 %v5708, %v5701
  %v7025 = vpack.c.b16 %v5709, %v5702
  %v7026 = vpack.c.b16 %v5710, %v5703
  %v7027 = vpack.c.b16 %v5711, %v5704
  %v7028 = vpack.c.b16 %v5719, %v5712
  %v7029 = vpack.c.b16 %v5720, %v5713
  %v7030 = vpack.c.b16 %v5721, %v5714
  %v7031 = vpack.c.b16 %v5722, %v5715
  %v7032 = vpack.c.b16 %v5723, %v5716
  %v7033 = vpack.c.b16 %v5724, %v5717
  %v7034 = vpack.c.b16 %v5725, %v5718
  %v7035 = vpack.c.b16 %v5733, %v5726
  %v7036 = vpack.c.b16 %v5734, %v5727
  %v7037 = vpack.c.b16 %v5735, %v5728
  %v7038 = vpack.c.b16 %v5736, %v5729
  %v7039 = vpack.c.b16 %v5737, %v5730
  %v7040 = vpack.c.b16 %v5738, %v5731
  %v7041 = vpack.c.b16 %v5739, %v5732
  %v7042 = vpack.c.b16 %v5747, %v5740
  %v7043 = vpack.c.b16 %v5748, %v5741
  %v7044 = vpack.c.b16 %v5749, %v5742
  %v7045 = vpack.c.b16 %v5750, %v5743
  %v7046 = vpack.c.b16 %v5751, %v5744
  %v7047 = vpack.c.b16 %v5752, %v5745
  %v7048 = vpack.c.b16 %v5753, %v5746
  %v7049 = vpack.c.b16 %v5761, %v5754
  %v7050 = vpack.c.b16 %v5762, %v5755
  %v7051 = vpack.c.b16 %v5763, %v5756
  %v7052 = vpack.c.b16 %v5764, %v5757
  %v7053 = vpack.c.b16 %v5765, %v5758
  %v7054 = vpack.c.b16 %v5766, %v5759
  %v7055 = vpack.c.b16 %v5767, %v5760
  %v7056 = vpack.c.b16 %v5775, %v5768
  %v7057 = vpack.c.b16 %v5776, %v5769
  %v7058 = vpack.c.b16 %v5777, %v5770
  %v7059 = vpack.c.b16 %v5778, %v5771
  %v7060 = vpack.c.b16 %v5779, %v5772
  %v7061 = vpack.c.b16 %v5780, %v5773
  %v7062 = vpack.c.b16 %v5781, %v5774
  %v7063 = vpack.c.b16 %v5789, %v5782
  %v7064 = vpack.c.b16 %v5790, %v5783
  %v7065 = vpack.c.b16 %v5791, %v5784
  %v7066 = vpack.c.b16 %v5792, %v5785
  %v7067 = vpack.c.b16 %v5793, %v5786
  %v7068 = vpack.c.b16 %v5794, %v5787
  %v7069 = vpack.c.b16 %v5795, %v5788
  %v7070 = vpack.c.b16 %v5803, %v5796
  %v7071 = vpack.c.b16 %v5804, %v5797
  %v7072 = vpack.c.b16 %v5805, %v5798
  %v7073 = vpack.c.b16 %v5806, %v5799
  %v7074 = vpack.c.b16 %v5807, %v5800
  %v7075 = vpack.c.b16 %v5808, %v5801
  %v7076 = vpack.c.b16 %v5809, %v5802
  %v7077 = vpack.c.b16 %v5817, %v5810
  %v7078 = vpack.c.b16 %v5818, %v5811
  %v7079 = vpack.c.b16 %v5819, %v5812
  %v7080 = vpack.c.b16 %v5820, %v5813
  %v7081 = vpack.c.b16 %v5821, %v5814
  %v7082 = vpack.c.b16 %v5822, %v5815
  %v7083 = vpack.c.b16 %v5823, %v5816
  %v7084 = vpack.c.b16 %v5831, %v5824
  %v7085 = vpack.c.b16 %v5832, %v5825
  %v7086 = vpack.c.b16 %v5833, %v5826
  %v7087 = vpack.c.b16 %v5834, %v5827
  %v7088 = vpack.c.b16 %v5835, %v5828
  %v7089 = vpack.c.b16 %v5836, %v5829
  %v7090 = vpack.c.b16 %v5837, %v5830
  %v7091 = vpack.c.b16 %v5845, %v5838
  %v7092 = vpack.c.b16 %v5846, %v5839
  %v7093 = vpack.c.b16 %v5847, %v5840
  %v7094 = vpack.c.b16 %v5848, %v5841
  %v7095 = vpack.c.b16 %v5849, %v5842
  %v7096 = vpack.c.b16 %v5850, %v5843
  %v7097 = vpack.c.b16 %v5851, %v5844
  %v7098 = vpack.c.b16 %v5859, %v5852
  %v7099 = vpack.c.b16 %v5860, %v5853
  %v7100 = vpack.c.b16 %v5861, %v5854
  %v7101 = vpack.c.b16 %v5862, %v5855
  %v7102 = vpack.c.b16 %v5863, %v5856
  %v7103 = vpack.c.b16 %v5864, %v5857
  %v7104 = vpack.c.b16 %v5865, %v5858
  %v7105 = vpack.c.b16 %v5873, %v5866
  %v7106 = vpack.c.b16 %v5874, %v5867
  %v7107 = vpack.c.b16 %v5875, %v5868
  %v7108 = vpack.c.b16 %v5876, %v5869
  %v7109 = vpack.c.b16 %v5877, %v5870
  %v7110 = vpack.c.b16 %v5878, %v5871
  %v7111 = vpack.c.b16 %v5879, %v5872
  %v7112 = vpack.c.b16 %v5887, %v5880
  %v7113 = vpack.c.b16 %v5888, %v5881
  %v7114 = vpack.c.b16 %v5889, %v5882
  %v7115 = vpack.c.b16 %v5890, %v5883
  %v7116 = vpack.c.b16 %v5891, %v5884
  %v7117 = vpack.c.b16 %v5892, %v5885
  %v7118 = vpack.c.b16 %v5893, %v5886
  %v7119 = vpack.c.b16 %v5901, %v5894
  %v7120 = vpack.c.b16 %v5902, %v5895
  %v7121 = vpack.c.b16 %v5903, %v5896
  %v7122 = vpack.c.b16 %v5904, %v5897
  %v7123 = vpack.c.b16 %v5905, %v5898
  %v7124 = vpack.c.b16 %v5906, %v5899
  %v7125 = vpack.c.b16 %v5907, %v5900
  %v7126 = vpack.c.b16 %v5915, %v5908
  %v7127 = vpack.c.b16 %v5916, %v5909
  %v7128 = vpack.c.b16 %v5917, %v5910
  %v7129 = vpack.c.b16 %v5918, %v5911
  %v7130 = vpack.c.b16 %v5919, %v5912
  %v7131 = vpack.c.b16 %v5920, %v5913
  %v7132 = vpack.c.b16 %v5921, %v5914
  %v7133 = vpack.c.b16 %v5929, %v5922
  %v7134 = vpack.c.b16 %v5930, %v5923
  %v7135 = vpack.c.b16 %v5931, %v5924
  %v7136 = vpack.c.b16 %v5932, %v5925
  %v7137 = vpack.c.b16 %v5933, %v5926
  %v7138 = vpack.c.b16 %v5934, %v5927
  %v7139 = vpack.c.b16 %v5935, %v5928
  %v7140 = vpack.c.b16 %v5943, %v5936
  %v7141 = vpack.c.b16 %v5944, %v5937
  %v7142 = vpack.c.b16 %v5945, %v5938
  %v7143 = vpack.c.b16 %v5946, %v5939
  %v7144 = vpack.c.b16 %v5947, %v5940
  %v7145 = vpack.c.b16 %v5948, %v5941
  %v7146 = vpack.c.b16 %v5949, %v5942
  %v7147 = vpack.c.b16 %v5957, %v5950
  %v7148 = vpack.c.b16 %v5958, %v5951
  %v7149 = vpack.c.b16 %v5959, %v5952
  %v7150 = vpack.c.b16 %v5960, %v5953
  %v7151 = vpack.c.b16 %v5961, %v5954
  %v7152 = vpack.c.b16 %v5962, %v5955
  %v7153 = vpack.c.b16 %v5963, %v5956
  %v7154 = vpack.c.b16 %v5971, %v5964
  %v7155 = vpack.c.b16 %v5972, %v5965
  %v7156 = vpack.c.b16 %v5973, %v5966
  %v7157 = vpack.c.b16 %v5974, %v5967
  %v7158 = vpack.c.b16 %v5975, %v5968
  %v7159 = vpack.c.b16 %v5976, %v5969
  %v7160 = vpack.c.b16 %v5977, %v5970
  %v7161 = vpack.c.b16 %v5985, %v5978
  %v7162 = vpack.c.b16 %v5986, %v5979
  %v7163 = vpack.c.b16 %v5987, %v5980
  %v7164 = vpack.c.b16 %v5988, %v5981
  %v7165 = vpack.c.b16 %v5989, %v5982
  %v7166 = vpack.c.b16 %v5990, %v5983
  %v7167 = vpack.c.b16 %v5991, %v5984
  %v7168 = vpack.c.b16 %v5999, %v5992
  %v7169 = vpack.c.b16 %v6000, %v5993
  %v7170 = vpack.c.b16 %v6001, %v5994
  %v7171 = vpack.c.b16 %v6002, %v5995
  %v7172 = vpack.c.b16 %v6003, %v5996
  %v7173 = vpack.c.b16 %v6004, %v5997
  %v7174 = vpack.c.b16 %v6005, %v5998
  %v7175 = vpack.c.b16 %v6013, %v6006
  %v7176 = vpack.c.b16 %v6014, %v6007
  %v7177 = vpack.c.b16 %v6015, %v6008
  %v7178 = vpack.c.b16 %v6016, %v6009
  %v7179 = vpack.c.b16 %v6017, %v6010
  %v7180 = vpack.c.b16 %v6018, %v6011
  %v7181 = vpack.c.b16 %v6019, %v6012
  %v7182 = vpack.c.b16 %v6027, %v6020
  %v7183 = vpack.c.b16 %v6028, %v6021
  %v7184 = vpack.c.b16 %v6029, %v6022
  %v7185 = vpack.c.b16 %v6030, %v6023
  %v7186 = vpack.c.b16 %v6031, %v6024
  %v7187 = vpack.c.b16 %v6032, %v6025
  %v7188 = vpack.c.b16 %v6033, %v6026
  %v7189 = vpack.c.b16 %v6041, %v6034
  %v7190 = vpack.c.b16 %v6042, %v6035
  %v7191 = vpack.c.b16 %v6043, %v6036
  %v7192 = vpack.c.b16 %v6044, %v6037
  %v7193 = vpack.c.b16 %v6045, %v6038
  %v7194 = vpack.c.b16 %v6046, %v6039
  %v7195 = vpack.c.b16 %v6047, %v6040
  %v7196 = vpack.c.b16 %v6055, %v6048
  %v7197 = vpack.c.b16 %v6056, %v6049
  %v7198 = vpack.c.b16 %v6057, %v6050
  %v7199 = vpack.c.b16 %v6058, %v6051
  %v7200 = vpack.c.b16 %v6059, %v6052
  %v7201 = vpack.c.b16 %v6060, %v6053
  %v7202 = vpack.c.b16 %v6061, %v6054
  %v7203 = vpack.c.b16 %v6069, %v6062
  %v7204 = vpack.c.b16 %v6070, %v6063
  %v7205 = vpack.c.b16 %v6071, %v6064
  %v7206 = vpack.c.b16 %v6072, %v6065
  %v7207 = vpack.c.b16 %v6073, %v6066
  %v7208 = vpack.c.b16 %v6074, %v6067
  %v7209 = vpack.c.b16 %v6075, %v6068
  %v7210 = vpack.c.b16 %v6083, %v6076
  %v7211 = vpack.c.b16 %v6084, %v6077
  %v7212 = vpack.c.b16 %v6085, %v6078
  %v7213 = vpack.c.b16 %v6086, %v6079
  %v7214 = vpack.c.b16 %v6087, %v6080
  %v7215 = vpack.c.b16 %v6088, %v6081
  %v7216 = vpack.c.b16 %v6089, %v6082
  %v7217 = vpack.c.b16 %v6097, %v6090
  %v7218 = vpack.c.b16 %v6098, %v6091
  %v7219 = vpack.c.b16 %v6099, %v6092
  %v7220 = vpack.c.b16 %v6100, %v6093
  %v7221 = vpack.c.b16 %v6101, %v6094
  %v7222 = vpack.c.b16 %v6102, %v6095
  %v7223 = vpack.c.b16 %v6103, %v6096
  %v7224 = vpack.c.b16 %v6111, %v6104
  %v7225 = vpack.c.b16 %v6112, %v6105
  %v7226 = vpack.c.b16 %v6113, %v6106
  %v7227 = vpack.c.b16 %v6114, %v6107
  %v7228 = vpack.c.b16 %v6115, %v6108
  %v7229 = vpack.c.b16 %v6116, %v6109
  %v7230 = vpack.c.b16 %v6117, %v6110
  %v7231 = vpack.c.b16 %v6125, %v6118
  %v7232 = vpack.c.b16 %v6126, %v6119
  %v7233 = vpack.c.b16 %v6127, %v6120
  %v7234 = vpack.c.b16 %v6128, %v6121
  %v7235 = vpack.c.b16 %v6129, %v6122
  %v7236 = vpack.c.b16 %v6130, %v6123
  %v7237 = vpack.c.b16 %v6131, %v6124
  %v7238 = vpack.c.b16 %v6139, %v6132
  %v7239 = vpack.c.b16 %v6140, %v6133
  %v7240 = vpack.c.b16 %v6141, %v6134
  %v7241 = vpack.c.b16 %v6142, %v6135
  %v7242 = vpack.c.b16 %v6143, %v6136
  %v7243 = vpack.c.b16 %v6144, %v6137
  %v7244 = vpack.c.b16 %v6145, %v6138
  %v7245 = vpack.c.b16 %v6153, %v6146
  %v7246 = vpack.c.b16 %v6154, %v6147
  %v7247 = vpack.c.b16 %v6155, %v6148
  %v7248 = vpack.c.b16 %v6156, %v6149
  %v7249 = vpack.c.b16 %v6157, %v6150
  %v7250 = vpack.c.b16 %v6158, %v6151
  %v7251 = vpack.c.b16 %v6159, %v6152
  %v7252 = vpack.c.b16 %v6167, %v6160
  %v7253 = vpack.c.b16 %v6168, %v6161
  %v7254 = vpack.c.b16 %v6169, %v6162
  %v7255 = vpack.c.b16 %v6170, %v6163
  %v7256 = vpack.c.b16 %v6171, %v6164
  %v7257 = vpack.c.b16 %v6172, %v6165
  %v7258 = vpack.c.b16 %v6173, %v6166
  %v7259 = vpack.c.b16 %v6181, %v6174
  %v7260 = vpack.c.b16 %v6182, %v6175
  %v7261 = vpack.c.b16 %v6183, %v6176
  %v7262 = vpack.c.b16 %v6184, %v6177
  %v7263 = vpack.c.b16 %v6185, %v6178
  %v7264 = vpack.c.b16 %v6186, %v6179
  %v7265 = vpack.c.b16 %v6187, %v6180
  %v7266 = vpack.c.b16 %v6195, %v6188
  %v7267 = vpack.c.b16 %v6196, %v6189
  %v7268 = vpack.c.b16 %v6197, %v6190
  %v7269 = vpack.c.b16 %v6198, %v6191
  %v7270 = vpack.c.b16 %v6199, %v6192
  %v7271 = vpack.c.b16 %v6200, %v6193
  %v7272 = vpack.c.b16 %v6201, %v6194
  %v7273 = vpack.c.b16 %v6209, %v6202
  %v7274 = vpack.c.b16 %v6210, %v6203
  %v7275 = vpack.c.b16 %v6211, %v6204
  %v7276 = vpack.c.b16 %v6212, %v6205
  %v7277 = vpack.c.b16 %v6213, %v6206
  %v7278 = vpack.c.b16 %v6214, %v6207
  %v7279 = vpack.c.b16 %v6215, %v6208
  %v7280 = vpack.c.b16 %v6223, %v6216
  %v7281 = vpack.c.b16 %v6224, %v6217
  %v7282 = vpack.c.b16 %v6225, %v6218
  %v7283 = vpack.c.b16 %v6226, %v6219
  %v7284 = vpack.c.b16 %v6227, %v6220
  %v7285 = vpack.c.b16 %v6228, %v6221
  %v7286 = vpack.c.b16 %v6229, %v6222
  %v7287 = vpack.c.b16 %v6237, %v6230
  %v7288 = vpack.c.b16 %v6238, %v6231
  %v7289 = vpack.c.b16 %v6239, %v6232
  %v7290 = vpack.c.b16 %v6240, %v6233
  %v7291 = vpack.c.b16 %v6241, %v6234
  %v7292 = vpack.c.b16 %v6242, %v6235
  %v7293 = vpack.c.b16 %v6243, %v6236
  %v7294 = vpack.c.b16 %v6251, %v6244
  %v7295 = vpack.c.b16 %v6252, %v6245
  %v7296 = vpack.c.b16 %v6253, %v6246
  %v7297 = vpack.c.b16 %v6254, %v6247
  %v7298 = vpack.c.b16 %v6255, %v6248
  %v7299 = vpack.c.b16 %v6256, %v6249
  %v7300 = vpack.c.b16 %v6257, %v6250
  %v7301 = vpack.c.b16 %v6265, %v6258
  %v7302 = vpack.c.b16 %v6266, %v6259
  %v7303 = vpack.c.b16 %v6267, %v6260
  %v7304 = vpack.c.b16 %v6268, %v6261
  %v7305 = vpack.c.b16 %v6269, %v6262
  %v7306 = vpack.c.b16 %v6270, %v6263
  %v7307 = vpack.c.b16 %v6271, %v6264
  %v7308 = vpack.c.b16 %v6279, %v6272
  %v7309 = vpack.c.b16 %v6280, %v6273
  %v7310 = vpack.c.b16 %v6281, %v6274
  %v7311 = vpack.c.b16 %v6282, %v6275
  %v7312 = vpack.c.b16 %v6283, %v6276
  %v7313 = vpack.c.b16 %v6284, %v6277
  %v7314 = vpack.c.b16 %v6285, %v6278
  %v7315 = vpack.c.b16 %v6293, %v6286
  %v7316 = vpack.c.b16 %v6294, %v6287
  %v7317 = vpack.c.b16 %v6295, %v6288
  %v7318 = vpack.c.b16 %v6296, %v6289
  %v7319 = vpack.c.b16 %v6297, %v6290
  %v7320 = vpack.c.b16 %v6298, %v6291
  %v7321 = vpack.c.b16 %v6299, %v6292
  %v7322 = vpack.c.b16 %v6307, %v6300
  %v7323 = vpack.c.b16 %v6308, %v6301
  %v7324 = vpack.c.b16 %v6309, %v6302
  %v7325 = vpack.c.b16 %v6310, %v6303
  %v7326 = vpack.c.b16 %v6311, %v6304
  %v7327 = vpack.c.b16 %v6312, %v6305
  %v7328 = vpack.c.b16 %v6313, %v6306
  %v7329 = vpack.c.b16 %v6321, %v6314
  %v7330 = vpack.c.b16 %v6322, %v6315
  %v7331 = vpack.c.b16 %v6323, %v6316
  %v7332 = vpack.c.b16 %v6324, %v6317
  %v7333 = vpack.c.b16 %v6325, %v6318
  %v7334 = vpack.c.b16 %v6326, %v6319
  %v7335 = vpack.c.b16 %v6327, %v6320
  %v7336 = vpack.c.b16 %v6335, %v6328
  %v7337 = vpack.c.b16 %v6336, %v6329
  %v7338 = vpack.c.b16 %v6337, %v6330
  %v7339 = vpack.c.b16 %v6338, %v6331
  %v7340 = vpack.c.b16 %v6339, %v6332
  %v7341 = vpack.c.b16 %v6340, %v6333
  %v7342 = vpack.c.b16 %v6341, %v6334
  %v7343 = vpack.c.b16 %v6349, %v6342
  %v7344 = vpack.c.b16 %v6350, %v6343
  %v7345 = vpack.c.b16 %v6351, %v6344
  %v7346 = vpack.c.b16 %v6352, %v6345
  %v7347 = vpack.c.b16 %v6353, %v6346
  %v7348 = vpack.c.b16 %v6354, %v6347
  %v7349 = vpack.c.b16 %v6355, %v6348
  %v7350 = vpack.c.b16 %v6363, %v6356
  %v7351 = vpack.c.b16 %v6364, %v6357
  %v7352 = vpack.c.b16 %v6365, %v6358
  %v7353 = vpack.c.b16 %v6366, %v6359
  %v7354 = vpack.c.b16 %v6367, %v6360
  %v7355 = vpack.c.b16 %v6368, %v6361
  %v7356 = vpack.c.b16 %v6369, %v6362
  %v7357 = vpack.c.b16 %v6377, %v6370
  %v7358 = vpack.c.b16 %v6378, %v6371
  %v7359 = vpack.c.b16 %v6379, %v6372
  %v7360 = vpack.c.b16 %v6380, %v6373
  %v7361 = vpack.c.b16 %v6381, %v6374
  %v7362 = vpack.c.b16 %v6382, %v6375
  %v7363 = vpack.c.b16 %v6383, %v6376
  %v7364 = vpack.c.b16 %v6391, %v6384
  %v7365 = vpack.c.b16 %v6392, %v6385
  %v7366 = vpack.c.b16 %v6393, %v6386
  %v7367 = vpack.c.b16 %v6394, %v6387
  %v7368 = vpack.c.b16 %v6395, %v6388
  %v7369 = vpack.c.b16 %v6396, %v6389
  %v7370 = vpack.c.b16 %v6397, %v6390
  %v7371 = vpack.c.b16 %v6405, %v6398
  %v7372 = vpack.c.b16 %v6406, %v6399
  %v7373 = vpack.c.b16 %v6407, %v6400
  %v7374 = vpack.c.b16 %v6408, %v6401
  %v7375 = vpack.c.b16 %v6409, %v6402
  %v7376 = vpack.c.b16 %v6410, %v6403
  %v7377 = vpack.c.b16 %v6411, %v6404
  %v7378 = vpack.c.b16 %v6419, %v6412
  %v7379 = vpack.c.b16 %v6420, %v6413
  %v7380 = vpack.c.b16 %v6421, %v6414
  %v7381 = vpack.c.b16 %v6422, %v6415
  %v7382 = vpack.c.b16 %v6423, %v6416
  %v7383 = vpack.c.b16 %v6424, %v6417
  %v7384 = vpack.c.b16 %v6425, %v6418
  %v7385 = vpack.c.b16 %v6433, %v6426
  %v7386 = vpack.c.b16 %v6434, %v6427
  %v7387 = vpack.c.b16 %v6435, %v6428
  %v7388 = vpack.c.b16 %v6436, %v6429
  %v7389 = vpack.c.b16 %v6437, %v6430
  %v7390 = vpack.c.b16 %v6438, %v6431
  %v7391 = vpack.c.b16 %v6439, %v6432
  %v7392 = vpack.c.b16 %v6447, %v6440
  %v7393 = vpack.c.b16 %v6448, %v6441
  %v7394 = vpack.c.b16 %v6449, %v6442
  %v7395 = vpack.c.b16 %v6450, %v6443
  %v7396 = vpack.c.b16 %v6451, %v6444
  %v7397 = vpack.c.b16 %v6452, %v6445
  %v7398 = vpack.c.b16 %v6453, %v6446
  %v7399 = vpack.c.b16 %v6461, %v6454
  %v7400 = vpack.c.b16 %v6462, %v6455
  %v7401 = vpack.c.b16 %v6463, %v6456
  %v7402 = vpack.c.b16 %v6464, %v6457
  %v7403 = vpack.c.b16 %v6465, %v6458
  %v7404 = vpack.c.b16 %v6466, %v6459
  %v7405 = vpack.c.b16 %v6467, %v6460
  %v7406 = vpack.c.b16 %v6475, %v6468
  %v7407 = vpack.c.b16 %v6476, %v6469
  %v7408 = vpack.c.b16 %v6477, %v6470
  %v7409 = vpack.c.b16 %v6478, %v6471
  %v7410 = vpack.c.b16 %v6479, %v6472
  %v7411 = vpack.c.b16 %v6480, %v6473
  %v7412 = vpack.c.b16 %v6481, %v6474
  %v7413 = vpack.c.b16 %v6489, %v6482
  %v7414 = vpack.c.b16 %v6490, %v6483
  %v7415 = vpack.c.b16 %v6491, %v6484
  %v7416 = vpack.c.b16 %v6492, %v6485
  %v7417 = vpack.c.b16 %v6493, %v6486
  %v7418 = vpack.c.b16 %v6494, %v6487
  %v7419 = vpack.c.b16 %v6495, %v6488
  %v7420 = vpack.c.b16 %v6503, %v6496
  %v7421 = vpack.c.b16 %v6504, %v6497
  %v7422 = vpack.c.b16 %v6505, %v6498
  %v7423 = vpack.c.b16 %v6506, %v6499
  %v7424 = vpack.c.b16 %v6507, %v6500
  %v7425 = vpack.c.b16 %v6508, %v6501
  %v7426 = vpack.c.b16 %v6509, %v6502
  %v7427 = vpack.c.b16 %v6517, %v6510
  %v7428 = vpack.c.b16 %v6518, %v6511
  %v7429 = vpack.c.b16 %v6519, %v6512
  %v7430 = vpack.c.b16 %v6520, %v6513
  %v7431 = vpack.c.b16 %v6521, %v6514
  %v7432 = vpack.c.b16 %v6522, %v6515
  %v7433 = vpack.c.b16 %v6523, %v6516
  %v7434 = vpack.c.b16 %v6531, %v6524
  %v7435 = vpack.c.b16 %v6532, %v6525
  %v7436 = vpack.c.b16 %v6533, %v6526
  %v7437 = vpack.c.b16 %v6534, %v6527
  %v7438 = vpack.c.b16 %v6535, %v6528
  %v7439 = vpack.c.b16 %v6536, %v6529
  %v7440 = vpack.c.b16 %v6537, %v6530
  %v7441 = vpack.c.b16 %v6545, %v6538
  %v7442 = vpack.c.b16 %v6546, %v6539
  %v7443 = vpack.c.b16 %v6547, %v6540
  %v7444 = vpack.c.b16 %v6548, %v6541
  %v7445 = vpack.c.b16 %v6549, %v6542
  %v7446 = vpack.c.b16 %v6550, %v6543
  %v7447 = vpack.c.b16 %v6551, %v6544
  %v7448 = vpack.c.b16 %v6559, %v6552
  %v7449 = vpack.c.b16 %v6560, %v6553
  %v7450 = vpack.c.b16 %v6561, %v6554
  %v7451 = vpack.c.b16 %v6562, %v6555
  %v7452 = vpack.c.b16 %v6563, %v6556
  %v7453 = vpack.c.b16 %v6564, %v6557
  %v7454 = vpack.c.b16 %v6565, %v6558
  %v7455 = vpack.c.b16 %v6573, %v6566
  %v7456 = vpack.c.b16 %v6574, %v6567
  %v7457 = vpack.c.b16 %v6575, %v6568
  %v7458 = vpack.c.b16 %v6576, %v6569
  %v7459 = vpack.c.b16 %v6577, %v6570
  %v7460 = vpack.c.b16 %v6578, %v6571
  %v7461 = vpack.c.b16 %v6579, %v6572
  %v7462 = vpack.c.b16 %v6587, %v6580
  %v7463 = vpack.c.b16 %v6588, %v6581
  %v7464 = vpack.c.b16 %v6589, %v6582
  %v7465 = vpack.c.b16 %v6590, %v6583
  %v7466 = vpack.c.b16 %v6591, %v6584
  %v7467 = vpack.c.b16 %v6592, %v6585
  %v7468 = vpack.c.b16 %v6593, %v6586
  %v7469 = vpack.c.b16 %v6601, %v6594
  %v7470 = vpack.c.b16 %v6602, %v6595
  %v7471 = vpack.c.b16 %v6603, %v6596
  %v7472 = vpack.c.b16 %v6604, %v6597
  %v7473 = vpack.c.b16 %v6605, %v6598
  %v7474 = vpack.c.b16 %v6606, %v6599
  %v7475 = vpack.c.b16 %v6607, %v6600
  %v7476 = vpack.c.b16 %v6615, %v6608
  %v7477 = vpack.c.b16 %v6616, %v6609
  %v7478 = vpack.c.b16 %v6617, %v6610
  %v7479 = vpack.c.b16 %v6618, %v6611
  %v7480 = vpack.c.b16 %v6619, %v6612
  %v7481 = vpack.c.b16 %v6620, %v6613
  %v7482 = vpack.c.b16 %v6621, %v6614
  %v7483 = vpack.c.b16 %v6629, %v6622
  %v7484 = vpack.c.b16 %v6630, %v6623
  %v7485 = vpack.c.b16 %v6631, %v6624
  %v7486 = vpack.c.b16 %v6632, %v6625
  %v7487 = vpack.c.b16 %v6633, %v6626
  %v7488 = vpack.c.b16 %v6634, %v6627
  %v7489 = vpack.c.b16 %v6635, %v6628
  %v7490 = vpack.c.b16 %v6643, %v6636
  %v7491 = vpack.c.b16 %v6644, %v6637
  %v7492 = vpack.c.b16 %v6645, %v6638
  %v7493 = vpack.c.b16 %v6646, %v6639
  %v7494 = vpack.c.b16 %v6647, %v6640
  %v7495 = vpack.c.b16 %v6648, %v6641
  %v7496 = vpack.c.b16 %v6649, %v6642
  %v7497 = vpack.c.b16 %v6657, %v6650
  %v7498 = vpack.c.b16 %v6658, %v6651
  %v7499 = vpack.c.b16 %v6659, %v6652
  %v7500 = vpack.c.b16 %v6660, %v6653
  %v7501 = vpack.c.b16 %v6661, %v6654
  %v7502 = vpack.c.b16 %v6662, %v6655
  %v7503 = vpack.c.b16 %v6663, %v6656
  %v7504 = vpack.c.b16 %v6671, %v6664
  %v7505 = vpack.c.b16 %v6672, %v6665
  %v7506 = vpack.c.b16 %v6673, %v6666
  %v7507 = vpack.c.b16 %v6674, %v6667
  %v7508 = vpack.c.b16 %v6675, %v6668
  %v7509 = vpack.c.b16 %v6676, %v6669
  %v7510 = vpack.c.b16 %v6677, %v6670
  %v7511 = vpack.c.b16 %v6685, %v6678
  %v7512 = vpack.c.b16 %v6686, %v6679
  %v7513 = vpack.c.b16 %v6687, %v6680
  %v7514 = vpack.c.b16 %v6688, %v6681
  %v7515 = vpack.c.b16 %v6689, %v6682
  %v7516 = vpack.c.b16 %v6690, %v6683
  %v7517 = vpack.c.b16 %v6691, %v6684
  %v7518 = vpack.c.b16 %v6699, %v6692
  %v7519 = vpack.c.b16 %v6700, %v6693
  %v7520 = vpack.c.b16 %v6701, %v6694
  %v7521 = vpack.c.b16 %v6702, %v6695
  %v7522 = vpack.c.b16 %v6703, %v6696
  %v7523 = vpack.c.b16 %v6704, %v6697
  %v7524 = vpack.c.b16 %v6705, %v6698
  %v7525 = vpack.c.b16 %v6713, %v6706
  %v7526 = vpack.c.b16 %v6714, %v6707
  %v7527 = vpack.c.b16 %v6715, %v6708
  %v7528 = vpack.c.b16 %v6716, %v6709
  %v7529 = vpack.c.b16 %v6717, %v6710
  %v7530 = vpack.c.b16 %v6718, %v6711
  %v7531 = vpack.c.b16 %v6719, %v6712
  %v7532 = vpack.c.b16 %v6727, %v6720
  %v7533 = vpack.c.b16 %v6728, %v6721
  %v7534 = vpack.c.b16 %v6729, %v6722
  %v7535 = vpack.c.b16 %v6730, %v6723
  %v7536 = vpack.c.b16 %v6731, %v6724
  %v7537 = vpack.c.b16 %v6732, %v6725
  %v7538 = vpack.c.b16 %v6733, %v6726
  %v7539 = vpack.c.b16 %v6741, %v6734
  %v7540 = vpack.c.b16 %v6742, %v6735
  %v7541 = vpack.c.b16 %v6743, %v6736
  %v7542 = vpack.c.b16 %v6744, %v6737
  %v7543 = vpack.c.b16 %v6745, %v6738
  %v7544 = vpack.c.b16 %v6746, %v6739
  %v7545 = vpack.c.b16 %v6747, %v6740
  %v7546 = vpack.c.b16 %v6755, %v6748
  %v7547 = vpack.c.b16 %v6756, %v6749
  %v7548 = vpack.c.b16 %v6757, %v6750
  %v7549 = vpack.c.b16 %v6758, %v6751
  %v7550 = vpack.c.b16 %v6759, %v6752
  %v7551 = vpack.c.b16 %v6760, %v6753
  %v7552 = vpack.c.b16 %v6761, %v6754
  %v7553 = vpack.c.b16 %v6769, %v6762
  %v7554 = vpack.c.b16 %v6770, %v6763
  %v7555 = vpack.c.b16 %v6771, %v6764
  %v7556 = vpack.c.b16 %v6772, %v6765
  %v7557 = vpack.c.b16 %v6773, %v6766
  %v7558 = vpack.c.b16 %v6774, %v6767
  %v7559 = vpack.c.b16 %v6775, %v6768
  %v7560 = vpack.c.b16 %v6783, %v6776
  %v7561 = vpack.c.b16 %v6784, %v6777
  %v7562 = vpack.c.b16 %v6785, %v6778
  %v7563 = vpack.c.b16 %v6786, %v6779
  %v7564 = vpack.c.b16 %v6787, %v6780
  %v7565 = vpack.c.b16 %v6788, %v6781
  %v7566 = vpack.c.b16 %v6789, %v6782
  %v7567 = vpack.c.b16 %v6797, %v6790
  %v7568 = vpack.c.b16 %v6798, %v6791
  %v7569 = vpack.c.b16 %v6799, %v6792
  %v7570 = vpack.c.b16 %v6800, %v6793
  %v7571 = vpack.c.b16 %v6801, %v6794
  %v7572 = vpack.c.b16 %v6802, %v6795
  %v7573 = vpack.c.b16 %v6803, %v6796
  %v7574 = vpack.c.b16 %v6811, %v6804
  %v7575 = vpack.c.b16 %v6812, %v6805
  %v7576 = vpack.c.b16 %v6813, %v6806
  %v7577 = vpack.c.b16 %v6814, %v6807
  %v7578 = vpack.c.b16 %v6815, %v6808
  %v7579 = vpack.c.b16 %v6816, %v6809
  %v7580 = vpack.c.b16 %v6817, %v6810
  %v7581 = vpack.c.b16 %v6825, %v6818
  %v7582 = vpack.c.b16 %v6826, %v6819
  %v7583 = vpack.c.b16 %v6827, %v6820
  %v7584 = vpack.c.b16 %v6828, %v6821
  %v7585 = vpack.c.b16 %v6829, %v6822
  %v7586 = vpack.c.b16 %v6830, %v6823
  %v7587 = vpack.c.b16 %v6831, %v6824
  %v7588 = vpack.c.b16 %v6839, %v6832
  %v7589 = vpack.c.b16 %v6840, %v6833
  %v7590 = vpack.c.b16 %v6841, %v6834
  %v7591 = vpack.c.b16 %v6842, %v6835
  %v7592 = vpack.c.b16 %v6843, %v6836
  %v7593 = vpack.c.b16 %v6844, %v6837
  %v7594 = vpack.c.b16 %v6845, %v6838
  %v7595 = vpack.c.b16 %v6853, %v6846
  %v7596 = vpack.c.b16 %v6854, %v6847
  %v7597 = vpack.c.b16 %v6855, %v6848
  %v7598 = vpack.c.b16 %v6856, %v6849
  %v7599 = vpack.c.b16 %v6857, %v6850
  %v7600 = vpack.c.b16 %v6858, %v6851
  %v7601 = vpack.c.b16 %v6859, %v6852
  %v7602 = vpack.c.b16 %v6867, %v6860
  %v7603 = vpack.c.b16 %v6868, %v6861
  %v7604 = vpack.c.b16 %v6869, %v6862
  %v7605 = vpack.c.b16 %v6870, %v6863
  %v7606 = vpack.c.b16 %v6871, %v6864
  %v7607 = vpack.c.b16 %v6872, %v6865
  %v7608 = vpack.c.b16 %v6873, %v6866
  %v7609 = vpack.c.b16 %v6881, %v6874
  %v7610 = vpack.c.b16 %v6882, %v6875
  %v7611 = vpack.c.b16 %v6883, %v6876
  %v7612 = vpack.c.b16 %v6884, %v6877
  %v7613 = vpack.c.b16 %v6885, %v6878
  %v7614 = vpack.c.b16 %v6886, %v6879
  %v7615 = vpack.c.b16 %v6887, %v6880
  %v7616 = vpack.c.b16 %v6895, %v6888
  %v7617 = vpack.c.b16 %v6896, %v6889
  %v7618 = vpack.c.b16 %v6897, %v6890
  %v7619 = vpack.c.b16 %v6898, %v6891
  %v7620 = vpack.c.b16 %v6899, %v6892
  %v7621 = vpack.c.b16 %v6900, %v6893
  %v7622 = vpack.c.b16 %v6901, %v6894
  %v7623 = vpack.c.b16 %v6909, %v6902
  %v7624 = vpack.c.b16 %v6910, %v6903
  %v7625 = vpack.c.b16 %v6911, %v6904
  %v7626 = vpack.c.b16 %v6912, %v6905
  %v7627 = vpack.c.b16 %v6913, %v6906
  %v7628 = vpack.c.b16 %v6914, %v6907
  %v7629 = vpack.c.b16 %v6915, %v6908
  %v7630 = vpack.c.b16 %v6923, %v6916
  %v7631 = vpack.c.b16 %v6924, %v6917
  %v7632 = vpack.c.b16 %v6925, %v6918
  %v7633 = vpack.c.b16 %v6926, %v6919
  %v7634 = vpack.c.b16 %v6927, %v6920
  %v7635 = vpack.c.b16 %v6928, %v6921
  %v7636 = vpack.c.b16 %v6929, %v6922
  %v7637 = vpack.c.b16 %v6937, %v6930
  %v7638 = vpack.c.b16 %v6938, %v6931
  %v7639 = vpack.c.b16 %v6939, %v6932
  %v7640 = vpack.c.b16 %v6940, %v6933
  %v7641 = vpack.c.b16 %v6941, %v6934
  %v7642 = vpack.c.b16 %v6942, %v6935
  %v7643 = vpack.c.b16 %v6943, %v6936
  %vm8344 = vcmask 523264
  %v8346 = vsel %vm8344, %v3933, 0
  %8348 = vmatprep.subr.bf16.mxu0 %v6994
  %8349 = vmatpush1.bf16.msra.mxu0 %v6993
  %8350 = vmatprep.subr.bf16.mxu0 %v6987
  %8351 = vmatpush1.bf16.msra.mxu0 %v6986
  %8352 = vmatprep.subr.bf16.mxu0 %v6980
  %8353 = vmatpush1.bf16.msra.mxu0 %v6979
  %8354 = vmatprep.subr.bf16.mxu0 %v6973
  %8355 = vmatpush1.bf16.msra.mxu0 %v6972
  %8356 = vmatprep.subr.bf16.mxu0 %v6966
  %8357 = vmatpush1.bf16.msra.mxu0 %v6965
  %8358 = vmatprep.subr.bf16.mxu0 %v6959
  %8359 = vmatpush1.bf16.msra.mxu0 %v6958
  %8360 = vmatprep.subr.bf16.mxu0 %v6952
  %8361 = vmatpush1.bf16.msra.mxu0 %v6951
  %8362 = vmatprep.subr.bf16.mxu0 %v6945
  %8363 = vmatpush1.bf16.msra.mxu0 %v6944
  %8364 = vmatprep.subr.bf16.mxu0 %v7050
  %8365 = vmatpush2.bf16.msra.mxu0 %v7049
  %8366 = vmatprep.subr.bf16.mxu0 %v7043
  %8367 = vmatpush2.bf16.msra.mxu0 %v7042
  %8368 = vmatprep.subr.bf16.mxu0 %v7036
  %8369 = vmatpush2.bf16.msra.mxu0 %v7035
  %8370 = vmatprep.subr.bf16.mxu0 %v7029
  %8371 = vmatpush2.bf16.msra.mxu0 %v7028
  %8372 = vmatprep.subr.bf16.mxu0 %v7022
  %8373 = vmatpush2.bf16.msra.mxu0 %v7021
  %8374 = vmatprep.subr.bf16.mxu0 %v7015
  %8375 = vmatpush2.bf16.msra.mxu0 %v7014
  %8376 = vmatprep.subr.bf16.mxu0 %v7008
  %8377 = vmatpush2.bf16.msra.mxu0 %v7007
  %8378 = vmatprep.subr.bf16.mxu0 %v7001
  %8379 = vmatpush2.bf16.msra.mxu0 %v7000
  %8380 = vmatprep.mubr.bf16.mxu0 %v3922
  %8381 = vmatmul.mubr.bf16.gmra.mxu0 %v3921
  %v8382 = vpop.f32.mrf.mxu0
  %v8383 = vadd.f32 %v4742, %v8382
  %v8384 = vpop.f32.mrf.mxu0
  %v8385 = vadd.f32 %v4742, %v8384
  %v8386 = vpop.f32.mrf.mxu0
  %v8387 = vpop.f32.mrf.mxu0
  %8388 = vdwg.mxu0
  %8389 = vmatprep.subr.bf16.mxu0 %v7106
  %8390 = vmatpush1.bf16.msra.mxu0 %v7105
  %8391 = vmatprep.subr.bf16.mxu0 %v7099
  %8392 = vmatpush1.bf16.msra.mxu0 %v7098
  %8393 = vmatprep.subr.bf16.mxu0 %v7092
  %8394 = vmatpush1.bf16.msra.mxu0 %v7091
  %8395 = vmatprep.subr.bf16.mxu0 %v7085
  %8396 = vmatpush1.bf16.msra.mxu0 %v7084
  %8397 = vmatprep.subr.bf16.mxu0 %v7078
  %8398 = vmatpush1.bf16.msra.mxu0 %v7077
  %8399 = vmatprep.subr.bf16.mxu0 %v7071
  %8400 = vmatpush1.bf16.msra.mxu0 %v7070
  %8401 = vmatprep.subr.bf16.mxu0 %v7064
  %8402 = vmatpush1.bf16.msra.mxu0 %v7063
  %8403 = vmatprep.subr.bf16.mxu0 %v7057
  %8404 = vmatpush1.bf16.msra.mxu0 %v7056
  %8405 = vmatprep.subr.bf16.mxu0 %v7162
  %8406 = vmatpush2.bf16.msra.mxu0 %v7161
  %8407 = vmatprep.subr.bf16.mxu0 %v7155
  %8408 = vmatpush2.bf16.msra.mxu0 %v7154
  %8409 = vmatprep.subr.bf16.mxu0 %v7148
  %8410 = vmatpush2.bf16.msra.mxu0 %v7147
  %8411 = vmatprep.subr.bf16.mxu0 %v7141
  %8412 = vmatpush2.bf16.msra.mxu0 %v7140
  %8413 = vmatprep.subr.bf16.mxu0 %v7134
  %8414 = vmatpush2.bf16.msra.mxu0 %v7133
  %8415 = vmatprep.subr.bf16.mxu0 %v7127
  %8416 = vmatpush2.bf16.msra.mxu0 %v7126
  %8417 = vmatprep.subr.bf16.mxu0 %v7120
  %8418 = vmatpush2.bf16.msra.mxu0 %v7119
  %8419 = vmatprep.subr.bf16.mxu0 %v7113
  %8420 = vmatpush2.bf16.msra.mxu0 %v7112
  %8421 = vmatprep.mubr.bf16.mxu0 %v3924
  %8422 = vmatmul.mubr.bf16.gmra.mxu0 %v3923
  %v8423 = vpop.f32.mrf.mxu0
  %v8424 = vadd.f32 %v8383, %v8423
  %v8425 = vpop.f32.mrf.mxu0
  %v8426 = vadd.f32 %v8385, %v8425
  %v8427 = vpop.f32.mrf.mxu0
  %v8428 = vpop.f32.mrf.mxu0
  %8429 = vdwg.mxu0
  %8430 = vmatprep.subr.bf16.mxu0 %v7218
  %8431 = vmatpush1.bf16.msra.mxu0 %v7217
  %8432 = vmatprep.subr.bf16.mxu0 %v7211
  %8433 = vmatpush1.bf16.msra.mxu0 %v7210
  %8434 = vmatprep.subr.bf16.mxu0 %v7204
  %8435 = vmatpush1.bf16.msra.mxu0 %v7203
  %8436 = vmatprep.subr.bf16.mxu0 %v7197
  %8437 = vmatpush1.bf16.msra.mxu0 %v7196
  %8438 = vmatprep.subr.bf16.mxu0 %v7190
  %8439 = vmatpush1.bf16.msra.mxu0 %v7189
  %8440 = vmatprep.subr.bf16.mxu0 %v7183
  %8441 = vmatpush1.bf16.msra.mxu0 %v7182
  %8442 = vmatprep.subr.bf16.mxu0 %v7176
  %8443 = vmatpush1.bf16.msra.mxu0 %v7175
  %8444 = vmatprep.subr.bf16.mxu0 %v7169
  %8445 = vmatpush1.bf16.msra.mxu0 %v7168
  %8446 = vmatprep.subr.bf16.mxu0 %v7274
  %8447 = vmatpush2.bf16.msra.mxu0 %v7273
  %8448 = vmatprep.subr.bf16.mxu0 %v7267
  %8449 = vmatpush2.bf16.msra.mxu0 %v7266
  %8450 = vmatprep.subr.bf16.mxu0 %v7260
  %8451 = vmatpush2.bf16.msra.mxu0 %v7259
  %8452 = vmatprep.subr.bf16.mxu0 %v7253
  %8453 = vmatpush2.bf16.msra.mxu0 %v7252
  %8454 = vmatprep.subr.bf16.mxu0 %v7246
  %8455 = vmatpush2.bf16.msra.mxu0 %v7245
  %8456 = vmatprep.subr.bf16.mxu0 %v7239
  %8457 = vmatpush2.bf16.msra.mxu0 %v7238
  %8458 = vmatprep.subr.bf16.mxu0 %v7232
  %8459 = vmatpush2.bf16.msra.mxu0 %v7231
  %8460 = vmatprep.subr.bf16.mxu0 %v7225
  %8461 = vmatpush2.bf16.msra.mxu0 %v7224
  %8462 = vmatprep.mubr.bf16.mxu0 %v3926
  %8463 = vmatmul.mubr.bf16.gmra.mxu0 %v3925
  %v8464 = vpop.f32.mrf.mxu0
  %v8465 = vadd.f32 %v8424, %v8464
  %v8466 = vpop.f32.mrf.mxu0
  %v8467 = vadd.f32 %v8426, %v8466
  %v8468 = vpop.f32.mrf.mxu0
  %v8469 = vpop.f32.mrf.mxu0
  %8470 = vdwg.mxu0
  %8471 = vmatprep.subr.bf16.mxu0 %v7330
  %8472 = vmatpush1.bf16.msra.mxu0 %v7329
  %8473 = vmatprep.subr.bf16.mxu0 %v7323
  %8474 = vmatpush1.bf16.msra.mxu0 %v7322
  %8475 = vmatprep.subr.bf16.mxu0 %v7316
  %8476 = vmatpush1.bf16.msra.mxu0 %v7315
  %8477 = vmatprep.subr.bf16.mxu0 %v7309
  %8478 = vmatpush1.bf16.msra.mxu0 %v7308
  %8479 = vmatprep.subr.bf16.mxu0 %v7302
  %8480 = vmatpush1.bf16.msra.mxu0 %v7301
  %8481 = vmatprep.subr.bf16.mxu0 %v7295
  %8482 = vmatpush1.bf16.msra.mxu0 %v7294
  %8483 = vmatprep.subr.bf16.mxu0 %v7288
  %8484 = vmatpush1.bf16.msra.mxu0 %v7287
  %8485 = vmatprep.subr.bf16.mxu0 %v7281
  %8486 = vmatpush1.bf16.msra.mxu0 %v7280
  %8487 = vmatprep.subr.bf16.mxu0 %v7386
  %8488 = vmatpush2.bf16.msra.mxu0 %v7385
  %8489 = vmatprep.subr.bf16.mxu0 %v7379
  %8490 = vmatpush2.bf16.msra.mxu0 %v7378
  %8491 = vmatprep.subr.bf16.mxu0 %v7372
  %8492 = vmatpush2.bf16.msra.mxu0 %v7371
  %8493 = vmatprep.subr.bf16.mxu0 %v7365
  %8494 = vmatpush2.bf16.msra.mxu0 %v7364
  %8495 = vmatprep.subr.bf16.mxu0 %v7358
  %8496 = vmatpush2.bf16.msra.mxu0 %v7357
  %8497 = vmatprep.subr.bf16.mxu0 %v7351
  %8498 = vmatpush2.bf16.msra.mxu0 %v7350
  %8499 = vmatprep.subr.bf16.mxu0 %v7344
  %8500 = vmatpush2.bf16.msra.mxu0 %v7343
  %8501 = vmatprep.subr.bf16.mxu0 %v7337
  %8502 = vmatpush2.bf16.msra.mxu0 %v7336
  %8503 = vmatprep.mubr.bf16.mxu0 %v3928
  %8504 = vmatmul.mubr.bf16.gmra.mxu0 %v3927
  %v8505 = vpop.f32.mrf.mxu0
  %v8506 = vadd.f32 %v8465, %v8505
  %v8507 = vpop.f32.mrf.mxu0
  %v8508 = vadd.f32 %v8467, %v8507
  %v8509 = vpop.f32.mrf.mxu0
  %v8510 = vpop.f32.mrf.mxu0
  %8511 = vdwg.mxu0
  %8512 = vmatprep.subr.bf16.mxu0 %v7442
  %8513 = vmatpush1.bf16.msra.mxu0 %v7441
  %8514 = vmatprep.subr.bf16.mxu0 %v7435
  %8515 = vmatpush1.bf16.msra.mxu0 %v7434
  %8516 = vmatprep.subr.bf16.mxu0 %v7428
  %8517 = vmatpush1.bf16.msra.mxu0 %v7427
  %8518 = vmatprep.subr.bf16.mxu0 %v7421
  %8519 = vmatpush1.bf16.msra.mxu0 %v7420
  %8520 = vmatprep.subr.bf16.mxu0 %v7414
  %8521 = vmatpush1.bf16.msra.mxu0 %v7413
  %8522 = vmatprep.subr.bf16.mxu0 %v7407
  %8523 = vmatpush1.bf16.msra.mxu0 %v7406
  %8524 = vmatprep.subr.bf16.mxu0 %v7400
  %8525 = vmatpush1.bf16.msra.mxu0 %v7399
  %8526 = vmatprep.subr.bf16.mxu0 %v7393
  %8527 = vmatpush1.bf16.msra.mxu0 %v7392
  %8528 = vmatprep.subr.bf16.mxu0 %v7498
  %8529 = vmatpush2.bf16.msra.mxu0 %v7497
  %8530 = vmatprep.subr.bf16.mxu0 %v7491
  %8531 = vmatpush2.bf16.msra.mxu0 %v7490
  %8532 = vmatprep.subr.bf16.mxu0 %v7484
  %8533 = vmatpush2.bf16.msra.mxu0 %v7483
  %8534 = vmatprep.subr.bf16.mxu0 %v7477
  %8535 = vmatpush2.bf16.msra.mxu0 %v7476
  %8536 = vmatprep.subr.bf16.mxu0 %v7470
  %8537 = vmatpush2.bf16.msra.mxu0 %v7469
  %8538 = vmatprep.subr.bf16.mxu0 %v7463
  %8539 = vmatpush2.bf16.msra.mxu0 %v7462
  %8540 = vmatprep.subr.bf16.mxu0 %v7456
  %8541 = vmatpush2.bf16.msra.mxu0 %v7455
  %8542 = vmatprep.subr.bf16.mxu0 %v7449
  %8543 = vmatpush2.bf16.msra.mxu0 %v7448
  %8544 = vmatprep.mubr.bf16.mxu0 %v3930
  %8545 = vmatmul.mubr.bf16.gmra.mxu0 %v3929
  %v8546 = vpop.f32.mrf.mxu0
  %v8547 = vadd.f32 %v8506, %v8546
  %v8548 = vpop.f32.mrf.mxu0
  %v8549 = vadd.f32 %v8508, %v8548
  %v8550 = vpop.f32.mrf.mxu0
  %v8551 = vpop.f32.mrf.mxu0
  %8552 = vdwg.mxu0
  %8553 = vmatprep.subr.bf16.mxu0 %v7554
  %8554 = vmatpush1.bf16.msra.mxu0 %v7553
  %8555 = vmatprep.subr.bf16.mxu0 %v7547
  %8556 = vmatpush1.bf16.msra.mxu0 %v7546
  %8557 = vmatprep.subr.bf16.mxu0 %v7540
  %8558 = vmatpush1.bf16.msra.mxu0 %v7539
  %8559 = vmatprep.subr.bf16.mxu0 %v7533
  %8560 = vmatpush1.bf16.msra.mxu0 %v7532
  %8561 = vmatprep.subr.bf16.mxu0 %v7526
  %8562 = vmatpush1.bf16.msra.mxu0 %v7525
  %8563 = vmatprep.subr.bf16.mxu0 %v7519
  %8564 = vmatpush1.bf16.msra.mxu0 %v7518
  %8565 = vmatprep.subr.bf16.mxu0 %v7512
  %8566 = vmatpush1.bf16.msra.mxu0 %v7511
  %8567 = vmatprep.subr.bf16.mxu0 %v7505
  %8568 = vmatpush1.bf16.msra.mxu0 %v7504
  %8569 = vmatprep.subr.bf16.mxu0 %v7610
  %8570 = vmatpush2.bf16.msra.mxu0 %v7609
  %8571 = vmatprep.subr.bf16.mxu0 %v7603
  %8572 = vmatpush2.bf16.msra.mxu0 %v7602
  %8573 = vmatprep.subr.bf16.mxu0 %v7596
  %8574 = vmatpush2.bf16.msra.mxu0 %v7595
  %8575 = vmatprep.subr.bf16.mxu0 %v7589
  %8576 = vmatpush2.bf16.msra.mxu0 %v7588
  %8577 = vmatprep.subr.bf16.mxu0 %v7582
  %8578 = vmatpush2.bf16.msra.mxu0 %v7581
  %8579 = vmatprep.subr.bf16.mxu0 %v7575
  %8580 = vmatpush2.bf16.msra.mxu0 %v7574
  %8581 = vmatprep.subr.bf16.mxu0 %v7568
  %8582 = vmatpush2.bf16.msra.mxu0 %v7567
  %8583 = vmatprep.subr.bf16.mxu0 %v7561
  %8584 = vmatpush2.bf16.msra.mxu0 %v7560
  %8585 = vmatprep.mubr.bf16.mxu0 %v3932
  %8586 = vmatmul.mubr.bf16.gmra.mxu0 %v3931
  %v8587 = vpop.f32.mrf.mxu0
  %v8588 = vadd.f32 %v8547, %v8587
  %v8589 = vpop.f32.mrf.mxu0
  %v8590 = vadd.f32 %v8549, %v8589
  %v8591 = vpop.f32.mrf.mxu0
  %v8592 = vpop.f32.mrf.mxu0
  %8593 = vdwg.mxu0
  %8594 = vmatprep.subr.bf16.mxu0 0
  %8595 = vmatpush1.bf16.msra.mxu0 0
  %8596 = vmatprep.subr.bf16.mxu0 0
  %8597 = vmatpush1.bf16.msra.mxu0 0
  %8598 = vmatprep.subr.bf16.mxu0 0
  %8599 = vmatpush1.bf16.msra.mxu0 0
  %8600 = vmatprep.subr.bf16.mxu0 0
  %8601 = vmatpush1.bf16.msra.mxu0 0
  %8602 = vmatprep.subr.bf16.mxu0 %v7638
  %8603 = vmatpush1.bf16.msra.mxu0 %v7637
  %8604 = vmatprep.subr.bf16.mxu0 %v7631
  %8605 = vmatpush1.bf16.msra.mxu0 %v7630
  %8606 = vmatprep.subr.bf16.mxu0 %v7624
  %8607 = vmatpush1.bf16.msra.mxu0 %v7623
  %8608 = vmatprep.subr.bf16.mxu0 %v7617
  %8609 = vmatpush1.bf16.msra.mxu0 %v7616
  %8610 = vmatprep.subr.bf16.mxu0 0
  %8611 = vmatpush2.bf16.msra.mxu0 0
  %8612 = vmatprep.subr.bf16.mxu0 0
  %8613 = vmatpush2.bf16.msra.mxu0 0
  %8614 = vmatprep.subr.bf16.mxu0 0
  %8615 = vmatpush2.bf16.msra.mxu0 0
  %8616 = vmatprep.subr.bf16.mxu0 0
  %8617 = vmatpush2.bf16.msra.mxu0 0
  %8618 = vmatprep.subr.bf16.mxu0 0
  %8619 = vmatpush2.bf16.msra.mxu0 0
  %8620 = vmatprep.subr.bf16.mxu0 0
  %8621 = vmatpush2.bf16.msra.mxu0 0
  %8622 = vmatprep.subr.bf16.mxu0 0
  %8623 = vmatpush2.bf16.msra.mxu0 0
  %8624 = vmatprep.subr.bf16.mxu0 0
  %8625 = vmatpush2.bf16.msra.mxu0 0
  %8626 = vmatprep.mubr.bf16.mxu0 0
  %8627 = vmatmul.mubr.bf16.gmra.mxu0 %v8346
  %v8628 = vpop.f32.mrf.mxu0
  %v8629 = vadd.f32 %v8588, %v8628
  %v8630 = vpop.f32.mrf.mxu0
  %v8631 = vadd.f32 %v8590, %v8630
  %v8632 = vpop.f32.mrf.mxu0
  %v8633 = vpop.f32.mrf.mxu0
  %8634 = vdwg.mxu0
  %8635 = vmatprep.subr.bf16.mxu0 %v6996
  %8636 = vmatpush1.bf16.msra.mxu0 %v6995
  %8637 = vmatprep.subr.bf16.mxu0 %v6989
  %8638 = vmatpush1.bf16.msra.mxu0 %v6988
  %8639 = vmatprep.subr.bf16.mxu0 %v6982
  %8640 = vmatpush1.bf16.msra.mxu0 %v6981
  %8641 = vmatprep.subr.bf16.mxu0 %v6975
  %8642 = vmatpush1.bf16.msra.mxu0 %v6974
  %8643 = vmatprep.subr.bf16.mxu0 %v6968
  %8644 = vmatpush1.bf16.msra.mxu0 %v6967
  %8645 = vmatprep.subr.bf16.mxu0 %v6961
  %8646 = vmatpush1.bf16.msra.mxu0 %v6960
  %8647 = vmatprep.subr.bf16.mxu0 %v6954
  %8648 = vmatpush1.bf16.msra.mxu0 %v6953
  %8649 = vmatprep.subr.bf16.mxu0 %v6947
  %8650 = vmatpush1.bf16.msra.mxu0 %v6946
  %8651 = vmatprep.subr.bf16.mxu0 %v7052
  %8652 = vmatpush2.bf16.msra.mxu0 %v7051
  %8653 = vmatprep.subr.bf16.mxu0 %v7045
  %8654 = vmatpush2.bf16.msra.mxu0 %v7044
  %8655 = vmatprep.subr.bf16.mxu0 %v7038
  %8656 = vmatpush2.bf16.msra.mxu0 %v7037
  %8657 = vmatprep.subr.bf16.mxu0 %v7031
  %8658 = vmatpush2.bf16.msra.mxu0 %v7030
  %8659 = vmatprep.subr.bf16.mxu0 %v7024
  %8660 = vmatpush2.bf16.msra.mxu0 %v7023
  %8661 = vmatprep.subr.bf16.mxu0 %v7017
  %8662 = vmatpush2.bf16.msra.mxu0 %v7016
  %8663 = vmatprep.subr.bf16.mxu0 %v7010
  %8664 = vmatpush2.bf16.msra.mxu0 %v7009
  %8665 = vmatprep.subr.bf16.mxu0 %v7003
  %8666 = vmatpush2.bf16.msra.mxu0 %v7002
  %8667 = vmatprep.mubr.bf16.mxu0 %v3922
  %8668 = vmatmul.mubr.bf16.gmra.mxu0 %v3921
  %v8669 = vpop.f32.mrf.mxu0
  %v8670 = vadd.f32 %v4742, %v8669
  %v8671 = vpop.f32.mrf.mxu0
  %v8672 = vadd.f32 %v4742, %v8671
  %v8673 = vpop.f32.mrf.mxu0
  %v8674 = vpop.f32.mrf.mxu0
  %8675 = vdwg.mxu0
  %8676 = vmatprep.subr.bf16.mxu0 %v7108
  %8677 = vmatpush1.bf16.msra.mxu0 %v7107
  %8678 = vmatprep.subr.bf16.mxu0 %v7101
  %8679 = vmatpush1.bf16.msra.mxu0 %v7100
  %8680 = vmatprep.subr.bf16.mxu0 %v7094
  %8681 = vmatpush1.bf16.msra.mxu0 %v7093
  %8682 = vmatprep.subr.bf16.mxu0 %v7087
  %8683 = vmatpush1.bf16.msra.mxu0 %v7086
  %8684 = vmatprep.subr.bf16.mxu0 %v7080
  %8685 = vmatpush1.bf16.msra.mxu0 %v7079
  %8686 = vmatprep.subr.bf16.mxu0 %v7073
  %8687 = vmatpush1.bf16.msra.mxu0 %v7072
  %8688 = vmatprep.subr.bf16.mxu0 %v7066
  %8689 = vmatpush1.bf16.msra.mxu0 %v7065
  %8690 = vmatprep.subr.bf16.mxu0 %v7059
  %8691 = vmatpush1.bf16.msra.mxu0 %v7058
  %8692 = vmatprep.subr.bf16.mxu0 %v7164
  %8693 = vmatpush2.bf16.msra.mxu0 %v7163
  %8694 = vmatprep.subr.bf16.mxu0 %v7157
  %8695 = vmatpush2.bf16.msra.mxu0 %v7156
  %8696 = vmatprep.subr.bf16.mxu0 %v7150
  %8697 = vmatpush2.bf16.msra.mxu0 %v7149
  %8698 = vmatprep.subr.bf16.mxu0 %v7143
  %8699 = vmatpush2.bf16.msra.mxu0 %v7142
  %8700 = vmatprep.subr.bf16.mxu0 %v7136
  %8701 = vmatpush2.bf16.msra.mxu0 %v7135
  %8702 = vmatprep.subr.bf16.mxu0 %v7129
  %8703 = vmatpush2.bf16.msra.mxu0 %v7128
  %8704 = vmatprep.subr.bf16.mxu0 %v7122
  %8705 = vmatpush2.bf16.msra.mxu0 %v7121
  %8706 = vmatprep.subr.bf16.mxu0 %v7115
  %8707 = vmatpush2.bf16.msra.mxu0 %v7114
  %8708 = vmatprep.mubr.bf16.mxu0 %v3924
  %8709 = vmatmul.mubr.bf16.gmra.mxu0 %v3923
  %v8710 = vpop.f32.mrf.mxu0
  %v8711 = vadd.f32 %v8670, %v8710
  %v8712 = vpop.f32.mrf.mxu0
  %v8713 = vadd.f32 %v8672, %v8712
  %v8714 = vpop.f32.mrf.mxu0
  %v8715 = vpop.f32.mrf.mxu0
  %8716 = vdwg.mxu0
  %8717 = vmatprep.subr.bf16.mxu0 %v7220
  %8718 = vmatpush1.bf16.msra.mxu0 %v7219
  %8719 = vmatprep.subr.bf16.mxu0 %v7213
  %8720 = vmatpush1.bf16.msra.mxu0 %v7212
  %8721 = vmatprep.subr.bf16.mxu0 %v7206
  %8722 = vmatpush1.bf16.msra.mxu0 %v7205
  %8723 = vmatprep.subr.bf16.mxu0 %v7199
  %8724 = vmatpush1.bf16.msra.mxu0 %v7198
  %8725 = vmatprep.subr.bf16.mxu0 %v7192
  %8726 = vmatpush1.bf16.msra.mxu0 %v7191
  %8727 = vmatprep.subr.bf16.mxu0 %v7185
  %8728 = vmatpush1.bf16.msra.mxu0 %v7184
  %8729 = vmatprep.subr.bf16.mxu0 %v7178
  %8730 = vmatpush1.bf16.msra.mxu0 %v7177
  %8731 = vmatprep.subr.bf16.mxu0 %v7171
  %8732 = vmatpush1.bf16.msra.mxu0 %v7170
  %8733 = vmatprep.subr.bf16.mxu0 %v7276
  %8734 = vmatpush2.bf16.msra.mxu0 %v7275
  %8735 = vmatprep.subr.bf16.mxu0 %v7269
  %8736 = vmatpush2.bf16.msra.mxu0 %v7268
  %8737 = vmatprep.subr.bf16.mxu0 %v7262
  %8738 = vmatpush2.bf16.msra.mxu0 %v7261
  %8739 = vmatprep.subr.bf16.mxu0 %v7255
  %8740 = vmatpush2.bf16.msra.mxu0 %v7254
  %8741 = vmatprep.subr.bf16.mxu0 %v7248
  %8742 = vmatpush2.bf16.msra.mxu0 %v7247
  %8743 = vmatprep.subr.bf16.mxu0 %v7241
  %8744 = vmatpush2.bf16.msra.mxu0 %v7240
  %8745 = vmatprep.subr.bf16.mxu0 %v7234
  %8746 = vmatpush2.bf16.msra.mxu0 %v7233
  %8747 = vmatprep.subr.bf16.mxu0 %v7227
  %8748 = vmatpush2.bf16.msra.mxu0 %v7226
  %8749 = vmatprep.mubr.bf16.mxu0 %v3926
  %8750 = vmatmul.mubr.bf16.gmra.mxu0 %v3925
  %v8751 = vpop.f32.mrf.mxu0
  %v8752 = vadd.f32 %v8711, %v8751
  %v8753 = vpop.f32.mrf.mxu0
  %v8754 = vadd.f32 %v8713, %v8753
  %v8755 = vpop.f32.mrf.mxu0
  %v8756 = vpop.f32.mrf.mxu0
  %8757 = vdwg.mxu0
  %8758 = vmatprep.subr.bf16.mxu0 %v7332
  %8759 = vmatpush1.bf16.msra.mxu0 %v7331
  %8760 = vmatprep.subr.bf16.mxu0 %v7325
  %8761 = vmatpush1.bf16.msra.mxu0 %v7324
  %8762 = vmatprep.subr.bf16.mxu0 %v7318
  %8763 = vmatpush1.bf16.msra.mxu0 %v7317
  %8764 = vmatprep.subr.bf16.mxu0 %v7311
  %8765 = vmatpush1.bf16.msra.mxu0 %v7310
  %8766 = vmatprep.subr.bf16.mxu0 %v7304
  %8767 = vmatpush1.bf16.msra.mxu0 %v7303
  %8768 = vmatprep.subr.bf16.mxu0 %v7297
  %8769 = vmatpush1.bf16.msra.mxu0 %v7296
  %8770 = vmatprep.subr.bf16.mxu0 %v7290
  %8771 = vmatpush1.bf16.msra.mxu0 %v7289
  %8772 = vmatprep.subr.bf16.mxu0 %v7283
  %8773 = vmatpush1.bf16.msra.mxu0 %v7282
  %8774 = vmatprep.subr.bf16.mxu0 %v7388
  %8775 = vmatpush2.bf16.msra.mxu0 %v7387
  %8776 = vmatprep.subr.bf16.mxu0 %v7381
  %8777 = vmatpush2.bf16.msra.mxu0 %v7380
  %8778 = vmatprep.subr.bf16.mxu0 %v7374
  %8779 = vmatpush2.bf16.msra.mxu0 %v7373
  %8780 = vmatprep.subr.bf16.mxu0 %v7367
  %8781 = vmatpush2.bf16.msra.mxu0 %v7366
  %8782 = vmatprep.subr.bf16.mxu0 %v7360
  %8783 = vmatpush2.bf16.msra.mxu0 %v7359
  %8784 = vmatprep.subr.bf16.mxu0 %v7353
  %8785 = vmatpush2.bf16.msra.mxu0 %v7352
  %8786 = vmatprep.subr.bf16.mxu0 %v7346
  %8787 = vmatpush2.bf16.msra.mxu0 %v7345
  %8788 = vmatprep.subr.bf16.mxu0 %v7339
  %8789 = vmatpush2.bf16.msra.mxu0 %v7338
  %8790 = vmatprep.mubr.bf16.mxu0 %v3928
  %8791 = vmatmul.mubr.bf16.gmra.mxu0 %v3927
  %v8792 = vpop.f32.mrf.mxu0
  %v8793 = vadd.f32 %v8752, %v8792
  %v8794 = vpop.f32.mrf.mxu0
  %v8795 = vadd.f32 %v8754, %v8794
  %v8796 = vpop.f32.mrf.mxu0
  %v8797 = vpop.f32.mrf.mxu0
  %8798 = vdwg.mxu0
  %8799 = vmatprep.subr.bf16.mxu0 %v7444
  %8800 = vmatpush1.bf16.msra.mxu0 %v7443
  %8801 = vmatprep.subr.bf16.mxu0 %v7437
  %8802 = vmatpush1.bf16.msra.mxu0 %v7436
  %8803 = vmatprep.subr.bf16.mxu0 %v7430
  %8804 = vmatpush1.bf16.msra.mxu0 %v7429
  %8805 = vmatprep.subr.bf16.mxu0 %v7423
  %8806 = vmatpush1.bf16.msra.mxu0 %v7422
  %8807 = vmatprep.subr.bf16.mxu0 %v7416
  %8808 = vmatpush1.bf16.msra.mxu0 %v7415
  %8809 = vmatprep.subr.bf16.mxu0 %v7409
  %8810 = vmatpush1.bf16.msra.mxu0 %v7408
  %8811 = vmatprep.subr.bf16.mxu0 %v7402
  %8812 = vmatpush1.bf16.msra.mxu0 %v7401
  %8813 = vmatprep.subr.bf16.mxu0 %v7395
  %8814 = vmatpush1.bf16.msra.mxu0 %v7394
  %8815 = vmatprep.subr.bf16.mxu0 %v7500
  %8816 = vmatpush2.bf16.msra.mxu0 %v7499
  %8817 = vmatprep.subr.bf16.mxu0 %v7493
  %8818 = vmatpush2.bf16.msra.mxu0 %v7492
  %8819 = vmatprep.subr.bf16.mxu0 %v7486
  %8820 = vmatpush2.bf16.msra.mxu0 %v7485
  %8821 = vmatprep.subr.bf16.mxu0 %v7479
  %8822 = vmatpush2.bf16.msra.mxu0 %v7478
  %8823 = vmatprep.subr.bf16.mxu0 %v7472
  %8824 = vmatpush2.bf16.msra.mxu0 %v7471
  %8825 = vmatprep.subr.bf16.mxu0 %v7465
  %8826 = vmatpush2.bf16.msra.mxu0 %v7464
  %8827 = vmatprep.subr.bf16.mxu0 %v7458
  %8828 = vmatpush2.bf16.msra.mxu0 %v7457
  %8829 = vmatprep.subr.bf16.mxu0 %v7451
  %8830 = vmatpush2.bf16.msra.mxu0 %v7450
  %8831 = vmatprep.mubr.bf16.mxu0 %v3930
  %8832 = vmatmul.mubr.bf16.gmra.mxu0 %v3929
  %v8833 = vpop.f32.mrf.mxu0
  %v8834 = vadd.f32 %v8793, %v8833
  %v8835 = vpop.f32.mrf.mxu0
  %v8836 = vadd.f32 %v8795, %v8835
  %v8837 = vpop.f32.mrf.mxu0
  %v8838 = vpop.f32.mrf.mxu0
  %8839 = vdwg.mxu0
  %8840 = vmatprep.subr.bf16.mxu0 %v7556
  %8841 = vmatpush1.bf16.msra.mxu0 %v7555
  %8842 = vmatprep.subr.bf16.mxu0 %v7549
  %8843 = vmatpush1.bf16.msra.mxu0 %v7548
  %8844 = vmatprep.subr.bf16.mxu0 %v7542
  %8845 = vmatpush1.bf16.msra.mxu0 %v7541
  %8846 = vmatprep.subr.bf16.mxu0 %v7535
  %8847 = vmatpush1.bf16.msra.mxu0 %v7534
  %8848 = vmatprep.subr.bf16.mxu0 %v7528
  %8849 = vmatpush1.bf16.msra.mxu0 %v7527
  %8850 = vmatprep.subr.bf16.mxu0 %v7521
  %8851 = vmatpush1.bf16.msra.mxu0 %v7520
  %8852 = vmatprep.subr.bf16.mxu0 %v7514
  %8853 = vmatpush1.bf16.msra.mxu0 %v7513
  %8854 = vmatprep.subr.bf16.mxu0 %v7507
  %8855 = vmatpush1.bf16.msra.mxu0 %v7506
  %8856 = vmatprep.subr.bf16.mxu0 %v7612
  %8857 = vmatpush2.bf16.msra.mxu0 %v7611
  %8858 = vmatprep.subr.bf16.mxu0 %v7605
  %8859 = vmatpush2.bf16.msra.mxu0 %v7604
  %8860 = vmatprep.subr.bf16.mxu0 %v7598
  %8861 = vmatpush2.bf16.msra.mxu0 %v7597
  %8862 = vmatprep.subr.bf16.mxu0 %v7591
  %8863 = vmatpush2.bf16.msra.mxu0 %v7590
  %8864 = vmatprep.subr.bf16.mxu0 %v7584
  %8865 = vmatpush2.bf16.msra.mxu0 %v7583
  %8866 = vmatprep.subr.bf16.mxu0 %v7577
  %8867 = vmatpush2.bf16.msra.mxu0 %v7576
  %8868 = vmatprep.subr.bf16.mxu0 %v7570
  %8869 = vmatpush2.bf16.msra.mxu0 %v7569
  %8870 = vmatprep.subr.bf16.mxu0 %v7563
  %8871 = vmatpush2.bf16.msra.mxu0 %v7562
  %8872 = vmatprep.mubr.bf16.mxu0 %v3932
  %8873 = vmatmul.mubr.bf16.gmra.mxu0 %v3931
  %v8874 = vpop.f32.mrf.mxu0
  %v8875 = vadd.f32 %v8834, %v8874
  %v8876 = vpop.f32.mrf.mxu0
  %v8877 = vadd.f32 %v8836, %v8876
  %v8878 = vpop.f32.mrf.mxu0
  %v8879 = vpop.f32.mrf.mxu0
  %8880 = vdwg.mxu0
  %8881 = vmatprep.subr.bf16.mxu0 0
  %8882 = vmatpush1.bf16.msra.mxu0 0
  %8883 = vmatprep.subr.bf16.mxu0 0
  %8884 = vmatpush1.bf16.msra.mxu0 0
  %8885 = vmatprep.subr.bf16.mxu0 0
  %8886 = vmatpush1.bf16.msra.mxu0 0
  %8887 = vmatprep.subr.bf16.mxu0 0
  %8888 = vmatpush1.bf16.msra.mxu0 0
  %8889 = vmatprep.subr.bf16.mxu0 %v7640
  %8890 = vmatpush1.bf16.msra.mxu0 %v7639
  %8891 = vmatprep.subr.bf16.mxu0 %v7633
  %8892 = vmatpush1.bf16.msra.mxu0 %v7632
  %8893 = vmatprep.subr.bf16.mxu0 %v7626
  %8894 = vmatpush1.bf16.msra.mxu0 %v7625
  %8895 = vmatprep.subr.bf16.mxu0 %v7619
  %8896 = vmatpush1.bf16.msra.mxu0 %v7618
  %8897 = vmatprep.subr.bf16.mxu0 0
  %8898 = vmatpush2.bf16.msra.mxu0 0
  %8899 = vmatprep.subr.bf16.mxu0 0
  %8900 = vmatpush2.bf16.msra.mxu0 0
  %8901 = vmatprep.subr.bf16.mxu0 0
  %8902 = vmatpush2.bf16.msra.mxu0 0
  %8903 = vmatprep.subr.bf16.mxu0 0
  %8904 = vmatpush2.bf16.msra.mxu0 0
  %8905 = vmatprep.subr.bf16.mxu0 0
  %8906 = vmatpush2.bf16.msra.mxu0 0
  %8907 = vmatprep.subr.bf16.mxu0 0
  %8908 = vmatpush2.bf16.msra.mxu0 0
  %8909 = vmatprep.subr.bf16.mxu0 0
  %8910 = vmatpush2.bf16.msra.mxu0 0
  %8911 = vmatprep.subr.bf16.mxu0 0
  %8912 = vmatpush2.bf16.msra.mxu0 0
  %8913 = vmatprep.mubr.bf16.mxu0 0
  %8914 = vmatmul.mubr.bf16.gmra.mxu0 %v8346
  %v8915 = vpop.f32.mrf.mxu0
  %v8916 = vadd.f32 %v8875, %v8915
  %v8917 = vpop.f32.mrf.mxu0
  %v8918 = vadd.f32 %v8877, %v8917
  %v8919 = vpop.f32.mrf.mxu0
  %v8920 = vpop.f32.mrf.mxu0
  %8921 = vdwg.mxu0
  %8922 = vmatprep.subr.bf16.mxu0 %v6998
  %8923 = vmatpush1.bf16.msra.mxu0 %v6997
  %8924 = vmatprep.subr.bf16.mxu0 %v6991
  %8925 = vmatpush1.bf16.msra.mxu0 %v6990
  %8926 = vmatprep.subr.bf16.mxu0 %v6984
  %8927 = vmatpush1.bf16.msra.mxu0 %v6983
  %8928 = vmatprep.subr.bf16.mxu0 %v6977
  %8929 = vmatpush1.bf16.msra.mxu0 %v6976
  %8930 = vmatprep.subr.bf16.mxu0 %v6970
  %8931 = vmatpush1.bf16.msra.mxu0 %v6969
  %8932 = vmatprep.subr.bf16.mxu0 %v6963
  %8933 = vmatpush1.bf16.msra.mxu0 %v6962
  %8934 = vmatprep.subr.bf16.mxu0 %v6956
  %8935 = vmatpush1.bf16.msra.mxu0 %v6955
  %8936 = vmatprep.subr.bf16.mxu0 %v6949
  %8937 = vmatpush1.bf16.msra.mxu0 %v6948
  %8938 = vmatprep.subr.bf16.mxu0 %v7054
  %8939 = vmatpush2.bf16.msra.mxu0 %v7053
  %8940 = vmatprep.subr.bf16.mxu0 %v7047
  %8941 = vmatpush2.bf16.msra.mxu0 %v7046
  %8942 = vmatprep.subr.bf16.mxu0 %v7040
  %8943 = vmatpush2.bf16.msra.mxu0 %v7039
  %8944 = vmatprep.subr.bf16.mxu0 %v7033
  %8945 = vmatpush2.bf16.msra.mxu0 %v7032
  %8946 = vmatprep.subr.bf16.mxu0 %v7026
  %8947 = vmatpush2.bf16.msra.mxu0 %v7025
  %8948 = vmatprep.subr.bf16.mxu0 %v7019
  %8949 = vmatpush2.bf16.msra.mxu0 %v7018
  %8950 = vmatprep.subr.bf16.mxu0 %v7012
  %8951 = vmatpush2.bf16.msra.mxu0 %v7011
  %8952 = vmatprep.subr.bf16.mxu0 %v7005
  %8953 = vmatpush2.bf16.msra.mxu0 %v7004
  %8954 = vmatprep.mubr.bf16.mxu0 %v3922
  %8955 = vmatmul.mubr.bf16.gmra.mxu0 %v3921
  %v8956 = vpop.f32.mrf.mxu0
  %v8957 = vadd.f32 %v4742, %v8956
  %v8958 = vpop.f32.mrf.mxu0
  %v8959 = vadd.f32 %v4742, %v8958
  %v8960 = vpop.f32.mrf.mxu0
  %v8961 = vpop.f32.mrf.mxu0
  %8962 = vdwg.mxu0
  %8963 = vmatprep.subr.bf16.mxu0 %v7110
  %8964 = vmatpush1.bf16.msra.mxu0 %v7109
  %8965 = vmatprep.subr.bf16.mxu0 %v7103
  %8966 = vmatpush1.bf16.msra.mxu0 %v7102
  %8967 = vmatprep.subr.bf16.mxu0 %v7096
  %8968 = vmatpush1.bf16.msra.mxu0 %v7095
  %8969 = vmatprep.subr.bf16.mxu0 %v7089
  %8970 = vmatpush1.bf16.msra.mxu0 %v7088
  %8971 = vmatprep.subr.bf16.mxu0 %v7082
  %8972 = vmatpush1.bf16.msra.mxu0 %v7081
  %8973 = vmatprep.subr.bf16.mxu0 %v7075
  %8974 = vmatpush1.bf16.msra.mxu0 %v7074
  %8975 = vmatprep.subr.bf16.mxu0 %v7068
  %8976 = vmatpush1.bf16.msra.mxu0 %v7067
  %8977 = vmatprep.subr.bf16.mxu0 %v7061
  %8978 = vmatpush1.bf16.msra.mxu0 %v7060
  %8979 = vmatprep.subr.bf16.mxu0 %v7166
  %8980 = vmatpush2.bf16.msra.mxu0 %v7165
  %8981 = vmatprep.subr.bf16.mxu0 %v7159
  %8982 = vmatpush2.bf16.msra.mxu0 %v7158
  %8983 = vmatprep.subr.bf16.mxu0 %v7152
  %8984 = vmatpush2.bf16.msra.mxu0 %v7151
  %8985 = vmatprep.subr.bf16.mxu0 %v7145
  %8986 = vmatpush2.bf16.msra.mxu0 %v7144
  %8987 = vmatprep.subr.bf16.mxu0 %v7138
  %8988 = vmatpush2.bf16.msra.mxu0 %v7137
  %8989 = vmatprep.subr.bf16.mxu0 %v7131
  %8990 = vmatpush2.bf16.msra.mxu0 %v7130
  %8991 = vmatprep.subr.bf16.mxu0 %v7124
  %8992 = vmatpush2.bf16.msra.mxu0 %v7123
  %8993 = vmatprep.subr.bf16.mxu0 %v7117
  %8994 = vmatpush2.bf16.msra.mxu0 %v7116
  %8995 = vmatprep.mubr.bf16.mxu0 %v3924
  %8996 = vmatmul.mubr.bf16.gmra.mxu0 %v3923
  %v8997 = vpop.f32.mrf.mxu0
  %v8998 = vadd.f32 %v8957, %v8997
  %v8999 = vpop.f32.mrf.mxu0
  %v9000 = vadd.f32 %v8959, %v8999
  %v9001 = vpop.f32.mrf.mxu0
  %v9002 = vpop.f32.mrf.mxu0
  %9003 = vdwg.mxu0
  %9004 = vmatprep.subr.bf16.mxu0 %v7222
  %9005 = vmatpush1.bf16.msra.mxu0 %v7221
  %9006 = vmatprep.subr.bf16.mxu0 %v7215
  %9007 = vmatpush1.bf16.msra.mxu0 %v7214
  %9008 = vmatprep.subr.bf16.mxu0 %v7208
  %9009 = vmatpush1.bf16.msra.mxu0 %v7207
  %9010 = vmatprep.subr.bf16.mxu0 %v7201
  %9011 = vmatpush1.bf16.msra.mxu0 %v7200
  %9012 = vmatprep.subr.bf16.mxu0 %v7194
  %9013 = vmatpush1.bf16.msra.mxu0 %v7193
  %9014 = vmatprep.subr.bf16.mxu0 %v7187
  %9015 = vmatpush1.bf16.msra.mxu0 %v7186
  %9016 = vmatprep.subr.bf16.mxu0 %v7180
  %9017 = vmatpush1.bf16.msra.mxu0 %v7179
  %9018 = vmatprep.subr.bf16.mxu0 %v7173
  %9019 = vmatpush1.bf16.msra.mxu0 %v7172
  %9020 = vmatprep.subr.bf16.mxu0 %v7278
  %9021 = vmatpush2.bf16.msra.mxu0 %v7277
  %9022 = vmatprep.subr.bf16.mxu0 %v7271
  %9023 = vmatpush2.bf16.msra.mxu0 %v7270
  %9024 = vmatprep.subr.bf16.mxu0 %v7264
  %9025 = vmatpush2.bf16.msra.mxu0 %v7263
  %9026 = vmatprep.subr.bf16.mxu0 %v7257
  %9027 = vmatpush2.bf16.msra.mxu0 %v7256
  %9028 = vmatprep.subr.bf16.mxu0 %v7250
  %9029 = vmatpush2.bf16.msra.mxu0 %v7249
  %9030 = vmatprep.subr.bf16.mxu0 %v7243
  %9031 = vmatpush2.bf16.msra.mxu0 %v7242
  %9032 = vmatprep.subr.bf16.mxu0 %v7236
  %9033 = vmatpush2.bf16.msra.mxu0 %v7235
  %9034 = vmatprep.subr.bf16.mxu0 %v7229
  %9035 = vmatpush2.bf16.msra.mxu0 %v7228
  %9036 = vmatprep.mubr.bf16.mxu0 %v3926
  %9037 = vmatmul.mubr.bf16.gmra.mxu0 %v3925
  %v9038 = vpop.f32.mrf.mxu0
  %v9039 = vadd.f32 %v8998, %v9038
  %v9040 = vpop.f32.mrf.mxu0
  %v9041 = vadd.f32 %v9000, %v9040
  %v9042 = vpop.f32.mrf.mxu0
  %v9043 = vpop.f32.mrf.mxu0
  %9044 = vdwg.mxu0
  %9045 = vmatprep.subr.bf16.mxu0 %v7334
  %9046 = vmatpush1.bf16.msra.mxu0 %v7333
  %9047 = vmatprep.subr.bf16.mxu0 %v7327
  %9048 = vmatpush1.bf16.msra.mxu0 %v7326
  %9049 = vmatprep.subr.bf16.mxu0 %v7320
  %9050 = vmatpush1.bf16.msra.mxu0 %v7319
  %9051 = vmatprep.subr.bf16.mxu0 %v7313
  %9052 = vmatpush1.bf16.msra.mxu0 %v7312
  %9053 = vmatprep.subr.bf16.mxu0 %v7306
  %9054 = vmatpush1.bf16.msra.mxu0 %v7305
  %9055 = vmatprep.subr.bf16.mxu0 %v7299
  %9056 = vmatpush1.bf16.msra.mxu0 %v7298
  %9057 = vmatprep.subr.bf16.mxu0 %v7292
  %9058 = vmatpush1.bf16.msra.mxu0 %v7291
  %9059 = vmatprep.subr.bf16.mxu0 %v7285
  %9060 = vmatpush1.bf16.msra.mxu0 %v7284
  %9061 = vmatprep.subr.bf16.mxu0 %v7390
  %9062 = vmatpush2.bf16.msra.mxu0 %v7389
  %9063 = vmatprep.subr.bf16.mxu0 %v7383
  %9064 = vmatpush2.bf16.msra.mxu0 %v7382
  %9065 = vmatprep.subr.bf16.mxu0 %v7376
  %9066 = vmatpush2.bf16.msra.mxu0 %v7375
  %9067 = vmatprep.subr.bf16.mxu0 %v7369
  %9068 = vmatpush2.bf16.msra.mxu0 %v7368
  %9069 = vmatprep.subr.bf16.mxu0 %v7362
  %9070 = vmatpush2.bf16.msra.mxu0 %v7361
  %9071 = vmatprep.subr.bf16.mxu0 %v7355
  %9072 = vmatpush2.bf16.msra.mxu0 %v7354
  %9073 = vmatprep.subr.bf16.mxu0 %v7348
  %9074 = vmatpush2.bf16.msra.mxu0 %v7347
  %9075 = vmatprep.subr.bf16.mxu0 %v7341
  %9076 = vmatpush2.bf16.msra.mxu0 %v7340
  %9077 = vmatprep.mubr.bf16.mxu0 %v3928
  %9078 = vmatmul.mubr.bf16.gmra.mxu0 %v3927
  %v9079 = vpop.f32.mrf.mxu0
  %v9080 = vadd.f32 %v9039, %v9079
  %v9081 = vpop.f32.mrf.mxu0
  %v9082 = vadd.f32 %v9041, %v9081
  %v9083 = vpop.f32.mrf.mxu0
  %v9084 = vpop.f32.mrf.mxu0
  %9085 = vdwg.mxu0
  %9086 = vmatprep.subr.bf16.mxu0 %v7446
  %9087 = vmatpush1.bf16.msra.mxu0 %v7445
  %9088 = vmatprep.subr.bf16.mxu0 %v7439
  %9089 = vmatpush1.bf16.msra.mxu0 %v7438
  %9090 = vmatprep.subr.bf16.mxu0 %v7432
  %9091 = vmatpush1.bf16.msra.mxu0 %v7431
  %9092 = vmatprep.subr.bf16.mxu0 %v7425
  %9093 = vmatpush1.bf16.msra.mxu0 %v7424
  %9094 = vmatprep.subr.bf16.mxu0 %v7418
  %9095 = vmatpush1.bf16.msra.mxu0 %v7417
  %9096 = vmatprep.subr.bf16.mxu0 %v7411
  %9097 = vmatpush1.bf16.msra.mxu0 %v7410
  %9098 = vmatprep.subr.bf16.mxu0 %v7404
  %9099 = vmatpush1.bf16.msra.mxu0 %v7403
  %9100 = vmatprep.subr.bf16.mxu0 %v7397
  %9101 = vmatpush1.bf16.msra.mxu0 %v7396
  %9102 = vmatprep.subr.bf16.mxu0 %v7502
  %9103 = vmatpush2.bf16.msra.mxu0 %v7501
  %9104 = vmatprep.subr.bf16.mxu0 %v7495
  %9105 = vmatpush2.bf16.msra.mxu0 %v7494
  %9106 = vmatprep.subr.bf16.mxu0 %v7488
  %9107 = vmatpush2.bf16.msra.mxu0 %v7487
  %9108 = vmatprep.subr.bf16.mxu0 %v7481
  %9109 = vmatpush2.bf16.msra.mxu0 %v7480
  %9110 = vmatprep.subr.bf16.mxu0 %v7474
  %9111 = vmatpush2.bf16.msra.mxu0 %v7473
  %9112 = vmatprep.subr.bf16.mxu0 %v7467
  %9113 = vmatpush2.bf16.msra.mxu0 %v7466
  %9114 = vmatprep.subr.bf16.mxu0 %v7460
  %9115 = vmatpush2.bf16.msra.mxu0 %v7459
  %9116 = vmatprep.subr.bf16.mxu0 %v7453
  %9117 = vmatpush2.bf16.msra.mxu0 %v7452
  %9118 = vmatprep.mubr.bf16.mxu0 %v3930
  %9119 = vmatmul.mubr.bf16.gmra.mxu0 %v3929
  %v9120 = vpop.f32.mrf.mxu0
  %v9121 = vadd.f32 %v9080, %v9120
  %v9122 = vpop.f32.mrf.mxu0
  %v9123 = vadd.f32 %v9082, %v9122
  %v9124 = vpop.f32.mrf.mxu0
  %v9125 = vpop.f32.mrf.mxu0
  %9126 = vdwg.mxu0
  %9127 = vmatprep.subr.bf16.mxu0 %v7558
  %9128 = vmatpush1.bf16.msra.mxu0 %v7557
  %9129 = vmatprep.subr.bf16.mxu0 %v7551
  %9130 = vmatpush1.bf16.msra.mxu0 %v7550
  %9131 = vmatprep.subr.bf16.mxu0 %v7544
  %9132 = vmatpush1.bf16.msra.mxu0 %v7543
  %9133 = vmatprep.subr.bf16.mxu0 %v7537
  %9134 = vmatpush1.bf16.msra.mxu0 %v7536
  %9135 = vmatprep.subr.bf16.mxu0 %v7530
  %9136 = vmatpush1.bf16.msra.mxu0 %v7529
  %9137 = vmatprep.subr.bf16.mxu0 %v7523
  %9138 = vmatpush1.bf16.msra.mxu0 %v7522
  %9139 = vmatprep.subr.bf16.mxu0 %v7516
  %9140 = vmatpush1.bf16.msra.mxu0 %v7515
  %9141 = vmatprep.subr.bf16.mxu0 %v7509
  %9142 = vmatpush1.bf16.msra.mxu0 %v7508
  %9143 = vmatprep.subr.bf16.mxu0 %v7614
  %9144 = vmatpush2.bf16.msra.mxu0 %v7613
  %9145 = vmatprep.subr.bf16.mxu0 %v7607
  %9146 = vmatpush2.bf16.msra.mxu0 %v7606
  %9147 = vmatprep.subr.bf16.mxu0 %v7600
  %9148 = vmatpush2.bf16.msra.mxu0 %v7599
  %9149 = vmatprep.subr.bf16.mxu0 %v7593
  %9150 = vmatpush2.bf16.msra.mxu0 %v7592
  %9151 = vmatprep.subr.bf16.mxu0 %v7586
  %9152 = vmatpush2.bf16.msra.mxu0 %v7585
  %9153 = vmatprep.subr.bf16.mxu0 %v7579
  %9154 = vmatpush2.bf16.msra.mxu0 %v7578
  %9155 = vmatprep.subr.bf16.mxu0 %v7572
  %9156 = vmatpush2.bf16.msra.mxu0 %v7571
  %9157 = vmatprep.subr.bf16.mxu0 %v7565
  %9158 = vmatpush2.bf16.msra.mxu0 %v7564
  %9159 = vmatprep.mubr.bf16.mxu0 %v3932
  %9160 = vmatmul.mubr.bf16.gmra.mxu0 %v3931
  %v9161 = vpop.f32.mrf.mxu0
  %v9162 = vadd.f32 %v9121, %v9161
  %v9163 = vpop.f32.mrf.mxu0
  %v9164 = vadd.f32 %v9123, %v9163
  %v9165 = vpop.f32.mrf.mxu0
  %v9166 = vpop.f32.mrf.mxu0
  %9167 = vdwg.mxu0
  %9168 = vmatprep.subr.bf16.mxu0 0
  %9169 = vmatpush1.bf16.msra.mxu0 0
  %9170 = vmatprep.subr.bf16.mxu0 0
  %9171 = vmatpush1.bf16.msra.mxu0 0
  %9172 = vmatprep.subr.bf16.mxu0 0
  %9173 = vmatpush1.bf16.msra.mxu0 0
  %9174 = vmatprep.subr.bf16.mxu0 0
  %9175 = vmatpush1.bf16.msra.mxu0 0
  %9176 = vmatprep.subr.bf16.mxu0 %v7642
  %9177 = vmatpush1.bf16.msra.mxu0 %v7641
  %9178 = vmatprep.subr.bf16.mxu0 %v7635
  %9179 = vmatpush1.bf16.msra.mxu0 %v7634
  %9180 = vmatprep.subr.bf16.mxu0 %v7628
  %9181 = vmatpush1.bf16.msra.mxu0 %v7627
  %9182 = vmatprep.subr.bf16.mxu0 %v7621
  %9183 = vmatpush1.bf16.msra.mxu0 %v7620
  %9184 = vmatprep.subr.bf16.mxu0 0
  %9185 = vmatpush2.bf16.msra.mxu0 0
  %9186 = vmatprep.subr.bf16.mxu0 0
  %9187 = vmatpush2.bf16.msra.mxu0 0
  %9188 = vmatprep.subr.bf16.mxu0 0
  %9189 = vmatpush2.bf16.msra.mxu0 0
  %9190 = vmatprep.subr.bf16.mxu0 0
  %9191 = vmatpush2.bf16.msra.mxu0 0
  %9192 = vmatprep.subr.bf16.mxu0 0
  %9193 = vmatpush2.bf16.msra.mxu0 0
  %9194 = vmatprep.subr.bf16.mxu0 0
  %9195 = vmatpush2.bf16.msra.mxu0 0
  %9196 = vmatprep.subr.bf16.mxu0 0
  %9197 = vmatpush2.bf16.msra.mxu0 0
  %9198 = vmatprep.subr.bf16.mxu0 0
  %9199 = vmatpush2.bf16.msra.mxu0 0
  %9200 = vmatprep.mubr.bf16.mxu0 0
  %9201 = vmatmul.mubr.bf16.gmra.mxu0 %v8346
  %v9202 = vpop.f32.mrf.mxu0
  %v9203 = vadd.f32 %v9162, %v9202
  %v9204 = vpop.f32.mrf.mxu0
  %v9205 = vadd.f32 %v9164, %v9204
  %v9206 = vpop.f32.mrf.mxu0
  %v9207 = vpop.f32.mrf.mxu0
  %9208 = vdwg.mxu0
  %9209 = vmatprep.subr.bf16.mxu0 0
  %9210 = vmatpush1.bf16.msra.mxu0 %v6999
  %9211 = vmatprep.subr.bf16.mxu0 0
  %9212 = vmatpush1.bf16.msra.mxu0 %v6992
  %9213 = vmatprep.subr.bf16.mxu0 0
  %9214 = vmatpush1.bf16.msra.mxu0 %v6985
  %9215 = vmatprep.subr.bf16.mxu0 0
  %9216 = vmatpush1.bf16.msra.mxu0 %v6978
  %9217 = vmatprep.subr.bf16.mxu0 0
  %9218 = vmatpush1.bf16.msra.mxu0 %v6971
  %9219 = vmatprep.subr.bf16.mxu0 0
  %9220 = vmatpush1.bf16.msra.mxu0 %v6964
  %9221 = vmatprep.subr.bf16.mxu0 0
  %9222 = vmatpush1.bf16.msra.mxu0 %v6957
  %9223 = vmatprep.subr.bf16.mxu0 0
  %9224 = vmatpush1.bf16.msra.mxu0 %v6950
  %9225 = vmatprep.subr.bf16.mxu0 0
  %9226 = vmatpush2.bf16.msra.mxu0 %v7055
  %9227 = vmatprep.subr.bf16.mxu0 0
  %9228 = vmatpush2.bf16.msra.mxu0 %v7048
  %9229 = vmatprep.subr.bf16.mxu0 0
  %9230 = vmatpush2.bf16.msra.mxu0 %v7041
  %9231 = vmatprep.subr.bf16.mxu0 0
  %9232 = vmatpush2.bf16.msra.mxu0 %v7034
  %9233 = vmatprep.subr.bf16.mxu0 0
  %9234 = vmatpush2.bf16.msra.mxu0 %v7027
  %9235 = vmatprep.subr.bf16.mxu0 0
  %9236 = vmatpush2.bf16.msra.mxu0 %v7020
  %9237 = vmatprep.subr.bf16.mxu0 0
  %9238 = vmatpush2.bf16.msra.mxu0 %v7013
  %9239 = vmatprep.subr.bf16.mxu0 0
  %9240 = vmatpush2.bf16.msra.mxu0 %v7006
  %9241 = vmatprep.mubr.bf16.mxu0 %v3922
  %9242 = vmatmul.mubr.bf16.gmra.mxu0 %v3921
  %v9243 = vpop.f32.mrf.mxu0
  %v9244 = vadd.f32 %v4742, %v9243
  %v9245 = vpop.f32.mrf.mxu0
  %v9246 = vpop.f32.mrf.mxu0
  %v9247 = vpop.f32.mrf.mxu0
  %9248 = vdwg.mxu0
  %9249 = vmatprep.subr.bf16.mxu0 0
  %9250 = vmatpush1.bf16.msra.mxu0 %v7111
  %9251 = vmatprep.subr.bf16.mxu0 0
  %9252 = vmatpush1.bf16.msra.mxu0 %v7104
  %9253 = vmatprep.subr.bf16.mxu0 0
  %9254 = vmatpush1.bf16.msra.mxu0 %v7097
  %9255 = vmatprep.subr.bf16.mxu0 0
  %9256 = vmatpush1.bf16.msra.mxu0 %v7090
  %9257 = vmatprep.subr.bf16.mxu0 0
  %9258 = vmatpush1.bf16.msra.mxu0 %v7083
  %9259 = vmatprep.subr.bf16.mxu0 0
  %9260 = vmatpush1.bf16.msra.mxu0 %v7076
  %9261 = vmatprep.subr.bf16.mxu0 0
  %9262 = vmatpush1.bf16.msra.mxu0 %v7069
  %9263 = vmatprep.subr.bf16.mxu0 0
  %9264 = vmatpush1.bf16.msra.mxu0 %v7062
  %9265 = vmatprep.subr.bf16.mxu0 0
  %9266 = vmatpush2.bf16.msra.mxu0 %v7167
  %9267 = vmatprep.subr.bf16.mxu0 0
  %9268 = vmatpush2.bf16.msra.mxu0 %v7160
  %9269 = vmatprep.subr.bf16.mxu0 0
  %9270 = vmatpush2.bf16.msra.mxu0 %v7153
  %9271 = vmatprep.subr.bf16.mxu0 0
  %9272 = vmatpush2.bf16.msra.mxu0 %v7146
  %9273 = vmatprep.subr.bf16.mxu0 0
  %9274 = vmatpush2.bf16.msra.mxu0 %v7139
  %9275 = vmatprep.subr.bf16.mxu0 0
  %9276 = vmatpush2.bf16.msra.mxu0 %v7132
  %9277 = vmatprep.subr.bf16.mxu0 0
  %9278 = vmatpush2.bf16.msra.mxu0 %v7125
  %9279 = vmatprep.subr.bf16.mxu0 0
  %9280 = vmatpush2.bf16.msra.mxu0 %v7118
  %9281 = vmatprep.mubr.bf16.mxu0 %v3924
  %9282 = vmatmul.mubr.bf16.gmra.mxu0 %v3923
  %v9283 = vpop.f32.mrf.mxu0
  %v9284 = vadd.f32 %v9244, %v9283
  %v9285 = vpop.f32.mrf.mxu0
  %v9286 = vpop.f32.mrf.mxu0
  %v9287 = vpop.f32.mrf.mxu0
  %9288 = vdwg.mxu0
  %9289 = vmatprep.subr.bf16.mxu0 0
  %9290 = vmatpush1.bf16.msra.mxu0 %v7223
  %9291 = vmatprep.subr.bf16.mxu0 0
  %9292 = vmatpush1.bf16.msra.mxu0 %v7216
  %9293 = vmatprep.subr.bf16.mxu0 0
  %9294 = vmatpush1.bf16.msra.mxu0 %v7209
  %9295 = vmatprep.subr.bf16.mxu0 0
  %9296 = vmatpush1.bf16.msra.mxu0 %v7202
  %9297 = vmatprep.subr.bf16.mxu0 0
  %9298 = vmatpush1.bf16.msra.mxu0 %v7195
  %9299 = vmatprep.subr.bf16.mxu0 0
  %9300 = vmatpush1.bf16.msra.mxu0 %v7188
  %9301 = vmatprep.subr.bf16.mxu0 0
  %9302 = vmatpush1.bf16.msra.mxu0 %v7181
  %9303 = vmatprep.subr.bf16.mxu0 0
  %9304 = vmatpush1.bf16.msra.mxu0 %v7174
  %9305 = vmatprep.subr.bf16.mxu0 0
  %9306 = vmatpush2.bf16.msra.mxu0 %v7279
  %9307 = vmatprep.subr.bf16.mxu0 0
  %9308 = vmatpush2.bf16.msra.mxu0 %v7272
  %9309 = vmatprep.subr.bf16.mxu0 0
  %9310 = vmatpush2.bf16.msra.mxu0 %v7265
  %9311 = vmatprep.subr.bf16.mxu0 0
  %9312 = vmatpush2.bf16.msra.mxu0 %v7258
  %9313 = vmatprep.subr.bf16.mxu0 0
  %9314 = vmatpush2.bf16.msra.mxu0 %v7251
  %9315 = vmatprep.subr.bf16.mxu0 0
  %9316 = vmatpush2.bf16.msra.mxu0 %v7244
  %9317 = vmatprep.subr.bf16.mxu0 0
  %9318 = vmatpush2.bf16.msra.mxu0 %v7237
  %9319 = vmatprep.subr.bf16.mxu0 0
  %9320 = vmatpush2.bf16.msra.mxu0 %v7230
  %9321 = vmatprep.mubr.bf16.mxu0 %v3926
  %9322 = vmatmul.mubr.bf16.gmra.mxu0 %v3925
  %v9323 = vpop.f32.mrf.mxu0
  %v9324 = vadd.f32 %v9284, %v9323
  %v9325 = vpop.f32.mrf.mxu0
  %v9326 = vpop.f32.mrf.mxu0
  %v9327 = vpop.f32.mrf.mxu0
  %9328 = vdwg.mxu0
  %9329 = vmatprep.subr.bf16.mxu0 0
  %9330 = vmatpush1.bf16.msra.mxu0 %v7335
  %9331 = vmatprep.subr.bf16.mxu0 0
  %9332 = vmatpush1.bf16.msra.mxu0 %v7328
  %9333 = vmatprep.subr.bf16.mxu0 0
  %9334 = vmatpush1.bf16.msra.mxu0 %v7321
  %9335 = vmatprep.subr.bf16.mxu0 0
  %9336 = vmatpush1.bf16.msra.mxu0 %v7314
  %9337 = vmatprep.subr.bf16.mxu0 0
  %9338 = vmatpush1.bf16.msra.mxu0 %v7307
  %9339 = vmatprep.subr.bf16.mxu0 0
  %9340 = vmatpush1.bf16.msra.mxu0 %v7300
  %9341 = vmatprep.subr.bf16.mxu0 0
  %9342 = vmatpush1.bf16.msra.mxu0 %v7293
  %9343 = vmatprep.subr.bf16.mxu0 0
  %9344 = vmatpush1.bf16.msra.mxu0 %v7286
  %9345 = vmatprep.subr.bf16.mxu0 0
  %9346 = vmatpush2.bf16.msra.mxu0 %v7391
  %9347 = vmatprep.subr.bf16.mxu0 0
  %9348 = vmatpush2.bf16.msra.mxu0 %v7384
  %9349 = vmatprep.subr.bf16.mxu0 0
  %9350 = vmatpush2.bf16.msra.mxu0 %v7377
  %9351 = vmatprep.subr.bf16.mxu0 0
  %9352 = vmatpush2.bf16.msra.mxu0 %v7370
  %9353 = vmatprep.subr.bf16.mxu0 0
  %9354 = vmatpush2.bf16.msra.mxu0 %v7363
  %9355 = vmatprep.subr.bf16.mxu0 0
  %9356 = vmatpush2.bf16.msra.mxu0 %v7356
  %9357 = vmatprep.subr.bf16.mxu0 0
  %9358 = vmatpush2.bf16.msra.mxu0 %v7349
  %9359 = vmatprep.subr.bf16.mxu0 0
  %9360 = vmatpush2.bf16.msra.mxu0 %v7342
  %9361 = vmatprep.mubr.bf16.mxu0 %v3928
  %9362 = vmatmul.mubr.bf16.gmra.mxu0 %v3927
  %v9363 = vpop.f32.mrf.mxu0
  %v9364 = vadd.f32 %v9324, %v9363
  %v9365 = vpop.f32.mrf.mxu0
  %v9366 = vpop.f32.mrf.mxu0
  %v9367 = vpop.f32.mrf.mxu0
  %9368 = vdwg.mxu0
  %9369 = vmatprep.subr.bf16.mxu0 0
  %9370 = vmatpush1.bf16.msra.mxu0 %v7447
  %9371 = vmatprep.subr.bf16.mxu0 0
  %9372 = vmatpush1.bf16.msra.mxu0 %v7440
  %9373 = vmatprep.subr.bf16.mxu0 0
  %9374 = vmatpush1.bf16.msra.mxu0 %v7433
  %9375 = vmatprep.subr.bf16.mxu0 0
  %9376 = vmatpush1.bf16.msra.mxu0 %v7426
  %9377 = vmatprep.subr.bf16.mxu0 0
  %9378 = vmatpush1.bf16.msra.mxu0 %v7419
  %9379 = vmatprep.subr.bf16.mxu0 0
  %9380 = vmatpush1.bf16.msra.mxu0 %v7412
  %9381 = vmatprep.subr.bf16.mxu0 0
  %9382 = vmatpush1.bf16.msra.mxu0 %v7405
  %9383 = vmatprep.subr.bf16.mxu0 0
  %9384 = vmatpush1.bf16.msra.mxu0 %v7398
  %9385 = vmatprep.subr.bf16.mxu0 0
  %9386 = vmatpush2.bf16.msra.mxu0 %v7503
  %9387 = vmatprep.subr.bf16.mxu0 0
  %9388 = vmatpush2.bf16.msra.mxu0 %v7496
  %9389 = vmatprep.subr.bf16.mxu0 0
  %9390 = vmatpush2.bf16.msra.mxu0 %v7489
  %9391 = vmatprep.subr.bf16.mxu0 0
  %9392 = vmatpush2.bf16.msra.mxu0 %v7482
  %9393 = vmatprep.subr.bf16.mxu0 0
  %9394 = vmatpush2.bf16.msra.mxu0 %v7475
  %9395 = vmatprep.subr.bf16.mxu0 0
  %9396 = vmatpush2.bf16.msra.mxu0 %v7468
  %9397 = vmatprep.subr.bf16.mxu0 0
  %9398 = vmatpush2.bf16.msra.mxu0 %v7461
  %9399 = vmatprep.subr.bf16.mxu0 0
  %9400 = vmatpush2.bf16.msra.mxu0 %v7454
  %9401 = vmatprep.mubr.bf16.mxu0 %v3930
  %9402 = vmatmul.mubr.bf16.gmra.mxu0 %v3929
  %v9403 = vpop.f32.mrf.mxu0
  %v9404 = vadd.f32 %v9364, %v9403
  %v9405 = vpop.f32.mrf.mxu0
  %v9406 = vpop.f32.mrf.mxu0
  %v9407 = vpop.f32.mrf.mxu0
  %9408 = vdwg.mxu0
  %9409 = vmatprep.subr.bf16.mxu0 0
  %9410 = vmatpush1.bf16.msra.mxu0 %v7559
  %9411 = vmatprep.subr.bf16.mxu0 0
  %9412 = vmatpush1.bf16.msra.mxu0 %v7552
  %9413 = vmatprep.subr.bf16.mxu0 0
  %9414 = vmatpush1.bf16.msra.mxu0 %v7545
  %9415 = vmatprep.subr.bf16.mxu0 0
  %9416 = vmatpush1.bf16.msra.mxu0 %v7538
  %9417 = vmatprep.subr.bf16.mxu0 0
  %9418 = vmatpush1.bf16.msra.mxu0 %v7531
  %9419 = vmatprep.subr.bf16.mxu0 0
  %9420 = vmatpush1.bf16.msra.mxu0 %v7524
  %9421 = vmatprep.subr.bf16.mxu0 0
  %9422 = vmatpush1.bf16.msra.mxu0 %v7517
  %9423 = vmatprep.subr.bf16.mxu0 0
  %9424 = vmatpush1.bf16.msra.mxu0 %v7510
  %9425 = vmatprep.subr.bf16.mxu0 0
  %9426 = vmatpush2.bf16.msra.mxu0 %v7615
  %9427 = vmatprep.subr.bf16.mxu0 0
  %9428 = vmatpush2.bf16.msra.mxu0 %v7608
  %9429 = vmatprep.subr.bf16.mxu0 0
  %9430 = vmatpush2.bf16.msra.mxu0 %v7601
  %9431 = vmatprep.subr.bf16.mxu0 0
  %9432 = vmatpush2.bf16.msra.mxu0 %v7594
  %9433 = vmatprep.subr.bf16.mxu0 0
  %9434 = vmatpush2.bf16.msra.mxu0 %v7587
  %9435 = vmatprep.subr.bf16.mxu0 0
  %9436 = vmatpush2.bf16.msra.mxu0 %v7580
  %9437 = vmatprep.subr.bf16.mxu0 0
  %9438 = vmatpush2.bf16.msra.mxu0 %v7573
  %9439 = vmatprep.subr.bf16.mxu0 0
  %9440 = vmatpush2.bf16.msra.mxu0 %v7566
  %9441 = vmatprep.mubr.bf16.mxu0 %v3932
  %9442 = vmatmul.mubr.bf16.gmra.mxu0 %v3931
  %v9443 = vpop.f32.mrf.mxu0
  %v9444 = vadd.f32 %v9404, %v9443
  %v9445 = vpop.f32.mrf.mxu0
  %v9446 = vpop.f32.mrf.mxu0
  %v9447 = vpop.f32.mrf.mxu0
  %9448 = vdwg.mxu0
  %9449 = vmatprep.subr.bf16.mxu0 0
  %9450 = vmatpush1.bf16.msra.mxu0 0
  %9451 = vmatprep.subr.bf16.mxu0 0
  %9452 = vmatpush1.bf16.msra.mxu0 0
  %9453 = vmatprep.subr.bf16.mxu0 0
  %9454 = vmatpush1.bf16.msra.mxu0 0
  %9455 = vmatprep.subr.bf16.mxu0 0
  %9456 = vmatpush1.bf16.msra.mxu0 0
  %9457 = vmatprep.subr.bf16.mxu0 0
  %9458 = vmatpush1.bf16.msra.mxu0 %v7643
  %9459 = vmatprep.subr.bf16.mxu0 0
  %9460 = vmatpush1.bf16.msra.mxu0 %v7636
  %9461 = vmatprep.subr.bf16.mxu0 0
  %9462 = vmatpush1.bf16.msra.mxu0 %v7629
  %9463 = vmatprep.subr.bf16.mxu0 0
  %9464 = vmatpush1.bf16.msra.mxu0 %v7622
  %9465 = vmatprep.subr.bf16.mxu0 0
  %9466 = vmatpush2.bf16.msra.mxu0 0
  %9467 = vmatprep.subr.bf16.mxu0 0
  %9468 = vmatpush2.bf16.msra.mxu0 0
  %9469 = vmatprep.subr.bf16.mxu0 0
  %9470 = vmatpush2.bf16.msra.mxu0 0
  %9471 = vmatprep.subr.bf16.mxu0 0
  %9472 = vmatpush2.bf16.msra.mxu0 0
  %9473 = vmatprep.subr.bf16.mxu0 0
  %9474 = vmatpush2.bf16.msra.mxu0 0
  %9475 = vmatprep.subr.bf16.mxu0 0
  %9476 = vmatpush2.bf16.msra.mxu0 0
  %9477 = vmatprep.subr.bf16.mxu0 0
  %9478 = vmatpush2.bf16.msra.mxu0 0
  %9479 = vmatprep.subr.bf16.mxu0 0
  %9480 = vmatpush2.bf16.msra.mxu0 0
  %9481 = vmatprep.mubr.bf16.mxu0 0
  %9482 = vmatmul.mubr.bf16.gmra.mxu0 %v8346
  %v9483 = vpop.f32.mrf.mxu0
  %v9484 = vadd.f32 %v9444, %v9483
  %v9485 = vpop.f32.mrf.mxu0
  %v9486 = vpop.f32.mrf.mxu0
  %v9487 = vpop.f32.mrf.mxu0
  %9488 = vdwg.mxu0
  %vm9489 = vcmp.gt.f32.partialorder %v8629, 0.0
  %vm9490 = vcmp.gt.f32.partialorder %v8631, 0.0
  %vm9491 = vcmp.gt.f32.partialorder %v8916, 0.0
  %vm9492 = vcmp.gt.f32.partialorder %v8918, 0.0
  %vm9493 = vcmp.gt.f32.partialorder %v9203, 0.0
  %vm9494 = vcmp.gt.f32.partialorder %v9205, 0.0
  %vm9495 = vcmp.gt.f32.partialorder %v9484, 0.0
  %v9496 = vmin.f32 %v8629, 0.0
  %v9497 = vmin.f32 %v8631, 0.0
  %v9498 = vmin.f32 %v8916, 0.0
  %v9499 = vmin.f32 %v8918, 0.0
  %v9500 = vmin.f32 %v9203, 0.0
  %v9501 = vmin.f32 %v9205, 0.0
  %v9502 = vmin.f32 %v9484, 0.0
  %v9503 = vmul.f32 %v9496, 1.442695
  %v9504 = vpow.pop %v9503
  %v9505 = vmul.f32 %v9497, 1.442695
  %v9506 = vpow.pop %v9505
  %v9507 = vmul.f32 %v9498, 1.442695
  %v9508 = vpow.pop %v9507
  %v9509 = vmul.f32 %v9499, 1.442695
  %v9510 = vpow.pop %v9509
  %v9511 = vmul.f32 %v9500, 1.442695
  %v9512 = vpow.pop %v9511
  %v9513 = vmul.f32 %v9501, 1.442695
  %v9514 = vpow.pop %v9513
  %v9515 = vmul.f32 %v9502, 1.442695
  %v9516 = vpow.pop %v9515
  %v9517 = vsub.f32 %v9504, 1.0
  %v9518 = vsub.f32 %v9506, 1.0
  %v9519 = vsub.f32 %v9508, 1.0
  %v9520 = vsub.f32 %v9510, 1.0
  %v9521 = vsub.f32 %v9512, 1.0
  %v9522 = vsub.f32 %v9514, 1.0
  %v9523 = vsub.f32 %v9516, 1.0
  %v9524 = vsel %vm9489, %v8629, %v9517
  %v9525 = vsel %vm9490, %v8631, %v9518
  %v9526 = vsel %vm9491, %v8916, %v9519
  %v9527 = vsel %vm9492, %v8918, %v9520
  %v9528 = vsel %vm9493, %v9203, %v9521
  %v9529 = vsel %vm9494, %v9205, %v9522
  %v9530 = vsel %vm9495, %v9484, %v9523
  %v9538 = vcombine.low %v9524, %v9525
  %v9539 = vcombine.low %v9526, %v9527
  %v9541 = vunpack.c.l.s4 1983009808
  %v9542 = vunpack.c.0.s8 %v9541
  %v9543 = vlaneseq
  %v9544 = vshrl.u32 %v9543, 7
  %v9545 = vsub.s32 %v9542, %v9544
  %v9546 = vrot.slane %v9538, %v9545
  %v9548 = vunpack.c.l.s4 1983009808
  %v9549 = vunpack.c.0.s8 %v9548
  %v9550 = vlaneseq
  %v9551 = vshrl.u32 %v9550, 7
  %v9552 = vsub.s32 %v9549, %v9551
  %v9553 = vrot.slane %v9539, %v9552
  %v9554 = vcombine.low %v9546, %v9553
  %v9555 = vcombine.low %v9528, %v9529
  %v9557 = vunpack.c.l.s4 1983009808
  %v9558 = vunpack.c.0.s8 %v9557
  %v9559 = vlaneseq
  %v9560 = vshrl.u32 %v9559, 7
  %v9561 = vsub.s32 %v9558, %v9560
  %v9562 = vrot.slane %v9555, %v9561
  %v9564 = vunpack.c.l.s4 1983009808
  %v9565 = vunpack.c.0.s8 %v9564
  %v9566 = vlaneseq
  %v9567 = vshrl.u32 %v9566, 7
  %v9568 = vsub.s32 %v9565, %v9567
  %v9569 = vrot.slane %v9530, %v9568
  %v9570 = vcombine.low %v9562, %v9569
  %9573 = vst [vmem:[%s7] sm:$0xff] %v9554
  %vm9574 = vcmask 1041408
  %vm9575 = vcmask 1043458
  %vm9576 = vmor %vm9575, %vm9574
  %vm9577 = vcmask 128004
  %vm9578 = vmor %vm9577, %vm9576
  %9579 = vst.msk [vmem:[%s7 + $0x8] sm:$0x3f] %vm9578, %v9570
  // Predicated region
  $region30: #{upscaler_forward.1} parent=0 // pred_check
    _
  $region31: #{upscaler_forward.1} parent=0 // pred_check_branch
    %9581 = sbr.rel (0) target = $region33
  $region32: #{upscaler_forward.1} parent=0 // pred_region
    _
  $region33: #{upscaler_forward.1} parent=0 // pred_fallthru
    _
  // Predicated region
  $region34: #{upscaler_forward.1} parent=0 // pred_check
    _
  $region35: #{upscaler_forward.1} parent=0 // pred_check_branch
    %9583 = sbr.rel (0) target = $region37
  $region36: #{upscaler_forward.1} parent=0 // pred_region
    _
  $region37: #{upscaler_forward.1} parent=0 // pred_fallthru
    _

</llo_original>
